<compile_context>
chip_gen: v5e
topology: v5e:2x2
jax: 0.10.0
libtpu: 0.0.40
codegen_flags: <defaults>
</compile_context>

<pallas_src>
import functools

import numpy as np
import jax
import jax.numpy as jnp
from jax import lax
from jax.experimental import pallas as pl
from jax.experimental.pallas import tpu as pltpu

LEAKY_SLOPE = 0.01          # nn.LeakyReLU() default
BN_EPS = 1e-5               # nn.BatchNorm2d default
BAND_TARGET_ROWS = 2048     # target flattened output rows per band (keeps blocks ~MBs)


def _round_up(v, m):
    return (v + m - 1) // m * m


def _cdiv(a, b):
    return -(-a // b)


# ----------------------------------------------------------------------------------
# Conv2d(3x3, stride 1) as a banded shifted-GEMM, fused folded-BN + LeakyReLU epilogue
# ----------------------------------------------------------------------------------
def _conv_kernel(x_ref, w_ref, s_ref, t_ref, o_ref, *acc_scratch,
                 kh, kw, wp, band_m, act, alpha):
    """One (band, cout-tile) output block, accumulated over cin tiles (grid axis 2)."""
    # f32 outputs accumulate directly into the resident output block (no extra scratch);
    # bf16 outputs accumulate into a band-sized f32 VMEM scratch.
    acc_ref = acc_scratch[0] if acc_scratch else o_ref
    ci = pl.program_id(2)

    @pl.when(ci == 0)
    def _():
        acc_ref[...] = jnp.zeros_like(acc_ref)

    band = band_m + (kh - 1) * wp
    acc = acc_ref[...]
    for dx in range(kw):
        # one realignment per column shift; dy offsets are multiples of wp (wp % 8 == 0)
        # so the inner slices stay sublane-aligned and cheap.
        seg = x_ref[pl.ds(dx, band), :]                      # (band, cin_t) bf16
        for dy in range(kh):
            acc = acc + jnp.dot(seg[dy * wp: dy * wp + band_m, :],
                                w_ref[dy * kw + dx],
                                preferred_element_type=jnp.float32)
    acc_ref[...] = acc

    @pl.when(ci == pl.num_programs(2) - 1)
    def _():
        y = acc_ref[...] * s_ref[...] + t_ref[...]           # conv bias folded into t
        if act == "leaky_relu":
            y = jnp.where(y >= 0, y, alpha * y)
        o_ref[...] = y.astype(o_ref.dtype)


def conv2d_bn_act(x, w_p, s_p, t_p, *, cout, kh=3, kw=3, padding=1,
                  act="leaky_relu", out_dtype=jnp.bfloat16,
                  band_target=BAND_TARGET_ROWS):
    """Conv2d(kh x kw, stride 1, pad `padding`) + folded (inference) BN + activation.

    x:   (N, H, W, Cin)  any float dtype (cast to bf16 internally)
    w_p: (KH*KW, Cin_p, Cout_p) bf16 channel-padded weights (from prepare_params)
    s_p, t_p: (1, Cout_p) f32 folded BN scale and bias+BN shift.
    Returns (N, H, W, cout) in out_dtype.
    """
    n, h, w_sp, cin = x.shape
    khkw, cin_p, cout_p = w_p.shape
    assert khkw == kh * kw and cin <= cin_p and cout <= cout_p

    hp = h + 2 * padding
    wp_raw = w_sp + 2 * padding
    wp = _round_up(wp_raw, 8)            # 8-aligned flattened row pitch
    hout = hp - kh + 1
    wout = wp_raw - kw + 1
    m = hout * wp                        # flattened output rows (incl. garbage columns)

    # ---- band tiling of the flattened row axis (bounds VMEM independent of H*W and,
    #      with the batch folded in, provides the parallel grid extent) --------------
    n_bands = max(1, _cdiv(m, band_target))
    band_m = _round_up(_cdiv(m, n_bands), 16)
    halo = (kh - 1) * wp + (kw - 1)
    band_rows = _round_up(band_m + halo, 16)
    rows_padded = (n_bands - 1) * band_m + band_rows

    # ---- channel tiling: lane-dense, 256-aligned where channel counts allow --------
    if cin_p <= 512:
        cin_t = cin_p
    elif cin_p % 512 == 0:
        cin_t = 512
    elif cin_p % 256 == 0:
        cin_t = 256
    else:
        cin_t = 128
    n_ci = cin_p // cin_t
    cout_t = 256 if cout_p % 256 == 0 else 128
    n_co = cout_p // cout_t

    # ---- operand layout (bf16 activations; all element shuffles fuse in XLA) -------
    xb = jnp.pad(x.astype(jnp.bfloat16),
                 ((0, 0), (padding, padding),
                  (padding, wp - w_sp - padding),
                  (0, cin_p - cin)))
    x_flat = xb.reshape(n, hp * wp, cin_p)
    x_flat = jnp.pad(x_flat, ((0, 0), (0, rows_padded - hp * wp), (0, 0)))
    # overlapped row bands (static gather; halo duplication ~ (kh-1)*wp / band_m)
    idx = (np.arange(n_bands, dtype=np.int32)[:, None] * band_m
           + np.arange(band_rows, dtype=np.int32)[None, :])
    x_bands = x_flat[:, idx, :].reshape(n * n_bands, band_rows, cin_p)

    need_acc = np.dtype(out_dtype) != np.dtype(np.float32)
    scratch = [pltpu.VMEM((band_m, cout_t), jnp.float32)] if need_acc else []

    # ---- VMEM budget from the actual block footprint (double-buffered inputs) ------
    x_bytes = band_rows * cin_t * 2
    w_bytes = khkw * cin_t * cout_t * 2
    o_bytes = band_m * cout_t * np.dtype(out_dtype).itemsize
    acc_bytes = band_m * cout_t * 4 if need_acc else 0
    footprint = 2 * (x_bytes + w_bytes + o_bytes + 2 * cout_t * 4) + acc_bytes
    vmem_limit = int(min(max(footprint * 13 // 10 + (2 << 20), 32 << 20), 60 << 20))

    kernel = functools.partial(_conv_kernel, kh=kh, kw=kw, wp=wp, band_m=band_m,
                               act=act, alpha=LEAKY_SLOPE)

    out = pl.pallas_call(
        kernel,
        out_shape=jax.ShapeDtypeStruct((n * n_bands, band_m, cout_p), out_dtype),
        grid_spec=pltpu.PrefetchScalarGridSpec(
            num_scalar_prefetch=0,
            grid=(n * n_bands, n_co, n_ci),      # (bands*batch, cout tiles, cin reduction)
            in_specs=[
                pl.BlockSpec((None, band_rows, cin_t), lambda b, co, ci: (b, 0, ci)),
                pl.BlockSpec((khkw, cin_t, cout_t), lambda b, co, ci: (0, ci, co)),
                pl.BlockSpec((1, cout_t), lambda b, co, ci: (0, co)),
                pl.BlockSpec((1, cout_t), lambda b, co, ci: (0, co)),
            ],
            out_specs=pl.BlockSpec((None, band_m, cout_t), lambda b, co, ci: (b, 0, co)),
            scratch_shapes=scratch,
        ),
        compiler_params=pltpu.CompilerParams(
            dimension_semantics=("parallel", "parallel", "arbitrary"),
            vmem_limit_bytes=vmem_limit),
    )(x_bands, w_p, s_p, t_p)

    out = out.reshape(n, n_bands * band_m, cout_p)[:, :m, :]
    out = out.reshape(n, hout, wp, cout_p)[:, :, :wout, :cout]
    return out


# ----------------------------------------------------------------------------------
# Bilinear upsampling (align_corners=True) as fused VPU gather + lerp (plain jnp)
# ----------------------------------------------------------------------------------
def _lerp_indices(n_out, n_in):
    if n_out <= 1:
        f = np.zeros((max(n_out, 1),), np.float64)
    else:
        f = np.arange(n_out, dtype=np.float64) * (n_in - 1) / (n_out - 1)
    i0 = np.floor(f).astype(np.int32)
    i1 = np.minimum(i0 + 1, n_in - 1).astype(np.int32)
    t = (f - i0).astype(np.float32)
    return i0, i1, t


def bilinear_resize_nhwc(x, out_hw):
    """F.interpolate(mode='bilinear', align_corners=True) on (N, H, W, C)."""
    n, h, w, c = x.shape
    h2, w2 = out_hw
    y = x
    if h2 != h:
        i0, i1, t = _lerp_indices(h2, h)
        t = jnp.asarray(t)[None, :, None, None]
        y = (jnp.take(y, jnp.asarray(i0), axis=1) * (1.0 - t)
             + jnp.take(y, jnp.asarray(i1), axis=1) * t)
    if w2 != w:
        i0, i1, t = _lerp_indices(w2, w)
        t = jnp.asarray(t)[None, None, :, None]
        y = (jnp.take(y, jnp.asarray(i0), axis=2) * (1.0 - t)
             + jnp.take(y, jnp.asarray(i1), axis=2) * t)
    return y


# ----------------------------------------------------------------------------------
# Parameters (deterministic synthetic init; BN running stats folded to scale/shift)
# ----------------------------------------------------------------------------------
def _conv_params(key, kh, kw, cin, cout):
    k1, k2 = jax.random.split(key)
    w = jax.random.normal(k1, (kh, kw, cin, cout), jnp.float32) / np.sqrt(kh * kw * cin)
    b = 0.05 * jax.random.normal(k2, (cout,), jnp.float32)
    return w, b


def _bn_params(key, c):
    k1, k2, k3, k4 = jax.random.split(key, 4)
    gamma = 1.0 + 0.1 * jax.random.normal(k1, (c,), jnp.float32)
    beta = 0.1 * jax.random.normal(k2, (c,), jnp.float32)
    mean = 0.1 * jax.random.normal(k3, (c,), jnp.float32)
    var = 1.0 + 0.1 * jax.random.uniform(k4, (c,), jnp.float32)
    s = gamma / jnp.sqrt(var + BN_EPS)
    t = beta - mean * s
    return s, t


def init_params(key, skip_input, output_features):
    """Raw (PyTorch-equivalent) parameters; BN running stats folded to (s, t)."""
    k1, k2, k3, k4 = jax.random.split(key, 4)
    p = {}
    p["w1"], p["b1"] = _conv_params(k1, 3, 3, skip_input, output_features)
    p["s1"], p["t1"] = _bn_params(k2, output_features)
    p["w2"], p["b2"] = _conv_params(k3, 3, 3, output_features, output_features)
    p["s2"], p["t2"] = _bn_params(k4, output_features)
    return p


def _prep_conv(w, b, s, t):
    """One-time kernel-ready weight prep (channel pad, (9,cin_p,cout_p) bf16) and
    bias-into-BN-shift fold — hoisted out of the jitted forward."""
    kh, kw, cin, cout = w.shape
    cin_p = max(_round_up(cin, 128), 128)
    cout_p = max(_round_up(cout, 128), 128)
    wk = jnp.pad(w, ((0, 0), (0, 0), (0, cin_p - cin), (0, cout_p - cout)))
    wk = wk.reshape(kh * kw, cin_p, cout_p).astype(jnp.bfloat16)
    s_p = jnp.pad(s.astype(jnp.float32), (0, cout_p - cout), constant_values=1.0)
    t_eff = b.astype(jnp.float32) * s.astype(jnp.float32) + t.astype(jnp.float32)
    t_p = jnp.pad(t_eff, (0, cout_p - cout))
    return {"w": wk, "s": s_p.reshape(1, cout_p), "t": t_p.reshape(1, cout_p)}


def prepare_params(raw):
    return {"conv1": _prep_conv(raw["w1"], raw["b1"], raw["s1"], raw["t1"]),
            "conv2": _prep_conv(raw["w2"], raw["b2"], raw["s2"], raw["t2"])}


# ----------------------------------------------------------------------------------
# UpSampleBN forward (NCHW in / NCHW out)
# ----------------------------------------------------------------------------------
def upsample_bn_apply(prepped, x_nchw, concat_nchw, *, output_features):
    x = jnp.transpose(x_nchw, (0, 2, 3, 1)).astype(jnp.float32)
    skip = jnp.transpose(concat_nchw, (0, 2, 3, 1)).astype(jnp.float32)
    up = bilinear_resize_nhwc(x, (skip.shape[1], skip.shape[2]))
    # cast to bf16 before the concat so the whole conv-input prep is one bf16 stream
    f = jnp.concatenate([up.astype(jnp.bfloat16), skip.astype(jnp.bfloat16)], axis=-1)
    c1, c2 = prepped["conv1"], prepped["conv2"]
    y = conv2d_bn_act(f, c1["w"], c1["s"], c1["t"], cout=output_features,
                      act="leaky_relu", out_dtype=jnp.bfloat16)   # bf16 intermediate
    y = conv2d_bn_act(y, c2["w"], c2["s"], c2["t"], cout=output_features,
                      act="leaky_relu", out_dtype=jnp.float32)
    return jnp.transpose(y, (0, 3, 1, 2))


# Pure-jnp f32 reference of the same module (inference-mode BN) for validation.
def reference_forward(raw, x_nchw, concat_nchw):
    x = jnp.transpose(x_nchw, (0, 2, 3, 1)).astype(jnp.float32)
    skip = jnp.transpose(concat_nchw, (0, 2, 3, 1)).astype(jnp.float32)
    up = bilinear_resize_nhwc(x, (skip.shape[1], skip.shape[2]))
    f = jnp.concatenate([up, skip], axis=-1)

    def block(z, w, b, s, t):
        z = lax.conv_general_dilated(z, w, (1, 1), "SAME",
                                     dimension_numbers=("NHWC", "HWIO", "NHWC")) + b
        z = z * s + t
        return jnp.where(z >= 0, z, LEAKY_SLOPE * z)

    y = block(f, raw["w1"], raw["b1"], raw["s1"], raw["t1"])
    y = block(y, raw["w2"], raw["b2"], raw["s2"], raw["t2"])
    return jnp.transpose(y, (0, 3, 1, 2))


if __name__ == "__main__":
    key = jax.random.PRNGKey(0)
    k_x, k_skip, k_p = jax.random.split(key, 3)

    N = 2
    C_X, H1, W1 = 96, 8, 8            # low-res decoder feature map to be upsampled
    C_SKIP, H2, W2 = 32, 16, 16       # skip connection it is concatenated with
    OUT_FEATURES = 128
    SKIP_INPUT = C_X + C_SKIP         # UpSampleBN(skip_input=128, output_features=128)

    x = jax.random.normal(k_x, (N, C_X, H1, W1), jnp.float32)
    concat_with = jax.random.normal(k_skip, (N, C_SKIP, H2, W2), jnp.float32)

    raw = init_params(k_p, SKIP_INPUT, OUT_FEATURES)
    prepped = prepare_params(raw)                      # one-time param prep, outside jit

    fwd = jax.jit(functools.partial(upsample_bn_apply, output_features=OUT_FEATURES))
    out = jax.block_until_ready(fwd(prepped, x, concat_with))

    assert out.shape == (N, OUT_FEATURES, H2, W2), out.shape
    assert bool(jnp.all(jnp.isfinite(out))), "non-finite output"

    ref = reference_forward(raw, x, concat_with)
    rel_err = float(jnp.linalg.norm(out - ref) / (jnp.linalg.norm(ref) + 1e-12))
    assert rel_err < 0.05, f"relative error too large: {rel_err}"

    print("KERNEL_OK")
</pallas_src>

<mosaic_0001>
module attributes {stable_mosaic.version = 11 : i64} {
  func.func @_conv_kernel(%arg0: i32, %arg1: i32, %arg2: i32, %arg3: memref<1x448x128xbf16, #tpu.memory_space<vmem>>, %arg4: memref<9x128x128xbf16, #tpu.memory_space<vmem>>, %arg5: memref<1x128xf32, #tpu.memory_space<vmem>>, %arg6: memref<1x128xf32, #tpu.memory_space<vmem>>, %arg7: memref<1x384x128xbf16, #tpu.memory_space<vmem>>, %arg8: memref<384x128xf32, #tpu.memory_space<vmem>>) attributes {dimension_semantics = [#tpu.dimension_semantics<parallel>, #tpu.dimension_semantics<parallel>, #tpu.dimension_semantics<arbitrary>], iteration_bounds = array<i64: 2, 1, 1>, scalar_prefetch = 0 : i64, scratch_operands = 1 : i64, tpu.core_type = #tpu.core_type<tc>, window_params = [{transform_indices = @transform_0, window_bounds = array<i64: 1, 448, 128>}, {transform_indices = @transform_1, window_bounds = array<i64: 9, 128, 128>}, {transform_indices = @transform_2, window_bounds = array<i64: 1, 128>}, {transform_indices = @transform_3, window_bounds = array<i64: 1, 128>}, {transform_indices = @transform_4, window_bounds = array<i64: 1, 384, 128>}]} {
    %c0_i32 = arith.constant 0 : i32
    %0 = arith.cmpi eq, %arg2, %c0_i32 : i32
    %1 = arith.extui %0 : i1 to i32
    %c0_i32_0 = arith.constant 0 : i32
    %2 = arith.cmpi ne, %1, %c0_i32_0 : i32
    scf.if %2 {
      %cst_42 = arith.constant 0.000000e+00 : f32
      %59 = vector.broadcast %cst_42 : f32 to vector<384x128xf32>
      %c0_43 = arith.constant 0 : index
      %c0_44 = arith.constant 0 : index
      %60 = vector.load %arg8[%c0_43, %c0_44] : memref<384x128xf32, #tpu.memory_space<vmem>>, vector<384x128xf32>
      tpu.vector_store %arg8[%c0_43, %c0_44], %59 {strides = array<i32>} : memref<384x128xf32, #tpu.memory_space<vmem>>, vector<384x128xf32>,
    } else {
    }
    %c0 = arith.constant 0 : index
    %c0_1 = arith.constant 0 : index
    %3 = vector.load %arg8[%c0, %c0_1] : memref<384x128xf32, #tpu.memory_space<vmem>>, vector<384x128xf32>
    %c0_2 = arith.constant 0 : index
    %c0_3 = arith.constant 0 : index
    %c0_4 = arith.constant 0 : index
    %4 = vector.load %arg3[%c0_2, %c0_3, %c0_4] : memref<1x448x128xbf16, #tpu.memory_space<vmem>>, vector<1x432x128xbf16>
    %5 = vector.shape_cast %4 : vector<1x432x128xbf16> to vector<432x128xbf16>
    %6 = vector.extract_strided_slice %5 {offsets = [0, 0], sizes = [384, 128], strides = [1, 1]} : vector<432x128xbf16> to vector<384x128xbf16>
    %c0_5 = arith.constant 0 : index
    %c0_6 = arith.constant 0 : index
    %c0_7 = arith.constant 0 : index
    %7 = vector.load %arg4[%c0_5, %c0_6, %c0_7] : memref<9x128x128xbf16, #tpu.memory_space<vmem>>, vector<1x128x128xbf16>
    %8 = vector.shape_cast %7 : vector<1x128x128xbf16> to vector<128x128xbf16>
    %cst = arith.constant dense<0.000000e+00> : vector<384x128xf32>
    %9 = tpu.matmul %6, %8, %cst {dimension_numbers = #tpu.dot_dimension_numbers<[1], [0], [0], [1], [0, 0, 1, 1], [], []>} : vector<384x128xbf16>, vector<128x128xbf16>, vector<384x128xf32> -> vector<384x128xf32>
    %10 = arith.addf %3, %9 : vector<384x128xf32>
    %11 = vector.extract_strided_slice %5 {offsets = [24, 0], sizes = [384, 128], strides = [1, 1]} : vector<432x128xbf16> to vector<384x128xbf16>
    %c3 = arith.constant 3 : index
    %c0_8 = arith.constant 0 : index
    %c0_9 = arith.constant 0 : index
    %12 = vector.load %arg4[%c3, %c0_8, %c0_9] : memref<9x128x128xbf16, #tpu.memory_space<vmem>>, vector<1x128x128xbf16>
    %13 = vector.shape_cast %12 : vector<1x128x128xbf16> to vector<128x128xbf16>
    %cst_10 = arith.constant dense<0.000000e+00> : vector<384x128xf32>
    %14 = tpu.matmul %11, %13, %cst_10 {dimension_numbers = #tpu.dot_dimension_numbers<[1], [0], [0], [1], [0, 0, 1, 1], [], []>} : vector<384x128xbf16>, vector<128x128xbf16>, vector<384x128xf32> -> vector<384x128xf32>
    %15 = arith.addf %10, %14 : vector<384x128xf32>
    %16 = vector.extract_strided_slice %5 {offsets = [48, 0], sizes = [384, 128], strides = [1, 1]} : vector<432x128xbf16> to vector<384x128xbf16>
    %c6 = arith.constant 6 : index
    %c0_11 = arith.constant 0 : index
    %c0_12 = arith.constant 0 : index
    %17 = vector.load %arg4[%c6, %c0_11, %c0_12] : memref<9x128x128xbf16, #tpu.memory_space<vmem>>, vector<1x128x128xbf16>
    %18 = vector.shape_cast %17 : vector<1x128x128xbf16> to vector<128x128xbf16>
    %cst_13 = arith.constant dense<0.000000e+00> : vector<384x128xf32>
    %19 = tpu.matmul %16, %18, %cst_13 {dimension_numbers = #tpu.dot_dimension_numbers<[1], [0], [0], [1], [0, 0, 1, 1], [], []>} : vector<384x128xbf16>, vector<128x128xbf16>, vector<384x128xf32> -> vector<384x128xf32>
    %20 = arith.addf %15, %19 : vector<384x128xf32>
    %c0_14 = arith.constant 0 : index
    %c1 = arith.constant 1 : index
    %c0_15 = arith.constant 0 : index
    %21 = vector.load %arg3[%c0_14, %c1, %c0_15] : memref<1x448x128xbf16, #tpu.memory_space<vmem>>, vector<1x432x128xbf16>
    %22 = vector.shape_cast %21 : vector<1x432x128xbf16> to vector<432x128xbf16>
    %23 = vector.extract_strided_slice %22 {offsets = [0, 0], sizes = [384, 128], strides = [1, 1]} : vector<432x128xbf16> to vector<384x128xbf16>
    %c1_16 = arith.constant 1 : index
    %c0_17 = arith.constant 0 : index
    %c0_18 = arith.constant 0 : index
    %24 = vector.load %arg4[%c1_16, %c0_17, %c0_18] : memref<9x128x128xbf16, #tpu.memory_space<vmem>>, vector<1x128x128xbf16>
    %25 = vector.shape_cast %24 : vector<1x128x128xbf16> to vector<128x128xbf16>
    %cst_19 = arith.constant dense<0.000000e+00> : vector<384x128xf32>
    %26 = tpu.matmul %23, %25, %cst_19 {dimension_numbers = #tpu.dot_dimension_numbers<[1], [0], [0], [1], [0, 0, 1, 1], [], []>} : vector<384x128xbf16>, vector<128x128xbf16>, vector<384x128xf32> -> vector<384x128xf32>
    %27 = arith.addf %20, %26 : vector<384x128xf32>
    %28 = vector.extract_strided_slice %22 {offsets = [24, 0], sizes = [384, 128], strides = [1, 1]} : vector<432x128xbf16> to vector<384x128xbf16>
    %c4 = arith.constant 4 : index
    %c0_20 = arith.constant 0 : index
    %c0_21 = arith.constant 0 : index
    %29 = vector.load %arg4[%c4, %c0_20, %c0_21] : memref<9x128x128xbf16, #tpu.memory_space<vmem>>, vector<1x128x128xbf16>
    %30 = vector.shape_cast %29 : vector<1x128x128xbf16> to vector<128x128xbf16>
    %cst_22 = arith.constant dense<0.000000e+00> : vector<384x128xf32>
    %31 = tpu.matmul %28, %30, %cst_22 {dimension_numbers = #tpu.dot_dimension_numbers<[1], [0], [0], [1], [0, 0, 1, 1], [], []>} : vector<384x128xbf16>, vector<128x128xbf16>, vector<384x128xf32> -> vector<384x128xf32>
    %32 = arith.addf %27, %31 : vector<384x128xf32>
    %33 = vector.extract_strided_slice %22 {offsets = [48, 0], sizes = [384, 128], strides = [1, 1]} : vector<432x128xbf16> to vector<384x128xbf16>
    %c7 = arith.constant 7 : index
    %c0_23 = arith.constant 0 : index
    %c0_24 = arith.constant 0 : index
    %34 = vector.load %arg4[%c7, %c0_23, %c0_24] : memref<9x128x128xbf16, #tpu.memory_space<vmem>>, vector<1x128x128xbf16>
    %35 = vector.shape_cast %34 : vector<1x128x128xbf16> to vector<128x128xbf16>
    %cst_25 = arith.constant dense<0.000000e+00> : vector<384x128xf32>
    %36 = tpu.matmul %33, %35, %cst_25 {dimension_numbers = #tpu.dot_dimension_numbers<[1], [0], [0], [1], [0, 0, 1, 1], [], []>} : vector<384x128xbf16>, vector<128x128xbf16>, vector<384x128xf32> -> vector<384x128xf32>
    %37 = arith.addf %32, %36 : vector<384x128xf32>
    %c0_26 = arith.constant 0 : index
    %c2 = arith.constant 2 : index
    %c0_27 = arith.constant 0 : index
    %38 = vector.load %arg3[%c0_26, %c2, %c0_27] : memref<1x448x128xbf16, #tpu.memory_space<vmem>>, vector<1x432x128xbf16>
    %39 = vector.shape_cast %38 : vector<1x432x128xbf16> to vector<432x128xbf16>
    %40 = vector.extract_strided_slice %39 {offsets = [0, 0], sizes = [384, 128], strides = [1, 1]} : vector<432x128xbf16> to vector<384x128xbf16>
    %c2_28 = arith.constant 2 : index
    %c0_29 = arith.constant 0 : index
    %c0_30 = arith.constant 0 : index
    %41 = vector.load %arg4[%c2_28, %c0_29, %c0_30] : memref<9x128x128xbf16, #tpu.memory_space<vmem>>, vector<1x128x128xbf16>
    %42 = vector.shape_cast %41 : vector<1x128x128xbf16> to vector<128x128xbf16>
    %cst_31 = arith.constant dense<0.000000e+00> : vector<384x128xf32>
    %43 = tpu.matmul %40, %42, %cst_31 {dimension_numbers = #tpu.dot_dimension_numbers<[1], [0], [0], [1], [0, 0, 1, 1], [], []>} : vector<384x128xbf16>, vector<128x128xbf16>, vector<384x128xf32> -> vector<384x128xf32>
    %44 = arith.addf %37, %43 : vector<384x128xf32>
    %45 = vector.extract_strided_slice %39 {offsets = [24, 0], sizes = [384, 128], strides = [1, 1]} : vector<432x128xbf16> to vector<384x128xbf16>
    %c5 = arith.constant 5 : index
    %c0_32 = arith.constant 0 : index
    %c0_33 = arith.constant 0 : index
    %46 = vector.load %arg4[%c5, %c0_32, %c0_33] : memref<9x128x128xbf16, #tpu.memory_space<vmem>>, vector<1x128x128xbf16>
    %47 = vector.shape_cast %46 : vector<1x128x128xbf16> to vector<128x128xbf16>
    %cst_34 = arith.constant dense<0.000000e+00> : vector<384x128xf32>
    %48 = tpu.matmul %45, %47, %cst_34 {dimension_numbers = #tpu.dot_dimension_numbers<[1], [0], [0], [1], [0, 0, 1, 1], [], []>} : vector<384x128xbf16>, vector<128x128xbf16>, vector<384x128xf32> -> vector<384x128xf32>
    %49 = arith.addf %44, %48 : vector<384x128xf32>
    %50 = vector.extract_strided_slice %39 {offsets = [48, 0], sizes = [384, 128], strides = [1, 1]} : vector<432x128xbf16> to vector<384x128xbf16>
    %c8 = arith.constant 8 : index
    %c0_35 = arith.constant 0 : index
    %c0_36 = arith.constant 0 : index
    %51 = vector.load %arg4[%c8, %c0_35, %c0_36] : memref<9x128x128xbf16, #tpu.memory_space<vmem>>, vector<1x128x128xbf16>
    %52 = vector.shape_cast %51 : vector<1x128x128xbf16> to vector<128x128xbf16>
    %cst_37 = arith.constant dense<0.000000e+00> : vector<384x128xf32>
    %53 = tpu.matmul %50, %52, %cst_37 {dimension_numbers = #tpu.dot_dimension_numbers<[1], [0], [0], [1], [0, 0, 1, 1], [], []>} : vector<384x128xbf16>, vector<128x128xbf16>, vector<384x128xf32> -> vector<384x128xf32>
    %54 = arith.addf %49, %53 : vector<384x128xf32>
    %c0_38 = arith.constant 0 : index
    %c0_39 = arith.constant 0 : index
    %55 = vector.load %arg8[%c0_38, %c0_39] : memref<384x128xf32, #tpu.memory_space<vmem>>, vector<384x128xf32>
    tpu.vector_store %arg8[%c0_38, %c0_39], %54 {strides = array<i32>} : memref<384x128xf32, #tpu.memory_space<vmem>>, vector<384x128xf32>,
    %c0_i32_40 = arith.constant 0 : i32
    %56 = arith.cmpi eq, %arg2, %c0_i32_40 : i32
    %57 = arith.extui %56 : i1 to i32
    %c0_i32_41 = arith.constant 0 : i32
    %58 = arith.cmpi ne, %57, %c0_i32_41 : i32
    scf.if %58 {
      %c0_42 = arith.constant 0 : index
      %c0_43 = arith.constant 0 : index
      %59 = vector.load %arg8[%c0_42, %c0_43] : memref<384x128xf32, #tpu.memory_space<vmem>>, vector<384x128xf32>
      %c0_44 = arith.constant 0 : index
      %c0_45 = arith.constant 0 : index
      %60 = vector.load %arg5[%c0_44, %c0_45] : memref<1x128xf32, #tpu.memory_space<vmem>>, vector<1x128xf32>
      %61 = vector.broadcast %60 : vector<1x128xf32> to vector<384x128xf32>
      %62 = arith.mulf %59, %61 : vector<384x128xf32>
      %c0_46 = arith.constant 0 : index
      %c0_47 = arith.constant 0 : index
      %63 = vector.load %arg6[%c0_46, %c0_47] : memref<1x128xf32, #tpu.memory_space<vmem>>, vector<1x128xf32>
      %64 = vector.broadcast %63 : vector<1x128xf32> to vector<384x128xf32>
      %65 = arith.addf %62, %64 : vector<384x128xf32>
      %cst_48 = arith.constant 0.000000e+00 : f32
      %66 = vector.broadcast %cst_48 : f32 to vector<384x128xf32>
      %67 = arith.cmpf oge, %65, %66 : vector<384x128xf32>
      %cst_49 = arith.constant 0.00999999977 : f32
      %68 = vector.broadcast %cst_49 : f32 to vector<384x128xf32>
      %69 = arith.mulf %68, %65 : vector<384x128xf32>
      %70 = arith.select %67, %65, %69 : vector<384x128xi1>, vector<384x128xf32>
      %71 = arith.truncf %70 : vector<384x128xf32> to vector<384x128xbf16>
      %c0_50 = arith.constant 0 : index
      %c0_51 = arith.constant 0 : index
      %c0_52 = arith.constant 0 : index
      %72 = vector.load %arg7[%c0_50, %c0_51, %c0_52] : memref<1x384x128xbf16, #tpu.memory_space<vmem>>, vector<1x384x128xbf16>
      %73 = vector.shape_cast %72 : vector<1x384x128xbf16> to vector<384x128xbf16>
      %74 = vector.shape_cast %71 : vector<384x128xbf16> to vector<1x384x128xbf16>
      tpu.vector_store %arg7[%c0_50, %c0_51, %c0_52], %74 {strides = array<i32>} : memref<1x384x128xbf16, #tpu.memory_space<vmem>>, vector<1x384x128xbf16>,
    } else {
    }
    return
  }
  func.func @transform_0(%arg0: i32, %arg1: i32, %arg2: i32) -> (i32, i32, i32) {
    %c0_i32 = arith.constant 0 : i32
    %c0_i32_0 = arith.constant 0 : i32
    return %arg0, %c0_i32, %arg2 : i32, i32, i32
  }
  func.func @transform_1(%arg0: i32, %arg1: i32, %arg2: i32) -> (i32, i32, i32) {
    %c0_i32 = arith.constant 0 : i32
    %c0_i32_0 = arith.constant 0 : i32
    return %c0_i32, %arg2, %arg1 : i32, i32, i32
  }
  func.func @transform_2(%arg0: i32, %arg1: i32, %arg2: i32) -> (i32, i32) {
    %c0_i32 = arith.constant 0 : i32
    %c0_i32_0 = arith.constant 0 : i32
    return %c0_i32, %arg1 : i32, i32
  }
  func.func @transform_3(%arg0: i32, %arg1: i32, %arg2: i32) -> (i32, i32) {
    %c0_i32 = arith.constant 0 : i32
    %c0_i32_0 = arith.constant 0 : i32
    return %c0_i32, %arg1 : i32, i32
  }
  func.func @transform_4(%arg0: i32, %arg1: i32, %arg2: i32) -> (i32, i32, i32) {
    %c0_i32 = arith.constant 0 : i32
    %c0_i32_0 = arith.constant 0 : i32
    return %arg0, %c0_i32, %arg1 : i32, i32, i32
  }
}

module attributes {stable_mosaic.version = 11 : i64} {
  func.func @_conv_kernel(%arg0: i32, %arg1: i32, %arg2: i32, %arg3: memref<1x448x128xbf16, #tpu.memory_space<vmem>>, %arg4: memref<9x128x128xbf16, #tpu.memory_space<vmem>>, %arg5: memref<1x128xf32, #tpu.memory_space<vmem>>, %arg6: memref<1x128xf32, #tpu.memory_space<vmem>>, %arg7: memref<1x384x128xf32, #tpu.memory_space<vmem>>) attributes {dimension_semantics = [#tpu.dimension_semantics<parallel>, #tpu.dimension_semantics<parallel>, #tpu.dimension_semantics<arbitrary>], iteration_bounds = array<i64: 2, 1, 1>, scalar_prefetch = 0 : i64, scratch_operands = 0 : i64, tpu.core_type = #tpu.core_type<tc>, window_params = [{transform_indices = @transform_0, window_bounds = array<i64: 1, 448, 128>}, {transform_indices = @transform_1, window_bounds = array<i64: 9, 128, 128>}, {transform_indices = @transform_2, window_bounds = array<i64: 1, 128>}, {transform_indices = @transform_3, window_bounds = array<i64: 1, 128>}, {transform_indices = @transform_4, window_bounds = array<i64: 1, 384, 128>}]} {
    %c0_i32 = arith.constant 0 : i32
    %0 = arith.cmpi eq, %arg2, %c0_i32 : i32
    %1 = arith.extui %0 : i1 to i32
    %c0_i32_0 = arith.constant 0 : i32
    %2 = arith.cmpi ne, %1, %c0_i32_0 : i32
    scf.if %2 {
      %cst_44 = arith.constant 0.000000e+00 : f32
      %62 = vector.broadcast %cst_44 : f32 to vector<384x128xf32>
      %c0_45 = arith.constant 0 : index
      %c0_46 = arith.constant 0 : index
      %c0_47 = arith.constant 0 : index
      %63 = vector.load %arg7[%c0_45, %c0_46, %c0_47] : memref<1x384x128xf32, #tpu.memory_space<vmem>>, vector<1x384x128xf32>
      %64 = vector.shape_cast %63 : vector<1x384x128xf32> to vector<384x128xf32>
      %65 = vector.shape_cast %62 : vector<384x128xf32> to vector<1x384x128xf32>
      tpu.vector_store %arg7[%c0_45, %c0_46, %c0_47], %65 {strides = array<i32>} : memref<1x384x128xf32, #tpu.memory_space<vmem>>, vector<1x384x128xf32>,
    } else {
    }
    %c0 = arith.constant 0 : index
    %c0_1 = arith.constant 0 : index
    %c0_2 = arith.constant 0 : index
    %3 = vector.load %arg7[%c0, %c0_1, %c0_2] : memref<1x384x128xf32, #tpu.memory_space<vmem>>, vector<1x384x128xf32>
    %4 = vector.shape_cast %3 : vector<1x384x128xf32> to vector<384x128xf32>
    %c0_3 = arith.constant 0 : index
    %c0_4 = arith.constant 0 : index
    %c0_5 = arith.constant 0 : index
    %5 = vector.load %arg3[%c0_3, %c0_4, %c0_5] : memref<1x448x128xbf16, #tpu.memory_space<vmem>>, vector<1x432x128xbf16>
    %6 = vector.shape_cast %5 : vector<1x432x128xbf16> to vector<432x128xbf16>
    %7 = vector.extract_strided_slice %6 {offsets = [0, 0], sizes = [384, 128], strides = [1, 1]} : vector<432x128xbf16> to vector<384x128xbf16>
    %c0_6 = arith.constant 0 : index
    %c0_7 = arith.constant 0 : index
    %c0_8 = arith.constant 0 : index
    %8 = vector.load %arg4[%c0_6, %c0_7, %c0_8] : memref<9x128x128xbf16, #tpu.memory_space<vmem>>, vector<1x128x128xbf16>
    %9 = vector.shape_cast %8 : vector<1x128x128xbf16> to vector<128x128xbf16>
    %cst = arith.constant dense<0.000000e+00> : vector<384x128xf32>
    %10 = tpu.matmul %7, %9, %cst {dimension_numbers = #tpu.dot_dimension_numbers<[1], [0], [0], [1], [0, 0, 1, 1], [], []>} : vector<384x128xbf16>, vector<128x128xbf16>, vector<384x128xf32> -> vector<384x128xf32>
    %11 = arith.addf %4, %10 : vector<384x128xf32>
    %12 = vector.extract_strided_slice %6 {offsets = [24, 0], sizes = [384, 128], strides = [1, 1]} : vector<432x128xbf16> to vector<384x128xbf16>
    %c3 = arith.constant 3 : index
    %c0_9 = arith.constant 0 : index
    %c0_10 = arith.constant 0 : index
    %13 = vector.load %arg4[%c3, %c0_9, %c0_10] : memref<9x128x128xbf16, #tpu.memory_space<vmem>>, vector<1x128x128xbf16>
    %14 = vector.shape_cast %13 : vector<1x128x128xbf16> to vector<128x128xbf16>
    %cst_11 = arith.constant dense<0.000000e+00> : vector<384x128xf32>
    %15 = tpu.matmul %12, %14, %cst_11 {dimension_numbers = #tpu.dot_dimension_numbers<[1], [0], [0], [1], [0, 0, 1, 1], [], []>} : vector<384x128xbf16>, vector<128x128xbf16>, vector<384x128xf32> -> vector<384x128xf32>
    %16 = arith.addf %11, %15 : vector<384x128xf32>
    %17 = vector.extract_strided_slice %6 {offsets = [48, 0], sizes = [384, 128], strides = [1, 1]} : vector<432x128xbf16> to vector<384x128xbf16>
    %c6 = arith.constant 6 : index
    %c0_12 = arith.constant 0 : index
    %c0_13 = arith.constant 0 : index
    %18 = vector.load %arg4[%c6, %c0_12, %c0_13] : memref<9x128x128xbf16, #tpu.memory_space<vmem>>, vector<1x128x128xbf16>
    %19 = vector.shape_cast %18 : vector<1x128x128xbf16> to vector<128x128xbf16>
    %cst_14 = arith.constant dense<0.000000e+00> : vector<384x128xf32>
    %20 = tpu.matmul %17, %19, %cst_14 {dimension_numbers = #tpu.dot_dimension_numbers<[1], [0], [0], [1], [0, 0, 1, 1], [], []>} : vector<384x128xbf16>, vector<128x128xbf16>, vector<384x128xf32> -> vector<384x128xf32>
    %21 = arith.addf %16, %20 : vector<384x128xf32>
    %c0_15 = arith.constant 0 : index
    %c1 = arith.constant 1 : index
    %c0_16 = arith.constant 0 : index
    %22 = vector.load %arg3[%c0_15, %c1, %c0_16] : memref<1x448x128xbf16, #tpu.memory_space<vmem>>, vector<1x432x128xbf16>
    %23 = vector.shape_cast %22 : vector<1x432x128xbf16> to vector<432x128xbf16>
    %24 = vector.extract_strided_slice %23 {offsets = [0, 0], sizes = [384, 128], strides = [1, 1]} : vector<432x128xbf16> to vector<384x128xbf16>
    %c1_17 = arith.constant 1 : index
    %c0_18 = arith.constant 0 : index
    %c0_19 = arith.constant 0 : index
    %25 = vector.load %arg4[%c1_17, %c0_18, %c0_19] : memref<9x128x128xbf16, #tpu.memory_space<vmem>>, vector<1x128x128xbf16>
    %26 = vector.shape_cast %25 : vector<1x128x128xbf16> to vector<128x128xbf16>
    %cst_20 = arith.constant dense<0.000000e+00> : vector<384x128xf32>
    %27 = tpu.matmul %24, %26, %cst_20 {dimension_numbers = #tpu.dot_dimension_numbers<[1], [0], [0], [1], [0, 0, 1, 1], [], []>} : vector<384x128xbf16>, vector<128x128xbf16>, vector<384x128xf32> -> vector<384x128xf32>
    %28 = arith.addf %21, %27 : vector<384x128xf32>
    %29 = vector.extract_strided_slice %23 {offsets = [24, 0], sizes = [384, 128], strides = [1, 1]} : vector<432x128xbf16> to vector<384x128xbf16>
    %c4 = arith.constant 4 : index
    %c0_21 = arith.constant 0 : index
    %c0_22 = arith.constant 0 : index
    %30 = vector.load %arg4[%c4, %c0_21, %c0_22] : memref<9x128x128xbf16, #tpu.memory_space<vmem>>, vector<1x128x128xbf16>
    %31 = vector.shape_cast %30 : vector<1x128x128xbf16> to vector<128x128xbf16>
    %cst_23 = arith.constant dense<0.000000e+00> : vector<384x128xf32>
    %32 = tpu.matmul %29, %31, %cst_23 {dimension_numbers = #tpu.dot_dimension_numbers<[1], [0], [0], [1], [0, 0, 1, 1], [], []>} : vector<384x128xbf16>, vector<128x128xbf16>, vector<384x128xf32> -> vector<384x128xf32>
    %33 = arith.addf %28, %32 : vector<384x128xf32>
    %34 = vector.extract_strided_slice %23 {offsets = [48, 0], sizes = [384, 128], strides = [1, 1]} : vector<432x128xbf16> to vector<384x128xbf16>
    %c7 = arith.constant 7 : index
    %c0_24 = arith.constant 0 : index
    %c0_25 = arith.constant 0 : index
    %35 = vector.load %arg4[%c7, %c0_24, %c0_25] : memref<9x128x128xbf16, #tpu.memory_space<vmem>>, vector<1x128x128xbf16>
    %36 = vector.shape_cast %35 : vector<1x128x128xbf16> to vector<128x128xbf16>
    %cst_26 = arith.constant dense<0.000000e+00> : vector<384x128xf32>
    %37 = tpu.matmul %34, %36, %cst_26 {dimension_numbers = #tpu.dot_dimension_numbers<[1], [0], [0], [1], [0, 0, 1, 1], [], []>} : vector<384x128xbf16>, vector<128x128xbf16>, vector<384x128xf32> -> vector<384x128xf32>
    %38 = arith.addf %33, %37 : vector<384x128xf32>
    %c0_27 = arith.constant 0 : index
    %c2 = arith.constant 2 : index
    %c0_28 = arith.constant 0 : index
    %39 = vector.load %arg3[%c0_27, %c2, %c0_28] : memref<1x448x128xbf16, #tpu.memory_space<vmem>>, vector<1x432x128xbf16>
    %40 = vector.shape_cast %39 : vector<1x432x128xbf16> to vector<432x128xbf16>
    %41 = vector.extract_strided_slice %40 {offsets = [0, 0], sizes = [384, 128], strides = [1, 1]} : vector<432x128xbf16> to vector<384x128xbf16>
    %c2_29 = arith.constant 2 : index
    %c0_30 = arith.constant 0 : index
    %c0_31 = arith.constant 0 : index
    %42 = vector.load %arg4[%c2_29, %c0_30, %c0_31] : memref<9x128x128xbf16, #tpu.memory_space<vmem>>, vector<1x128x128xbf16>
    %43 = vector.shape_cast %42 : vector<1x128x128xbf16> to vector<128x128xbf16>
    %cst_32 = arith.constant dense<0.000000e+00> : vector<384x128xf32>
    %44 = tpu.matmul %41, %43, %cst_32 {dimension_numbers = #tpu.dot_dimension_numbers<[1], [0], [0], [1], [0, 0, 1, 1], [], []>} : vector<384x128xbf16>, vector<128x128xbf16>, vector<384x128xf32> -> vector<384x128xf32>
    %45 = arith.addf %38, %44 : vector<384x128xf32>
    %46 = vector.extract_strided_slice %40 {offsets = [24, 0], sizes = [384, 128], strides = [1, 1]} : vector<432x128xbf16> to vector<384x128xbf16>
    %c5 = arith.constant 5 : index
    %c0_33 = arith.constant 0 : index
    %c0_34 = arith.constant 0 : index
    %47 = vector.load %arg4[%c5, %c0_33, %c0_34] : memref<9x128x128xbf16, #tpu.memory_space<vmem>>, vector<1x128x128xbf16>
    %48 = vector.shape_cast %47 : vector<1x128x128xbf16> to vector<128x128xbf16>
    %cst_35 = arith.constant dense<0.000000e+00> : vector<384x128xf32>
    %49 = tpu.matmul %46, %48, %cst_35 {dimension_numbers = #tpu.dot_dimension_numbers<[1], [0], [0], [1], [0, 0, 1, 1], [], []>} : vector<384x128xbf16>, vector<128x128xbf16>, vector<384x128xf32> -> vector<384x128xf32>
    %50 = arith.addf %45, %49 : vector<384x128xf32>
    %51 = vector.extract_strided_slice %40 {offsets = [48, 0], sizes = [384, 128], strides = [1, 1]} : vector<432x128xbf16> to vector<384x128xbf16>
    %c8 = arith.constant 8 : index
    %c0_36 = arith.constant 0 : index
    %c0_37 = arith.constant 0 : index
    %52 = vector.load %arg4[%c8, %c0_36, %c0_37] : memref<9x128x128xbf16, #tpu.memory_space<vmem>>, vector<1x128x128xbf16>
    %53 = vector.shape_cast %52 : vector<1x128x128xbf16> to vector<128x128xbf16>
    %cst_38 = arith.constant dense<0.000000e+00> : vector<384x128xf32>
    %54 = tpu.matmul %51, %53, %cst_38 {dimension_numbers = #tpu.dot_dimension_numbers<[1], [0], [0], [1], [0, 0, 1, 1], [], []>} : vector<384x128xbf16>, vector<128x128xbf16>, vector<384x128xf32> -> vector<384x128xf32>
    %55 = arith.addf %50, %54 : vector<384x128xf32>
    %c0_39 = arith.constant 0 : index
    %c0_40 = arith.constant 0 : index
    %c0_41 = arith.constant 0 : index
    %56 = vector.load %arg7[%c0_39, %c0_40, %c0_41] : memref<1x384x128xf32, #tpu.memory_space<vmem>>, vector<1x384x128xf32>
    %57 = vector.shape_cast %56 : vector<1x384x128xf32> to vector<384x128xf32>
    %58 = vector.shape_cast %55 : vector<384x128xf32> to vector<1x384x128xf32>
    tpu.vector_store %arg7[%c0_39, %c0_40, %c0_41], %58 {strides = array<i32>} : memref<1x384x128xf32, #tpu.memory_space<vmem>>, vector<1x384x128xf32>,
    %c0_i32_42 = arith.constant 0 : i32
    %59 = arith.cmpi eq, %arg2, %c0_i32_42 : i32
    %60 = arith.extui %59 : i1 to i32
    %c0_i32_43 = arith.constant 0 : i32
    %61 = arith.cmpi ne, %60, %c0_i32_43 : i32
    scf.if %61 {
      %c0_44 = arith.constant 0 : index
      %c0_45 = arith.constant 0 : index
      %c0_46 = arith.constant 0 : index
      %62 = vector.load %arg7[%c0_44, %c0_45, %c0_46] : memref<1x384x128xf32, #tpu.memory_space<vmem>>, vector<1x384x128xf32>
      %63 = vector.shape_cast %62 : vector<1x384x128xf32> to vector<384x128xf32>
      %c0_47 = arith.constant 0 : index
      %c0_48 = arith.constant 0 : index
      %64 = vector.load %arg5[%c0_47, %c0_48] : memref<1x128xf32, #tpu.memory_space<vmem>>, vector<1x128xf32>
      %65 = vector.broadcast %64 : vector<1x128xf32> to vector<384x128xf32>
      %66 = arith.mulf %63, %65 : vector<384x128xf32>
      %c0_49 = arith.constant 0 : index
      %c0_50 = arith.constant 0 : index
      %67 = vector.load %arg6[%c0_49, %c0_50] : memref<1x128xf32, #tpu.memory_space<vmem>>, vector<1x128xf32>
      %68 = vector.broadcast %67 : vector<1x128xf32> to vector<384x128xf32>
      %69 = arith.addf %66, %68 : vector<384x128xf32>
      %cst_51 = arith.constant 0.000000e+00 : f32
      %70 = vector.broadcast %cst_51 : f32 to vector<384x128xf32>
      %71 = arith.cmpf oge, %69, %70 : vector<384x128xf32>
      %cst_52 = arith.constant 0.00999999977 : f32
      %72 = vector.broadcast %cst_52 : f32 to vector<384x128xf32>
      %73 = arith.mulf %72, %69 : vector<384x128xf32>
      %74 = arith.select %71, %69, %73 : vector<384x128xi1>, vector<384x128xf32>
      %c0_53 = arith.constant 0 : index
      %c0_54 = arith.constant 0 : index
      %c0_55 = arith.constant 0 : index
      %75 = vector.load %arg7[%c0_53, %c0_54, %c0_55] : memref<1x384x128xf32, #tpu.memory_space<vmem>>, vector<1x384x128xf32>
      %76 = vector.shape_cast %75 : vector<1x384x128xf32> to vector<384x128xf32>
      %77 = vector.shape_cast %74 : vector<384x128xf32> to vector<1x384x128xf32>
      tpu.vector_store %arg7[%c0_53, %c0_54, %c0_55], %77 {strides = array<i32>} : memref<1x384x128xf32, #tpu.memory_space<vmem>>, vector<1x384x128xf32>,
    } else {
    }
    return
  }
  func.func @transform_0(%arg0: i32, %arg1: i32, %arg2: i32) -> (i32, i32, i32) {
    %c0_i32 = arith.constant 0 : i32
    %c0_i32_0 = arith.constant 0 : i32
    return %arg0, %c0_i32, %arg2 : i32, i32, i32
  }
  func.func @transform_1(%arg0: i32, %arg1: i32, %arg2: i32) -> (i32, i32, i32) {
    %c0_i32 = arith.constant 0 : i32
    %c0_i32_0 = arith.constant 0 : i32
    return %c0_i32, %arg2, %arg1 : i32, i32, i32
  }
  func.func @transform_2(%arg0: i32, %arg1: i32, %arg2: i32) -> (i32, i32) {
    %c0_i32 = arith.constant 0 : i32
    %c0_i32_0 = arith.constant 0 : i32
    return %c0_i32, %arg1 : i32, i32
  }
  func.func @transform_3(%arg0: i32, %arg1: i32, %arg2: i32) -> (i32, i32) {
    %c0_i32 = arith.constant 0 : i32
    %c0_i32_0 = arith.constant 0 : i32
    return %c0_i32, %arg1 : i32, i32
  }
  func.func @transform_4(%arg0: i32, %arg1: i32, %arg2: i32) -> (i32, i32, i32) {
    %c0_i32 = arith.constant 0 : i32
    %c0_i32_0 = arith.constant 0 : i32
    return %arg0, %c0_i32, %arg1 : i32, i32, i32
  }
}

</mosaic_0001>

<llo_original>
// kernel: upsample_bn_apply.2
$region0: #{upsample_bn_apply.2}
  #allocation0 [shape = 'u32[]', space=smem, size = 0x4, offset = 0x4, fixed_abs, tag = 'smem constant byte address 0x4 - core index']
  #allocation1 [shape = 'u32[72,128]{1,0:T(1,128)}', space=vmem, size = 0x9000, scoped, tag = 'internal scratch']
  #allocation2 [shape = 'f32[384,128]{1,0:T(8,128)}', space=vmem, size = 0x30000, scoped, tag = 'scratch operand']
  %s0 = inlined_call_operand.vmem [shape: bf16[2,448,128], index: 0, kind: input, shape index: {}]
  %s1 = inlined_call_operand.vmem [shape: bf16[9,128,128], index: 1, kind: input, shape index: {}]
  %s2 = inlined_call_operand.vmem [shape: f32[1,128], index: 2, kind: input, shape index: {}]
  %s3 = inlined_call_operand.vmem [shape: f32[1,128], index: 3, kind: input, shape index: {}]
  %s4 = inlined_call_operand.vmem [shape: bf16[2,384,128], index: 4, kind: output, shape index: {}]
  %s5 = sld [smem:[#allocation0]]
  $region57: #{upsample_bn_apply.2} parent=0
    _
  %s7 = ssub.s32 1, %s5
  %s8 = scalar_select 0, %s7, %s5
  loop: start=0, step=1, limit=4
  $region2: #{upsample_bn_apply.2} parent=0 // loop_pre_header
    _
  $region3: #{upsample_bn_apply.2} parent=0 // loop_header
    %s10 = sphi 0, %s14
    %p11 = scmp.ge.s32.totalorder %s10, 4
    %s17 = sphi 0, %s36
    %s18 = sphi 0, %s32
    %s19 = sphi 0, %s28
    %s20 = sphi 0, %s17
    %s21 = sphi 0, %s18
    %s22 = sphi 0, %s19
    %s23 = sphi 0, %s20
    %s24 = sphi 0, %s21
    %s25 = sphi 0, %s22
    %s41 = sphi 0, %s43
    %s44 = sphi 0, %s41
    %s45 = sphi 0, %s44
    %s61 = sphi 0, %s45
    %s69 = sphi 0, %s71
    %s72 = sphi 0, %s69
    %s73 = sphi 0, %s72
    %s89 = sphi 0, %s73
    %s95 = sphi 0, %s97
    %s98 = sphi 0, %s95
    %s99 = sphi 0, %s98
    %s115 = sphi 0, %s99
    %s121 = sphi 0, %s123
    %s124 = sphi 0, %s121
    %s125 = sphi 0, %s124
    %s141 = sphi 0, %s125
    %s149 = sphi 0, %s151
    %s152 = sphi 0, %s149
    %s153 = sphi 0, %s152
    %s169 = sphi 0, %s153
  $region4: #{upsample_bn_apply.2} parent=0 // loop_header_branch
    %13 = sbr.rel (%p11) target = $region8
  $region5: #{upsample_bn_apply.2} parent=0 // loop_body
    %s15 = ssub.s32 %s10, 1
    %s16 = ssub.s32 %s10, 2
    %s26 = sadd.s32 1, %s19
    %p27 = scmp.ge.s32.totalorder %s26, 1
    %s28 = scalar_select %p27, 0, %s26
    %s29 = sadd.s32 1, %s18
    %s30 = scalar_select %p27, %s29, %s18
    %p31 = scmp.ge.s32.totalorder %s30, 1
    %s32 = scalar_select %p31, 0, %s30
    %s33 = sadd.s32 1, %s17
    %s34 = scalar_select %p31, %s33, %s17
    %p35 = scmp.ge.s32.totalorder %s34, 2
    %s36 = scalar_select %p35, 0, %s34
    %s37 = ssub.s32 %s17, %s36
    %s38 = ssub.s32 %s19, %s28
    %s39 = sor.u32 %s37, %s38
    %p40 = scmp.eq.s32.totalorder %s39, 0
    %s42 = sadd.s32 %s41, 1
    %s43 = scalar_select %p40, %s41, %s42
    %p46 = pneg %p40
    %p47 = scmp.eq.s32.totalorder %s10, 1
    %p48 = por %p46, %p47
    %p49 = scmp.ne.s32.totalorder %s41, %s44
    %p50 = scmp.eq.s32.totalorder %s10, 0
    %p51 = por %p49, %p50
    %p52 = scmp.ne.s32.totalorder %s41, %s44
    %p53 = scmp.eq.s32.totalorder %s15, 1
    %p54 = por %p52, %p53
    %p55 = scmp.ne.s32.totalorder %s44, %s45
    %p56 = scmp.eq.s32.totalorder %s15, 0
    %p57 = por %p55, %p56
    %p58 = scmp.ne.s32.totalorder %s44, %s45
    %p59 = scmp.eq.s32.totalorder %s16, 1
    %p60 = por %p58, %p59
    %p62 = scmp.ne.s32.totalorder %s45, %s61
    %p63 = scmp.eq.s32.totalorder %s16, 0
    %p64 = por %p62, %p63
    %s65 = ssub.s32 %s19, %s28
    %s66 = ssub.s32 %s18, %s32
    %s67 = sor.u32 %s65, %s66
    %p68 = scmp.eq.s32.totalorder %s67, 0
    %s70 = sadd.s32 %s69, 1
    %s71 = scalar_select %p68, %s69, %s70
    %p74 = pneg %p68
    %p75 = scmp.eq.s32.totalorder %s10, 1
    %p76 = por %p74, %p75
    %p77 = scmp.ne.s32.totalorder %s69, %s72
    %p78 = scmp.eq.s32.totalorder %s10, 0
    %p79 = por %p77, %p78
    %p80 = scmp.ne.s32.totalorder %s69, %s72
    %p81 = scmp.eq.s32.totalorder %s15, 1
    %p82 = por %p80, %p81
    %p83 = scmp.ne.s32.totalorder %s72, %s73
    %p84 = scmp.eq.s32.totalorder %s15, 0
    %p85 = por %p83, %p84
    %p86 = scmp.ne.s32.totalorder %s72, %s73
    %p87 = scmp.eq.s32.totalorder %s16, 1
    %p88 = por %p86, %p87
    %p90 = scmp.ne.s32.totalorder %s73, %s89
    %p91 = scmp.eq.s32.totalorder %s16, 0
    %p92 = por %p90, %p91
    %s93 = ssub.s32 %s18, %s32
    %p94 = scmp.eq.s32.totalorder %s93, 0
    %s96 = sadd.s32 %s95, 1
    %s97 = scalar_select %p94, %s95, %s96
    %p100 = pneg %p94
    %p101 = scmp.eq.s32.totalorder %s10, 1
    %p102 = por %p100, %p101
    %p103 = scmp.ne.s32.totalorder %s95, %s98
    %p104 = scmp.eq.s32.totalorder %s10, 0
    %p105 = por %p103, %p104
    %p106 = scmp.ne.s32.totalorder %s95, %s98
    %p107 = scmp.eq.s32.totalorder %s15, 1
    %p108 = por %p106, %p107
    %p109 = scmp.ne.s32.totalorder %s98, %s99
    %p110 = scmp.eq.s32.totalorder %s15, 0
    %p111 = por %p109, %p110
    %p112 = scmp.ne.s32.totalorder %s98, %s99
    %p113 = scmp.eq.s32.totalorder %s16, 1
    %p114 = por %p112, %p113
    %p116 = scmp.ne.s32.totalorder %s99, %s115
    %p117 = scmp.eq.s32.totalorder %s16, 0
    %p118 = por %p116, %p117
    %s119 = ssub.s32 %s18, %s32
    %p120 = scmp.eq.s32.totalorder %s119, 0
    %s122 = sadd.s32 %s121, 1
    %s123 = scalar_select %p120, %s121, %s122
    %p126 = pneg %p120
    %p127 = scmp.eq.s32.totalorder %s10, 1
    %p128 = por %p126, %p127
    %p129 = scmp.ne.s32.totalorder %s121, %s124
    %p130 = scmp.eq.s32.totalorder %s10, 0
    %p131 = por %p129, %p130
    %p132 = scmp.ne.s32.totalorder %s121, %s124
    %p133 = scmp.eq.s32.totalorder %s15, 1
    %p134 = por %p132, %p133
    %p135 = scmp.ne.s32.totalorder %s124, %s125
    %p136 = scmp.eq.s32.totalorder %s15, 0
    %p137 = por %p135, %p136
    %p138 = scmp.ne.s32.totalorder %s124, %s125
    %p139 = scmp.eq.s32.totalorder %s16, 1
    %p140 = por %p138, %p139
    %p142 = scmp.ne.s32.totalorder %s125, %s141
    %p143 = scmp.eq.s32.totalorder %s16, 0
    %p144 = por %p142, %p143
    %s145 = ssub.s32 %s17, %s36
    %s146 = ssub.s32 %s18, %s32
    %s147 = sor.u32 %s145, %s146
    %p148 = scmp.eq.s32.totalorder %s147, 0
    %s150 = sadd.s32 %s149, 1
    %s151 = scalar_select %p148, %s149, %s150
    %p154 = pneg %p148
    %p155 = scmp.eq.s32.totalorder %s10, 1
    %p156 = por %p154, %p155
    %p157 = scmp.ne.s32.totalorder %s149, %s152
    %p158 = scmp.eq.s32.totalorder %s10, 0
    %p159 = por %p157, %p158
    %p160 = scmp.ne.s32.totalorder %s149, %s152
    %p161 = scmp.eq.s32.totalorder %s15, 1
    %p162 = por %p160, %p161
    %p163 = scmp.ne.s32.totalorder %s152, %s153
    %p164 = scmp.eq.s32.totalorder %s15, 0
    %p165 = por %p163, %p164
    %p166 = scmp.ne.s32.totalorder %s152, %s153
    %p167 = scmp.eq.s32.totalorder %s16, 1
    %p168 = por %p166, %p167
    %p170 = scmp.ne.s32.totalorder %s153, %s169
    %p171 = scmp.eq.s32.totalorder %s16, 0
    %p172 = por %p170, %p171
    %p173 = scmp.le.s32.totalorder 1, %s10
    %p174 = scmp.lt.s32.totalorder %s10, 3
    %p175 = pnand %p173, %p174
    %p176 = pneg %p175
    // Predicated region
    $region9: #{upsample_bn_apply.2} parent=5 // pred_check
      _
    $region10: #{upsample_bn_apply.2} parent=5 // pred_check_branch
      %178 = sbr.rel (%p175) target = $region12
    $region11: #{upsample_bn_apply.2} parent=5 // pred_region
      %s179 = ssub.s32 %s10, 1
      // Predicated region
      $region13: #{upsample_bn_apply.2} parent=11 // pred_check
        %p180 = pneg %p85
      $region14: #{upsample_bn_apply.2} parent=11 // pred_check_branch
        %182 = sbr.rel (%p180) target = $region16
      $region15: #{upsample_bn_apply.2} parent=11 // pred_region
        %s183 = smul.u32 16, %s22
        %p184 = scmp.lt.s32.totalorder %s183, 15
        %s185 = scalar_select %p184, %s183, 15
        %p186 = scmp.lt.s32.totalorder %s21, 0
        %s187 = scalar_select %p186, %s21, 0
        %s188 = sadd.s32 %s187, %s185
        %s189 = smul.addr %s188, 4
        %s190 = scalar_lea.vmem %s1, %s189
        %s191 = smul.u32 16, %s22
      $region16: #{upsample_bn_apply.2} parent=11 // pred_fallthru
        _
      // Predicated region
      $region17: #{upsample_bn_apply.2} parent=11 // pred_check
        %p192 = pneg %p111
      $region18: #{upsample_bn_apply.2} parent=11 // pred_check_branch
        %194 = sbr.rel (%p192) target = $region20
      $region19: #{upsample_bn_apply.2} parent=11 // pred_region
        %p195 = scmp.lt.s32.totalorder %s21, 0
        %s196 = scalar_select %p195, %s21, 0
        %s197 = scalar_lea.vmem %s2, %s196
      $region20: #{upsample_bn_apply.2} parent=11 // pred_fallthru
        _
      // Predicated region
      $region21: #{upsample_bn_apply.2} parent=11 // pred_check
        %p198 = pneg %p137
      $region22: #{upsample_bn_apply.2} parent=11 // pred_check_branch
        %200 = sbr.rel (%p198) target = $region24
      $region23: #{upsample_bn_apply.2} parent=11 // pred_region
        %p201 = scmp.lt.s32.totalorder %s21, 0
        %s202 = scalar_select %p201, %s21, 0
        %s203 = scalar_lea.vmem %s3, %s202
      $region24: #{upsample_bn_apply.2} parent=11 // pred_fallthru
        _
    $region12: #{upsample_bn_apply.2} parent=5 // pred_fallthru
      _
    %p204 = scmp.lt.s32.totalorder %s10, 2
    // Predicated region
    $region25: #{upsample_bn_apply.2} parent=5 // pred_check
      %p205 = pneg %p204
    $region26: #{upsample_bn_apply.2} parent=5 // pred_check_branch
      %207 = sbr.rel (%p205) target = $region28
    $region27: #{upsample_bn_apply.2} parent=5 // pred_region
      // Predicated region
      $region29: #{upsample_bn_apply.2} parent=27 // pred_check
        %p208 = pneg %p51
      $region30: #{upsample_bn_apply.2} parent=27 // pred_check_branch
        %210 = sbr.rel (%p208) target = $region32
      $region31: #{upsample_bn_apply.2} parent=27 // pred_region
        %p211 = scmp.lt.s32.totalorder %s17, 1
        %s212 = scalar_select %p211, %s17, 1
        %p213 = scmp.lt.s32.totalorder %s19, 0
        %s214 = scalar_select %p213, %s19, 0
        %s215 = smul.addr %s212, 56
        %s216 = sadd.s32 %s214, %s215
        %s217 = smul.addr %s216, 4
        %s218 = scalar_lea.vmem %s0, %s217
      $region32: #{upsample_bn_apply.2} parent=27 // pred_fallthru
        _
    $region28: #{upsample_bn_apply.2} parent=5 // pred_fallthru
      _
    %p219 = scmp.le.s32.totalorder 1, %s10
    %p220 = scmp.lt.s32.totalorder %s10, 3
    %p221 = pnand %p219, %p220
    %p222 = pneg %p221
    // Predicated region
    $region33: #{upsample_bn_apply.2} parent=5 // pred_check
      _
    $region34: #{upsample_bn_apply.2} parent=5 // pred_check_branch
      %224 = sbr.rel (%p221) target = $region36
    $region35: #{upsample_bn_apply.2} parent=5 // pred_region
      %s225 = ssub.s32 %s10, 1
      %p226 = scmp.lt.s32.totalorder %s20, 1
      %s227 = scalar_select %p226, %s20, 1
      %p228 = scmp.lt.s32.totalorder %s22, 0
      %s229 = scalar_select %p228, %s22, 0
      %s230 = smul.addr %s227, 56
      %s231 = sadd.s32 %s229, %s230
      %s232 = smul.addr %s231, 4
      %s233 = scalar_lea.vmem %s0, %s232
      %p234 = pneg %p57
      %p235 = pneg %p54
      %s236 = smul.u32 16, %s22
      %p237 = scmp.lt.s32.totalorder %s236, 15
      %s238 = scalar_select %p237, %s236, 15
      %p239 = scmp.lt.s32.totalorder %s21, 0
      %s240 = scalar_select %p239, %s21, 0
      %s241 = sadd.s32 %s240, %s238
      %s242 = smul.addr %s241, 4
      %s243 = scalar_lea.vmem %s1, %s242
      %p244 = pneg %p85
      %p245 = pneg %p82
      %p246 = scmp.lt.s32.totalorder %s21, 0
      %s247 = scalar_select %p246, %s21, 0
      %s248 = scalar_lea.vmem %s2, %s247
      %p249 = pneg %p111
      %p250 = pneg %p108
      %p251 = scmp.lt.s32.totalorder %s21, 0
      %s252 = scalar_select %p251, %s21, 0
      %s253 = scalar_lea.vmem %s3, %s252
      %p254 = pneg %p137
      %p255 = pneg %p134
      %p256 = pneg %p165
      %p257 = pneg %p162
      %p258 = scmp.lt.s32.totalorder %s20, 1
      %s259 = scalar_select %p258, %s20, 1
      %p260 = scmp.lt.s32.totalorder %s21, 0
      %s261 = scalar_select %p260, %s21, 0
      %s262 = smul.addr %s259, 48
      %s263 = sadd.s32 %s261, %s262
      %s264 = smul.addr %s263, 4
      %s265 = scalar_lea.vmem %s4, %s264
      %p266 = scmp.lt.s32.totalorder %s20, 1
      %s267 = scalar_select %p266, %s20, 1
      %p268 = scmp.lt.s32.totalorder %s22, 0
      %s269 = scalar_select %p268, %s22, 0
      %s270 = smul.addr %s267, 56
      %s271 = sadd.s32 %s269, %s270
      %s272 = smul.addr %s271, 4
      %s273 = scalar_lea.vmem %s0, %s272
      %s274 = smul.u32 16, %s22
      %p275 = scmp.lt.s32.totalorder %s274, 15
      %s276 = scalar_select %p275, %s274, 15
      %p277 = scmp.lt.s32.totalorder %s21, 0
      %s278 = scalar_select %p277, %s21, 0
      %s279 = sadd.s32 %s278, %s276
      %s280 = smul.addr %s279, 4
      %s281 = scalar_lea.vmem %s1, %s280
      %s282 = smul.u32 16, %s22
      %p283 = scmp.lt.s32.totalorder %s21, 0
      %s284 = scalar_select %p283, %s21, 0
      %s285 = scalar_lea.vmem %s2, %s284
      %p286 = scmp.lt.s32.totalorder %s21, 0
      %s287 = scalar_select %p286, %s21, 0
      %s288 = scalar_lea.vmem %s3, %s287
      %p289 = scmp.lt.s32.totalorder %s20, 1
      %s290 = scalar_select %p289, %s20, 1
      %p291 = scmp.lt.s32.totalorder %s21, 0
      %s292 = scalar_select %p291, %s21, 0
      %s293 = smul.addr %s290, 48
      %s294 = sadd.s32 %s292, %s293
      %s295 = smul.addr %s294, 4
      %s296 = scalar_lea.vmem %s4, %s295
      %p297 = scmp.eq.s32.totalorder %s22, 0
      // Predicated region
      $region37: #{upsample_bn_apply.2} parent=35 // pred_check
        %p298 = pneg %p297
      $region38: #{upsample_bn_apply.2} parent=35 // pred_check_branch
        %300 = sbr.rel (%p298) target = $region40
      $region39: #{upsample_bn_apply.2} parent=35 // pred_region
        %301 = vst [vmem:[#allocation2] sm:$0xff] 0.0
        %302 = vst [vmem:[#allocation2 + $0x8] sm:$0xff] 0.0
        %303 = vst [vmem:[#allocation2 + $0x10] sm:$0xff] 0.0
        %304 = vst [vmem:[#allocation2 + $0x18] sm:$0xff] 0.0
        %305 = vst [vmem:[#allocation2 + $0x20] sm:$0xff] 0.0
        %306 = vst [vmem:[#allocation2 + $0x28] sm:$0xff] 0.0
        %307 = vst [vmem:[#allocation2 + $0x30] sm:$0xff] 0.0
        %308 = vst [vmem:[#allocation2 + $0x38] sm:$0xff] 0.0
        %309 = vst [vmem:[#allocation2 + $0x40] sm:$0xff] 0.0
        %310 = vst [vmem:[#allocation2 + $0x48] sm:$0xff] 0.0
        %311 = vst [vmem:[#allocation2 + $0x50] sm:$0xff] 0.0
        %312 = vst [vmem:[#allocation2 + $0x58] sm:$0xff] 0.0
        %313 = vst [vmem:[#allocation2 + $0x60] sm:$0xff] 0.0
        %314 = vst [vmem:[#allocation2 + $0x68] sm:$0xff] 0.0
        %315 = vst [vmem:[#allocation2 + $0x70] sm:$0xff] 0.0
        %316 = vst [vmem:[#allocation2 + $0x78] sm:$0xff] 0.0
        %317 = vst [vmem:[#allocation2 + $0x80] sm:$0xff] 0.0
        %318 = vst [vmem:[#allocation2 + $0x88] sm:$0xff] 0.0
        %319 = vst [vmem:[#allocation2 + $0x90] sm:$0xff] 0.0
        %320 = vst [vmem:[#allocation2 + $0x98] sm:$0xff] 0.0
        %321 = vst [vmem:[#allocation2 + $0xa0] sm:$0xff] 0.0
        %322 = vst [vmem:[#allocation2 + $0xa8] sm:$0xff] 0.0
        %323 = vst [vmem:[#allocation2 + $0xb0] sm:$0xff] 0.0
        %324 = vst [vmem:[#allocation2 + $0xb8] sm:$0xff] 0.0
        %325 = vst [vmem:[#allocation2 + $0xc0] sm:$0xff] 0.0
        %326 = vst [vmem:[#allocation2 + $0xc8] sm:$0xff] 0.0
        %327 = vst [vmem:[#allocation2 + $0xd0] sm:$0xff] 0.0
        %328 = vst [vmem:[#allocation2 + $0xd8] sm:$0xff] 0.0
        %329 = vst [vmem:[#allocation2 + $0xe0] sm:$0xff] 0.0
        %330 = vst [vmem:[#allocation2 + $0xe8] sm:$0xff] 0.0
        %331 = vst [vmem:[#allocation2 + $0xf0] sm:$0xff] 0.0
        %332 = vst [vmem:[#allocation2 + $0xf8] sm:$0xff] 0.0
        %333 = vst [vmem:[#allocation2 + $0x100] sm:$0xff] 0.0
        %334 = vst [vmem:[#allocation2 + $0x108] sm:$0xff] 0.0
        %335 = vst [vmem:[#allocation2 + $0x110] sm:$0xff] 0.0
        %336 = vst [vmem:[#allocation2 + $0x118] sm:$0xff] 0.0
        %337 = vst [vmem:[#allocation2 + $0x120] sm:$0xff] 0.0
        %338 = vst [vmem:[#allocation2 + $0x128] sm:$0xff] 0.0
        %339 = vst [vmem:[#allocation2 + $0x130] sm:$0xff] 0.0
        %340 = vst [vmem:[#allocation2 + $0x138] sm:$0xff] 0.0
        %341 = vst [vmem:[#allocation2 + $0x140] sm:$0xff] 0.0
        %342 = vst [vmem:[#allocation2 + $0x148] sm:$0xff] 0.0
        %343 = vst [vmem:[#allocation2 + $0x150] sm:$0xff] 0.0
        %344 = vst [vmem:[#allocation2 + $0x158] sm:$0xff] 0.0
        %345 = vst [vmem:[#allocation2 + $0x160] sm:$0xff] 0.0
        %346 = vst [vmem:[#allocation2 + $0x168] sm:$0xff] 0.0
        %347 = vst [vmem:[#allocation2 + $0x170] sm:$0xff] 0.0
        %348 = vst [vmem:[#allocation2 + $0x178] sm:$0xff] 0.0
      $region40: #{upsample_bn_apply.2} parent=35 // pred_fallthru
        _
      %v349 = vld [vmem:[#allocation2] sm:$0xff]
      %v350 = vld [vmem:[#allocation2 + $0x8] sm:$0xff]
      %v351 = vld [vmem:[#allocation2 + $0x10] sm:$0xff]
      %v352 = vld [vmem:[#allocation2 + $0x18] sm:$0xff]
      %v353 = vld [vmem:[#allocation2 + $0x20] sm:$0xff]
      %v354 = vld [vmem:[#allocation2 + $0x28] sm:$0xff]
      %v355 = vld [vmem:[#allocation2 + $0x30] sm:$0xff]
      %v356 = vld [vmem:[#allocation2 + $0x38] sm:$0xff]
      %v357 = vld [vmem:[#allocation2 + $0x40] sm:$0xff]
      %v358 = vld [vmem:[#allocation2 + $0x48] sm:$0xff]
      %v359 = vld [vmem:[#allocation2 + $0x50] sm:$0xff]
      %v360 = vld [vmem:[#allocation2 + $0x58] sm:$0xff]
      %v361 = vld [vmem:[#allocation2 + $0x60] sm:$0xff]
      %v362 = vld [vmem:[#allocation2 + $0x68] sm:$0xff]
      %v363 = vld [vmem:[#allocation2 + $0x70] sm:$0xff]
      %v364 = vld [vmem:[#allocation2 + $0x78] sm:$0xff]
      %v365 = vld [vmem:[#allocation2 + $0x80] sm:$0xff]
      %v366 = vld [vmem:[#allocation2 + $0x88] sm:$0xff]
      %v367 = vld [vmem:[#allocation2 + $0x90] sm:$0xff]
      %v368 = vld [vmem:[#allocation2 + $0x98] sm:$0xff]
      %v369 = vld [vmem:[#allocation2 + $0xa0] sm:$0xff]
      %v370 = vld [vmem:[#allocation2 + $0xa8] sm:$0xff]
      %v371 = vld [vmem:[#allocation2 + $0xb0] sm:$0xff]
      %v372 = vld [vmem:[#allocation2 + $0xb8] sm:$0xff]
      %v373 = vld [vmem:[#allocation2 + $0xc0] sm:$0xff]
      %v374 = vld [vmem:[#allocation2 + $0xc8] sm:$0xff]
      %v375 = vld [vmem:[#allocation2 + $0xd0] sm:$0xff]
      %v376 = vld [vmem:[#allocation2 + $0xd8] sm:$0xff]
      %v377 = vld [vmem:[#allocation2 + $0xe0] sm:$0xff]
      %v378 = vld [vmem:[#allocation2 + $0xe8] sm:$0xff]
      %v379 = vld [vmem:[#allocation2 + $0xf0] sm:$0xff]
      %v380 = vld [vmem:[#allocation2 + $0xf8] sm:$0xff]
      %v381 = vld [vmem:[#allocation2 + $0x100] sm:$0xff]
      %v382 = vld [vmem:[#allocation2 + $0x108] sm:$0xff]
      %v383 = vld [vmem:[#allocation2 + $0x110] sm:$0xff]
      %v384 = vld [vmem:[#allocation2 + $0x118] sm:$0xff]
      %v385 = vld [vmem:[#allocation2 + $0x120] sm:$0xff]
      %v386 = vld [vmem:[#allocation2 + $0x128] sm:$0xff]
      %v387 = vld [vmem:[#allocation2 + $0x130] sm:$0xff]
      %v388 = vld [vmem:[#allocation2 + $0x138] sm:$0xff]
      %v389 = vld [vmem:[#allocation2 + $0x140] sm:$0xff]
      %v390 = vld [vmem:[#allocation2 + $0x148] sm:$0xff]
      %v391 = vld [vmem:[#allocation2 + $0x150] sm:$0xff]
      %v392 = vld [vmem:[#allocation2 + $0x158] sm:$0xff]
      %v393 = vld [vmem:[#allocation2 + $0x160] sm:$0xff]
      %v394 = vld [vmem:[#allocation2 + $0x168] sm:$0xff]
      %v395 = vld [vmem:[#allocation2 + $0x170] sm:$0xff]
      %v396 = vld [vmem:[#allocation2 + $0x178] sm:$0xff]
      %v397 = vld [vmem:[%s273] sm:$0xf]
      %v398 = vld [vmem:[%s273 + $0x4] sm:$0xf]
      %v399 = vld [vmem:[%s273 + $0x8] sm:$0xf]
      %v400 = vld [vmem:[%s273 + $0xc] sm:$0xf]
      %v401 = vld [vmem:[%s273 + $0x10] sm:$0xf]
      %v402 = vld [vmem:[%s273 + $0x14] sm:$0xf]
      %v403 = vld [vmem:[%s273 + $0x18] sm:$0xf]
      %v404 = vld [vmem:[%s273 + $0x1c] sm:$0xf]
      %v405 = vld [vmem:[%s273 + $0x20] sm:$0xf]
      %v406 = vld [vmem:[%s273 + $0x24] sm:$0xf]
      %v407 = vld [vmem:[%s273 + $0x28] sm:$0xf]
      %v408 = vld [vmem:[%s273 + $0x2c] sm:$0xf]
      %v409 = vld [vmem:[%s273 + $0x30] sm:$0xf]
      %v410 = vld [vmem:[%s273 + $0x34] sm:$0xf]
      %v411 = vld [vmem:[%s273 + $0x38] sm:$0xf]
      %v412 = vld [vmem:[%s273 + $0x3c] sm:$0xf]
      %v413 = vld [vmem:[%s273 + $0x40] sm:$0xf]
      %v414 = vld [vmem:[%s273 + $0x44] sm:$0xf]
      %v415 = vld [vmem:[%s273 + $0x48] sm:$0xf]
      %v416 = vld [vmem:[%s273 + $0x4c] sm:$0xf]
      %v417 = vld [vmem:[%s273 + $0x50] sm:$0xf]
      %v418 = vld [vmem:[%s273 + $0x54] sm:$0xf]
      %v419 = vld [vmem:[%s273 + $0x58] sm:$0xf]
      %v420 = vld [vmem:[%s273 + $0x5c] sm:$0xf]
      %v421 = vld [vmem:[%s273 + $0x60] sm:$0xf]
      %v422 = vld [vmem:[%s273 + $0x64] sm:$0xf]
      %v423 = vld [vmem:[%s273 + $0x68] sm:$0xf]
      %v424 = vld [vmem:[%s273 + $0x6c] sm:$0xf]
      %v425 = vld [vmem:[%s273 + $0x70] sm:$0xf]
      %v426 = vld [vmem:[%s273 + $0x74] sm:$0xf]
      %v427 = vld [vmem:[%s273 + $0x78] sm:$0xf]
      %v428 = vld [vmem:[%s273 + $0x7c] sm:$0xf]
      %v429 = vld [vmem:[%s273 + $0x80] sm:$0xf]
      %v430 = vld [vmem:[%s273 + $0x84] sm:$0xf]
      %v431 = vld [vmem:[%s273 + $0x88] sm:$0xf]
      %v432 = vld [vmem:[%s273 + $0x8c] sm:$0xf]
      %v433 = vld [vmem:[%s273 + $0x90] sm:$0xf]
      %v434 = vld [vmem:[%s273 + $0x94] sm:$0xf]
      %v435 = vld [vmem:[%s273 + $0x98] sm:$0xf]
      %v436 = vld [vmem:[%s273 + $0x9c] sm:$0xf]
      %v437 = vld [vmem:[%s273 + $0xa0] sm:$0xf]
      %v438 = vld [vmem:[%s273 + $0xa4] sm:$0xf]
      %v439 = vld [vmem:[%s273 + $0xa8] sm:$0xf]
      %v440 = vld [vmem:[%s273 + $0xac] sm:$0xf]
      %v441 = vld [vmem:[%s273 + $0xb0] sm:$0xf]
      %v442 = vld [vmem:[%s273 + $0xb4] sm:$0xf]
      %v443 = vld [vmem:[%s273 + $0xb8] sm:$0xf]
      %v444 = vld [vmem:[%s273 + $0xbc] sm:$0xf]
      %v445 = vld [vmem:[%s273 + $0xc0] sm:$0xf]
      %v446 = vld [vmem:[%s273 + $0xc4] sm:$0xf]
      %v447 = vld [vmem:[%s273 + $0xc8] sm:$0xf]
      %v448 = vld [vmem:[%s273 + $0xcc] sm:$0xf]
      %v449 = vld [vmem:[%s273 + $0xd0] sm:$0xf]
      %v450 = vld [vmem:[%s273 + $0xd4] sm:$0xf]
      %v451 = vld [vmem:[%s281] sm:$0xf]
      %v452 = vld [vmem:[%s281 + $0x4] sm:$0xf]
      %v453 = vld [vmem:[%s281 + $0x8] sm:$0xf]
      %v454 = vld [vmem:[%s281 + $0xc] sm:$0xf]
      %v455 = vld [vmem:[%s281 + $0x10] sm:$0xf]
      %v456 = vld [vmem:[%s281 + $0x14] sm:$0xf]
      %v457 = vld [vmem:[%s281 + $0x18] sm:$0xf]
      %v458 = vld [vmem:[%s281 + $0x1c] sm:$0xf]
      %v459 = vld [vmem:[%s281 + $0x20] sm:$0xf]
      %v460 = vld [vmem:[%s281 + $0x24] sm:$0xf]
      %v461 = vld [vmem:[%s281 + $0x28] sm:$0xf]
      %v462 = vld [vmem:[%s281 + $0x2c] sm:$0xf]
      %v463 = vld [vmem:[%s281 + $0x30] sm:$0xf]
      %v464 = vld [vmem:[%s281 + $0x34] sm:$0xf]
      %v465 = vld [vmem:[%s281 + $0x38] sm:$0xf]
      %v466 = vld [vmem:[%s281 + $0x3c] sm:$0xf]
      %v515 = vunpack.c.l.b16 %v397
      %v516 = vunpack.c.l.b16 %v398
      %v517 = vunpack.c.l.b16 %v399
      %v518 = vunpack.c.l.b16 %v400
      %v519 = vunpack.c.l.b16 %v401
      %v520 = vunpack.c.l.b16 %v402
      %v521 = vunpack.c.l.b16 %v403
      %v522 = vunpack.c.l.b16 %v404
      %v523 = vunpack.c.l.b16 %v405
      %v524 = vunpack.c.l.b16 %v406
      %v525 = vunpack.c.l.b16 %v407
      %v526 = vunpack.c.l.b16 %v408
      %v527 = vunpack.c.l.b16 %v409
      %v528 = vunpack.c.l.b16 %v410
      %v529 = vunpack.c.l.b16 %v411
      %v530 = vunpack.c.l.b16 %v412
      %v531 = vunpack.c.l.b16 %v413
      %v532 = vunpack.c.l.b16 %v414
      %v533 = vunpack.c.l.b16 %v415
      %v534 = vunpack.c.l.b16 %v416
      %v535 = vunpack.c.l.b16 %v417
      %v536 = vunpack.c.l.b16 %v418
      %v537 = vunpack.c.l.b16 %v419
      %v538 = vunpack.c.l.b16 %v420
      %v539 = vunpack.c.l.b16 %v421
      %v540 = vunpack.c.l.b16 %v422
      %v541 = vunpack.c.l.b16 %v423
      %v542 = vunpack.c.l.b16 %v424
      %v543 = vunpack.c.l.b16 %v425
      %v544 = vunpack.c.l.b16 %v426
      %v545 = vunpack.c.l.b16 %v427
      %v546 = vunpack.c.l.b16 %v428
      %v547 = vunpack.c.l.b16 %v429
      %v548 = vunpack.c.l.b16 %v430
      %v549 = vunpack.c.l.b16 %v431
      %v550 = vunpack.c.l.b16 %v432
      %v551 = vunpack.c.l.b16 %v433
      %v552 = vunpack.c.l.b16 %v434
      %v553 = vunpack.c.l.b16 %v435
      %v554 = vunpack.c.l.b16 %v436
      %v555 = vunpack.c.l.b16 %v437
      %v556 = vunpack.c.l.b16 %v438
      %v557 = vunpack.c.l.b16 %v439
      %v558 = vunpack.c.l.b16 %v440
      %v559 = vunpack.c.l.b16 %v441
      %v560 = vunpack.c.l.b16 %v442
      %v561 = vunpack.c.l.b16 %v443
      %v562 = vunpack.c.l.b16 %v444
      %v563 = vpack.c.b16 %v516, %v515
      %v564 = vpack.c.b16 %v518, %v517
      %v565 = vpack.c.b16 %v520, %v519
      %v566 = vpack.c.b16 %v522, %v521
      %v567 = vpack.c.b16 %v524, %v523
      %v568 = vpack.c.b16 %v526, %v525
      %v569 = vpack.c.b16 %v528, %v527
      %v570 = vpack.c.b16 %v530, %v529
      %v571 = vpack.c.b16 %v532, %v531
      %v572 = vpack.c.b16 %v534, %v533
      %v573 = vpack.c.b16 %v536, %v535
      %v574 = vpack.c.b16 %v538, %v537
      %v575 = vpack.c.b16 %v540, %v539
      %v576 = vpack.c.b16 %v542, %v541
      %v577 = vpack.c.b16 %v544, %v543
      %v578 = vpack.c.b16 %v546, %v545
      %v579 = vpack.c.b16 %v548, %v547
      %v580 = vpack.c.b16 %v550, %v549
      %v581 = vpack.c.b16 %v552, %v551
      %v582 = vpack.c.b16 %v554, %v553
      %v583 = vpack.c.b16 %v556, %v555
      %v584 = vpack.c.b16 %v558, %v557
      %v585 = vpack.c.b16 %v560, %v559
      %v586 = vpack.c.b16 %v562, %v561
      %v627 = vunpack.c.l.b16 %v451
      %v628 = vunpack.c.l.b16 %v452
      %v629 = vunpack.c.l.b16 %v453
      %v630 = vunpack.c.l.b16 %v454
      %v631 = vunpack.c.l.b16 %v455
      %v632 = vunpack.c.l.b16 %v456
      %v633 = vunpack.c.l.b16 %v457
      %v634 = vunpack.c.l.b16 %v458
      %v635 = vunpack.c.l.b16 %v459
      %v636 = vunpack.c.l.b16 %v460
      %v637 = vunpack.c.l.b16 %v461
      %v638 = vunpack.c.l.b16 %v462
      %v639 = vunpack.c.l.b16 %v463
      %v640 = vunpack.c.l.b16 %v464
      %v641 = vunpack.c.l.b16 %v465
      %v642 = vunpack.c.l.b16 %v466
      %v643 = vpack.c.b16 %v628, %v627
      %v644 = vpack.c.b16 %v630, %v629
      %v645 = vpack.c.b16 %v632, %v631
      %v646 = vpack.c.b16 %v634, %v633
      %v647 = vpack.c.b16 %v636, %v635
      %v648 = vpack.c.b16 %v638, %v637
      %v649 = vpack.c.b16 %v640, %v639
      %v650 = vpack.c.b16 %v642, %v641
      %659 = vmatpush.bf16.msra.mxu0 %v650
      %660 = vmatpush.bf16.msra.mxu0 %v649
      %661 = vmatpush.bf16.msra.mxu0 %v648
      %662 = vmatpush.bf16.msra.mxu0 %v647
      %663 = vmatpush.bf16.msra.mxu0 %v646
      %664 = vmatpush.bf16.msra.mxu0 %v645
      %665 = vmatpush.bf16.msra.mxu0 %v644
      %666 = vmatpush.bf16.msra.mxu0 %v643
      %667 = vmatmul.bf16.gmra.mxu0 %v563
      %v668 = vpop.f32.mrf.mxu0
      %v669 = vadd.f32 0.0, %v668
      %v670 = vpop.f32.mrf.mxu0
      %v671 = vadd.f32 0.0, %v670
      %672 = vmatmul.bf16.gmra.mxu0 %v564
      %v673 = vpop.f32.mrf.mxu0
      %v674 = vadd.f32 0.0, %v673
      %v675 = vpop.f32.mrf.mxu0
      %v676 = vadd.f32 0.0, %v675
      %677 = vmatmul.bf16.gmra.mxu0 %v565
      %v678 = vpop.f32.mrf.mxu0
      %v679 = vadd.f32 0.0, %v678
      %v680 = vpop.f32.mrf.mxu0
      %v681 = vadd.f32 0.0, %v680
      %682 = vmatmul.bf16.gmra.mxu0 %v566
      %v683 = vpop.f32.mrf.mxu0
      %v684 = vadd.f32 0.0, %v683
      %v685 = vpop.f32.mrf.mxu0
      %v686 = vadd.f32 0.0, %v685
      %687 = vmatmul.bf16.gmra.mxu0 %v567
      %v688 = vpop.f32.mrf.mxu0
      %v689 = vadd.f32 0.0, %v688
      %v690 = vpop.f32.mrf.mxu0
      %v691 = vadd.f32 0.0, %v690
      %692 = vmatmul.bf16.gmra.mxu0 %v568
      %v693 = vpop.f32.mrf.mxu0
      %v694 = vadd.f32 0.0, %v693
      %v695 = vpop.f32.mrf.mxu0
      %v696 = vadd.f32 0.0, %v695
      %697 = vmatmul.bf16.gmra.mxu0 %v569
      %v698 = vpop.f32.mrf.mxu0
      %v699 = vadd.f32 0.0, %v698
      %v700 = vpop.f32.mrf.mxu0
      %v701 = vadd.f32 0.0, %v700
      %702 = vmatmul.bf16.gmra.mxu0 %v570
      %v703 = vpop.f32.mrf.mxu0
      %v704 = vadd.f32 0.0, %v703
      %v705 = vpop.f32.mrf.mxu0
      %v706 = vadd.f32 0.0, %v705
      %707 = vmatmul.bf16.gmra.mxu0 %v571
      %v708 = vpop.f32.mrf.mxu0
      %v709 = vadd.f32 0.0, %v708
      %v710 = vpop.f32.mrf.mxu0
      %v711 = vadd.f32 0.0, %v710
      %712 = vmatmul.bf16.gmra.mxu0 %v572
      %v713 = vpop.f32.mrf.mxu0
      %v714 = vadd.f32 0.0, %v713
      %v715 = vpop.f32.mrf.mxu0
      %v716 = vadd.f32 0.0, %v715
      %717 = vmatmul.bf16.gmra.mxu0 %v573
      %v718 = vpop.f32.mrf.mxu0
      %v719 = vadd.f32 0.0, %v718
      %v720 = vpop.f32.mrf.mxu0
      %v721 = vadd.f32 0.0, %v720
      %722 = vmatmul.bf16.gmra.mxu0 %v574
      %v723 = vpop.f32.mrf.mxu0
      %v724 = vadd.f32 0.0, %v723
      %v725 = vpop.f32.mrf.mxu0
      %v726 = vadd.f32 0.0, %v725
      %727 = vmatmul.bf16.gmra.mxu0 %v575
      %v728 = vpop.f32.mrf.mxu0
      %v729 = vadd.f32 0.0, %v728
      %v730 = vpop.f32.mrf.mxu0
      %v731 = vadd.f32 0.0, %v730
      %732 = vmatmul.bf16.gmra.mxu0 %v576
      %v733 = vpop.f32.mrf.mxu0
      %v734 = vadd.f32 0.0, %v733
      %v735 = vpop.f32.mrf.mxu0
      %v736 = vadd.f32 0.0, %v735
      %737 = vmatmul.bf16.gmra.mxu0 %v577
      %v738 = vpop.f32.mrf.mxu0
      %v739 = vadd.f32 0.0, %v738
      %v740 = vpop.f32.mrf.mxu0
      %v741 = vadd.f32 0.0, %v740
      %742 = vmatmul.bf16.gmra.mxu0 %v578
      %v743 = vpop.f32.mrf.mxu0
      %v744 = vadd.f32 0.0, %v743
      %v745 = vpop.f32.mrf.mxu0
      %v746 = vadd.f32 0.0, %v745
      %747 = vmatmul.bf16.gmra.mxu0 %v579
      %v748 = vpop.f32.mrf.mxu0
      %v749 = vadd.f32 0.0, %v748
      %v750 = vpop.f32.mrf.mxu0
      %v751 = vadd.f32 0.0, %v750
      %752 = vmatmul.bf16.gmra.mxu0 %v580
      %v753 = vpop.f32.mrf.mxu0
      %v754 = vadd.f32 0.0, %v753
      %v755 = vpop.f32.mrf.mxu0
      %v756 = vadd.f32 0.0, %v755
      %757 = vmatmul.bf16.gmra.mxu0 %v581
      %v758 = vpop.f32.mrf.mxu0
      %v759 = vadd.f32 0.0, %v758
      %v760 = vpop.f32.mrf.mxu0
      %v761 = vadd.f32 0.0, %v760
      %762 = vmatmul.bf16.gmra.mxu0 %v582
      %v763 = vpop.f32.mrf.mxu0
      %v764 = vadd.f32 0.0, %v763
      %v765 = vpop.f32.mrf.mxu0
      %v766 = vadd.f32 0.0, %v765
      %767 = vmatmul.bf16.gmra.mxu0 %v583
      %v768 = vpop.f32.mrf.mxu0
      %v769 = vadd.f32 0.0, %v768
      %v770 = vpop.f32.mrf.mxu0
      %v771 = vadd.f32 0.0, %v770
      %772 = vmatmul.bf16.gmra.mxu0 %v584
      %v773 = vpop.f32.mrf.mxu0
      %v774 = vadd.f32 0.0, %v773
      %v775 = vpop.f32.mrf.mxu0
      %v776 = vadd.f32 0.0, %v775
      %777 = vmatmul.bf16.gmra.mxu0 %v585
      %v778 = vpop.f32.mrf.mxu0
      %v779 = vadd.f32 0.0, %v778
      %v780 = vpop.f32.mrf.mxu0
      %v781 = vadd.f32 0.0, %v780
      %782 = vmatmul.bf16.gmra.mxu0 %v586
      %v783 = vpop.f32.mrf.mxu0
      %v784 = vadd.f32 0.0, %v783
      %v785 = vpop.f32.mrf.mxu0
      %v786 = vadd.f32 0.0, %v785
      %787 = vdwg.mxu0
      %v788 = vadd.f32 %v349, %v669
      %v789 = vadd.f32 %v350, %v671
      %v790 = vadd.f32 %v351, %v674
      %v791 = vadd.f32 %v352, %v676
      %v792 = vadd.f32 %v353, %v679
      %v793 = vadd.f32 %v354, %v681
      %v794 = vadd.f32 %v355, %v684
      %v795 = vadd.f32 %v356, %v686
      %v796 = vadd.f32 %v357, %v689
      %v797 = vadd.f32 %v358, %v691
      %v798 = vadd.f32 %v359, %v694
      %v799 = vadd.f32 %v360, %v696
      %v800 = vadd.f32 %v361, %v699
      %v801 = vadd.f32 %v362, %v701
      %v802 = vadd.f32 %v363, %v704
      %v803 = vadd.f32 %v364, %v706
      %v804 = vadd.f32 %v365, %v709
      %v805 = vadd.f32 %v366, %v711
      %v806 = vadd.f32 %v367, %v714
      %v807 = vadd.f32 %v368, %v716
      %v808 = vadd.f32 %v369, %v719
      %v809 = vadd.f32 %v370, %v721
      %v810 = vadd.f32 %v371, %v724
      %v811 = vadd.f32 %v372, %v726
      %v812 = vadd.f32 %v373, %v729
      %v813 = vadd.f32 %v374, %v731
      %v814 = vadd.f32 %v375, %v734
      %v815 = vadd.f32 %v376, %v736
      %v816 = vadd.f32 %v377, %v739
      %v817 = vadd.f32 %v378, %v741
      %v818 = vadd.f32 %v379, %v744
      %v819 = vadd.f32 %v380, %v746
      %v820 = vadd.f32 %v381, %v749
      %v821 = vadd.f32 %v382, %v751
      %v822 = vadd.f32 %v383, %v754
      %v823 = vadd.f32 %v384, %v756
      %v824 = vadd.f32 %v385, %v759
      %v825 = vadd.f32 %v386, %v761
      %v826 = vadd.f32 %v387, %v764
      %v827 = vadd.f32 %v388, %v766
      %v828 = vadd.f32 %v389, %v769
      %v829 = vadd.f32 %v390, %v771
      %v830 = vadd.f32 %v391, %v774
      %v831 = vadd.f32 %v392, %v776
      %v832 = vadd.f32 %v393, %v779
      %v833 = vadd.f32 %v394, %v781
      %v834 = vadd.f32 %v395, %v784
      %v835 = vadd.f32 %v396, %v786
      %s836 = scalar_lea.vmem %s281, 192
      %v837 = vld [vmem:[%s836] sm:$0xf]
      %v838 = vld [vmem:[%s836 + $0x4] sm:$0xf]
      %v839 = vld [vmem:[%s836 + $0x8] sm:$0xf]
      %v840 = vld [vmem:[%s836 + $0xc] sm:$0xf]
      %v841 = vld [vmem:[%s836 + $0x10] sm:$0xf]
      %v842 = vld [vmem:[%s836 + $0x14] sm:$0xf]
      %v843 = vld [vmem:[%s836 + $0x18] sm:$0xf]
      %v844 = vld [vmem:[%s836 + $0x1c] sm:$0xf]
      %v845 = vld [vmem:[%s836 + $0x20] sm:$0xf]
      %v846 = vld [vmem:[%s836 + $0x24] sm:$0xf]
      %v847 = vld [vmem:[%s836 + $0x28] sm:$0xf]
      %v848 = vld [vmem:[%s836 + $0x2c] sm:$0xf]
      %v849 = vld [vmem:[%s836 + $0x30] sm:$0xf]
      %v850 = vld [vmem:[%s836 + $0x34] sm:$0xf]
      %v851 = vld [vmem:[%s836 + $0x38] sm:$0xf]
      %v852 = vld [vmem:[%s836 + $0x3c] sm:$0xf]
      %v856 = vunpack.c.l.b16 %v445
      %v857 = vunpack.c.l.b16 %v446
      %v858 = vunpack.c.l.b16 %v447
      %v859 = vpack.c.b16 %v519, %v518
      %v860 = vpack.c.b16 %v521, %v520
      %v861 = vpack.c.b16 %v523, %v522
      %v862 = vpack.c.b16 %v525, %v524
      %v863 = vpack.c.b16 %v527, %v526
      %v864 = vpack.c.b16 %v529, %v528
      %v865 = vpack.c.b16 %v531, %v530
      %v866 = vpack.c.b16 %v533, %v532
      %v867 = vpack.c.b16 %v535, %v534
      %v868 = vpack.c.b16 %v537, %v536
      %v869 = vpack.c.b16 %v539, %v538
      %v870 = vpack.c.b16 %v541, %v540
      %v871 = vpack.c.b16 %v543, %v542
      %v872 = vpack.c.b16 %v545, %v544
      %v873 = vpack.c.b16 %v547, %v546
      %v874 = vpack.c.b16 %v549, %v548
      %v875 = vpack.c.b16 %v551, %v550
      %v876 = vpack.c.b16 %v553, %v552
      %v877 = vpack.c.b16 %v555, %v554
      %v878 = vpack.c.b16 %v557, %v556
      %v879 = vpack.c.b16 %v559, %v558
      %v880 = vpack.c.b16 %v561, %v560
      %v881 = vpack.c.b16 %v856, %v562
      %v882 = vpack.c.b16 %v858, %v857
      %v923 = vunpack.c.l.b16 %v837
      %v924 = vunpack.c.l.b16 %v838
      %v925 = vunpack.c.l.b16 %v839
      %v926 = vunpack.c.l.b16 %v840
      %v927 = vunpack.c.l.b16 %v841
      %v928 = vunpack.c.l.b16 %v842
      %v929 = vunpack.c.l.b16 %v843
      %v930 = vunpack.c.l.b16 %v844
      %v931 = vunpack.c.l.b16 %v845
      %v932 = vunpack.c.l.b16 %v846
      %v933 = vunpack.c.l.b16 %v847
      %v934 = vunpack.c.l.b16 %v848
      %v935 = vunpack.c.l.b16 %v849
      %v936 = vunpack.c.l.b16 %v850
      %v937 = vunpack.c.l.b16 %v851
      %v938 = vunpack.c.l.b16 %v852
      %v939 = vpack.c.b16 %v924, %v923
      %v940 = vpack.c.b16 %v926, %v925
      %v941 = vpack.c.b16 %v928, %v927
      %v942 = vpack.c.b16 %v930, %v929
      %v943 = vpack.c.b16 %v932, %v931
      %v944 = vpack.c.b16 %v934, %v933
      %v945 = vpack.c.b16 %v936, %v935
      %v946 = vpack.c.b16 %v938, %v937
      %955 = vmatpush.bf16.msra.mxu0 %v946
      %956 = vmatpush.bf16.msra.mxu0 %v945
      %957 = vmatpush.bf16.msra.mxu0 %v944
      %958 = vmatpush.bf16.msra.mxu0 %v943
      %959 = vmatpush.bf16.msra.mxu0 %v942
      %960 = vmatpush.bf16.msra.mxu0 %v941
      %961 = vmatpush.bf16.msra.mxu0 %v940
      %962 = vmatpush.bf16.msra.mxu0 %v939
      %963 = vmatmul.bf16.gmra.mxu0 %v859
      %v964 = vpop.f32.mrf.mxu0
      %v965 = vadd.f32 0.0, %v964
      %v966 = vpop.f32.mrf.mxu0
      %v967 = vadd.f32 0.0, %v966
      %968 = vmatmul.bf16.gmra.mxu0 %v860
      %v969 = vpop.f32.mrf.mxu0
      %v970 = vadd.f32 0.0, %v969
      %v971 = vpop.f32.mrf.mxu0
      %v972 = vadd.f32 0.0, %v971
      %973 = vmatmul.bf16.gmra.mxu0 %v861
      %v974 = vpop.f32.mrf.mxu0
      %v975 = vadd.f32 0.0, %v974
      %v976 = vpop.f32.mrf.mxu0
      %v977 = vadd.f32 0.0, %v976
      %978 = vmatmul.bf16.gmra.mxu0 %v862
      %v979 = vpop.f32.mrf.mxu0
      %v980 = vadd.f32 0.0, %v979
      %v981 = vpop.f32.mrf.mxu0
      %v982 = vadd.f32 0.0, %v981
      %983 = vmatmul.bf16.gmra.mxu0 %v863
      %v984 = vpop.f32.mrf.mxu0
      %v985 = vadd.f32 0.0, %v984
      %v986 = vpop.f32.mrf.mxu0
      %v987 = vadd.f32 0.0, %v986
      %988 = vmatmul.bf16.gmra.mxu0 %v864
      %v989 = vpop.f32.mrf.mxu0
      %v990 = vadd.f32 0.0, %v989
      %v991 = vpop.f32.mrf.mxu0
      %v992 = vadd.f32 0.0, %v991
      %993 = vmatmul.bf16.gmra.mxu0 %v865
      %v994 = vpop.f32.mrf.mxu0
      %v995 = vadd.f32 0.0, %v994
      %v996 = vpop.f32.mrf.mxu0
      %v997 = vadd.f32 0.0, %v996
      %998 = vmatmul.bf16.gmra.mxu0 %v866
      %v999 = vpop.f32.mrf.mxu0
      %v1000 = vadd.f32 0.0, %v999
      %v1001 = vpop.f32.mrf.mxu0
      %v1002 = vadd.f32 0.0, %v1001
      %1003 = vmatmul.bf16.gmra.mxu0 %v867
      %v1004 = vpop.f32.mrf.mxu0
      %v1005 = vadd.f32 0.0, %v1004
      %v1006 = vpop.f32.mrf.mxu0
      %v1007 = vadd.f32 0.0, %v1006
      %1008 = vmatmul.bf16.gmra.mxu0 %v868
      %v1009 = vpop.f32.mrf.mxu0
      %v1010 = vadd.f32 0.0, %v1009
      %v1011 = vpop.f32.mrf.mxu0
      %v1012 = vadd.f32 0.0, %v1011
      %1013 = vmatmul.bf16.gmra.mxu0 %v869
      %v1014 = vpop.f32.mrf.mxu0
      %v1015 = vadd.f32 0.0, %v1014
      %v1016 = vpop.f32.mrf.mxu0
      %v1017 = vadd.f32 0.0, %v1016
      %1018 = vmatmul.bf16.gmra.mxu0 %v870
      %v1019 = vpop.f32.mrf.mxu0
      %v1020 = vadd.f32 0.0, %v1019
      %v1021 = vpop.f32.mrf.mxu0
      %v1022 = vadd.f32 0.0, %v1021
      %1023 = vmatmul.bf16.gmra.mxu0 %v871
      %v1024 = vpop.f32.mrf.mxu0
      %v1025 = vadd.f32 0.0, %v1024
      %v1026 = vpop.f32.mrf.mxu0
      %v1027 = vadd.f32 0.0, %v1026
      %1028 = vmatmul.bf16.gmra.mxu0 %v872
      %v1029 = vpop.f32.mrf.mxu0
      %v1030 = vadd.f32 0.0, %v1029
      %v1031 = vpop.f32.mrf.mxu0
      %v1032 = vadd.f32 0.0, %v1031
      %1033 = vmatmul.bf16.gmra.mxu0 %v873
      %v1034 = vpop.f32.mrf.mxu0
      %v1035 = vadd.f32 0.0, %v1034
      %v1036 = vpop.f32.mrf.mxu0
      %v1037 = vadd.f32 0.0, %v1036
      %1038 = vmatmul.bf16.gmra.mxu0 %v874
      %v1039 = vpop.f32.mrf.mxu0
      %v1040 = vadd.f32 0.0, %v1039
      %v1041 = vpop.f32.mrf.mxu0
      %v1042 = vadd.f32 0.0, %v1041
      %1043 = vmatmul.bf16.gmra.mxu0 %v875
      %v1044 = vpop.f32.mrf.mxu0
      %v1045 = vadd.f32 0.0, %v1044
      %v1046 = vpop.f32.mrf.mxu0
      %v1047 = vadd.f32 0.0, %v1046
      %1048 = vmatmul.bf16.gmra.mxu0 %v876
      %v1049 = vpop.f32.mrf.mxu0
      %v1050 = vadd.f32 0.0, %v1049
      %v1051 = vpop.f32.mrf.mxu0
      %v1052 = vadd.f32 0.0, %v1051
      %1053 = vmatmul.bf16.gmra.mxu0 %v877
      %v1054 = vpop.f32.mrf.mxu0
      %v1055 = vadd.f32 0.0, %v1054
      %v1056 = vpop.f32.mrf.mxu0
      %v1057 = vadd.f32 0.0, %v1056
      %1058 = vmatmul.bf16.gmra.mxu0 %v878
      %v1059 = vpop.f32.mrf.mxu0
      %v1060 = vadd.f32 0.0, %v1059
      %v1061 = vpop.f32.mrf.mxu0
      %v1062 = vadd.f32 0.0, %v1061
      %1063 = vmatmul.bf16.gmra.mxu0 %v879
      %v1064 = vpop.f32.mrf.mxu0
      %v1065 = vadd.f32 0.0, %v1064
      %v1066 = vpop.f32.mrf.mxu0
      %v1067 = vadd.f32 0.0, %v1066
      %1068 = vmatmul.bf16.gmra.mxu0 %v880
      %v1069 = vpop.f32.mrf.mxu0
      %v1070 = vadd.f32 0.0, %v1069
      %v1071 = vpop.f32.mrf.mxu0
      %v1072 = vadd.f32 0.0, %v1071
      %1073 = vmatmul.bf16.gmra.mxu0 %v881
      %v1074 = vpop.f32.mrf.mxu0
      %v1075 = vadd.f32 0.0, %v1074
      %v1076 = vpop.f32.mrf.mxu0
      %v1077 = vadd.f32 0.0, %v1076
      %1078 = vmatmul.bf16.gmra.mxu0 %v882
      %v1079 = vpop.f32.mrf.mxu0
      %v1080 = vadd.f32 0.0, %v1079
      %v1081 = vpop.f32.mrf.mxu0
      %v1082 = vadd.f32 0.0, %v1081
      %1083 = vdwg.mxu0
      %v1084 = vadd.f32 %v788, %v965
      %v1085 = vadd.f32 %v789, %v967
      %v1086 = vadd.f32 %v790, %v970
      %v1087 = vadd.f32 %v791, %v972
      %v1088 = vadd.f32 %v792, %v975
      %v1089 = vadd.f32 %v793, %v977
      %v1090 = vadd.f32 %v794, %v980
      %v1091 = vadd.f32 %v795, %v982
      %v1092 = vadd.f32 %v796, %v985
      %v1093 = vadd.f32 %v797, %v987
      %v1094 = vadd.f32 %v798, %v990
      %v1095 = vadd.f32 %v799, %v992
      %v1096 = vadd.f32 %v800, %v995
      %v1097 = vadd.f32 %v801, %v997
      %v1098 = vadd.f32 %v802, %v1000
      %v1099 = vadd.f32 %v803, %v1002
      %v1100 = vadd.f32 %v804, %v1005
      %v1101 = vadd.f32 %v805, %v1007
      %v1102 = vadd.f32 %v806, %v1010
      %v1103 = vadd.f32 %v807, %v1012
      %v1104 = vadd.f32 %v808, %v1015
      %v1105 = vadd.f32 %v809, %v1017
      %v1106 = vadd.f32 %v810, %v1020
      %v1107 = vadd.f32 %v811, %v1022
      %v1108 = vadd.f32 %v812, %v1025
      %v1109 = vadd.f32 %v813, %v1027
      %v1110 = vadd.f32 %v814, %v1030
      %v1111 = vadd.f32 %v815, %v1032
      %v1112 = vadd.f32 %v816, %v1035
      %v1113 = vadd.f32 %v817, %v1037
      %v1114 = vadd.f32 %v818, %v1040
      %v1115 = vadd.f32 %v819, %v1042
      %v1116 = vadd.f32 %v820, %v1045
      %v1117 = vadd.f32 %v821, %v1047
      %v1118 = vadd.f32 %v822, %v1050
      %v1119 = vadd.f32 %v823, %v1052
      %v1120 = vadd.f32 %v824, %v1055
      %v1121 = vadd.f32 %v825, %v1057
      %v1122 = vadd.f32 %v826, %v1060
      %v1123 = vadd.f32 %v827, %v1062
      %v1124 = vadd.f32 %v828, %v1065
      %v1125 = vadd.f32 %v829, %v1067
      %v1126 = vadd.f32 %v830, %v1070
      %v1127 = vadd.f32 %v831, %v1072
      %v1128 = vadd.f32 %v832, %v1075
      %v1129 = vadd.f32 %v833, %v1077
      %v1130 = vadd.f32 %v834, %v1080
      %v1131 = vadd.f32 %v835, %v1082
      %s1132 = scalar_lea.vmem %s281, 384
      %v1133 = vld [vmem:[%s1132] sm:$0xf]
      %v1134 = vld [vmem:[%s1132 + $0x4] sm:$0xf]
      %v1135 = vld [vmem:[%s1132 + $0x8] sm:$0xf]
      %v1136 = vld [vmem:[%s1132 + $0xc] sm:$0xf]
      %v1137 = vld [vmem:[%s1132 + $0x10] sm:$0xf]
      %v1138 = vld [vmem:[%s1132 + $0x14] sm:$0xf]
      %v1139 = vld [vmem:[%s1132 + $0x18] sm:$0xf]
      %v1140 = vld [vmem:[%s1132 + $0x1c] sm:$0xf]
      %v1141 = vld [vmem:[%s1132 + $0x20] sm:$0xf]
      %v1142 = vld [vmem:[%s1132 + $0x24] sm:$0xf]
      %v1143 = vld [vmem:[%s1132 + $0x28] sm:$0xf]
      %v1144 = vld [vmem:[%s1132 + $0x2c] sm:$0xf]
      %v1145 = vld [vmem:[%s1132 + $0x30] sm:$0xf]
      %v1146 = vld [vmem:[%s1132 + $0x34] sm:$0xf]
      %v1147 = vld [vmem:[%s1132 + $0x38] sm:$0xf]
      %v1148 = vld [vmem:[%s1132 + $0x3c] sm:$0xf]
      %v1152 = vunpack.c.l.b16 %v448
      %v1153 = vunpack.c.l.b16 %v449
      %v1154 = vunpack.c.l.b16 %v450
      %v1155 = vpack.c.b16 %v857, %v856
      %v1156 = vpack.c.b16 %v1152, %v858
      %v1157 = vpack.c.b16 %v1154, %v1153
      %v1177 = vunpack.c.l.b16 %v1133
      %v1178 = vunpack.c.l.b16 %v1134
      %v1179 = vunpack.c.l.b16 %v1135
      %v1180 = vunpack.c.l.b16 %v1136
      %v1181 = vunpack.c.l.b16 %v1137
      %v1182 = vunpack.c.l.b16 %v1138
      %v1183 = vunpack.c.l.b16 %v1139
      %v1184 = vunpack.c.l.b16 %v1140
      %v1185 = vunpack.c.l.b16 %v1141
      %v1186 = vunpack.c.l.b16 %v1142
      %v1187 = vunpack.c.l.b16 %v1143
      %v1188 = vunpack.c.l.b16 %v1144
      %v1189 = vunpack.c.l.b16 %v1145
      %v1190 = vunpack.c.l.b16 %v1146
      %v1191 = vunpack.c.l.b16 %v1147
      %v1192 = vunpack.c.l.b16 %v1148
      %v1193 = vpack.c.b16 %v1178, %v1177
      %v1194 = vpack.c.b16 %v1180, %v1179
      %v1195 = vpack.c.b16 %v1182, %v1181
      %v1196 = vpack.c.b16 %v1184, %v1183
      %v1197 = vpack.c.b16 %v1186, %v1185
      %v1198 = vpack.c.b16 %v1188, %v1187
      %v1199 = vpack.c.b16 %v1190, %v1189
      %v1200 = vpack.c.b16 %v1192, %v1191
      %1209 = vmatpush.bf16.msra.mxu0 %v1200
      %1210 = vmatpush.bf16.msra.mxu0 %v1199
      %1211 = vmatpush.bf16.msra.mxu0 %v1198
      %1212 = vmatpush.bf16.msra.mxu0 %v1197
      %1213 = vmatpush.bf16.msra.mxu0 %v1196
      %1214 = vmatpush.bf16.msra.mxu0 %v1195
      %1215 = vmatpush.bf16.msra.mxu0 %v1194
      %1216 = vmatpush.bf16.msra.mxu0 %v1193
      %1217 = vmatmul.bf16.gmra.mxu0 %v566
      %v1218 = vpop.f32.mrf.mxu0
      %v1219 = vadd.f32 0.0, %v1218
      %v1220 = vpop.f32.mrf.mxu0
      %v1221 = vadd.f32 0.0, %v1220
      %1222 = vmatmul.bf16.gmra.mxu0 %v567
      %v1223 = vpop.f32.mrf.mxu0
      %v1224 = vadd.f32 0.0, %v1223
      %v1225 = vpop.f32.mrf.mxu0
      %v1226 = vadd.f32 0.0, %v1225
      %1227 = vmatmul.bf16.gmra.mxu0 %v568
      %v1228 = vpop.f32.mrf.mxu0
      %v1229 = vadd.f32 0.0, %v1228
      %v1230 = vpop.f32.mrf.mxu0
      %v1231 = vadd.f32 0.0, %v1230
      %1232 = vmatmul.bf16.gmra.mxu0 %v569
      %v1233 = vpop.f32.mrf.mxu0
      %v1234 = vadd.f32 0.0, %v1233
      %v1235 = vpop.f32.mrf.mxu0
      %v1236 = vadd.f32 0.0, %v1235
      %1237 = vmatmul.bf16.gmra.mxu0 %v570
      %v1238 = vpop.f32.mrf.mxu0
      %v1239 = vadd.f32 0.0, %v1238
      %v1240 = vpop.f32.mrf.mxu0
      %v1241 = vadd.f32 0.0, %v1240
      %1242 = vmatmul.bf16.gmra.mxu0 %v571
      %v1243 = vpop.f32.mrf.mxu0
      %v1244 = vadd.f32 0.0, %v1243
      %v1245 = vpop.f32.mrf.mxu0
      %v1246 = vadd.f32 0.0, %v1245
      %1247 = vmatmul.bf16.gmra.mxu0 %v572
      %v1248 = vpop.f32.mrf.mxu0
      %v1249 = vadd.f32 0.0, %v1248
      %v1250 = vpop.f32.mrf.mxu0
      %v1251 = vadd.f32 0.0, %v1250
      %1252 = vmatmul.bf16.gmra.mxu0 %v573
      %v1253 = vpop.f32.mrf.mxu0
      %v1254 = vadd.f32 0.0, %v1253
      %v1255 = vpop.f32.mrf.mxu0
      %v1256 = vadd.f32 0.0, %v1255
      %1257 = vmatmul.bf16.gmra.mxu0 %v574
      %v1258 = vpop.f32.mrf.mxu0
      %v1259 = vadd.f32 0.0, %v1258
      %v1260 = vpop.f32.mrf.mxu0
      %v1261 = vadd.f32 0.0, %v1260
      %1262 = vmatmul.bf16.gmra.mxu0 %v575
      %v1263 = vpop.f32.mrf.mxu0
      %v1264 = vadd.f32 0.0, %v1263
      %v1265 = vpop.f32.mrf.mxu0
      %v1266 = vadd.f32 0.0, %v1265
      %1267 = vmatmul.bf16.gmra.mxu0 %v576
      %v1268 = vpop.f32.mrf.mxu0
      %v1269 = vadd.f32 0.0, %v1268
      %v1270 = vpop.f32.mrf.mxu0
      %v1271 = vadd.f32 0.0, %v1270
      %1272 = vmatmul.bf16.gmra.mxu0 %v577
      %v1273 = vpop.f32.mrf.mxu0
      %v1274 = vadd.f32 0.0, %v1273
      %v1275 = vpop.f32.mrf.mxu0
      %v1276 = vadd.f32 0.0, %v1275
      %1277 = vmatmul.bf16.gmra.mxu0 %v578
      %v1278 = vpop.f32.mrf.mxu0
      %v1279 = vadd.f32 0.0, %v1278
      %v1280 = vpop.f32.mrf.mxu0
      %v1281 = vadd.f32 0.0, %v1280
      %1282 = vmatmul.bf16.gmra.mxu0 %v579
      %v1283 = vpop.f32.mrf.mxu0
      %v1284 = vadd.f32 0.0, %v1283
      %v1285 = vpop.f32.mrf.mxu0
      %v1286 = vadd.f32 0.0, %v1285
      %1287 = vmatmul.bf16.gmra.mxu0 %v580
      %v1288 = vpop.f32.mrf.mxu0
      %v1289 = vadd.f32 0.0, %v1288
      %v1290 = vpop.f32.mrf.mxu0
      %v1291 = vadd.f32 0.0, %v1290
      %1292 = vmatmul.bf16.gmra.mxu0 %v581
      %v1293 = vpop.f32.mrf.mxu0
      %v1294 = vadd.f32 0.0, %v1293
      %v1295 = vpop.f32.mrf.mxu0
      %v1296 = vadd.f32 0.0, %v1295
      %1297 = vmatmul.bf16.gmra.mxu0 %v582
      %v1298 = vpop.f32.mrf.mxu0
      %v1299 = vadd.f32 0.0, %v1298
      %v1300 = vpop.f32.mrf.mxu0
      %v1301 = vadd.f32 0.0, %v1300
      %1302 = vmatmul.bf16.gmra.mxu0 %v583
      %v1303 = vpop.f32.mrf.mxu0
      %v1304 = vadd.f32 0.0, %v1303
      %v1305 = vpop.f32.mrf.mxu0
      %v1306 = vadd.f32 0.0, %v1305
      %1307 = vmatmul.bf16.gmra.mxu0 %v584
      %v1308 = vpop.f32.mrf.mxu0
      %v1309 = vadd.f32 0.0, %v1308
      %v1310 = vpop.f32.mrf.mxu0
      %v1311 = vadd.f32 0.0, %v1310
      %1312 = vmatmul.bf16.gmra.mxu0 %v585
      %v1313 = vpop.f32.mrf.mxu0
      %v1314 = vadd.f32 0.0, %v1313
      %v1315 = vpop.f32.mrf.mxu0
      %v1316 = vadd.f32 0.0, %v1315
      %1317 = vmatmul.bf16.gmra.mxu0 %v586
      %v1318 = vpop.f32.mrf.mxu0
      %v1319 = vadd.f32 0.0, %v1318
      %v1320 = vpop.f32.mrf.mxu0
      %v1321 = vadd.f32 0.0, %v1320
      %1322 = vmatmul.bf16.gmra.mxu0 %v1155
      %v1323 = vpop.f32.mrf.mxu0
      %v1324 = vadd.f32 0.0, %v1323
      %v1325 = vpop.f32.mrf.mxu0
      %v1326 = vadd.f32 0.0, %v1325
      %1327 = vmatmul.bf16.gmra.mxu0 %v1156
      %v1328 = vpop.f32.mrf.mxu0
      %v1329 = vadd.f32 0.0, %v1328
      %v1330 = vpop.f32.mrf.mxu0
      %v1331 = vadd.f32 0.0, %v1330
      %1332 = vmatmul.bf16.gmra.mxu0 %v1157
      %v1333 = vpop.f32.mrf.mxu0
      %v1334 = vadd.f32 0.0, %v1333
      %v1335 = vpop.f32.mrf.mxu0
      %v1336 = vadd.f32 0.0, %v1335
      %1337 = vdwg.mxu0
      %v1338 = vadd.f32 %v1084, %v1219
      %v1339 = vadd.f32 %v1085, %v1221
      %v1340 = vadd.f32 %v1086, %v1224
      %v1341 = vadd.f32 %v1087, %v1226
      %v1342 = vadd.f32 %v1088, %v1229
      %v1343 = vadd.f32 %v1089, %v1231
      %v1344 = vadd.f32 %v1090, %v1234
      %v1345 = vadd.f32 %v1091, %v1236
      %v1346 = vadd.f32 %v1092, %v1239
      %v1347 = vadd.f32 %v1093, %v1241
      %v1348 = vadd.f32 %v1094, %v1244
      %v1349 = vadd.f32 %v1095, %v1246
      %v1350 = vadd.f32 %v1096, %v1249
      %v1351 = vadd.f32 %v1097, %v1251
      %v1352 = vadd.f32 %v1098, %v1254
      %v1353 = vadd.f32 %v1099, %v1256
      %v1354 = vadd.f32 %v1100, %v1259
      %v1355 = vadd.f32 %v1101, %v1261
      %v1356 = vadd.f32 %v1102, %v1264
      %v1357 = vadd.f32 %v1103, %v1266
      %v1358 = vadd.f32 %v1104, %v1269
      %v1359 = vadd.f32 %v1105, %v1271
      %v1360 = vadd.f32 %v1106, %v1274
      %v1361 = vadd.f32 %v1107, %v1276
      %v1362 = vadd.f32 %v1108, %v1279
      %v1363 = vadd.f32 %v1109, %v1281
      %v1364 = vadd.f32 %v1110, %v1284
      %v1365 = vadd.f32 %v1111, %v1286
      %v1366 = vadd.f32 %v1112, %v1289
      %v1367 = vadd.f32 %v1113, %v1291
      %v1368 = vadd.f32 %v1114, %v1294
      %v1369 = vadd.f32 %v1115, %v1296
      %v1370 = vadd.f32 %v1116, %v1299
      %v1371 = vadd.f32 %v1117, %v1301
      %v1372 = vadd.f32 %v1118, %v1304
      %v1373 = vadd.f32 %v1119, %v1306
      %v1374 = vadd.f32 %v1120, %v1309
      %v1375 = vadd.f32 %v1121, %v1311
      %v1376 = vadd.f32 %v1122, %v1314
      %v1377 = vadd.f32 %v1123, %v1316
      %v1378 = vadd.f32 %v1124, %v1319
      %v1379 = vadd.f32 %v1125, %v1321
      %v1380 = vadd.f32 %v1126, %v1324
      %v1381 = vadd.f32 %v1127, %v1326
      %v1382 = vadd.f32 %v1128, %v1329
      %v1383 = vadd.f32 %v1129, %v1331
      %v1384 = vadd.f32 %v1130, %v1334
      %v1385 = vadd.f32 %v1131, %v1336
      %v1386 = vld [vmem:[%s273] sm:$0xf]
      %v1387 = vld [vmem:[%s273 + $0x4] sm:$0xf]
      %v1388 = vld [vmem:[%s273 + $0x8] sm:$0xf]
      %v1389 = vld [vmem:[%s273 + $0xc] sm:$0xf]
      %v1390 = vld [vmem:[%s273 + $0x10] sm:$0xf]
      %v1391 = vld [vmem:[%s273 + $0x14] sm:$0xf]
      %v1392 = vld [vmem:[%s273 + $0x18] sm:$0xf]
      %v1393 = vld [vmem:[%s273 + $0x1c] sm:$0xf]
      %v1394 = vld [vmem:[%s273 + $0x20] sm:$0xf]
      %v1395 = vld [vmem:[%s273 + $0x24] sm:$0xf]
      %v1396 = vld [vmem:[%s273 + $0x28] sm:$0xf]
      %v1397 = vld [vmem:[%s273 + $0x2c] sm:$0xf]
      %v1398 = vld [vmem:[%s273 + $0x30] sm:$0xf]
      %v1399 = vld [vmem:[%s273 + $0x34] sm:$0xf]
      %v1400 = vld [vmem:[%s273 + $0x38] sm:$0xf]
      %v1401 = vld [vmem:[%s273 + $0x3c] sm:$0xf]
      %v1402 = vld [vmem:[%s273 + $0x40] sm:$0xf]
      %v1403 = vld [vmem:[%s273 + $0x44] sm:$0xf]
      %v1404 = vld [vmem:[%s273 + $0x48] sm:$0xf]
      %v1405 = vld [vmem:[%s273 + $0x4c] sm:$0xf]
      %v1406 = vld [vmem:[%s273 + $0x50] sm:$0xf]
      %v1407 = vld [vmem:[%s273 + $0x54] sm:$0xf]
      %v1408 = vld [vmem:[%s273 + $0x58] sm:$0xf]
      %v1409 = vld [vmem:[%s273 + $0x5c] sm:$0xf]
      %v1410 = vld [vmem:[%s273 + $0x60] sm:$0xf]
      %v1411 = vld [vmem:[%s273 + $0x64] sm:$0xf]
      %v1412 = vld [vmem:[%s273 + $0x68] sm:$0xf]
      %v1413 = vld [vmem:[%s273 + $0x6c] sm:$0xf]
      %v1414 = vld [vmem:[%s273 + $0x70] sm:$0xf]
      %v1415 = vld [vmem:[%s273 + $0x74] sm:$0xf]
      %v1416 = vld [vmem:[%s273 + $0x78] sm:$0xf]
      %v1417 = vld [vmem:[%s273 + $0x7c] sm:$0xf]
      %v1418 = vld [vmem:[%s273 + $0x80] sm:$0xf]
      %v1419 = vld [vmem:[%s273 + $0x84] sm:$0xf]
      %v1420 = vld [vmem:[%s273 + $0x88] sm:$0xf]
      %v1421 = vld [vmem:[%s273 + $0x8c] sm:$0xf]
      %v1422 = vld [vmem:[%s273 + $0x90] sm:$0xf]
      %v1423 = vld [vmem:[%s273 + $0x94] sm:$0xf]
      %v1424 = vld [vmem:[%s273 + $0x98] sm:$0xf]
      %v1425 = vld [vmem:[%s273 + $0x9c] sm:$0xf]
      %v1426 = vld [vmem:[%s273 + $0xa0] sm:$0xf]
      %v1427 = vld [vmem:[%s273 + $0xa4] sm:$0xf]
      %v1428 = vld [vmem:[%s273 + $0xa8] sm:$0xf]
      %v1429 = vld [vmem:[%s273 + $0xac] sm:$0xf]
      %v1430 = vld [vmem:[%s273 + $0xb0] sm:$0xf]
      %v1431 = vld [vmem:[%s273 + $0xb4] sm:$0xf]
      %v1432 = vld [vmem:[%s273 + $0xb8] sm:$0xf]
      %v1433 = vld [vmem:[%s273 + $0xbc] sm:$0xf]
      %v1434 = vld [vmem:[%s273 + $0xc0] sm:$0xf]
      %v1435 = vld [vmem:[%s273 + $0xc4] sm:$0xf]
      %v1436 = vld [vmem:[%s273 + $0xc8] sm:$0xf]
      %v1437 = vld [vmem:[%s273 + $0xcc] sm:$0xf]
      %v1438 = vld [vmem:[%s273 + $0xd0] sm:$0xf]
      %v1439 = vld [vmem:[%s273 + $0xd4] sm:$0xf]
      %v1440 = vld [vmem:[%s273 + $0xd8] sm:$0x1]
      %s1441 = scalar_lea.vmem %s281, 64
      %v1442 = vld [vmem:[%s1441] sm:$0xf]
      %v1443 = vld [vmem:[%s1441 + $0x4] sm:$0xf]
      %v1444 = vld [vmem:[%s1441 + $0x8] sm:$0xf]
      %v1445 = vld [vmem:[%s1441 + $0xc] sm:$0xf]
      %v1446 = vld [vmem:[%s1441 + $0x10] sm:$0xf]
      %v1447 = vld [vmem:[%s1441 + $0x14] sm:$0xf]
      %v1448 = vld [vmem:[%s1441 + $0x18] sm:$0xf]
      %v1449 = vld [vmem:[%s1441 + $0x1c] sm:$0xf]
      %v1450 = vld [vmem:[%s1441 + $0x20] sm:$0xf]
      %v1451 = vld [vmem:[%s1441 + $0x24] sm:$0xf]
      %v1452 = vld [vmem:[%s1441 + $0x28] sm:$0xf]
      %v1453 = vld [vmem:[%s1441 + $0x2c] sm:$0xf]
      %v1454 = vld [vmem:[%s1441 + $0x30] sm:$0xf]
      %v1455 = vld [vmem:[%s1441 + $0x34] sm:$0xf]
      %v1456 = vld [vmem:[%s1441 + $0x38] sm:$0xf]
      %v1457 = vld [vmem:[%s1441 + $0x3c] sm:$0xf]
      %v1507 = vunpack.c.l.b16 %v1386
      %v1508 = vunpack.c.l.b16 %v1387
      %v1509 = vunpack.c.l.b16 %v1388
      %v1510 = vunpack.c.l.b16 %v1389
      %v1511 = vunpack.c.l.b16 %v1390
      %v1512 = vunpack.c.l.b16 %v1391
      %v1513 = vunpack.c.l.b16 %v1392
      %v1514 = vunpack.c.l.b16 %v1393
      %v1515 = vunpack.c.l.b16 %v1394
      %v1516 = vunpack.c.l.b16 %v1395
      %v1517 = vunpack.c.l.b16 %v1396
      %v1518 = vunpack.c.l.b16 %v1397
      %v1519 = vunpack.c.l.b16 %v1398
      %v1520 = vunpack.c.l.b16 %v1399
      %v1521 = vunpack.c.l.b16 %v1400
      %v1522 = vunpack.c.l.b16 %v1401
      %v1523 = vunpack.c.l.b16 %v1402
      %v1524 = vunpack.c.l.b16 %v1403
      %v1525 = vunpack.c.l.b16 %v1404
      %v1526 = vunpack.c.l.b16 %v1405
      %v1527 = vunpack.c.l.b16 %v1406
      %v1528 = vunpack.c.l.b16 %v1407
      %v1529 = vunpack.c.l.b16 %v1408
      %v1530 = vunpack.c.l.b16 %v1409
      %v1531 = vunpack.c.l.b16 %v1410
      %v1532 = vunpack.c.l.b16 %v1411
      %v1533 = vunpack.c.l.b16 %v1412
      %v1534 = vunpack.c.l.b16 %v1413
      %v1535 = vunpack.c.l.b16 %v1414
      %v1536 = vunpack.c.l.b16 %v1415
      %v1537 = vunpack.c.l.b16 %v1416
      %v1538 = vunpack.c.l.b16 %v1417
      %v1539 = vunpack.c.l.b16 %v1418
      %v1540 = vunpack.c.l.b16 %v1419
      %v1541 = vunpack.c.l.b16 %v1420
      %v1542 = vunpack.c.l.b16 %v1421
      %v1543 = vunpack.c.l.b16 %v1422
      %v1544 = vunpack.c.l.b16 %v1423
      %v1545 = vunpack.c.l.b16 %v1424
      %v1546 = vunpack.c.l.b16 %v1425
      %v1547 = vunpack.c.l.b16 %v1426
      %v1548 = vunpack.c.l.b16 %v1427
      %v1549 = vunpack.c.l.b16 %v1428
      %v1550 = vunpack.c.l.b16 %v1429
      %v1551 = vunpack.c.l.b16 %v1430
      %v1552 = vunpack.c.l.b16 %v1431
      %v1553 = vunpack.c.l.b16 %v1432
      %v1554 = vunpack.c.l.b16 %v1433
      %v1555 = vunpack.c.l.b16 %v1434
      %v1556 = vpack.c.b16 %v1508, %v1507
      %v1557 = vpack.c.b16 %v1510, %v1509
      %v1558 = vpack.c.b16 %v1512, %v1511
      %v1559 = vpack.c.b16 %v1514, %v1513
      %v1560 = vpack.c.b16 %v1516, %v1515
      %v1561 = vpack.c.b16 %v1518, %v1517
      %v1562 = vpack.c.b16 %v1520, %v1519
      %v1563 = vpack.c.b16 %v1522, %v1521
      %v1564 = vpack.c.b16 %v1524, %v1523
      %v1565 = vpack.c.b16 %v1526, %v1525
      %v1566 = vpack.c.b16 %v1528, %v1527
      %v1567 = vpack.c.b16 %v1530, %v1529
      %v1568 = vpack.c.b16 %v1532, %v1531
      %v1569 = vpack.c.b16 %v1534, %v1533
      %v1570 = vpack.c.b16 %v1536, %v1535
      %v1571 = vpack.c.b16 %v1538, %v1537
      %v1572 = vpack.c.b16 %v1540, %v1539
      %v1573 = vpack.c.b16 %v1542, %v1541
      %v1574 = vpack.c.b16 %v1544, %v1543
      %v1575 = vpack.c.b16 %v1546, %v1545
      %v1576 = vpack.c.b16 %v1548, %v1547
      %v1577 = vpack.c.b16 %v1550, %v1549
      %v1578 = vpack.c.b16 %v1552, %v1551
      %v1579 = vpack.c.b16 %v1554, %v1553
      %v1580 = vpack.c.b16 %v1555, %v1555
      %vm1581 = vsmask.f32 7424
      %v1583 = vshrl.u32 %v1556, 16
      %v1585 = vshll.u32 %v1556, 16
      %v1587 = vrot.slane %v1585, 1
      %v1588 = vor.u32 %v1583, %v1587
      %v1590 = vshll.u32 %v1557, 16
      %v1592 = vrot.slane %v1590, 1
      %v1593 = vsel %vm1581, %v1588, %v1592
      %v1594 = vshrl.u32 %v1557, 16
      %v1596 = vor.u32 %v1594, %v1592
      %v1598 = vshll.u32 %v1558, 16
      %v1600 = vrot.slane %v1598, 1
      %v1601 = vsel %vm1581, %v1596, %v1600
      %v1602 = vshrl.u32 %v1558, 16
      %v1604 = vor.u32 %v1602, %v1600
      %v1606 = vshll.u32 %v1559, 16
      %v1608 = vrot.slane %v1606, 1
      %v1609 = vsel %vm1581, %v1604, %v1608
      %v1610 = vshrl.u32 %v1559, 16
      %v1612 = vor.u32 %v1610, %v1608
      %v1614 = vshll.u32 %v1560, 16
      %v1616 = vrot.slane %v1614, 1
      %v1617 = vsel %vm1581, %v1612, %v1616
      %v1618 = vshrl.u32 %v1560, 16
      %v1620 = vor.u32 %v1618, %v1616
      %v1622 = vshll.u32 %v1561, 16
      %v1624 = vrot.slane %v1622, 1
      %v1625 = vsel %vm1581, %v1620, %v1624
      %v1626 = vshrl.u32 %v1561, 16
      %v1628 = vor.u32 %v1626, %v1624
      %v1630 = vshll.u32 %v1562, 16
      %v1632 = vrot.slane %v1630, 1
      %v1633 = vsel %vm1581, %v1628, %v1632
      %v1634 = vshrl.u32 %v1562, 16
      %v1636 = vor.u32 %v1634, %v1632
      %v1638 = vshll.u32 %v1563, 16
      %v1640 = vrot.slane %v1638, 1
      %v1641 = vsel %vm1581, %v1636, %v1640
      %v1642 = vshrl.u32 %v1563, 16
      %v1644 = vor.u32 %v1642, %v1640
      %v1646 = vshll.u32 %v1564, 16
      %v1648 = vrot.slane %v1646, 1
      %v1649 = vsel %vm1581, %v1644, %v1648
      %v1650 = vshrl.u32 %v1564, 16
      %v1652 = vor.u32 %v1650, %v1648
      %v1654 = vshll.u32 %v1565, 16
      %v1656 = vrot.slane %v1654, 1
      %v1657 = vsel %vm1581, %v1652, %v1656
      %v1658 = vshrl.u32 %v1565, 16
      %v1660 = vor.u32 %v1658, %v1656
      %v1662 = vshll.u32 %v1566, 16
      %v1664 = vrot.slane %v1662, 1
      %v1665 = vsel %vm1581, %v1660, %v1664
      %v1666 = vshrl.u32 %v1566, 16
      %v1668 = vor.u32 %v1666, %v1664
      %v1670 = vshll.u32 %v1567, 16
      %v1672 = vrot.slane %v1670, 1
      %v1673 = vsel %vm1581, %v1668, %v1672
      %v1674 = vshrl.u32 %v1567, 16
      %v1676 = vor.u32 %v1674, %v1672
      %v1678 = vshll.u32 %v1568, 16
      %v1680 = vrot.slane %v1678, 1
      %v1681 = vsel %vm1581, %v1676, %v1680
      %v1682 = vshrl.u32 %v1568, 16
      %v1684 = vor.u32 %v1682, %v1680
      %v1686 = vshll.u32 %v1569, 16
      %v1688 = vrot.slane %v1686, 1
      %v1689 = vsel %vm1581, %v1684, %v1688
      %v1690 = vshrl.u32 %v1569, 16
      %v1692 = vor.u32 %v1690, %v1688
      %v1694 = vshll.u32 %v1570, 16
      %v1696 = vrot.slane %v1694, 1
      %v1697 = vsel %vm1581, %v1692, %v1696
      %v1698 = vshrl.u32 %v1570, 16
      %v1700 = vor.u32 %v1698, %v1696
      %v1702 = vshll.u32 %v1571, 16
      %v1704 = vrot.slane %v1702, 1
      %v1705 = vsel %vm1581, %v1700, %v1704
      %v1706 = vshrl.u32 %v1571, 16
      %v1708 = vor.u32 %v1706, %v1704
      %v1710 = vshll.u32 %v1572, 16
      %v1712 = vrot.slane %v1710, 1
      %v1713 = vsel %vm1581, %v1708, %v1712
      %v1714 = vshrl.u32 %v1572, 16
      %v1716 = vor.u32 %v1714, %v1712
      %v1718 = vshll.u32 %v1573, 16
      %v1720 = vrot.slane %v1718, 1
      %v1721 = vsel %vm1581, %v1716, %v1720
      %v1722 = vshrl.u32 %v1573, 16
      %v1724 = vor.u32 %v1722, %v1720
      %v1726 = vshll.u32 %v1574, 16
      %v1728 = vrot.slane %v1726, 1
      %v1729 = vsel %vm1581, %v1724, %v1728
      %v1730 = vshrl.u32 %v1574, 16
      %v1732 = vor.u32 %v1730, %v1728
      %v1734 = vshll.u32 %v1575, 16
      %v1736 = vrot.slane %v1734, 1
      %v1737 = vsel %vm1581, %v1732, %v1736
      %v1738 = vshrl.u32 %v1575, 16
      %v1740 = vor.u32 %v1738, %v1736
      %v1742 = vshll.u32 %v1576, 16
      %v1744 = vrot.slane %v1742, 1
      %v1745 = vsel %vm1581, %v1740, %v1744
      %v1746 = vshrl.u32 %v1576, 16
      %v1748 = vor.u32 %v1746, %v1744
      %v1750 = vshll.u32 %v1577, 16
      %v1752 = vrot.slane %v1750, 1
      %v1753 = vsel %vm1581, %v1748, %v1752
      %v1754 = vshrl.u32 %v1577, 16
      %v1756 = vor.u32 %v1754, %v1752
      %v1758 = vshll.u32 %v1578, 16
      %v1760 = vrot.slane %v1758, 1
      %v1761 = vsel %vm1581, %v1756, %v1760
      %v1762 = vshrl.u32 %v1578, 16
      %v1764 = vor.u32 %v1762, %v1760
      %v1766 = vshll.u32 %v1579, 16
      %v1768 = vrot.slane %v1766, 1
      %v1769 = vsel %vm1581, %v1764, %v1768
      %v1770 = vshrl.u32 %v1579, 16
      %v1772 = vor.u32 %v1770, %v1768
      %v1774 = vshll.u32 %v1580, 16
      %v1776 = vrot.slane %v1774, 1
      %v1777 = vsel %vm1581, %v1772, %v1776
      %v1818 = vunpack.c.l.b16 %v1442
      %v1819 = vunpack.c.l.b16 %v1443
      %v1820 = vunpack.c.l.b16 %v1444
      %v1821 = vunpack.c.l.b16 %v1445
      %v1822 = vunpack.c.l.b16 %v1446
      %v1823 = vunpack.c.l.b16 %v1447
      %v1824 = vunpack.c.l.b16 %v1448
      %v1825 = vunpack.c.l.b16 %v1449
      %v1826 = vunpack.c.l.b16 %v1450
      %v1827 = vunpack.c.l.b16 %v1451
      %v1828 = vunpack.c.l.b16 %v1452
      %v1829 = vunpack.c.l.b16 %v1453
      %v1830 = vunpack.c.l.b16 %v1454
      %v1831 = vunpack.c.l.b16 %v1455
      %v1832 = vunpack.c.l.b16 %v1456
      %v1833 = vunpack.c.l.b16 %v1457
      %v1834 = vpack.c.b16 %v1819, %v1818
      %v1835 = vpack.c.b16 %v1821, %v1820
      %v1836 = vpack.c.b16 %v1823, %v1822
      %v1837 = vpack.c.b16 %v1825, %v1824
      %v1838 = vpack.c.b16 %v1827, %v1826
      %v1839 = vpack.c.b16 %v1829, %v1828
      %v1840 = vpack.c.b16 %v1831, %v1830
      %v1841 = vpack.c.b16 %v1833, %v1832
      %1850 = vmatpush.bf16.msra.mxu0 %v1841
      %1851 = vmatpush.bf16.msra.mxu0 %v1840
      %1852 = vmatpush.bf16.msra.mxu0 %v1839
      %1853 = vmatpush.bf16.msra.mxu0 %v1838
      %1854 = vmatpush.bf16.msra.mxu0 %v1837
      %1855 = vmatpush.bf16.msra.mxu0 %v1836
      %1856 = vmatpush.bf16.msra.mxu0 %v1835
      %1857 = vmatpush.bf16.msra.mxu0 %v1834
      %1858 = vmatmul.bf16.gmra.mxu0 %v1593
      %v1859 = vpop.f32.mrf.mxu0
      %v1860 = vadd.f32 0.0, %v1859
      %v1861 = vpop.f32.mrf.mxu0
      %v1862 = vadd.f32 0.0, %v1861
      %1863 = vmatmul.bf16.gmra.mxu0 %v1601
      %v1864 = vpop.f32.mrf.mxu0
      %v1865 = vadd.f32 0.0, %v1864
      %v1866 = vpop.f32.mrf.mxu0
      %v1867 = vadd.f32 0.0, %v1866
      %1868 = vmatmul.bf16.gmra.mxu0 %v1609
      %v1869 = vpop.f32.mrf.mxu0
      %v1870 = vadd.f32 0.0, %v1869
      %v1871 = vpop.f32.mrf.mxu0
      %v1872 = vadd.f32 0.0, %v1871
      %1873 = vmatmul.bf16.gmra.mxu0 %v1617
      %v1874 = vpop.f32.mrf.mxu0
      %v1875 = vadd.f32 0.0, %v1874
      %v1876 = vpop.f32.mrf.mxu0
      %v1877 = vadd.f32 0.0, %v1876
      %1878 = vmatmul.bf16.gmra.mxu0 %v1625
      %v1879 = vpop.f32.mrf.mxu0
      %v1880 = vadd.f32 0.0, %v1879
      %v1881 = vpop.f32.mrf.mxu0
      %v1882 = vadd.f32 0.0, %v1881
      %1883 = vmatmul.bf16.gmra.mxu0 %v1633
      %v1884 = vpop.f32.mrf.mxu0
      %v1885 = vadd.f32 0.0, %v1884
      %v1886 = vpop.f32.mrf.mxu0
      %v1887 = vadd.f32 0.0, %v1886
      %1888 = vmatmul.bf16.gmra.mxu0 %v1641
      %v1889 = vpop.f32.mrf.mxu0
      %v1890 = vadd.f32 0.0, %v1889
      %v1891 = vpop.f32.mrf.mxu0
      %v1892 = vadd.f32 0.0, %v1891
      %1893 = vmatmul.bf16.gmra.mxu0 %v1649
      %v1894 = vpop.f32.mrf.mxu0
      %v1895 = vadd.f32 0.0, %v1894
      %v1896 = vpop.f32.mrf.mxu0
      %v1897 = vadd.f32 0.0, %v1896
      %1898 = vmatmul.bf16.gmra.mxu0 %v1657
      %v1899 = vpop.f32.mrf.mxu0
      %v1900 = vadd.f32 0.0, %v1899
      %v1901 = vpop.f32.mrf.mxu0
      %v1902 = vadd.f32 0.0, %v1901
      %1903 = vmatmul.bf16.gmra.mxu0 %v1665
      %v1904 = vpop.f32.mrf.mxu0
      %v1905 = vadd.f32 0.0, %v1904
      %v1906 = vpop.f32.mrf.mxu0
      %v1907 = vadd.f32 0.0, %v1906
      %1908 = vmatmul.bf16.gmra.mxu0 %v1673
      %v1909 = vpop.f32.mrf.mxu0
      %v1910 = vadd.f32 0.0, %v1909
      %v1911 = vpop.f32.mrf.mxu0
      %v1912 = vadd.f32 0.0, %v1911
      %1913 = vmatmul.bf16.gmra.mxu0 %v1681
      %v1914 = vpop.f32.mrf.mxu0
      %v1915 = vadd.f32 0.0, %v1914
      %v1916 = vpop.f32.mrf.mxu0
      %v1917 = vadd.f32 0.0, %v1916
      %1918 = vmatmul.bf16.gmra.mxu0 %v1689
      %v1919 = vpop.f32.mrf.mxu0
      %v1920 = vadd.f32 0.0, %v1919
      %v1921 = vpop.f32.mrf.mxu0
      %v1922 = vadd.f32 0.0, %v1921
      %1923 = vmatmul.bf16.gmra.mxu0 %v1697
      %v1924 = vpop.f32.mrf.mxu0
      %v1925 = vadd.f32 0.0, %v1924
      %v1926 = vpop.f32.mrf.mxu0
      %v1927 = vadd.f32 0.0, %v1926
      %1928 = vmatmul.bf16.gmra.mxu0 %v1705
      %v1929 = vpop.f32.mrf.mxu0
      %v1930 = vadd.f32 0.0, %v1929
      %v1931 = vpop.f32.mrf.mxu0
      %v1932 = vadd.f32 0.0, %v1931
      %1933 = vmatmul.bf16.gmra.mxu0 %v1713
      %v1934 = vpop.f32.mrf.mxu0
      %v1935 = vadd.f32 0.0, %v1934
      %v1936 = vpop.f32.mrf.mxu0
      %v1937 = vadd.f32 0.0, %v1936
      %1938 = vmatmul.bf16.gmra.mxu0 %v1721
      %v1939 = vpop.f32.mrf.mxu0
      %v1940 = vadd.f32 0.0, %v1939
      %v1941 = vpop.f32.mrf.mxu0
      %v1942 = vadd.f32 0.0, %v1941
      %1943 = vmatmul.bf16.gmra.mxu0 %v1729
      %v1944 = vpop.f32.mrf.mxu0
      %v1945 = vadd.f32 0.0, %v1944
      %v1946 = vpop.f32.mrf.mxu0
      %v1947 = vadd.f32 0.0, %v1946
      %1948 = vmatmul.bf16.gmra.mxu0 %v1737
      %v1949 = vpop.f32.mrf.mxu0
      %v1950 = vadd.f32 0.0, %v1949
      %v1951 = vpop.f32.mrf.mxu0
      %v1952 = vadd.f32 0.0, %v1951
      %1953 = vmatmul.bf16.gmra.mxu0 %v1745
      %v1954 = vpop.f32.mrf.mxu0
      %v1955 = vadd.f32 0.0, %v1954
      %v1956 = vpop.f32.mrf.mxu0
      %v1957 = vadd.f32 0.0, %v1956
      %1958 = vmatmul.bf16.gmra.mxu0 %v1753
      %v1959 = vpop.f32.mrf.mxu0
      %v1960 = vadd.f32 0.0, %v1959
      %v1961 = vpop.f32.mrf.mxu0
      %v1962 = vadd.f32 0.0, %v1961
      %1963 = vmatmul.bf16.gmra.mxu0 %v1761
      %v1964 = vpop.f32.mrf.mxu0
      %v1965 = vadd.f32 0.0, %v1964
      %v1966 = vpop.f32.mrf.mxu0
      %v1967 = vadd.f32 0.0, %v1966
      %1968 = vmatmul.bf16.gmra.mxu0 %v1769
      %v1969 = vpop.f32.mrf.mxu0
      %v1970 = vadd.f32 0.0, %v1969
      %v1971 = vpop.f32.mrf.mxu0
      %v1972 = vadd.f32 0.0, %v1971
      %1973 = vmatmul.bf16.gmra.mxu0 %v1777
      %v1974 = vpop.f32.mrf.mxu0
      %v1975 = vadd.f32 0.0, %v1974
      %v1976 = vpop.f32.mrf.mxu0
      %v1977 = vadd.f32 0.0, %v1976
      %1978 = vdwg.mxu0
      %v1979 = vadd.f32 %v1338, %v1860
      %v1980 = vadd.f32 %v1339, %v1862
      %v1981 = vadd.f32 %v1340, %v1865
      %v1982 = vadd.f32 %v1341, %v1867
      %v1983 = vadd.f32 %v1342, %v1870
      %v1984 = vadd.f32 %v1343, %v1872
      %v1985 = vadd.f32 %v1344, %v1875
      %v1986 = vadd.f32 %v1345, %v1877
      %v1987 = vadd.f32 %v1346, %v1880
      %v1988 = vadd.f32 %v1347, %v1882
      %v1989 = vadd.f32 %v1348, %v1885
      %v1990 = vadd.f32 %v1349, %v1887
      %v1991 = vadd.f32 %v1350, %v1890
      %v1992 = vadd.f32 %v1351, %v1892
      %v1993 = vadd.f32 %v1352, %v1895
      %v1994 = vadd.f32 %v1353, %v1897
      %v1995 = vadd.f32 %v1354, %v1900
      %v1996 = vadd.f32 %v1355, %v1902
      %v1997 = vadd.f32 %v1356, %v1905
      %v1998 = vadd.f32 %v1357, %v1907
      %v1999 = vadd.f32 %v1358, %v1910
      %v2000 = vadd.f32 %v1359, %v1912
      %v2001 = vadd.f32 %v1360, %v1915
      %v2002 = vadd.f32 %v1361, %v1917
      %v2003 = vadd.f32 %v1362, %v1920
      %v2004 = vadd.f32 %v1363, %v1922
      %v2005 = vadd.f32 %v1364, %v1925
      %v2006 = vadd.f32 %v1365, %v1927
      %v2007 = vadd.f32 %v1366, %v1930
      %v2008 = vadd.f32 %v1367, %v1932
      %v2009 = vadd.f32 %v1368, %v1935
      %v2010 = vadd.f32 %v1369, %v1937
      %v2011 = vadd.f32 %v1370, %v1940
      %v2012 = vadd.f32 %v1371, %v1942
      %v2013 = vadd.f32 %v1372, %v1945
      %v2014 = vadd.f32 %v1373, %v1947
      %v2015 = vadd.f32 %v1374, %v1950
      %v2016 = vadd.f32 %v1375, %v1952
      %v2017 = vadd.f32 %v1376, %v1955
      %v2018 = vadd.f32 %v1377, %v1957
      %v2019 = vadd.f32 %v1378, %v1960
      %v2020 = vadd.f32 %v1379, %v1962
      %v2021 = vadd.f32 %v1380, %v1965
      %v2022 = vadd.f32 %v1381, %v1967
      %v2023 = vadd.f32 %v1382, %v1970
      %v2024 = vadd.f32 %v1383, %v1972
      %v2025 = vadd.f32 %v1384, %v1975
      %v2026 = vadd.f32 %v1385, %v1977
      %s2027 = scalar_lea.vmem %s281, 256
      %v2028 = vld [vmem:[%s2027] sm:$0xf]
      %v2029 = vld [vmem:[%s2027 + $0x4] sm:$0xf]
      %v2030 = vld [vmem:[%s2027 + $0x8] sm:$0xf]
      %v2031 = vld [vmem:[%s2027 + $0xc] sm:$0xf]
      %v2032 = vld [vmem:[%s2027 + $0x10] sm:$0xf]
      %v2033 = vld [vmem:[%s2027 + $0x14] sm:$0xf]
      %v2034 = vld [vmem:[%s2027 + $0x18] sm:$0xf]
      %v2035 = vld [vmem:[%s2027 + $0x1c] sm:$0xf]
      %v2036 = vld [vmem:[%s2027 + $0x20] sm:$0xf]
      %v2037 = vld [vmem:[%s2027 + $0x24] sm:$0xf]
      %v2038 = vld [vmem:[%s2027 + $0x28] sm:$0xf]
      %v2039 = vld [vmem:[%s2027 + $0x2c] sm:$0xf]
      %v2040 = vld [vmem:[%s2027 + $0x30] sm:$0xf]
      %v2041 = vld [vmem:[%s2027 + $0x34] sm:$0xf]
      %v2042 = vld [vmem:[%s2027 + $0x38] sm:$0xf]
      %v2043 = vld [vmem:[%s2027 + $0x3c] sm:$0xf]
      %v2047 = vunpack.c.l.b16 %v1435
      %v2048 = vunpack.c.l.b16 %v1436
      %v2049 = vunpack.c.l.b16 %v1437
      %v2050 = vpack.c.b16 %v1511, %v1510
      %v2051 = vpack.c.b16 %v1513, %v1512
      %v2052 = vpack.c.b16 %v1515, %v1514
      %v2053 = vpack.c.b16 %v1517, %v1516
      %v2054 = vpack.c.b16 %v1519, %v1518
      %v2055 = vpack.c.b16 %v1521, %v1520
      %v2056 = vpack.c.b16 %v1523, %v1522
      %v2057 = vpack.c.b16 %v1525, %v1524
      %v2058 = vpack.c.b16 %v1527, %v1526
      %v2059 = vpack.c.b16 %v1529, %v1528
      %v2060 = vpack.c.b16 %v1531, %v1530
      %v2061 = vpack.c.b16 %v1533, %v1532
      %v2062 = vpack.c.b16 %v1535, %v1534
      %v2063 = vpack.c.b16 %v1537, %v1536
      %v2064 = vpack.c.b16 %v1539, %v1538
      %v2065 = vpack.c.b16 %v1541, %v1540
      %v2066 = vpack.c.b16 %v1543, %v1542
      %v2067 = vpack.c.b16 %v1545, %v1544
      %v2068 = vpack.c.b16 %v1547, %v1546
      %v2069 = vpack.c.b16 %v1549, %v1548
      %v2070 = vpack.c.b16 %v1551, %v1550
      %v2071 = vpack.c.b16 %v1553, %v1552
      %v2072 = vpack.c.b16 %v1555, %v1554
      %v2073 = vpack.c.b16 %v2048, %v2047
      %v2074 = vpack.c.b16 %v2049, %v2049
      %v2076 = vshrl.u32 %v2050, 16
      %v2078 = vshll.u32 %v2050, 16
      %v2080 = vrot.slane %v2078, 1
      %v2081 = vor.u32 %v2076, %v2080
      %v2083 = vshll.u32 %v2051, 16
      %v2085 = vrot.slane %v2083, 1
      %v2086 = vsel %vm1581, %v2081, %v2085
      %v2087 = vshrl.u32 %v2051, 16
      %v2089 = vor.u32 %v2087, %v2085
      %v2091 = vshll.u32 %v2052, 16
      %v2093 = vrot.slane %v2091, 1
      %v2094 = vsel %vm1581, %v2089, %v2093
      %v2095 = vshrl.u32 %v2052, 16
      %v2097 = vor.u32 %v2095, %v2093
      %v2099 = vshll.u32 %v2053, 16
      %v2101 = vrot.slane %v2099, 1
      %v2102 = vsel %vm1581, %v2097, %v2101
      %v2103 = vshrl.u32 %v2053, 16
      %v2105 = vor.u32 %v2103, %v2101
      %v2107 = vshll.u32 %v2054, 16
      %v2109 = vrot.slane %v2107, 1
      %v2110 = vsel %vm1581, %v2105, %v2109
      %v2111 = vshrl.u32 %v2054, 16
      %v2113 = vor.u32 %v2111, %v2109
      %v2115 = vshll.u32 %v2055, 16
      %v2117 = vrot.slane %v2115, 1
      %v2118 = vsel %vm1581, %v2113, %v2117
      %v2119 = vshrl.u32 %v2055, 16
      %v2121 = vor.u32 %v2119, %v2117
      %v2123 = vshll.u32 %v2056, 16
      %v2125 = vrot.slane %v2123, 1
      %v2126 = vsel %vm1581, %v2121, %v2125
      %v2127 = vshrl.u32 %v2056, 16
      %v2129 = vor.u32 %v2127, %v2125
      %v2131 = vshll.u32 %v2057, 16
      %v2133 = vrot.slane %v2131, 1
      %v2134 = vsel %vm1581, %v2129, %v2133
      %v2135 = vshrl.u32 %v2057, 16
      %v2137 = vor.u32 %v2135, %v2133
      %v2139 = vshll.u32 %v2058, 16
      %v2141 = vrot.slane %v2139, 1
      %v2142 = vsel %vm1581, %v2137, %v2141
      %v2143 = vshrl.u32 %v2058, 16
      %v2145 = vor.u32 %v2143, %v2141
      %v2147 = vshll.u32 %v2059, 16
      %v2149 = vrot.slane %v2147, 1
      %v2150 = vsel %vm1581, %v2145, %v2149
      %v2151 = vshrl.u32 %v2059, 16
      %v2153 = vor.u32 %v2151, %v2149
      %v2155 = vshll.u32 %v2060, 16
      %v2157 = vrot.slane %v2155, 1
      %v2158 = vsel %vm1581, %v2153, %v2157
      %v2159 = vshrl.u32 %v2060, 16
      %v2161 = vor.u32 %v2159, %v2157
      %v2163 = vshll.u32 %v2061, 16
      %v2165 = vrot.slane %v2163, 1
      %v2166 = vsel %vm1581, %v2161, %v2165
      %v2167 = vshrl.u32 %v2061, 16
      %v2169 = vor.u32 %v2167, %v2165
      %v2171 = vshll.u32 %v2062, 16
      %v2173 = vrot.slane %v2171, 1
      %v2174 = vsel %vm1581, %v2169, %v2173
      %v2175 = vshrl.u32 %v2062, 16
      %v2177 = vor.u32 %v2175, %v2173
      %v2179 = vshll.u32 %v2063, 16
      %v2181 = vrot.slane %v2179, 1
      %v2182 = vsel %vm1581, %v2177, %v2181
      %v2183 = vshrl.u32 %v2063, 16
      %v2185 = vor.u32 %v2183, %v2181
      %v2187 = vshll.u32 %v2064, 16
      %v2189 = vrot.slane %v2187, 1
      %v2190 = vsel %vm1581, %v2185, %v2189
      %v2191 = vshrl.u32 %v2064, 16
      %v2193 = vor.u32 %v2191, %v2189
      %v2195 = vshll.u32 %v2065, 16
      %v2197 = vrot.slane %v2195, 1
      %v2198 = vsel %vm1581, %v2193, %v2197
      %v2199 = vshrl.u32 %v2065, 16
      %v2201 = vor.u32 %v2199, %v2197
      %v2203 = vshll.u32 %v2066, 16
      %v2205 = vrot.slane %v2203, 1
      %v2206 = vsel %vm1581, %v2201, %v2205
      %v2207 = vshrl.u32 %v2066, 16
      %v2209 = vor.u32 %v2207, %v2205
      %v2211 = vshll.u32 %v2067, 16
      %v2213 = vrot.slane %v2211, 1
      %v2214 = vsel %vm1581, %v2209, %v2213
      %v2215 = vshrl.u32 %v2067, 16
      %v2217 = vor.u32 %v2215, %v2213
      %v2219 = vshll.u32 %v2068, 16
      %v2221 = vrot.slane %v2219, 1
      %v2222 = vsel %vm1581, %v2217, %v2221
      %v2223 = vshrl.u32 %v2068, 16
      %v2225 = vor.u32 %v2223, %v2221
      %v2227 = vshll.u32 %v2069, 16
      %v2229 = vrot.slane %v2227, 1
      %v2230 = vsel %vm1581, %v2225, %v2229
      %v2231 = vshrl.u32 %v2069, 16
      %v2233 = vor.u32 %v2231, %v2229
      %v2235 = vshll.u32 %v2070, 16
      %v2237 = vrot.slane %v2235, 1
      %v2238 = vsel %vm1581, %v2233, %v2237
      %v2239 = vshrl.u32 %v2070, 16
      %v2241 = vor.u32 %v2239, %v2237
      %v2243 = vshll.u32 %v2071, 16
      %v2245 = vrot.slane %v2243, 1
      %v2246 = vsel %vm1581, %v2241, %v2245
      %v2247 = vshrl.u32 %v2071, 16
      %v2249 = vor.u32 %v2247, %v2245
      %v2251 = vshll.u32 %v2072, 16
      %v2253 = vrot.slane %v2251, 1
      %v2254 = vsel %vm1581, %v2249, %v2253
      %v2255 = vshrl.u32 %v2072, 16
      %v2257 = vor.u32 %v2255, %v2253
      %v2259 = vshll.u32 %v2073, 16
      %v2261 = vrot.slane %v2259, 1
      %v2262 = vsel %vm1581, %v2257, %v2261
      %v2263 = vshrl.u32 %v2073, 16
      %v2265 = vor.u32 %v2263, %v2261
      %v2267 = vshll.u32 %v2074, 16
      %v2269 = vrot.slane %v2267, 1
      %v2270 = vsel %vm1581, %v2265, %v2269
      %v2311 = vunpack.c.l.b16 %v2028
      %v2312 = vunpack.c.l.b16 %v2029
      %v2313 = vunpack.c.l.b16 %v2030
      %v2314 = vunpack.c.l.b16 %v2031
      %v2315 = vunpack.c.l.b16 %v2032
      %v2316 = vunpack.c.l.b16 %v2033
      %v2317 = vunpack.c.l.b16 %v2034
      %v2318 = vunpack.c.l.b16 %v2035
      %v2319 = vunpack.c.l.b16 %v2036
      %v2320 = vunpack.c.l.b16 %v2037
      %v2321 = vunpack.c.l.b16 %v2038
      %v2322 = vunpack.c.l.b16 %v2039
      %v2323 = vunpack.c.l.b16 %v2040
      %v2324 = vunpack.c.l.b16 %v2041
      %v2325 = vunpack.c.l.b16 %v2042
      %v2326 = vunpack.c.l.b16 %v2043
      %v2327 = vpack.c.b16 %v2312, %v2311
      %v2328 = vpack.c.b16 %v2314, %v2313
      %v2329 = vpack.c.b16 %v2316, %v2315
      %v2330 = vpack.c.b16 %v2318, %v2317
      %v2331 = vpack.c.b16 %v2320, %v2319
      %v2332 = vpack.c.b16 %v2322, %v2321
      %v2333 = vpack.c.b16 %v2324, %v2323
      %v2334 = vpack.c.b16 %v2326, %v2325
      %2343 = vmatpush.bf16.msra.mxu0 %v2334
      %2344 = vmatpush.bf16.msra.mxu0 %v2333
      %2345 = vmatpush.bf16.msra.mxu0 %v2332
      %2346 = vmatpush.bf16.msra.mxu0 %v2331
      %2347 = vmatpush.bf16.msra.mxu0 %v2330
      %2348 = vmatpush.bf16.msra.mxu0 %v2329
      %2349 = vmatpush.bf16.msra.mxu0 %v2328
      %2350 = vmatpush.bf16.msra.mxu0 %v2327
      %2351 = vmatmul.bf16.gmra.mxu0 %v2086
      %v2352 = vpop.f32.mrf.mxu0
      %v2353 = vadd.f32 0.0, %v2352
      %v2354 = vpop.f32.mrf.mxu0
      %v2355 = vadd.f32 0.0, %v2354
      %2356 = vmatmul.bf16.gmra.mxu0 %v2094
      %v2357 = vpop.f32.mrf.mxu0
      %v2358 = vadd.f32 0.0, %v2357
      %v2359 = vpop.f32.mrf.mxu0
      %v2360 = vadd.f32 0.0, %v2359
      %2361 = vmatmul.bf16.gmra.mxu0 %v2102
      %v2362 = vpop.f32.mrf.mxu0
      %v2363 = vadd.f32 0.0, %v2362
      %v2364 = vpop.f32.mrf.mxu0
      %v2365 = vadd.f32 0.0, %v2364
      %2366 = vmatmul.bf16.gmra.mxu0 %v2110
      %v2367 = vpop.f32.mrf.mxu0
      %v2368 = vadd.f32 0.0, %v2367
      %v2369 = vpop.f32.mrf.mxu0
      %v2370 = vadd.f32 0.0, %v2369
      %2371 = vmatmul.bf16.gmra.mxu0 %v2118
      %v2372 = vpop.f32.mrf.mxu0
      %v2373 = vadd.f32 0.0, %v2372
      %v2374 = vpop.f32.mrf.mxu0
      %v2375 = vadd.f32 0.0, %v2374
      %2376 = vmatmul.bf16.gmra.mxu0 %v2126
      %v2377 = vpop.f32.mrf.mxu0
      %v2378 = vadd.f32 0.0, %v2377
      %v2379 = vpop.f32.mrf.mxu0
      %v2380 = vadd.f32 0.0, %v2379
      %2381 = vmatmul.bf16.gmra.mxu0 %v2134
      %v2382 = vpop.f32.mrf.mxu0
      %v2383 = vadd.f32 0.0, %v2382
      %v2384 = vpop.f32.mrf.mxu0
      %v2385 = vadd.f32 0.0, %v2384
      %2386 = vmatmul.bf16.gmra.mxu0 %v2142
      %v2387 = vpop.f32.mrf.mxu0
      %v2388 = vadd.f32 0.0, %v2387
      %v2389 = vpop.f32.mrf.mxu0
      %v2390 = vadd.f32 0.0, %v2389
      %2391 = vmatmul.bf16.gmra.mxu0 %v2150
      %v2392 = vpop.f32.mrf.mxu0
      %v2393 = vadd.f32 0.0, %v2392
      %v2394 = vpop.f32.mrf.mxu0
      %v2395 = vadd.f32 0.0, %v2394
      %2396 = vmatmul.bf16.gmra.mxu0 %v2158
      %v2397 = vpop.f32.mrf.mxu0
      %v2398 = vadd.f32 0.0, %v2397
      %v2399 = vpop.f32.mrf.mxu0
      %v2400 = vadd.f32 0.0, %v2399
      %2401 = vmatmul.bf16.gmra.mxu0 %v2166
      %v2402 = vpop.f32.mrf.mxu0
      %v2403 = vadd.f32 0.0, %v2402
      %v2404 = vpop.f32.mrf.mxu0
      %v2405 = vadd.f32 0.0, %v2404
      %2406 = vmatmul.bf16.gmra.mxu0 %v2174
      %v2407 = vpop.f32.mrf.mxu0
      %v2408 = vadd.f32 0.0, %v2407
      %v2409 = vpop.f32.mrf.mxu0
      %v2410 = vadd.f32 0.0, %v2409
      %2411 = vmatmul.bf16.gmra.mxu0 %v2182
      %v2412 = vpop.f32.mrf.mxu0
      %v2413 = vadd.f32 0.0, %v2412
      %v2414 = vpop.f32.mrf.mxu0
      %v2415 = vadd.f32 0.0, %v2414
      %2416 = vmatmul.bf16.gmra.mxu0 %v2190
      %v2417 = vpop.f32.mrf.mxu0
      %v2418 = vadd.f32 0.0, %v2417
      %v2419 = vpop.f32.mrf.mxu0
      %v2420 = vadd.f32 0.0, %v2419
      %2421 = vmatmul.bf16.gmra.mxu0 %v2198
      %v2422 = vpop.f32.mrf.mxu0
      %v2423 = vadd.f32 0.0, %v2422
      %v2424 = vpop.f32.mrf.mxu0
      %v2425 = vadd.f32 0.0, %v2424
      %2426 = vmatmul.bf16.gmra.mxu0 %v2206
      %v2427 = vpop.f32.mrf.mxu0
      %v2428 = vadd.f32 0.0, %v2427
      %v2429 = vpop.f32.mrf.mxu0
      %v2430 = vadd.f32 0.0, %v2429
      %2431 = vmatmul.bf16.gmra.mxu0 %v2214
      %v2432 = vpop.f32.mrf.mxu0
      %v2433 = vadd.f32 0.0, %v2432
      %v2434 = vpop.f32.mrf.mxu0
      %v2435 = vadd.f32 0.0, %v2434
      %2436 = vmatmul.bf16.gmra.mxu0 %v2222
      %v2437 = vpop.f32.mrf.mxu0
      %v2438 = vadd.f32 0.0, %v2437
      %v2439 = vpop.f32.mrf.mxu0
      %v2440 = vadd.f32 0.0, %v2439
      %2441 = vmatmul.bf16.gmra.mxu0 %v2230
      %v2442 = vpop.f32.mrf.mxu0
      %v2443 = vadd.f32 0.0, %v2442
      %v2444 = vpop.f32.mrf.mxu0
      %v2445 = vadd.f32 0.0, %v2444
      %2446 = vmatmul.bf16.gmra.mxu0 %v2238
      %v2447 = vpop.f32.mrf.mxu0
      %v2448 = vadd.f32 0.0, %v2447
      %v2449 = vpop.f32.mrf.mxu0
      %v2450 = vadd.f32 0.0, %v2449
      %2451 = vmatmul.bf16.gmra.mxu0 %v2246
      %v2452 = vpop.f32.mrf.mxu0
      %v2453 = vadd.f32 0.0, %v2452
      %v2454 = vpop.f32.mrf.mxu0
      %v2455 = vadd.f32 0.0, %v2454
      %2456 = vmatmul.bf16.gmra.mxu0 %v2254
      %v2457 = vpop.f32.mrf.mxu0
      %v2458 = vadd.f32 0.0, %v2457
      %v2459 = vpop.f32.mrf.mxu0
      %v2460 = vadd.f32 0.0, %v2459
      %2461 = vmatmul.bf16.gmra.mxu0 %v2262
      %v2462 = vpop.f32.mrf.mxu0
      %v2463 = vadd.f32 0.0, %v2462
      %v2464 = vpop.f32.mrf.mxu0
      %v2465 = vadd.f32 0.0, %v2464
      %2466 = vmatmul.bf16.gmra.mxu0 %v2270
      %v2467 = vpop.f32.mrf.mxu0
      %v2468 = vadd.f32 0.0, %v2467
      %v2469 = vpop.f32.mrf.mxu0
      %v2470 = vadd.f32 0.0, %v2469
      %2471 = vdwg.mxu0
      %v2472 = vadd.f32 %v1979, %v2353
      %v2473 = vadd.f32 %v1980, %v2355
      %v2474 = vadd.f32 %v1981, %v2358
      %v2475 = vadd.f32 %v1982, %v2360
      %v2476 = vadd.f32 %v1983, %v2363
      %v2477 = vadd.f32 %v1984, %v2365
      %v2478 = vadd.f32 %v1985, %v2368
      %v2479 = vadd.f32 %v1986, %v2370
      %v2480 = vadd.f32 %v1987, %v2373
      %v2481 = vadd.f32 %v1988, %v2375
      %v2482 = vadd.f32 %v1989, %v2378
      %v2483 = vadd.f32 %v1990, %v2380
      %v2484 = vadd.f32 %v1991, %v2383
      %v2485 = vadd.f32 %v1992, %v2385
      %v2486 = vadd.f32 %v1993, %v2388
      %v2487 = vadd.f32 %v1994, %v2390
      %v2488 = vadd.f32 %v1995, %v2393
      %v2489 = vadd.f32 %v1996, %v2395
      %v2490 = vadd.f32 %v1997, %v2398
      %v2491 = vadd.f32 %v1998, %v2400
      %v2492 = vadd.f32 %v1999, %v2403
      %v2493 = vadd.f32 %v2000, %v2405
      %v2494 = vadd.f32 %v2001, %v2408
      %v2495 = vadd.f32 %v2002, %v2410
      %v2496 = vadd.f32 %v2003, %v2413
      %v2497 = vadd.f32 %v2004, %v2415
      %v2498 = vadd.f32 %v2005, %v2418
      %v2499 = vadd.f32 %v2006, %v2420
      %v2500 = vadd.f32 %v2007, %v2423
      %v2501 = vadd.f32 %v2008, %v2425
      %v2502 = vadd.f32 %v2009, %v2428
      %v2503 = vadd.f32 %v2010, %v2430
      %v2504 = vadd.f32 %v2011, %v2433
      %v2505 = vadd.f32 %v2012, %v2435
      %v2506 = vadd.f32 %v2013, %v2438
      %v2507 = vadd.f32 %v2014, %v2440
      %v2508 = vadd.f32 %v2015, %v2443
      %v2509 = vadd.f32 %v2016, %v2445
      %v2510 = vadd.f32 %v2017, %v2448
      %v2511 = vadd.f32 %v2018, %v2450
      %v2512 = vadd.f32 %v2019, %v2453
      %v2513 = vadd.f32 %v2020, %v2455
      %v2514 = vadd.f32 %v2021, %v2458
      %v2515 = vadd.f32 %v2022, %v2460
      %v2516 = vadd.f32 %v2023, %v2463
      %v2517 = vadd.f32 %v2024, %v2465
      %v2518 = vadd.f32 %v2025, %v2468
      %v2519 = vadd.f32 %v2026, %v2470
      %s2520 = scalar_lea.vmem %s281, 448
      %v2521 = vld [vmem:[%s2520] sm:$0xf]
      %v2522 = vld [vmem:[%s2520 + $0x4] sm:$0xf]
      %v2523 = vld [vmem:[%s2520 + $0x8] sm:$0xf]
      %v2524 = vld [vmem:[%s2520 + $0xc] sm:$0xf]
      %v2525 = vld [vmem:[%s2520 + $0x10] sm:$0xf]
      %v2526 = vld [vmem:[%s2520 + $0x14] sm:$0xf]
      %v2527 = vld [vmem:[%s2520 + $0x18] sm:$0xf]
      %v2528 = vld [vmem:[%s2520 + $0x1c] sm:$0xf]
      %v2529 = vld [vmem:[%s2520 + $0x20] sm:$0xf]
      %v2530 = vld [vmem:[%s2520 + $0x24] sm:$0xf]
      %v2531 = vld [vmem:[%s2520 + $0x28] sm:$0xf]
      %v2532 = vld [vmem:[%s2520 + $0x2c] sm:$0xf]
      %v2533 = vld [vmem:[%s2520 + $0x30] sm:$0xf]
      %v2534 = vld [vmem:[%s2520 + $0x34] sm:$0xf]
      %v2535 = vld [vmem:[%s2520 + $0x38] sm:$0xf]
      %v2536 = vld [vmem:[%s2520 + $0x3c] sm:$0xf]
      %v2540 = vunpack.c.l.b16 %v1438
      %v2541 = vunpack.c.l.b16 %v1439
      %v2542 = vunpack.c.l.b16 %v1440
      %v2543 = vpack.c.b16 %v2047, %v1555
      %v2544 = vpack.c.b16 %v2049, %v2048
      %v2545 = vpack.c.b16 %v2541, %v2540
      %v2546 = vpack.c.b16 %v2542, %v2542
      %v2548 = vshll.u32 %v2543, 16
      %v2550 = vrot.slane %v2548, 1
      %v2551 = vsel %vm1581, %v1772, %v2550
      %v2552 = vshrl.u32 %v2543, 16
      %v2554 = vor.u32 %v2552, %v2550
      %v2556 = vshll.u32 %v2544, 16
      %v2558 = vrot.slane %v2556, 1
      %v2559 = vsel %vm1581, %v2554, %v2558
      %v2560 = vshrl.u32 %v2544, 16
      %v2562 = vor.u32 %v2560, %v2558
      %v2564 = vshll.u32 %v2545, 16
      %v2566 = vrot.slane %v2564, 1
      %v2567 = vsel %vm1581, %v2562, %v2566
      %v2568 = vshrl.u32 %v2545, 16
      %v2570 = vor.u32 %v2568, %v2566
      %v2572 = vshll.u32 %v2546, 16
      %v2574 = vrot.slane %v2572, 1
      %v2575 = vsel %vm1581, %v2570, %v2574
      %v2596 = vunpack.c.l.b16 %v2521
      %v2597 = vunpack.c.l.b16 %v2522
      %v2598 = vunpack.c.l.b16 %v2523
      %v2599 = vunpack.c.l.b16 %v2524
      %v2600 = vunpack.c.l.b16 %v2525
      %v2601 = vunpack.c.l.b16 %v2526
      %v2602 = vunpack.c.l.b16 %v2527
      %v2603 = vunpack.c.l.b16 %v2528
      %v2604 = vunpack.c.l.b16 %v2529
      %v2605 = vunpack.c.l.b16 %v2530
      %v2606 = vunpack.c.l.b16 %v2531
      %v2607 = vunpack.c.l.b16 %v2532
      %v2608 = vunpack.c.l.b16 %v2533
      %v2609 = vunpack.c.l.b16 %v2534
      %v2610 = vunpack.c.l.b16 %v2535
      %v2611 = vunpack.c.l.b16 %v2536
      %v2612 = vpack.c.b16 %v2597, %v2596
      %v2613 = vpack.c.b16 %v2599, %v2598
      %v2614 = vpack.c.b16 %v2601, %v2600
      %v2615 = vpack.c.b16 %v2603, %v2602
      %v2616 = vpack.c.b16 %v2605, %v2604
      %v2617 = vpack.c.b16 %v2607, %v2606
      %v2618 = vpack.c.b16 %v2609, %v2608
      %v2619 = vpack.c.b16 %v2611, %v2610
      %2628 = vmatpush.bf16.msra.mxu0 %v2619
      %2629 = vmatpush.bf16.msra.mxu0 %v2618
      %2630 = vmatpush.bf16.msra.mxu0 %v2617
      %2631 = vmatpush.bf16.msra.mxu0 %v2616
      %2632 = vmatpush.bf16.msra.mxu0 %v2615
      %2633 = vmatpush.bf16.msra.mxu0 %v2614
      %2634 = vmatpush.bf16.msra.mxu0 %v2613
      %2635 = vmatpush.bf16.msra.mxu0 %v2612
      %2636 = vmatmul.bf16.gmra.mxu0 %v1617
      %v2637 = vpop.f32.mrf.mxu0
      %v2638 = vadd.f32 0.0, %v2637
      %v2639 = vpop.f32.mrf.mxu0
      %v2640 = vadd.f32 0.0, %v2639
      %2641 = vmatmul.bf16.gmra.mxu0 %v1625
      %v2642 = vpop.f32.mrf.mxu0
      %v2643 = vadd.f32 0.0, %v2642
      %v2644 = vpop.f32.mrf.mxu0
      %v2645 = vadd.f32 0.0, %v2644
      %2646 = vmatmul.bf16.gmra.mxu0 %v1633
      %v2647 = vpop.f32.mrf.mxu0
      %v2648 = vadd.f32 0.0, %v2647
      %v2649 = vpop.f32.mrf.mxu0
      %v2650 = vadd.f32 0.0, %v2649
      %2651 = vmatmul.bf16.gmra.mxu0 %v1641
      %v2652 = vpop.f32.mrf.mxu0
      %v2653 = vadd.f32 0.0, %v2652
      %v2654 = vpop.f32.mrf.mxu0
      %v2655 = vadd.f32 0.0, %v2654
      %2656 = vmatmul.bf16.gmra.mxu0 %v1649
      %v2657 = vpop.f32.mrf.mxu0
      %v2658 = vadd.f32 0.0, %v2657
      %v2659 = vpop.f32.mrf.mxu0
      %v2660 = vadd.f32 0.0, %v2659
      %2661 = vmatmul.bf16.gmra.mxu0 %v1657
      %v2662 = vpop.f32.mrf.mxu0
      %v2663 = vadd.f32 0.0, %v2662
      %v2664 = vpop.f32.mrf.mxu0
      %v2665 = vadd.f32 0.0, %v2664
      %2666 = vmatmul.bf16.gmra.mxu0 %v1665
      %v2667 = vpop.f32.mrf.mxu0
      %v2668 = vadd.f32 0.0, %v2667
      %v2669 = vpop.f32.mrf.mxu0
      %v2670 = vadd.f32 0.0, %v2669
      %2671 = vmatmul.bf16.gmra.mxu0 %v1673
      %v2672 = vpop.f32.mrf.mxu0
      %v2673 = vadd.f32 0.0, %v2672
      %v2674 = vpop.f32.mrf.mxu0
      %v2675 = vadd.f32 0.0, %v2674
      %2676 = vmatmul.bf16.gmra.mxu0 %v1681
      %v2677 = vpop.f32.mrf.mxu0
      %v2678 = vadd.f32 0.0, %v2677
      %v2679 = vpop.f32.mrf.mxu0
      %v2680 = vadd.f32 0.0, %v2679
      %2681 = vmatmul.bf16.gmra.mxu0 %v1689
      %v2682 = vpop.f32.mrf.mxu0
      %v2683 = vadd.f32 0.0, %v2682
      %v2684 = vpop.f32.mrf.mxu0
      %v2685 = vadd.f32 0.0, %v2684
      %2686 = vmatmul.bf16.gmra.mxu0 %v1697
      %v2687 = vpop.f32.mrf.mxu0
      %v2688 = vadd.f32 0.0, %v2687
      %v2689 = vpop.f32.mrf.mxu0
      %v2690 = vadd.f32 0.0, %v2689
      %2691 = vmatmul.bf16.gmra.mxu0 %v1705
      %v2692 = vpop.f32.mrf.mxu0
      %v2693 = vadd.f32 0.0, %v2692
      %v2694 = vpop.f32.mrf.mxu0
      %v2695 = vadd.f32 0.0, %v2694
      %2696 = vmatmul.bf16.gmra.mxu0 %v1713
      %v2697 = vpop.f32.mrf.mxu0
      %v2698 = vadd.f32 0.0, %v2697
      %v2699 = vpop.f32.mrf.mxu0
      %v2700 = vadd.f32 0.0, %v2699
      %2701 = vmatmul.bf16.gmra.mxu0 %v1721
      %v2702 = vpop.f32.mrf.mxu0
      %v2703 = vadd.f32 0.0, %v2702
      %v2704 = vpop.f32.mrf.mxu0
      %v2705 = vadd.f32 0.0, %v2704
      %2706 = vmatmul.bf16.gmra.mxu0 %v1729
      %v2707 = vpop.f32.mrf.mxu0
      %v2708 = vadd.f32 0.0, %v2707
      %v2709 = vpop.f32.mrf.mxu0
      %v2710 = vadd.f32 0.0, %v2709
      %2711 = vmatmul.bf16.gmra.mxu0 %v1737
      %v2712 = vpop.f32.mrf.mxu0
      %v2713 = vadd.f32 0.0, %v2712
      %v2714 = vpop.f32.mrf.mxu0
      %v2715 = vadd.f32 0.0, %v2714
      %2716 = vmatmul.bf16.gmra.mxu0 %v1745
      %v2717 = vpop.f32.mrf.mxu0
      %v2718 = vadd.f32 0.0, %v2717
      %v2719 = vpop.f32.mrf.mxu0
      %v2720 = vadd.f32 0.0, %v2719
      %2721 = vmatmul.bf16.gmra.mxu0 %v1753
      %v2722 = vpop.f32.mrf.mxu0
      %v2723 = vadd.f32 0.0, %v2722
      %v2724 = vpop.f32.mrf.mxu0
      %v2725 = vadd.f32 0.0, %v2724
      %2726 = vmatmul.bf16.gmra.mxu0 %v1761
      %v2727 = vpop.f32.mrf.mxu0
      %v2728 = vadd.f32 0.0, %v2727
      %v2729 = vpop.f32.mrf.mxu0
      %v2730 = vadd.f32 0.0, %v2729
      %2731 = vmatmul.bf16.gmra.mxu0 %v1769
      %v2732 = vpop.f32.mrf.mxu0
      %v2733 = vadd.f32 0.0, %v2732
      %v2734 = vpop.f32.mrf.mxu0
      %v2735 = vadd.f32 0.0, %v2734
      %2736 = vmatmul.bf16.gmra.mxu0 %v2551
      %v2737 = vpop.f32.mrf.mxu0
      %v2738 = vadd.f32 0.0, %v2737
      %v2739 = vpop.f32.mrf.mxu0
      %v2740 = vadd.f32 0.0, %v2739
      %2741 = vmatmul.bf16.gmra.mxu0 %v2559
      %v2742 = vpop.f32.mrf.mxu0
      %v2743 = vadd.f32 0.0, %v2742
      %v2744 = vpop.f32.mrf.mxu0
      %v2745 = vadd.f32 0.0, %v2744
      %2746 = vmatmul.bf16.gmra.mxu0 %v2567
      %v2747 = vpop.f32.mrf.mxu0
      %v2748 = vadd.f32 0.0, %v2747
      %v2749 = vpop.f32.mrf.mxu0
      %v2750 = vadd.f32 0.0, %v2749
      %2751 = vmatmul.bf16.gmra.mxu0 %v2575
      %v2752 = vpop.f32.mrf.mxu0
      %v2753 = vadd.f32 0.0, %v2752
      %v2754 = vpop.f32.mrf.mxu0
      %v2755 = vadd.f32 0.0, %v2754
      %2756 = vdwg.mxu0
      %v2757 = vadd.f32 %v2472, %v2638
      %v2758 = vadd.f32 %v2473, %v2640
      %v2759 = vadd.f32 %v2474, %v2643
      %v2760 = vadd.f32 %v2475, %v2645
      %v2761 = vadd.f32 %v2476, %v2648
      %v2762 = vadd.f32 %v2477, %v2650
      %v2763 = vadd.f32 %v2478, %v2653
      %v2764 = vadd.f32 %v2479, %v2655
      %v2765 = vadd.f32 %v2480, %v2658
      %v2766 = vadd.f32 %v2481, %v2660
      %v2767 = vadd.f32 %v2482, %v2663
      %v2768 = vadd.f32 %v2483, %v2665
      %v2769 = vadd.f32 %v2484, %v2668
      %v2770 = vadd.f32 %v2485, %v2670
      %v2771 = vadd.f32 %v2486, %v2673
      %v2772 = vadd.f32 %v2487, %v2675
      %v2773 = vadd.f32 %v2488, %v2678
      %v2774 = vadd.f32 %v2489, %v2680
      %v2775 = vadd.f32 %v2490, %v2683
      %v2776 = vadd.f32 %v2491, %v2685
      %v2777 = vadd.f32 %v2492, %v2688
      %v2778 = vadd.f32 %v2493, %v2690
      %v2779 = vadd.f32 %v2494, %v2693
      %v2780 = vadd.f32 %v2495, %v2695
      %v2781 = vadd.f32 %v2496, %v2698
      %v2782 = vadd.f32 %v2497, %v2700
      %v2783 = vadd.f32 %v2498, %v2703
      %v2784 = vadd.f32 %v2499, %v2705
      %v2785 = vadd.f32 %v2500, %v2708
      %v2786 = vadd.f32 %v2501, %v2710
      %v2787 = vadd.f32 %v2502, %v2713
      %v2788 = vadd.f32 %v2503, %v2715
      %v2789 = vadd.f32 %v2504, %v2718
      %v2790 = vadd.f32 %v2505, %v2720
      %v2791 = vadd.f32 %v2506, %v2723
      %v2792 = vadd.f32 %v2507, %v2725
      %v2793 = vadd.f32 %v2508, %v2728
      %v2794 = vadd.f32 %v2509, %v2730
      %v2795 = vadd.f32 %v2510, %v2733
      %v2796 = vadd.f32 %v2511, %v2735
      %v2797 = vadd.f32 %v2512, %v2738
      %v2798 = vadd.f32 %v2513, %v2740
      %v2799 = vadd.f32 %v2514, %v2743
      %v2800 = vadd.f32 %v2515, %v2745
      %v2801 = vadd.f32 %v2516, %v2748
      %v2802 = vadd.f32 %v2517, %v2750
      %v2803 = vadd.f32 %v2518, %v2753
      %v2804 = vadd.f32 %v2519, %v2755
      %v2805 = vld [vmem:[%s273] sm:$0xe]
      %s2806 = scalar_lea.vmem %s281, 128
      %v2807 = vld [vmem:[%s2806] sm:$0xf]
      %v2808 = vld [vmem:[%s2806 + $0x4] sm:$0xf]
      %v2809 = vld [vmem:[%s2806 + $0x8] sm:$0xf]
      %v2810 = vld [vmem:[%s2806 + $0xc] sm:$0xf]
      %v2811 = vld [vmem:[%s2806 + $0x10] sm:$0xf]
      %v2812 = vld [vmem:[%s2806 + $0x14] sm:$0xf]
      %v2813 = vld [vmem:[%s2806 + $0x18] sm:$0xf]
      %v2814 = vld [vmem:[%s2806 + $0x1c] sm:$0xf]
      %v2815 = vld [vmem:[%s2806 + $0x20] sm:$0xf]
      %v2816 = vld [vmem:[%s2806 + $0x24] sm:$0xf]
      %v2817 = vld [vmem:[%s2806 + $0x28] sm:$0xf]
      %v2818 = vld [vmem:[%s2806 + $0x2c] sm:$0xf]
      %v2819 = vld [vmem:[%s2806 + $0x30] sm:$0xf]
      %v2820 = vld [vmem:[%s2806 + $0x34] sm:$0xf]
      %v2821 = vld [vmem:[%s2806 + $0x38] sm:$0xf]
      %v2822 = vld [vmem:[%s2806 + $0x3c] sm:$0xf]
      %v2824 = vunpack.c.l.b16 %v2805
      %v2825 = vpack.c.b16 %v1508, %v2824
      %vm2826 = vcmask 1046528
      %v2827 = vrot.slane %v2825, 1
      %v2828 = vrot.slane %v1557, 1
      %v2829 = vsel %vm2826, %v2827, %v2828
      %v2830 = vrot.slane %v1558, 1
      %v2831 = vsel %vm2826, %v2828, %v2830
      %v2832 = vrot.slane %v1559, 1
      %v2833 = vsel %vm2826, %v2830, %v2832
      %v2834 = vrot.slane %v1560, 1
      %v2835 = vsel %vm2826, %v2832, %v2834
      %v2836 = vrot.slane %v1561, 1
      %v2837 = vsel %vm2826, %v2834, %v2836
      %v2838 = vrot.slane %v1562, 1
      %v2839 = vsel %vm2826, %v2836, %v2838
      %v2840 = vrot.slane %v1563, 1
      %v2841 = vsel %vm2826, %v2838, %v2840
      %v2842 = vrot.slane %v1564, 1
      %v2843 = vsel %vm2826, %v2840, %v2842
      %v2844 = vrot.slane %v1565, 1
      %v2845 = vsel %vm2826, %v2842, %v2844
      %v2846 = vrot.slane %v1566, 1
      %v2847 = vsel %vm2826, %v2844, %v2846
      %v2848 = vrot.slane %v1567, 1
      %v2849 = vsel %vm2826, %v2846, %v2848
      %v2850 = vrot.slane %v1568, 1
      %v2851 = vsel %vm2826, %v2848, %v2850
      %v2852 = vrot.slane %v1569, 1
      %v2853 = vsel %vm2826, %v2850, %v2852
      %v2854 = vrot.slane %v1570, 1
      %v2855 = vsel %vm2826, %v2852, %v2854
      %v2856 = vrot.slane %v1571, 1
      %v2857 = vsel %vm2826, %v2854, %v2856
      %v2858 = vrot.slane %v1572, 1
      %v2859 = vsel %vm2826, %v2856, %v2858
      %v2860 = vrot.slane %v1573, 1
      %v2861 = vsel %vm2826, %v2858, %v2860
      %v2862 = vrot.slane %v1574, 1
      %v2863 = vsel %vm2826, %v2860, %v2862
      %v2864 = vrot.slane %v1575, 1
      %v2865 = vsel %vm2826, %v2862, %v2864
      %v2866 = vrot.slane %v1576, 1
      %v2867 = vsel %vm2826, %v2864, %v2866
      %v2868 = vrot.slane %v1577, 1
      %v2869 = vsel %vm2826, %v2866, %v2868
      %v2870 = vrot.slane %v1578, 1
      %v2871 = vsel %vm2826, %v2868, %v2870
      %v2872 = vrot.slane %v1579, 1
      %v2873 = vsel %vm2826, %v2870, %v2872
      %v2874 = vrot.slane %v1580, 1
      %v2875 = vsel %vm2826, %v2872, %v2874
      %v2916 = vunpack.c.l.b16 %v2807
      %v2917 = vunpack.c.l.b16 %v2808
      %v2918 = vunpack.c.l.b16 %v2809
      %v2919 = vunpack.c.l.b16 %v2810
      %v2920 = vunpack.c.l.b16 %v2811
      %v2921 = vunpack.c.l.b16 %v2812
      %v2922 = vunpack.c.l.b16 %v2813
      %v2923 = vunpack.c.l.b16 %v2814
      %v2924 = vunpack.c.l.b16 %v2815
      %v2925 = vunpack.c.l.b16 %v2816
      %v2926 = vunpack.c.l.b16 %v2817
      %v2927 = vunpack.c.l.b16 %v2818
      %v2928 = vunpack.c.l.b16 %v2819
      %v2929 = vunpack.c.l.b16 %v2820
      %v2930 = vunpack.c.l.b16 %v2821
      %v2931 = vunpack.c.l.b16 %v2822
      %v2932 = vpack.c.b16 %v2917, %v2916
      %v2933 = vpack.c.b16 %v2919, %v2918
      %v2934 = vpack.c.b16 %v2921, %v2920
      %v2935 = vpack.c.b16 %v2923, %v2922
      %v2936 = vpack.c.b16 %v2925, %v2924
      %v2937 = vpack.c.b16 %v2927, %v2926
      %v2938 = vpack.c.b16 %v2929, %v2928
      %v2939 = vpack.c.b16 %v2931, %v2930
      %2948 = vmatpush.bf16.msra.mxu0 %v2939
      %2949 = vmatpush.bf16.msra.mxu0 %v2938
      %2950 = vmatpush.bf16.msra.mxu0 %v2937
      %2951 = vmatpush.bf16.msra.mxu0 %v2936
      %2952 = vmatpush.bf16.msra.mxu0 %v2935
      %2953 = vmatpush.bf16.msra.mxu0 %v2934
      %2954 = vmatpush.bf16.msra.mxu0 %v2933
      %2955 = vmatpush.bf16.msra.mxu0 %v2932
      %2956 = vmatmul.bf16.gmra.mxu0 %v2829
      %v2957 = vpop.f32.mrf.mxu0
      %v2958 = vadd.f32 0.0, %v2957
      %v2959 = vpop.f32.mrf.mxu0
      %v2960 = vadd.f32 0.0, %v2959
      %2961 = vmatmul.bf16.gmra.mxu0 %v2831
      %v2962 = vpop.f32.mrf.mxu0
      %v2963 = vadd.f32 0.0, %v2962
      %v2964 = vpop.f32.mrf.mxu0
      %v2965 = vadd.f32 0.0, %v2964
      %2966 = vmatmul.bf16.gmra.mxu0 %v2833
      %v2967 = vpop.f32.mrf.mxu0
      %v2968 = vadd.f32 0.0, %v2967
      %v2969 = vpop.f32.mrf.mxu0
      %v2970 = vadd.f32 0.0, %v2969
      %2971 = vmatmul.bf16.gmra.mxu0 %v2835
      %v2972 = vpop.f32.mrf.mxu0
      %v2973 = vadd.f32 0.0, %v2972
      %v2974 = vpop.f32.mrf.mxu0
      %v2975 = vadd.f32 0.0, %v2974
      %2976 = vmatmul.bf16.gmra.mxu0 %v2837
      %v2977 = vpop.f32.mrf.mxu0
      %v2978 = vadd.f32 0.0, %v2977
      %v2979 = vpop.f32.mrf.mxu0
      %v2980 = vadd.f32 0.0, %v2979
      %2981 = vmatmul.bf16.gmra.mxu0 %v2839
      %v2982 = vpop.f32.mrf.mxu0
      %v2983 = vadd.f32 0.0, %v2982
      %v2984 = vpop.f32.mrf.mxu0
      %v2985 = vadd.f32 0.0, %v2984
      %2986 = vmatmul.bf16.gmra.mxu0 %v2841
      %v2987 = vpop.f32.mrf.mxu0
      %v2988 = vadd.f32 0.0, %v2987
      %v2989 = vpop.f32.mrf.mxu0
      %v2990 = vadd.f32 0.0, %v2989
      %2991 = vmatmul.bf16.gmra.mxu0 %v2843
      %v2992 = vpop.f32.mrf.mxu0
      %v2993 = vadd.f32 0.0, %v2992
      %v2994 = vpop.f32.mrf.mxu0
      %v2995 = vadd.f32 0.0, %v2994
      %2996 = vmatmul.bf16.gmra.mxu0 %v2845
      %v2997 = vpop.f32.mrf.mxu0
      %v2998 = vadd.f32 0.0, %v2997
      %v2999 = vpop.f32.mrf.mxu0
      %v3000 = vadd.f32 0.0, %v2999
      %3001 = vmatmul.bf16.gmra.mxu0 %v2847
      %v3002 = vpop.f32.mrf.mxu0
      %v3003 = vadd.f32 0.0, %v3002
      %v3004 = vpop.f32.mrf.mxu0
      %v3005 = vadd.f32 0.0, %v3004
      %3006 = vmatmul.bf16.gmra.mxu0 %v2849
      %v3007 = vpop.f32.mrf.mxu0
      %v3008 = vadd.f32 0.0, %v3007
      %v3009 = vpop.f32.mrf.mxu0
      %v3010 = vadd.f32 0.0, %v3009
      %3011 = vmatmul.bf16.gmra.mxu0 %v2851
      %v3012 = vpop.f32.mrf.mxu0
      %v3013 = vadd.f32 0.0, %v3012
      %v3014 = vpop.f32.mrf.mxu0
      %v3015 = vadd.f32 0.0, %v3014
      %3016 = vmatmul.bf16.gmra.mxu0 %v2853
      %v3017 = vpop.f32.mrf.mxu0
      %v3018 = vadd.f32 0.0, %v3017
      %v3019 = vpop.f32.mrf.mxu0
      %v3020 = vadd.f32 0.0, %v3019
      %3021 = vmatmul.bf16.gmra.mxu0 %v2855
      %v3022 = vpop.f32.mrf.mxu0
      %v3023 = vadd.f32 0.0, %v3022
      %v3024 = vpop.f32.mrf.mxu0
      %v3025 = vadd.f32 0.0, %v3024
      %3026 = vmatmul.bf16.gmra.mxu0 %v2857
      %v3027 = vpop.f32.mrf.mxu0
      %v3028 = vadd.f32 0.0, %v3027
      %v3029 = vpop.f32.mrf.mxu0
      %v3030 = vadd.f32 0.0, %v3029
      %3031 = vmatmul.bf16.gmra.mxu0 %v2859
      %v3032 = vpop.f32.mrf.mxu0
      %v3033 = vadd.f32 0.0, %v3032
      %v3034 = vpop.f32.mrf.mxu0
      %v3035 = vadd.f32 0.0, %v3034
      %3036 = vmatmul.bf16.gmra.mxu0 %v2861
      %v3037 = vpop.f32.mrf.mxu0
      %v3038 = vadd.f32 0.0, %v3037
      %v3039 = vpop.f32.mrf.mxu0
      %v3040 = vadd.f32 0.0, %v3039
      %3041 = vmatmul.bf16.gmra.mxu0 %v2863
      %v3042 = vpop.f32.mrf.mxu0
      %v3043 = vadd.f32 0.0, %v3042
      %v3044 = vpop.f32.mrf.mxu0
      %v3045 = vadd.f32 0.0, %v3044
      %3046 = vmatmul.bf16.gmra.mxu0 %v2865
      %v3047 = vpop.f32.mrf.mxu0
      %v3048 = vadd.f32 0.0, %v3047
      %v3049 = vpop.f32.mrf.mxu0
      %v3050 = vadd.f32 0.0, %v3049
      %3051 = vmatmul.bf16.gmra.mxu0 %v2867
      %v3052 = vpop.f32.mrf.mxu0
      %v3053 = vadd.f32 0.0, %v3052
      %v3054 = vpop.f32.mrf.mxu0
      %v3055 = vadd.f32 0.0, %v3054
      %3056 = vmatmul.bf16.gmra.mxu0 %v2869
      %v3057 = vpop.f32.mrf.mxu0
      %v3058 = vadd.f32 0.0, %v3057
      %v3059 = vpop.f32.mrf.mxu0
      %v3060 = vadd.f32 0.0, %v3059
      %3061 = vmatmul.bf16.gmra.mxu0 %v2871
      %v3062 = vpop.f32.mrf.mxu0
      %v3063 = vadd.f32 0.0, %v3062
      %v3064 = vpop.f32.mrf.mxu0
      %v3065 = vadd.f32 0.0, %v3064
      %3066 = vmatmul.bf16.gmra.mxu0 %v2873
      %v3067 = vpop.f32.mrf.mxu0
      %v3068 = vadd.f32 0.0, %v3067
      %v3069 = vpop.f32.mrf.mxu0
      %v3070 = vadd.f32 0.0, %v3069
      %3071 = vmatmul.bf16.gmra.mxu0 %v2875
      %v3072 = vpop.f32.mrf.mxu0
      %v3073 = vadd.f32 0.0, %v3072
      %v3074 = vpop.f32.mrf.mxu0
      %v3075 = vadd.f32 0.0, %v3074
      %3076 = vdwg.mxu0
      %v3077 = vadd.f32 %v2757, %v2958
      %v3078 = vadd.f32 %v2758, %v2960
      %v3079 = vadd.f32 %v2759, %v2963
      %v3080 = vadd.f32 %v2760, %v2965
      %v3081 = vadd.f32 %v2761, %v2968
      %v3082 = vadd.f32 %v2762, %v2970
      %v3083 = vadd.f32 %v2763, %v2973
      %v3084 = vadd.f32 %v2764, %v2975
      %v3085 = vadd.f32 %v2765, %v2978
      %v3086 = vadd.f32 %v2766, %v2980
      %v3087 = vadd.f32 %v2767, %v2983
      %v3088 = vadd.f32 %v2768, %v2985
      %v3089 = vadd.f32 %v2769, %v2988
      %v3090 = vadd.f32 %v2770, %v2990
      %v3091 = vadd.f32 %v2771, %v2993
      %v3092 = vadd.f32 %v2772, %v2995
      %v3093 = vadd.f32 %v2773, %v2998
      %v3094 = vadd.f32 %v2774, %v3000
      %v3095 = vadd.f32 %v2775, %v3003
      %v3096 = vadd.f32 %v2776, %v3005
      %v3097 = vadd.f32 %v2777, %v3008
      %v3098 = vadd.f32 %v2778, %v3010
      %v3099 = vadd.f32 %v2779, %v3013
      %v3100 = vadd.f32 %v2780, %v3015
      %v3101 = vadd.f32 %v2781, %v3018
      %v3102 = vadd.f32 %v2782, %v3020
      %v3103 = vadd.f32 %v2783, %v3023
      %v3104 = vadd.f32 %v2784, %v3025
      %v3105 = vadd.f32 %v2785, %v3028
      %v3106 = vadd.f32 %v2786, %v3030
      %v3107 = vadd.f32 %v2787, %v3033
      %v3108 = vadd.f32 %v2788, %v3035
      %v3109 = vadd.f32 %v2789, %v3038
      %v3110 = vadd.f32 %v2790, %v3040
      %v3111 = vadd.f32 %v2791, %v3043
      %v3112 = vadd.f32 %v2792, %v3045
      %v3113 = vadd.f32 %v2793, %v3048
      %v3114 = vadd.f32 %v2794, %v3050
      %v3115 = vadd.f32 %v2795, %v3053
      %v3116 = vadd.f32 %v2796, %v3055
      %v3117 = vadd.f32 %v2797, %v3058
      %v3118 = vadd.f32 %v2798, %v3060
      %v3119 = vadd.f32 %v2799, %v3063
      %v3120 = vadd.f32 %v2800, %v3065
      %v3121 = vadd.f32 %v2801, %v3068
      %v3122 = vadd.f32 %v2802, %v3070
      %v3123 = vadd.f32 %v2803, %v3073
      %v3124 = vadd.f32 %v2804, %v3075
      %s3125 = scalar_lea.vmem %s281, 320
      %v3126 = vld [vmem:[%s3125] sm:$0xf]
      %v3127 = vld [vmem:[%s3125 + $0x4] sm:$0xf]
      %v3128 = vld [vmem:[%s3125 + $0x8] sm:$0xf]
      %v3129 = vld [vmem:[%s3125 + $0xc] sm:$0xf]
      %v3130 = vld [vmem:[%s3125 + $0x10] sm:$0xf]
      %v3131 = vld [vmem:[%s3125 + $0x14] sm:$0xf]
      %v3132 = vld [vmem:[%s3125 + $0x18] sm:$0xf]
      %v3133 = vld [vmem:[%s3125 + $0x1c] sm:$0xf]
      %v3134 = vld [vmem:[%s3125 + $0x20] sm:$0xf]
      %v3135 = vld [vmem:[%s3125 + $0x24] sm:$0xf]
      %v3136 = vld [vmem:[%s3125 + $0x28] sm:$0xf]
      %v3137 = vld [vmem:[%s3125 + $0x2c] sm:$0xf]
      %v3138 = vld [vmem:[%s3125 + $0x30] sm:$0xf]
      %v3139 = vld [vmem:[%s3125 + $0x34] sm:$0xf]
      %v3140 = vld [vmem:[%s3125 + $0x38] sm:$0xf]
      %v3141 = vld [vmem:[%s3125 + $0x3c] sm:$0xf]
      %v3142 = vrot.slane %v2050, 1
      %v3143 = vrot.slane %v2051, 1
      %v3144 = vsel %vm2826, %v3142, %v3143
      %v3145 = vrot.slane %v2052, 1
      %v3146 = vsel %vm2826, %v3143, %v3145
      %v3147 = vrot.slane %v2053, 1
      %v3148 = vsel %vm2826, %v3145, %v3147
      %v3149 = vrot.slane %v2054, 1
      %v3150 = vsel %vm2826, %v3147, %v3149
      %v3151 = vrot.slane %v2055, 1
      %v3152 = vsel %vm2826, %v3149, %v3151
      %v3153 = vrot.slane %v2056, 1
      %v3154 = vsel %vm2826, %v3151, %v3153
      %v3155 = vrot.slane %v2057, 1
      %v3156 = vsel %vm2826, %v3153, %v3155
      %v3157 = vrot.slane %v2058, 1
      %v3158 = vsel %vm2826, %v3155, %v3157
      %v3159 = vrot.slane %v2059, 1
      %v3160 = vsel %vm2826, %v3157, %v3159
      %v3161 = vrot.slane %v2060, 1
      %v3162 = vsel %vm2826, %v3159, %v3161
      %v3163 = vrot.slane %v2061, 1
      %v3164 = vsel %vm2826, %v3161, %v3163
      %v3165 = vrot.slane %v2062, 1
      %v3166 = vsel %vm2826, %v3163, %v3165
      %v3167 = vrot.slane %v2063, 1
      %v3168 = vsel %vm2826, %v3165, %v3167
      %v3169 = vrot.slane %v2064, 1
      %v3170 = vsel %vm2826, %v3167, %v3169
      %v3171 = vrot.slane %v2065, 1
      %v3172 = vsel %vm2826, %v3169, %v3171
      %v3173 = vrot.slane %v2066, 1
      %v3174 = vsel %vm2826, %v3171, %v3173
      %v3175 = vrot.slane %v2067, 1
      %v3176 = vsel %vm2826, %v3173, %v3175
      %v3177 = vrot.slane %v2068, 1
      %v3178 = vsel %vm2826, %v3175, %v3177
      %v3179 = vrot.slane %v2069, 1
      %v3180 = vsel %vm2826, %v3177, %v3179
      %v3181 = vrot.slane %v2070, 1
      %v3182 = vsel %vm2826, %v3179, %v3181
      %v3183 = vrot.slane %v2071, 1
      %v3184 = vsel %vm2826, %v3181, %v3183
      %v3185 = vrot.slane %v2072, 1
      %v3186 = vsel %vm2826, %v3183, %v3185
      %v3187 = vrot.slane %v2073, 1
      %v3188 = vsel %vm2826, %v3185, %v3187
      %v3189 = vrot.slane %v2074, 1
      %v3190 = vsel %vm2826, %v3187, %v3189
      %v3231 = vunpack.c.l.b16 %v3126
      %v3232 = vunpack.c.l.b16 %v3127
      %v3233 = vunpack.c.l.b16 %v3128
      %v3234 = vunpack.c.l.b16 %v3129
      %v3235 = vunpack.c.l.b16 %v3130
      %v3236 = vunpack.c.l.b16 %v3131
      %v3237 = vunpack.c.l.b16 %v3132
      %v3238 = vunpack.c.l.b16 %v3133
      %v3239 = vunpack.c.l.b16 %v3134
      %v3240 = vunpack.c.l.b16 %v3135
      %v3241 = vunpack.c.l.b16 %v3136
      %v3242 = vunpack.c.l.b16 %v3137
      %v3243 = vunpack.c.l.b16 %v3138
      %v3244 = vunpack.c.l.b16 %v3139
      %v3245 = vunpack.c.l.b16 %v3140
      %v3246 = vunpack.c.l.b16 %v3141
      %v3247 = vpack.c.b16 %v3232, %v3231
      %v3248 = vpack.c.b16 %v3234, %v3233
      %v3249 = vpack.c.b16 %v3236, %v3235
      %v3250 = vpack.c.b16 %v3238, %v3237
      %v3251 = vpack.c.b16 %v3240, %v3239
      %v3252 = vpack.c.b16 %v3242, %v3241
      %v3253 = vpack.c.b16 %v3244, %v3243
      %v3254 = vpack.c.b16 %v3246, %v3245
      %3263 = vmatpush.bf16.msra.mxu0 %v3254
      %3264 = vmatpush.bf16.msra.mxu0 %v3253
      %3265 = vmatpush.bf16.msra.mxu0 %v3252
      %3266 = vmatpush.bf16.msra.mxu0 %v3251
      %3267 = vmatpush.bf16.msra.mxu0 %v3250
      %3268 = vmatpush.bf16.msra.mxu0 %v3249
      %3269 = vmatpush.bf16.msra.mxu0 %v3248
      %3270 = vmatpush.bf16.msra.mxu0 %v3247
      %3271 = vmatmul.bf16.gmra.mxu0 %v3144
      %v3272 = vpop.f32.mrf.mxu0
      %v3273 = vadd.f32 0.0, %v3272
      %v3274 = vpop.f32.mrf.mxu0
      %v3275 = vadd.f32 0.0, %v3274
      %3276 = vmatmul.bf16.gmra.mxu0 %v3146
      %v3277 = vpop.f32.mrf.mxu0
      %v3278 = vadd.f32 0.0, %v3277
      %v3279 = vpop.f32.mrf.mxu0
      %v3280 = vadd.f32 0.0, %v3279
      %3281 = vmatmul.bf16.gmra.mxu0 %v3148
      %v3282 = vpop.f32.mrf.mxu0
      %v3283 = vadd.f32 0.0, %v3282
      %v3284 = vpop.f32.mrf.mxu0
      %v3285 = vadd.f32 0.0, %v3284
      %3286 = vmatmul.bf16.gmra.mxu0 %v3150
      %v3287 = vpop.f32.mrf.mxu0
      %v3288 = vadd.f32 0.0, %v3287
      %v3289 = vpop.f32.mrf.mxu0
      %v3290 = vadd.f32 0.0, %v3289
      %3291 = vmatmul.bf16.gmra.mxu0 %v3152
      %v3292 = vpop.f32.mrf.mxu0
      %v3293 = vadd.f32 0.0, %v3292
      %v3294 = vpop.f32.mrf.mxu0
      %v3295 = vadd.f32 0.0, %v3294
      %3296 = vmatmul.bf16.gmra.mxu0 %v3154
      %v3297 = vpop.f32.mrf.mxu0
      %v3298 = vadd.f32 0.0, %v3297
      %v3299 = vpop.f32.mrf.mxu0
      %v3300 = vadd.f32 0.0, %v3299
      %3301 = vmatmul.bf16.gmra.mxu0 %v3156
      %v3302 = vpop.f32.mrf.mxu0
      %v3303 = vadd.f32 0.0, %v3302
      %v3304 = vpop.f32.mrf.mxu0
      %v3305 = vadd.f32 0.0, %v3304
      %3306 = vmatmul.bf16.gmra.mxu0 %v3158
      %v3307 = vpop.f32.mrf.mxu0
      %v3308 = vadd.f32 0.0, %v3307
      %v3309 = vpop.f32.mrf.mxu0
      %v3310 = vadd.f32 0.0, %v3309
      %3311 = vmatmul.bf16.gmra.mxu0 %v3160
      %v3312 = vpop.f32.mrf.mxu0
      %v3313 = vadd.f32 0.0, %v3312
      %v3314 = vpop.f32.mrf.mxu0
      %v3315 = vadd.f32 0.0, %v3314
      %3316 = vmatmul.bf16.gmra.mxu0 %v3162
      %v3317 = vpop.f32.mrf.mxu0
      %v3318 = vadd.f32 0.0, %v3317
      %v3319 = vpop.f32.mrf.mxu0
      %v3320 = vadd.f32 0.0, %v3319
      %3321 = vmatmul.bf16.gmra.mxu0 %v3164
      %v3322 = vpop.f32.mrf.mxu0
      %v3323 = vadd.f32 0.0, %v3322
      %v3324 = vpop.f32.mrf.mxu0
      %v3325 = vadd.f32 0.0, %v3324
      %3326 = vmatmul.bf16.gmra.mxu0 %v3166
      %v3327 = vpop.f32.mrf.mxu0
      %v3328 = vadd.f32 0.0, %v3327
      %v3329 = vpop.f32.mrf.mxu0
      %v3330 = vadd.f32 0.0, %v3329
      %3331 = vmatmul.bf16.gmra.mxu0 %v3168
      %v3332 = vpop.f32.mrf.mxu0
      %v3333 = vadd.f32 0.0, %v3332
      %v3334 = vpop.f32.mrf.mxu0
      %v3335 = vadd.f32 0.0, %v3334
      %3336 = vmatmul.bf16.gmra.mxu0 %v3170
      %v3337 = vpop.f32.mrf.mxu0
      %v3338 = vadd.f32 0.0, %v3337
      %v3339 = vpop.f32.mrf.mxu0
      %v3340 = vadd.f32 0.0, %v3339
      %3341 = vmatmul.bf16.gmra.mxu0 %v3172
      %v3342 = vpop.f32.mrf.mxu0
      %v3343 = vadd.f32 0.0, %v3342
      %v3344 = vpop.f32.mrf.mxu0
      %v3345 = vadd.f32 0.0, %v3344
      %3346 = vmatmul.bf16.gmra.mxu0 %v3174
      %v3347 = vpop.f32.mrf.mxu0
      %v3348 = vadd.f32 0.0, %v3347
      %v3349 = vpop.f32.mrf.mxu0
      %v3350 = vadd.f32 0.0, %v3349
      %3351 = vmatmul.bf16.gmra.mxu0 %v3176
      %v3352 = vpop.f32.mrf.mxu0
      %v3353 = vadd.f32 0.0, %v3352
      %v3354 = vpop.f32.mrf.mxu0
      %v3355 = vadd.f32 0.0, %v3354
      %3356 = vmatmul.bf16.gmra.mxu0 %v3178
      %v3357 = vpop.f32.mrf.mxu0
      %v3358 = vadd.f32 0.0, %v3357
      %v3359 = vpop.f32.mrf.mxu0
      %v3360 = vadd.f32 0.0, %v3359
      %3361 = vmatmul.bf16.gmra.mxu0 %v3180
      %v3362 = vpop.f32.mrf.mxu0
      %v3363 = vadd.f32 0.0, %v3362
      %v3364 = vpop.f32.mrf.mxu0
      %v3365 = vadd.f32 0.0, %v3364
      %3366 = vmatmul.bf16.gmra.mxu0 %v3182
      %v3367 = vpop.f32.mrf.mxu0
      %v3368 = vadd.f32 0.0, %v3367
      %v3369 = vpop.f32.mrf.mxu0
      %v3370 = vadd.f32 0.0, %v3369
      %3371 = vmatmul.bf16.gmra.mxu0 %v3184
      %v3372 = vpop.f32.mrf.mxu0
      %v3373 = vadd.f32 0.0, %v3372
      %v3374 = vpop.f32.mrf.mxu0
      %v3375 = vadd.f32 0.0, %v3374
      %3376 = vmatmul.bf16.gmra.mxu0 %v3186
      %v3377 = vpop.f32.mrf.mxu0
      %v3378 = vadd.f32 0.0, %v3377
      %v3379 = vpop.f32.mrf.mxu0
      %v3380 = vadd.f32 0.0, %v3379
      %3381 = vmatmul.bf16.gmra.mxu0 %v3188
      %v3382 = vpop.f32.mrf.mxu0
      %v3383 = vadd.f32 0.0, %v3382
      %v3384 = vpop.f32.mrf.mxu0
      %v3385 = vadd.f32 0.0, %v3384
      %3386 = vmatmul.bf16.gmra.mxu0 %v3190
      %v3387 = vpop.f32.mrf.mxu0
      %v3388 = vadd.f32 0.0, %v3387
      %v3389 = vpop.f32.mrf.mxu0
      %v3390 = vadd.f32 0.0, %v3389
      %3391 = vdwg.mxu0
      %v3392 = vadd.f32 %v3077, %v3273
      %v3393 = vadd.f32 %v3078, %v3275
      %v3394 = vadd.f32 %v3079, %v3278
      %v3395 = vadd.f32 %v3080, %v3280
      %v3396 = vadd.f32 %v3081, %v3283
      %v3397 = vadd.f32 %v3082, %v3285
      %v3398 = vadd.f32 %v3083, %v3288
      %v3399 = vadd.f32 %v3084, %v3290
      %v3400 = vadd.f32 %v3085, %v3293
      %v3401 = vadd.f32 %v3086, %v3295
      %v3402 = vadd.f32 %v3087, %v3298
      %v3403 = vadd.f32 %v3088, %v3300
      %v3404 = vadd.f32 %v3089, %v3303
      %v3405 = vadd.f32 %v3090, %v3305
      %v3406 = vadd.f32 %v3091, %v3308
      %v3407 = vadd.f32 %v3092, %v3310
      %v3408 = vadd.f32 %v3093, %v3313
      %v3409 = vadd.f32 %v3094, %v3315
      %v3410 = vadd.f32 %v3095, %v3318
      %v3411 = vadd.f32 %v3096, %v3320
      %v3412 = vadd.f32 %v3097, %v3323
      %v3413 = vadd.f32 %v3098, %v3325
      %v3414 = vadd.f32 %v3099, %v3328
      %v3415 = vadd.f32 %v3100, %v3330
      %v3416 = vadd.f32 %v3101, %v3333
      %v3417 = vadd.f32 %v3102, %v3335
      %v3418 = vadd.f32 %v3103, %v3338
      %v3419 = vadd.f32 %v3104, %v3340
      %v3420 = vadd.f32 %v3105, %v3343
      %v3421 = vadd.f32 %v3106, %v3345
      %v3422 = vadd.f32 %v3107, %v3348
      %v3423 = vadd.f32 %v3108, %v3350
      %v3424 = vadd.f32 %v3109, %v3353
      %v3425 = vadd.f32 %v3110, %v3355
      %v3426 = vadd.f32 %v3111, %v3358
      %v3427 = vadd.f32 %v3112, %v3360
      %v3428 = vadd.f32 %v3113, %v3363
      %v3429 = vadd.f32 %v3114, %v3365
      %v3430 = vadd.f32 %v3115, %v3368
      %v3431 = vadd.f32 %v3116, %v3370
      %v3432 = vadd.f32 %v3117, %v3373
      %v3433 = vadd.f32 %v3118, %v3375
      %v3434 = vadd.f32 %v3119, %v3378
      %v3435 = vadd.f32 %v3120, %v3380
      %v3436 = vadd.f32 %v3121, %v3383
      %v3437 = vadd.f32 %v3122, %v3385
      %v3438 = vadd.f32 %v3123, %v3388
      %v3439 = vadd.f32 %v3124, %v3390
      %s3440 = scalar_lea.vmem %s281, 512
      %v3441 = vld [vmem:[%s3440] sm:$0xf]
      %v3442 = vld [vmem:[%s3440 + $0x4] sm:$0xf]
      %v3443 = vld [vmem:[%s3440 + $0x8] sm:$0xf]
      %v3444 = vld [vmem:[%s3440 + $0xc] sm:$0xf]
      %v3445 = vld [vmem:[%s3440 + $0x10] sm:$0xf]
      %v3446 = vld [vmem:[%s3440 + $0x14] sm:$0xf]
      %v3447 = vld [vmem:[%s3440 + $0x18] sm:$0xf]
      %v3448 = vld [vmem:[%s3440 + $0x1c] sm:$0xf]
      %v3449 = vld [vmem:[%s3440 + $0x20] sm:$0xf]
      %v3450 = vld [vmem:[%s3440 + $0x24] sm:$0xf]
      %v3451 = vld [vmem:[%s3440 + $0x28] sm:$0xf]
      %v3452 = vld [vmem:[%s3440 + $0x2c] sm:$0xf]
      %v3453 = vld [vmem:[%s3440 + $0x30] sm:$0xf]
      %v3454 = vld [vmem:[%s3440 + $0x34] sm:$0xf]
      %v3455 = vld [vmem:[%s3440 + $0x38] sm:$0xf]
      %v3456 = vld [vmem:[%s3440 + $0x3c] sm:$0xf]
      %v3457 = vrot.slane %v2543, 1
      %v3458 = vsel %vm2826, %v2872, %v3457
      %v3459 = vrot.slane %v2544, 1
      %v3460 = vsel %vm2826, %v3457, %v3459
      %v3461 = vrot.slane %v2545, 1
      %v3462 = vsel %vm2826, %v3459, %v3461
      %v3463 = vrot.slane %v2546, 1
      %v3464 = vsel %vm2826, %v3461, %v3463
      %v3485 = vunpack.c.l.b16 %v3441
      %v3486 = vunpack.c.l.b16 %v3442
      %v3487 = vunpack.c.l.b16 %v3443
      %v3488 = vunpack.c.l.b16 %v3444
      %v3489 = vunpack.c.l.b16 %v3445
      %v3490 = vunpack.c.l.b16 %v3446
      %v3491 = vunpack.c.l.b16 %v3447
      %v3492 = vunpack.c.l.b16 %v3448
      %v3493 = vunpack.c.l.b16 %v3449
      %v3494 = vunpack.c.l.b16 %v3450
      %v3495 = vunpack.c.l.b16 %v3451
      %v3496 = vunpack.c.l.b16 %v3452
      %v3497 = vunpack.c.l.b16 %v3453
      %v3498 = vunpack.c.l.b16 %v3454
      %v3499 = vunpack.c.l.b16 %v3455
      %v3500 = vunpack.c.l.b16 %v3456
      %v3501 = vpack.c.b16 %v3486, %v3485
      %v3502 = vpack.c.b16 %v3488, %v3487
      %v3503 = vpack.c.b16 %v3490, %v3489
      %v3504 = vpack.c.b16 %v3492, %v3491
      %v3505 = vpack.c.b16 %v3494, %v3493
      %v3506 = vpack.c.b16 %v3496, %v3495
      %v3507 = vpack.c.b16 %v3498, %v3497
      %v3508 = vpack.c.b16 %v3500, %v3499
      %3517 = vmatpush.bf16.msra.mxu0 %v3508
      %3518 = vmatpush.bf16.msra.mxu0 %v3507
      %3519 = vmatpush.bf16.msra.mxu0 %v3506
      %3520 = vmatpush.bf16.msra.mxu0 %v3505
      %3521 = vmatpush.bf16.msra.mxu0 %v3504
      %3522 = vmatpush.bf16.msra.mxu0 %v3503
      %3523 = vmatpush.bf16.msra.mxu0 %v3502
      %3524 = vmatpush.bf16.msra.mxu0 %v3501
      %3525 = vmatmul.bf16.gmra.mxu0 %v2835
      %v3526 = vpop.f32.mrf.mxu0
      %v3527 = vadd.f32 0.0, %v3526
      %v3528 = vpop.f32.mrf.mxu0
      %v3529 = vadd.f32 0.0, %v3528
      %3530 = vmatmul.bf16.gmra.mxu0 %v2837
      %v3531 = vpop.f32.mrf.mxu0
      %v3532 = vadd.f32 0.0, %v3531
      %v3533 = vpop.f32.mrf.mxu0
      %v3534 = vadd.f32 0.0, %v3533
      %3535 = vmatmul.bf16.gmra.mxu0 %v2839
      %v3536 = vpop.f32.mrf.mxu0
      %v3537 = vadd.f32 0.0, %v3536
      %v3538 = vpop.f32.mrf.mxu0
      %v3539 = vadd.f32 0.0, %v3538
      %3540 = vmatmul.bf16.gmra.mxu0 %v2841
      %v3541 = vpop.f32.mrf.mxu0
      %v3542 = vadd.f32 0.0, %v3541
      %v3543 = vpop.f32.mrf.mxu0
      %v3544 = vadd.f32 0.0, %v3543
      %3545 = vmatmul.bf16.gmra.mxu0 %v2843
      %v3546 = vpop.f32.mrf.mxu0
      %v3547 = vadd.f32 0.0, %v3546
      %v3548 = vpop.f32.mrf.mxu0
      %v3549 = vadd.f32 0.0, %v3548
      %3550 = vmatmul.bf16.gmra.mxu0 %v2845
      %v3551 = vpop.f32.mrf.mxu0
      %v3552 = vadd.f32 0.0, %v3551
      %v3553 = vpop.f32.mrf.mxu0
      %v3554 = vadd.f32 0.0, %v3553
      %3555 = vmatmul.bf16.gmra.mxu0 %v2847
      %v3556 = vpop.f32.mrf.mxu0
      %v3557 = vadd.f32 0.0, %v3556
      %v3558 = vpop.f32.mrf.mxu0
      %v3559 = vadd.f32 0.0, %v3558
      %3560 = vmatmul.bf16.gmra.mxu0 %v2849
      %v3561 = vpop.f32.mrf.mxu0
      %v3562 = vadd.f32 0.0, %v3561
      %v3563 = vpop.f32.mrf.mxu0
      %v3564 = vadd.f32 0.0, %v3563
      %3565 = vmatmul.bf16.gmra.mxu0 %v2851
      %v3566 = vpop.f32.mrf.mxu0
      %v3567 = vadd.f32 0.0, %v3566
      %v3568 = vpop.f32.mrf.mxu0
      %v3569 = vadd.f32 0.0, %v3568
      %3570 = vmatmul.bf16.gmra.mxu0 %v2853
      %v3571 = vpop.f32.mrf.mxu0
      %v3572 = vadd.f32 0.0, %v3571
      %v3573 = vpop.f32.mrf.mxu0
      %v3574 = vadd.f32 0.0, %v3573
      %3575 = vmatmul.bf16.gmra.mxu0 %v2855
      %v3576 = vpop.f32.mrf.mxu0
      %v3577 = vadd.f32 0.0, %v3576
      %v3578 = vpop.f32.mrf.mxu0
      %v3579 = vadd.f32 0.0, %v3578
      %3580 = vmatmul.bf16.gmra.mxu0 %v2857
      %v3581 = vpop.f32.mrf.mxu0
      %v3582 = vadd.f32 0.0, %v3581
      %v3583 = vpop.f32.mrf.mxu0
      %v3584 = vadd.f32 0.0, %v3583
      %3585 = vmatmul.bf16.gmra.mxu0 %v2859
      %v3586 = vpop.f32.mrf.mxu0
      %v3587 = vadd.f32 0.0, %v3586
      %v3588 = vpop.f32.mrf.mxu0
      %v3589 = vadd.f32 0.0, %v3588
      %3590 = vmatmul.bf16.gmra.mxu0 %v2861
      %v3591 = vpop.f32.mrf.mxu0
      %v3592 = vadd.f32 0.0, %v3591
      %v3593 = vpop.f32.mrf.mxu0
      %v3594 = vadd.f32 0.0, %v3593
      %3595 = vmatmul.bf16.gmra.mxu0 %v2863
      %v3596 = vpop.f32.mrf.mxu0
      %v3597 = vadd.f32 0.0, %v3596
      %v3598 = vpop.f32.mrf.mxu0
      %v3599 = vadd.f32 0.0, %v3598
      %3600 = vmatmul.bf16.gmra.mxu0 %v2865
      %v3601 = vpop.f32.mrf.mxu0
      %v3602 = vadd.f32 0.0, %v3601
      %v3603 = vpop.f32.mrf.mxu0
      %v3604 = vadd.f32 0.0, %v3603
      %3605 = vmatmul.bf16.gmra.mxu0 %v2867
      %v3606 = vpop.f32.mrf.mxu0
      %v3607 = vadd.f32 0.0, %v3606
      %v3608 = vpop.f32.mrf.mxu0
      %v3609 = vadd.f32 0.0, %v3608
      %3610 = vmatmul.bf16.gmra.mxu0 %v2869
      %v3611 = vpop.f32.mrf.mxu0
      %v3612 = vadd.f32 0.0, %v3611
      %v3613 = vpop.f32.mrf.mxu0
      %v3614 = vadd.f32 0.0, %v3613
      %3615 = vmatmul.bf16.gmra.mxu0 %v2871
      %v3616 = vpop.f32.mrf.mxu0
      %v3617 = vadd.f32 0.0, %v3616
      %v3618 = vpop.f32.mrf.mxu0
      %v3619 = vadd.f32 0.0, %v3618
      %3620 = vmatmul.bf16.gmra.mxu0 %v2873
      %v3621 = vpop.f32.mrf.mxu0
      %v3622 = vadd.f32 0.0, %v3621
      %v3623 = vpop.f32.mrf.mxu0
      %v3624 = vadd.f32 0.0, %v3623
      %3625 = vmatmul.bf16.gmra.mxu0 %v3458
      %v3626 = vpop.f32.mrf.mxu0
      %v3627 = vadd.f32 0.0, %v3626
      %v3628 = vpop.f32.mrf.mxu0
      %v3629 = vadd.f32 0.0, %v3628
      %3630 = vmatmul.bf16.gmra.mxu0 %v3460
      %v3631 = vpop.f32.mrf.mxu0
      %v3632 = vadd.f32 0.0, %v3631
      %v3633 = vpop.f32.mrf.mxu0
      %v3634 = vadd.f32 0.0, %v3633
      %3635 = vmatmul.bf16.gmra.mxu0 %v3462
      %v3636 = vpop.f32.mrf.mxu0
      %v3637 = vadd.f32 0.0, %v3636
      %v3638 = vpop.f32.mrf.mxu0
      %v3639 = vadd.f32 0.0, %v3638
      %3640 = vmatmul.bf16.gmra.mxu0 %v3464
      %v3641 = vpop.f32.mrf.mxu0
      %v3642 = vadd.f32 0.0, %v3641
      %v3643 = vpop.f32.mrf.mxu0
      %v3644 = vadd.f32 0.0, %v3643
      %3645 = vdwg.mxu0
      %v3646 = vadd.f32 %v3392, %v3527
      %v3647 = vadd.f32 %v3393, %v3529
      %v3648 = vadd.f32 %v3394, %v3532
      %v3649 = vadd.f32 %v3395, %v3534
      %v3650 = vadd.f32 %v3396, %v3537
      %v3651 = vadd.f32 %v3397, %v3539
      %v3652 = vadd.f32 %v3398, %v3542
      %v3653 = vadd.f32 %v3399, %v3544
      %v3654 = vadd.f32 %v3400, %v3547
      %v3655 = vadd.f32 %v3401, %v3549
      %v3656 = vadd.f32 %v3402, %v3552
      %v3657 = vadd.f32 %v3403, %v3554
      %v3658 = vadd.f32 %v3404, %v3557
      %v3659 = vadd.f32 %v3405, %v3559
      %v3660 = vadd.f32 %v3406, %v3562
      %v3661 = vadd.f32 %v3407, %v3564
      %v3662 = vadd.f32 %v3408, %v3567
      %v3663 = vadd.f32 %v3409, %v3569
      %v3664 = vadd.f32 %v3410, %v3572
      %v3665 = vadd.f32 %v3411, %v3574
      %v3666 = vadd.f32 %v3412, %v3577
      %v3667 = vadd.f32 %v3413, %v3579
      %v3668 = vadd.f32 %v3414, %v3582
      %v3669 = vadd.f32 %v3415, %v3584
      %v3670 = vadd.f32 %v3416, %v3587
      %v3671 = vadd.f32 %v3417, %v3589
      %v3672 = vadd.f32 %v3418, %v3592
      %v3673 = vadd.f32 %v3419, %v3594
      %v3674 = vadd.f32 %v3420, %v3597
      %v3675 = vadd.f32 %v3421, %v3599
      %v3676 = vadd.f32 %v3422, %v3602
      %v3677 = vadd.f32 %v3423, %v3604
      %v3678 = vadd.f32 %v3424, %v3607
      %v3679 = vadd.f32 %v3425, %v3609
      %v3680 = vadd.f32 %v3426, %v3612
      %v3681 = vadd.f32 %v3427, %v3614
      %v3682 = vadd.f32 %v3428, %v3617
      %v3683 = vadd.f32 %v3429, %v3619
      %v3684 = vadd.f32 %v3430, %v3622
      %v3685 = vadd.f32 %v3431, %v3624
      %v3686 = vadd.f32 %v3432, %v3627
      %v3687 = vadd.f32 %v3433, %v3629
      %v3688 = vadd.f32 %v3434, %v3632
      %v3689 = vadd.f32 %v3435, %v3634
      %v3690 = vadd.f32 %v3436, %v3637
      %v3691 = vadd.f32 %v3437, %v3639
      %v3692 = vadd.f32 %v3438, %v3642
      %v3693 = vadd.f32 %v3439, %v3644
      %3694 = vst [vmem:[#allocation2] sm:$0xff] %v3646
      %3695 = vst [vmem:[#allocation2 + $0x8] sm:$0xff] %v3647
      %3696 = vst [vmem:[#allocation2 + $0x10] sm:$0xff] %v3648
      %3697 = vst [vmem:[#allocation2 + $0x18] sm:$0xff] %v3649
      %3698 = vst [vmem:[#allocation2 + $0x20] sm:$0xff] %v3650
      %3699 = vst [vmem:[#allocation2 + $0x28] sm:$0xff] %v3651
      %3700 = vst [vmem:[#allocation2 + $0x30] sm:$0xff] %v3652
      %3701 = vst [vmem:[#allocation2 + $0x38] sm:$0xff] %v3653
      %3702 = vst [vmem:[#allocation2 + $0x40] sm:$0xff] %v3654
      %3703 = vst [vmem:[#allocation2 + $0x48] sm:$0xff] %v3655
      %3704 = vst [vmem:[#allocation2 + $0x50] sm:$0xff] %v3656
      %3705 = vst [vmem:[#allocation2 + $0x58] sm:$0xff] %v3657
      %3706 = vst [vmem:[#allocation2 + $0x60] sm:$0xff] %v3658
      %3707 = vst [vmem:[#allocation2 + $0x68] sm:$0xff] %v3659
      %3708 = vst [vmem:[#allocation2 + $0x70] sm:$0xff] %v3660
      %3709 = vst [vmem:[#allocation2 + $0x78] sm:$0xff] %v3661
      %3710 = vst [vmem:[#allocation2 + $0x80] sm:$0xff] %v3662
      %3711 = vst [vmem:[#allocation2 + $0x88] sm:$0xff] %v3663
      %3712 = vst [vmem:[#allocation2 + $0x90] sm:$0xff] %v3664
      %3713 = vst [vmem:[#allocation2 + $0x98] sm:$0xff] %v3665
      %3714 = vst [vmem:[#allocation2 + $0xa0] sm:$0xff] %v3666
      %3715 = vst [vmem:[#allocation2 + $0xa8] sm:$0xff] %v3667
      %3716 = vst [vmem:[#allocation2 + $0xb0] sm:$0xff] %v3668
      %3717 = vst [vmem:[#allocation2 + $0xb8] sm:$0xff] %v3669
      %3718 = vst [vmem:[#allocation2 + $0xc0] sm:$0xff] %v3670
      %3719 = vst [vmem:[#allocation2 + $0xc8] sm:$0xff] %v3671
      %3720 = vst [vmem:[#allocation2 + $0xd0] sm:$0xff] %v3672
      %3721 = vst [vmem:[#allocation2 + $0xd8] sm:$0xff] %v3673
      %3722 = vst [vmem:[#allocation2 + $0xe0] sm:$0xff] %v3674
      %3723 = vst [vmem:[#allocation2 + $0xe8] sm:$0xff] %v3675
      %3724 = vst [vmem:[#allocation2 + $0xf0] sm:$0xff] %v3676
      %3725 = vst [vmem:[#allocation2 + $0xf8] sm:$0xff] %v3677
      %3726 = vst [vmem:[#allocation2 + $0x100] sm:$0xff] %v3678
      %3727 = vst [vmem:[#allocation2 + $0x108] sm:$0xff] %v3679
      %3728 = vst [vmem:[#allocation2 + $0x110] sm:$0xff] %v3680
      %3729 = vst [vmem:[#allocation2 + $0x118] sm:$0xff] %v3681
      %3730 = vst [vmem:[#allocation2 + $0x120] sm:$0xff] %v3682
      %3731 = vst [vmem:[#allocation2 + $0x128] sm:$0xff] %v3683
      %3732 = vst [vmem:[#allocation2 + $0x130] sm:$0xff] %v3684
      %3733 = vst [vmem:[#allocation2 + $0x138] sm:$0xff] %v3685
      %3734 = vst [vmem:[#allocation2 + $0x140] sm:$0xff] %v3686
      %3735 = vst [vmem:[#allocation2 + $0x148] sm:$0xff] %v3687
      %3736 = vst [vmem:[#allocation2 + $0x150] sm:$0xff] %v3688
      %3737 = vst [vmem:[#allocation2 + $0x158] sm:$0xff] %v3689
      %3738 = vst [vmem:[#allocation2 + $0x160] sm:$0xff] %v3690
      %3739 = vst [vmem:[#allocation2 + $0x168] sm:$0xff] %v3691
      %3740 = vst [vmem:[#allocation2 + $0x170] sm:$0xff] %v3692
      %3741 = vst [vmem:[#allocation2 + $0x178] sm:$0xff] %v3693
      // Predicated region
      $region41: #{upsample_bn_apply.2} parent=35 // pred_check
        %p3742 = pneg %p297
      $region42: #{upsample_bn_apply.2} parent=35 // pred_check_branch
        %3744 = sbr.rel (%p3742) target = $region44
      $region43: #{upsample_bn_apply.2} parent=35 // pred_region
        %v3745 = vld [vmem:[#allocation2] sm:$0xff]
        %v3746 = vld [vmem:[#allocation2 + $0x8] sm:$0xff]
        %v3747 = vld [vmem:[#allocation2 + $0x10] sm:$0xff]
        %v3748 = vld [vmem:[#allocation2 + $0x18] sm:$0xff]
        %v3749 = vld [vmem:[#allocation2 + $0x20] sm:$0xff]
        %v3750 = vld [vmem:[#allocation2 + $0x28] sm:$0xff]
        %v3751 = vld [vmem:[#allocation2 + $0x30] sm:$0xff]
        %v3752 = vld [vmem:[#allocation2 + $0x38] sm:$0xff]
        %v3753 = vld [vmem:[#allocation2 + $0x40] sm:$0xff]
        %v3754 = vld [vmem:[#allocation2 + $0x48] sm:$0xff]
        %v3755 = vld [vmem:[#allocation2 + $0x50] sm:$0xff]
        %v3756 = vld [vmem:[#allocation2 + $0x58] sm:$0xff]
        %v3757 = vld [vmem:[#allocation2 + $0x60] sm:$0xff]
        %v3758 = vld [vmem:[#allocation2 + $0x68] sm:$0xff]
        %v3759 = vld [vmem:[#allocation2 + $0x70] sm:$0xff]
        %v3760 = vld [vmem:[#allocation2 + $0x78] sm:$0xff]
        %v3761 = vld [vmem:[#allocation2 + $0x80] sm:$0xff]
        %v3762 = vld [vmem:[#allocation2 + $0x88] sm:$0xff]
        %v3763 = vld [vmem:[#allocation2 + $0x90] sm:$0xff]
        %v3764 = vld [vmem:[#allocation2 + $0x98] sm:$0xff]
        %v3765 = vld [vmem:[#allocation2 + $0xa0] sm:$0xff]
        %v3766 = vld [vmem:[#allocation2 + $0xa8] sm:$0xff]
        %v3767 = vld [vmem:[#allocation2 + $0xb0] sm:$0xff]
        %v3768 = vld [vmem:[#allocation2 + $0xb8] sm:$0xff]
        %v3769 = vld [vmem:[#allocation2 + $0xc0] sm:$0xff]
        %v3770 = vld [vmem:[#allocation2 + $0xc8] sm:$0xff]
        %v3771 = vld [vmem:[#allocation2 + $0xd0] sm:$0xff]
        %v3772 = vld [vmem:[#allocation2 + $0xd8] sm:$0xff]
        %v3773 = vld [vmem:[#allocation2 + $0xe0] sm:$0xff]
        %v3774 = vld [vmem:[#allocation2 + $0xe8] sm:$0xff]
        %v3775 = vld [vmem:[#allocation2 + $0xf0] sm:$0xff]
        %v3776 = vld [vmem:[#allocation2 + $0xf8] sm:$0xff]
        %v3777 = vld [vmem:[#allocation2 + $0x100] sm:$0xff]
        %v3778 = vld [vmem:[#allocation2 + $0x108] sm:$0xff]
        %v3779 = vld [vmem:[#allocation2 + $0x110] sm:$0xff]
        %v3780 = vld [vmem:[#allocation2 + $0x118] sm:$0xff]
        %v3781 = vld [vmem:[#allocation2 + $0x120] sm:$0xff]
        %v3782 = vld [vmem:[#allocation2 + $0x128] sm:$0xff]
        %v3783 = vld [vmem:[#allocation2 + $0x130] sm:$0xff]
        %v3784 = vld [vmem:[#allocation2 + $0x138] sm:$0xff]
        %v3785 = vld [vmem:[#allocation2 + $0x140] sm:$0xff]
        %v3786 = vld [vmem:[#allocation2 + $0x148] sm:$0xff]
        %v3787 = vld [vmem:[#allocation2 + $0x150] sm:$0xff]
        %v3788 = vld [vmem:[#allocation2 + $0x158] sm:$0xff]
        %v3789 = vld [vmem:[#allocation2 + $0x160] sm:$0xff]
        %v3790 = vld [vmem:[#allocation2 + $0x168] sm:$0xff]
        %v3791 = vld [vmem:[#allocation2 + $0x170] sm:$0xff]
        %v3792 = vld [vmem:[#allocation2 + $0x178] sm:$0xff]
        %v3793 = vld [vmem:[%s285] sm:$0x1]
        %v3795 = vperm.slane %v3793, 0
        %v3797 = vmul.f32 %v3745, %v3795
        %v3798 = vmul.f32 %v3746, %v3795
        %v3799 = vmul.f32 %v3747, %v3795
        %v3800 = vmul.f32 %v3748, %v3795
        %v3801 = vmul.f32 %v3749, %v3795
        %v3802 = vmul.f32 %v3750, %v3795
        %v3803 = vmul.f32 %v3751, %v3795
        %v3804 = vmul.f32 %v3752, %v3795
        %v3805 = vmul.f32 %v3753, %v3795
        %v3806 = vmul.f32 %v3754, %v3795
        %v3807 = vmul.f32 %v3755, %v3795
        %v3808 = vmul.f32 %v3756, %v3795
        %v3809 = vmul.f32 %v3757, %v3795
        %v3810 = vmul.f32 %v3758, %v3795
        %v3811 = vmul.f32 %v3759, %v3795
        %v3812 = vmul.f32 %v3760, %v3795
        %v3813 = vmul.f32 %v3761, %v3795
        %v3814 = vmul.f32 %v3762, %v3795
        %v3815 = vmul.f32 %v3763, %v3795
        %v3816 = vmul.f32 %v3764, %v3795
        %v3817 = vmul.f32 %v3765, %v3795
        %v3818 = vmul.f32 %v3766, %v3795
        %v3819 = vmul.f32 %v3767, %v3795
        %v3820 = vmul.f32 %v3768, %v3795
        %v3821 = vmul.f32 %v3769, %v3795
        %v3822 = vmul.f32 %v3770, %v3795
        %v3823 = vmul.f32 %v3771, %v3795
        %v3824 = vmul.f32 %v3772, %v3795
        %v3825 = vmul.f32 %v3773, %v3795
        %v3826 = vmul.f32 %v3774, %v3795
        %v3827 = vmul.f32 %v3775, %v3795
        %v3828 = vmul.f32 %v3776, %v3795
        %v3829 = vmul.f32 %v3777, %v3795
        %v3830 = vmul.f32 %v3778, %v3795
        %v3831 = vmul.f32 %v3779, %v3795
        %v3832 = vmul.f32 %v3780, %v3795
        %v3833 = vmul.f32 %v3781, %v3795
        %v3834 = vmul.f32 %v3782, %v3795
        %v3835 = vmul.f32 %v3783, %v3795
        %v3836 = vmul.f32 %v3784, %v3795
        %v3837 = vmul.f32 %v3785, %v3795
        %v3838 = vmul.f32 %v3786, %v3795
        %v3839 = vmul.f32 %v3787, %v3795
        %v3840 = vmul.f32 %v3788, %v3795
        %v3841 = vmul.f32 %v3789, %v3795
        %v3842 = vmul.f32 %v3790, %v3795
        %v3843 = vmul.f32 %v3791, %v3795
        %v3844 = vmul.f32 %v3792, %v3795
        %v3845 = vld [vmem:[%s288] sm:$0x1]
        %v3847 = vperm.slane %v3845, 0
        %v3849 = vadd.f32 %v3797, %v3847
        %v3850 = vadd.f32 %v3798, %v3847
        %v3851 = vadd.f32 %v3799, %v3847
        %v3852 = vadd.f32 %v3800, %v3847
        %v3853 = vadd.f32 %v3801, %v3847
        %v3854 = vadd.f32 %v3802, %v3847
        %v3855 = vadd.f32 %v3803, %v3847
        %v3856 = vadd.f32 %v3804, %v3847
        %v3857 = vadd.f32 %v3805, %v3847
        %v3858 = vadd.f32 %v3806, %v3847
        %v3859 = vadd.f32 %v3807, %v3847
        %v3860 = vadd.f32 %v3808, %v3847
        %v3861 = vadd.f32 %v3809, %v3847
        %v3862 = vadd.f32 %v3810, %v3847
        %v3863 = vadd.f32 %v3811, %v3847
        %v3864 = vadd.f32 %v3812, %v3847
        %v3865 = vadd.f32 %v3813, %v3847
        %v3866 = vadd.f32 %v3814, %v3847
        %v3867 = vadd.f32 %v3815, %v3847
        %v3868 = vadd.f32 %v3816, %v3847
        %v3869 = vadd.f32 %v3817, %v3847
        %v3870 = vadd.f32 %v3818, %v3847
        %v3871 = vadd.f32 %v3819, %v3847
        %v3872 = vadd.f32 %v3820, %v3847
        %v3873 = vadd.f32 %v3821, %v3847
        %v3874 = vadd.f32 %v3822, %v3847
        %v3875 = vadd.f32 %v3823, %v3847
        %v3876 = vadd.f32 %v3824, %v3847
        %v3877 = vadd.f32 %v3825, %v3847
        %v3878 = vadd.f32 %v3826, %v3847
        %v3879 = vadd.f32 %v3827, %v3847
        %v3880 = vadd.f32 %v3828, %v3847
        %v3881 = vadd.f32 %v3829, %v3847
        %v3882 = vadd.f32 %v3830, %v3847
        %v3883 = vadd.f32 %v3831, %v3847
        %v3884 = vadd.f32 %v3832, %v3847
        %v3885 = vadd.f32 %v3833, %v3847
        %v3886 = vadd.f32 %v3834, %v3847
        %v3887 = vadd.f32 %v3835, %v3847
        %v3888 = vadd.f32 %v3836, %v3847
        %v3889 = vadd.f32 %v3837, %v3847
        %v3890 = vadd.f32 %v3838, %v3847
        %v3891 = vadd.f32 %v3839, %v3847
        %v3892 = vadd.f32 %v3840, %v3847
        %v3893 = vadd.f32 %v3841, %v3847
        %v3894 = vadd.f32 %v3842, %v3847
        %v3895 = vadd.f32 %v3843, %v3847
        %v3896 = vadd.f32 %v3844, %v3847
        %vm3897 = vcmp.ge.f32.partialorder %v3849, 0.0
        %vm3898 = vcmp.ge.f32.partialorder %v3850, 0.0
        %vm3899 = vcmp.ge.f32.partialorder %v3851, 0.0
        %vm3900 = vcmp.ge.f32.partialorder %v3852, 0.0
        %vm3901 = vcmp.ge.f32.partialorder %v3853, 0.0
        %vm3902 = vcmp.ge.f32.partialorder %v3854, 0.0
        %vm3903 = vcmp.ge.f32.partialorder %v3855, 0.0
        %vm3904 = vcmp.ge.f32.partialorder %v3856, 0.0
        %vm3905 = vcmp.ge.f32.partialorder %v3857, 0.0
        %vm3906 = vcmp.ge.f32.partialorder %v3858, 0.0
        %vm3907 = vcmp.ge.f32.partialorder %v3859, 0.0
        %vm3908 = vcmp.ge.f32.partialorder %v3860, 0.0
        %vm3909 = vcmp.ge.f32.partialorder %v3861, 0.0
        %vm3910 = vcmp.ge.f32.partialorder %v3862, 0.0
        %vm3911 = vcmp.ge.f32.partialorder %v3863, 0.0
        %vm3912 = vcmp.ge.f32.partialorder %v3864, 0.0
        %vm3913 = vcmp.ge.f32.partialorder %v3865, 0.0
        %vm3914 = vcmp.ge.f32.partialorder %v3866, 0.0
        %vm3915 = vcmp.ge.f32.partialorder %v3867, 0.0
        %vm3916 = vcmp.ge.f32.partialorder %v3868, 0.0
        %vm3917 = vcmp.ge.f32.partialorder %v3869, 0.0
        %vm3918 = vcmp.ge.f32.partialorder %v3870, 0.0
        %vm3919 = vcmp.ge.f32.partialorder %v3871, 0.0
        %vm3920 = vcmp.ge.f32.partialorder %v3872, 0.0
        %vm3921 = vcmp.ge.f32.partialorder %v3873, 0.0
        %vm3922 = vcmp.ge.f32.partialorder %v3874, 0.0
        %vm3923 = vcmp.ge.f32.partialorder %v3875, 0.0
        %vm3924 = vcmp.ge.f32.partialorder %v3876, 0.0
        %vm3925 = vcmp.ge.f32.partialorder %v3877, 0.0
        %vm3926 = vcmp.ge.f32.partialorder %v3878, 0.0
        %vm3927 = vcmp.ge.f32.partialorder %v3879, 0.0
        %vm3928 = vcmp.ge.f32.partialorder %v3880, 0.0
        %vm3929 = vcmp.ge.f32.partialorder %v3881, 0.0
        %vm3930 = vcmp.ge.f32.partialorder %v3882, 0.0
        %vm3931 = vcmp.ge.f32.partialorder %v3883, 0.0
        %vm3932 = vcmp.ge.f32.partialorder %v3884, 0.0
        %vm3933 = vcmp.ge.f32.partialorder %v3885, 0.0
        %vm3934 = vcmp.ge.f32.partialorder %v3886, 0.0
        %vm3935 = vcmp.ge.f32.partialorder %v3887, 0.0
        %vm3936 = vcmp.ge.f32.partialorder %v3888, 0.0
        %vm3937 = vcmp.ge.f32.partialorder %v3889, 0.0
        %vm3938 = vcmp.ge.f32.partialorder %v3890, 0.0
        %vm3939 = vcmp.ge.f32.partialorder %v3891, 0.0
        %vm3940 = vcmp.ge.f32.partialorder %v3892, 0.0
        %vm3941 = vcmp.ge.f32.partialorder %v3893, 0.0
        %vm3942 = vcmp.ge.f32.partialorder %v3894, 0.0
        %vm3943 = vcmp.ge.f32.partialorder %v3895, 0.0
        %vm3944 = vcmp.ge.f32.partialorder %v3896, 0.0
        %v3945 = vmul.f32 %v3849, 0.01
        %v3946 = vmul.f32 %v3850, 0.01
        %v3947 = vmul.f32 %v3851, 0.01
        %v3948 = vmul.f32 %v3852, 0.01
        %v3949 = vmul.f32 %v3853, 0.01
        %v3950 = vmul.f32 %v3854, 0.01
        %v3951 = vmul.f32 %v3855, 0.01
        %v3952 = vmul.f32 %v3856, 0.01
        %v3953 = vmul.f32 %v3857, 0.01
        %v3954 = vmul.f32 %v3858, 0.01
        %v3955 = vmul.f32 %v3859, 0.01
        %v3956 = vmul.f32 %v3860, 0.01
        %v3957 = vmul.f32 %v3861, 0.01
        %v3958 = vmul.f32 %v3862, 0.01
        %v3959 = vmul.f32 %v3863, 0.01
        %v3960 = vmul.f32 %v3864, 0.01
        %v3961 = vmul.f32 %v3865, 0.01
        %v3962 = vmul.f32 %v3866, 0.01
        %v3963 = vmul.f32 %v3867, 0.01
        %v3964 = vmul.f32 %v3868, 0.01
        %v3965 = vmul.f32 %v3869, 0.01
        %v3966 = vmul.f32 %v3870, 0.01
        %v3967 = vmul.f32 %v3871, 0.01
        %v3968 = vmul.f32 %v3872, 0.01
        %v3969 = vmul.f32 %v3873, 0.01
        %v3970 = vmul.f32 %v3874, 0.01
        %v3971 = vmul.f32 %v3875, 0.01
        %v3972 = vmul.f32 %v3876, 0.01
        %v3973 = vmul.f32 %v3877, 0.01
        %v3974 = vmul.f32 %v3878, 0.01
        %v3975 = vmul.f32 %v3879, 0.01
        %v3976 = vmul.f32 %v3880, 0.01
        %v3977 = vmul.f32 %v3881, 0.01
        %v3978 = vmul.f32 %v3882, 0.01
        %v3979 = vmul.f32 %v3883, 0.01
        %v3980 = vmul.f32 %v3884, 0.01
        %v3981 = vmul.f32 %v3885, 0.01
        %v3982 = vmul.f32 %v3886, 0.01
        %v3983 = vmul.f32 %v3887, 0.01
        %v3984 = vmul.f32 %v3888, 0.01
        %v3985 = vmul.f32 %v3889, 0.01
        %v3986 = vmul.f32 %v3890, 0.01
        %v3987 = vmul.f32 %v3891, 0.01
        %v3988 = vmul.f32 %v3892, 0.01
        %v3989 = vmul.f32 %v3893, 0.01
        %v3990 = vmul.f32 %v3894, 0.01
        %v3991 = vmul.f32 %v3895, 0.01
        %v3992 = vmul.f32 %v3896, 0.01
        %v3993 = vsel %vm3897, %v3849, %v3945
        %v3994 = vsel %vm3898, %v3850, %v3946
        %v3995 = vsel %vm3899, %v3851, %v3947
        %v3996 = vsel %vm3900, %v3852, %v3948
        %v3997 = vsel %vm3901, %v3853, %v3949
        %v3998 = vsel %vm3902, %v3854, %v3950
        %v3999 = vsel %vm3903, %v3855, %v3951
        %v4000 = vsel %vm3904, %v3856, %v3952
        %v4001 = vsel %vm3905, %v3857, %v3953
        %v4002 = vsel %vm3906, %v3858, %v3954
        %v4003 = vsel %vm3907, %v3859, %v3955
        %v4004 = vsel %vm3908, %v3860, %v3956
        %v4005 = vsel %vm3909, %v3861, %v3957
        %v4006 = vsel %vm3910, %v3862, %v3958
        %v4007 = vsel %vm3911, %v3863, %v3959
        %v4008 = vsel %vm3912, %v3864, %v3960
        %v4009 = vsel %vm3913, %v3865, %v3961
        %v4010 = vsel %vm3914, %v3866, %v3962
        %v4011 = vsel %vm3915, %v3867, %v3963
        %v4012 = vsel %vm3916, %v3868, %v3964
        %v4013 = vsel %vm3917, %v3869, %v3965
        %v4014 = vsel %vm3918, %v3870, %v3966
        %v4015 = vsel %vm3919, %v3871, %v3967
        %v4016 = vsel %vm3920, %v3872, %v3968
        %v4017 = vsel %vm3921, %v3873, %v3969
        %v4018 = vsel %vm3922, %v3874, %v3970
        %v4019 = vsel %vm3923, %v3875, %v3971
        %v4020 = vsel %vm3924, %v3876, %v3972
        %v4021 = vsel %vm3925, %v3877, %v3973
        %v4022 = vsel %vm3926, %v3878, %v3974
        %v4023 = vsel %vm3927, %v3879, %v3975
        %v4024 = vsel %vm3928, %v3880, %v3976
        %v4025 = vsel %vm3929, %v3881, %v3977
        %v4026 = vsel %vm3930, %v3882, %v3978
        %v4027 = vsel %vm3931, %v3883, %v3979
        %v4028 = vsel %vm3932, %v3884, %v3980
        %v4029 = vsel %vm3933, %v3885, %v3981
        %v4030 = vsel %vm3934, %v3886, %v3982
        %v4031 = vsel %vm3935, %v3887, %v3983
        %v4032 = vsel %vm3936, %v3888, %v3984
        %v4033 = vsel %vm3937, %v3889, %v3985
        %v4034 = vsel %vm3938, %v3890, %v3986
        %v4035 = vsel %vm3939, %v3891, %v3987
        %v4036 = vsel %vm3940, %v3892, %v3988
        %v4037 = vsel %vm3941, %v3893, %v3989
        %v4038 = vsel %vm3942, %v3894, %v3990
        %v4039 = vsel %vm3943, %v3895, %v3991
        %v4040 = vsel %vm3944, %v3896, %v3992
        %v4041 = vpack.c.bf16 %v3993, %v3993
        %v4042 = vpack.c.bf16 %v3994, %v3994
        %v4043 = vpack.c.bf16 %v3995, %v3995
        %v4044 = vpack.c.bf16 %v3996, %v3996
        %v4045 = vpack.c.bf16 %v3997, %v3997
        %v4046 = vpack.c.bf16 %v3998, %v3998
        %v4047 = vpack.c.bf16 %v3999, %v3999
        %v4048 = vpack.c.bf16 %v4000, %v4000
        %v4049 = vpack.c.bf16 %v4001, %v4001
        %v4050 = vpack.c.bf16 %v4002, %v4002
        %v4051 = vpack.c.bf16 %v4003, %v4003
        %v4052 = vpack.c.bf16 %v4004, %v4004
        %v4053 = vpack.c.bf16 %v4005, %v4005
        %v4054 = vpack.c.bf16 %v4006, %v4006
        %v4055 = vpack.c.bf16 %v4007, %v4007
        %v4056 = vpack.c.bf16 %v4008, %v4008
        %v4057 = vpack.c.bf16 %v4009, %v4009
        %v4058 = vpack.c.bf16 %v4010, %v4010
        %v4059 = vpack.c.bf16 %v4011, %v4011
        %v4060 = vpack.c.bf16 %v4012, %v4012
        %v4061 = vpack.c.bf16 %v4013, %v4013
        %v4062 = vpack.c.bf16 %v4014, %v4014
        %v4063 = vpack.c.bf16 %v4015, %v4015
        %v4064 = vpack.c.bf16 %v4016, %v4016
        %v4065 = vpack.c.bf16 %v4017, %v4017
        %v4066 = vpack.c.bf16 %v4018, %v4018
        %v4067 = vpack.c.bf16 %v4019, %v4019
        %v4068 = vpack.c.bf16 %v4020, %v4020
        %v4069 = vpack.c.bf16 %v4021, %v4021
        %v4070 = vpack.c.bf16 %v4022, %v4022
        %v4071 = vpack.c.bf16 %v4023, %v4023
        %v4072 = vpack.c.bf16 %v4024, %v4024
        %v4073 = vpack.c.bf16 %v4025, %v4025
        %v4074 = vpack.c.bf16 %v4026, %v4026
        %v4075 = vpack.c.bf16 %v4027, %v4027
        %v4076 = vpack.c.bf16 %v4028, %v4028
        %v4077 = vpack.c.bf16 %v4029, %v4029
        %v4078 = vpack.c.bf16 %v4030, %v4030
        %v4079 = vpack.c.bf16 %v4031, %v4031
        %v4080 = vpack.c.bf16 %v4032, %v4032
        %v4081 = vpack.c.bf16 %v4033, %v4033
        %v4082 = vpack.c.bf16 %v4034, %v4034
        %v4083 = vpack.c.bf16 %v4035, %v4035
        %v4084 = vpack.c.bf16 %v4036, %v4036
        %v4085 = vpack.c.bf16 %v4037, %v4037
        %v4086 = vpack.c.bf16 %v4038, %v4038
        %v4087 = vpack.c.bf16 %v4039, %v4039
        %v4088 = vpack.c.bf16 %v4040, %v4040
        %4089 = vst [vmem:[%s296] sm:$0xf] %v4041
        %4090 = vst [vmem:[%s296 + $0x4] sm:$0xf] %v4042
        %4091 = vst [vmem:[%s296 + $0x8] sm:$0xf] %v4043
        %4092 = vst [vmem:[%s296 + $0xc] sm:$0xf] %v4044
        %4093 = vst [vmem:[%s296 + $0x10] sm:$0xf] %v4045
        %4094 = vst [vmem:[%s296 + $0x14] sm:$0xf] %v4046
        %4095 = vst [vmem:[%s296 + $0x18] sm:$0xf] %v4047
        %4096 = vst [vmem:[%s296 + $0x1c] sm:$0xf] %v4048
        %4097 = vst [vmem:[%s296 + $0x20] sm:$0xf] %v4049
        %4098 = vst [vmem:[%s296 + $0x24] sm:$0xf] %v4050
        %4099 = vst [vmem:[%s296 + $0x28] sm:$0xf] %v4051
        %4100 = vst [vmem:[%s296 + $0x2c] sm:$0xf] %v4052
        %4101 = vst [vmem:[%s296 + $0x30] sm:$0xf] %v4053
        %4102 = vst [vmem:[%s296 + $0x34] sm:$0xf] %v4054
        %4103 = vst [vmem:[%s296 + $0x38] sm:$0xf] %v4055
        %4104 = vst [vmem:[%s296 + $0x3c] sm:$0xf] %v4056
        %4105 = vst [vmem:[%s296 + $0x40] sm:$0xf] %v4057
        %4106 = vst [vmem:[%s296 + $0x44] sm:$0xf] %v4058
        %4107 = vst [vmem:[%s296 + $0x48] sm:$0xf] %v4059
        %4108 = vst [vmem:[%s296 + $0x4c] sm:$0xf] %v4060
        %4109 = vst [vmem:[%s296 + $0x50] sm:$0xf] %v4061
        %4110 = vst [vmem:[%s296 + $0x54] sm:$0xf] %v4062
        %4111 = vst [vmem:[%s296 + $0x58] sm:$0xf] %v4063
        %4112 = vst [vmem:[%s296 + $0x5c] sm:$0xf] %v4064
        %4113 = vst [vmem:[%s296 + $0x60] sm:$0xf] %v4065
        %4114 = vst [vmem:[%s296 + $0x64] sm:$0xf] %v4066
        %4115 = vst [vmem:[%s296 + $0x68] sm:$0xf] %v4067
        %4116 = vst [vmem:[%s296 + $0x6c] sm:$0xf] %v4068
        %4117 = vst [vmem:[%s296 + $0x70] sm:$0xf] %v4069
        %4118 = vst [vmem:[%s296 + $0x74] sm:$0xf] %v4070
        %4119 = vst [vmem:[%s296 + $0x78] sm:$0xf] %v4071
        %4120 = vst [vmem:[%s296 + $0x7c] sm:$0xf] %v4072
        %4121 = vst [vmem:[%s296 + $0x80] sm:$0xf] %v4073
        %4122 = vst [vmem:[%s296 + $0x84] sm:$0xf] %v4074
        %4123 = vst [vmem:[%s296 + $0x88] sm:$0xf] %v4075
        %4124 = vst [vmem:[%s296 + $0x8c] sm:$0xf] %v4076
        %4125 = vst [vmem:[%s296 + $0x90] sm:$0xf] %v4077
        %4126 = vst [vmem:[%s296 + $0x94] sm:$0xf] %v4078
        %4127 = vst [vmem:[%s296 + $0x98] sm:$0xf] %v4079
        %4128 = vst [vmem:[%s296 + $0x9c] sm:$0xf] %v4080
        %4129 = vst [vmem:[%s296 + $0xa0] sm:$0xf] %v4081
        %4130 = vst [vmem:[%s296 + $0xa4] sm:$0xf] %v4082
        %4131 = vst [vmem:[%s296 + $0xa8] sm:$0xf] %v4083
        %4132 = vst [vmem:[%s296 + $0xac] sm:$0xf] %v4084
        %4133 = vst [vmem:[%s296 + $0xb0] sm:$0xf] %v4085
        %4134 = vst [vmem:[%s296 + $0xb4] sm:$0xf] %v4086
        %4135 = vst [vmem:[%s296 + $0xb8] sm:$0xf] %v4087
        %4136 = vst [vmem:[%s296 + $0xbc] sm:$0xf] %v4088
      $region44: #{upsample_bn_apply.2} parent=35 // pred_fallthru
        _
      %p4137 = scmp.lt.s32.totalorder %s20, 1
      %s4138 = scalar_select %p4137, %s20, 1
      %p4139 = scmp.lt.s32.totalorder %s21, 0
      %s4140 = scalar_select %p4139, %s21, 0
      %s4141 = smul.addr %s4138, 48
      %s4142 = sadd.s32 %s4140, %s4141
      %s4143 = smul.addr %s4142, 4
      %s4144 = scalar_lea.vmem %s4, %s4143
      // Predicated region
      $region45: #{upsample_bn_apply.2} parent=35 // pred_check
        %p4145 = pneg %p162
      $region46: #{upsample_bn_apply.2} parent=35 // pred_check_branch
        %4147 = sbr.rel (%p4145) target = $region48
      $region47: #{upsample_bn_apply.2} parent=35 // pred_region
        _
      $region48: #{upsample_bn_apply.2} parent=35 // pred_fallthru
        _
    $region36: #{upsample_bn_apply.2} parent=5 // pred_fallthru
      _
    %p4148 = scmp.le.s32.totalorder 2, %s10
    // Predicated region
    $region49: #{upsample_bn_apply.2} parent=5 // pred_check
      %p4149 = pneg %p4148
    $region50: #{upsample_bn_apply.2} parent=5 // pred_check_branch
      %4151 = sbr.rel (%p4149) target = $region52
    $region51: #{upsample_bn_apply.2} parent=5 // pred_region
      %s4152 = ssub.s32 %s10, 2
      // Predicated region
      $region53: #{upsample_bn_apply.2} parent=51 // pred_check
        %p4153 = pneg %p168
      $region54: #{upsample_bn_apply.2} parent=51 // pred_check_branch
        %4155 = sbr.rel (%p4153) target = $region56
      $region55: #{upsample_bn_apply.2} parent=51 // pred_region
        %p4156 = scmp.lt.s32.totalorder %s23, 1
        %s4157 = scalar_select %p4156, %s23, 1
        %p4158 = scmp.lt.s32.totalorder %s24, 0
        %s4159 = scalar_select %p4158, %s24, 0
        %s4160 = smul.addr %s4157, 48
        %s4161 = sadd.s32 %s4159, %s4160
        %s4162 = smul.addr %s4161, 4
        %s4163 = scalar_lea.vmem %s4, %s4162
      $region56: #{upsample_bn_apply.2} parent=51 // pred_fallthru
        _
    $region52: #{upsample_bn_apply.2} parent=5 // pred_fallthru
      _
  $region6: #{upsample_bn_apply.2} parent=0 // loop_footer
    %s14 = sadd.s32 1, %s10
  $region7: #{upsample_bn_apply.2} parent=0 // loop_footer_branch
    %9 = sbr.rel target = $region3
  $region8: #{upsample_bn_apply.2} parent=0 // loop_exit
    _

// kernel: upsample_bn_apply.3
$region0: #{upsample_bn_apply.3}
  #allocation0 [shape = 'u32[]', space=smem, size = 0x4, offset = 0x4, fixed_abs, tag = 'smem constant byte address 0x4 - core index']
  #allocation1 [shape = 'u32[72,128]{1,0:T(1,128)}', space=vmem, size = 0x9000, scoped, tag = 'internal scratch']
  %s0 = inlined_call_operand.vmem [shape: bf16[2,448,128], index: 0, kind: input, shape index: {}]
  %s1 = inlined_call_operand.vmem [shape: bf16[9,128,128], index: 1, kind: input, shape index: {}]
  %s2 = inlined_call_operand.vmem [shape: f32[1,128], index: 2, kind: input, shape index: {}]
  %s3 = inlined_call_operand.vmem [shape: f32[1,128], index: 3, kind: input, shape index: {}]
  %s4 = inlined_call_operand.vmem [shape: f32[2,384,128], index: 4, kind: output, shape index: {}]
  %s5 = sld [smem:[#allocation0]]
  $region57: #{upsample_bn_apply.3} parent=0
    _
  %s7 = ssub.s32 1, %s5
  %s8 = scalar_select 0, %s7, %s5
  loop: start=0, step=1, limit=4
  $region2: #{upsample_bn_apply.3} parent=0 // loop_pre_header
    _
  $region3: #{upsample_bn_apply.3} parent=0 // loop_header
    %s10 = sphi 0, %s14
    %p11 = scmp.ge.s32.totalorder %s10, 4
    %s17 = sphi 0, %s36
    %s18 = sphi 0, %s32
    %s19 = sphi 0, %s28
    %s20 = sphi 0, %s17
    %s21 = sphi 0, %s18
    %s22 = sphi 0, %s19
    %s23 = sphi 0, %s20
    %s24 = sphi 0, %s21
    %s25 = sphi 0, %s22
    %s41 = sphi 0, %s43
    %s44 = sphi 0, %s41
    %s45 = sphi 0, %s44
    %s61 = sphi 0, %s45
    %s69 = sphi 0, %s71
    %s72 = sphi 0, %s69
    %s73 = sphi 0, %s72
    %s89 = sphi 0, %s73
    %s95 = sphi 0, %s97
    %s98 = sphi 0, %s95
    %s99 = sphi 0, %s98
    %s115 = sphi 0, %s99
    %s121 = sphi 0, %s123
    %s124 = sphi 0, %s121
    %s125 = sphi 0, %s124
    %s141 = sphi 0, %s125
    %s149 = sphi 0, %s151
    %s152 = sphi 0, %s149
    %s153 = sphi 0, %s152
    %s169 = sphi 0, %s153
  $region4: #{upsample_bn_apply.3} parent=0 // loop_header_branch
    %13 = sbr.rel (%p11) target = $region8
  $region5: #{upsample_bn_apply.3} parent=0 // loop_body
    %s15 = ssub.s32 %s10, 1
    %s16 = ssub.s32 %s10, 2
    %s26 = sadd.s32 1, %s19
    %p27 = scmp.ge.s32.totalorder %s26, 1
    %s28 = scalar_select %p27, 0, %s26
    %s29 = sadd.s32 1, %s18
    %s30 = scalar_select %p27, %s29, %s18
    %p31 = scmp.ge.s32.totalorder %s30, 1
    %s32 = scalar_select %p31, 0, %s30
    %s33 = sadd.s32 1, %s17
    %s34 = scalar_select %p31, %s33, %s17
    %p35 = scmp.ge.s32.totalorder %s34, 2
    %s36 = scalar_select %p35, 0, %s34
    %s37 = ssub.s32 %s17, %s36
    %s38 = ssub.s32 %s19, %s28
    %s39 = sor.u32 %s37, %s38
    %p40 = scmp.eq.s32.totalorder %s39, 0
    %s42 = sadd.s32 %s41, 1
    %s43 = scalar_select %p40, %s41, %s42
    %p46 = pneg %p40
    %p47 = scmp.eq.s32.totalorder %s10, 1
    %p48 = por %p46, %p47
    %p49 = scmp.ne.s32.totalorder %s41, %s44
    %p50 = scmp.eq.s32.totalorder %s10, 0
    %p51 = por %p49, %p50
    %p52 = scmp.ne.s32.totalorder %s41, %s44
    %p53 = scmp.eq.s32.totalorder %s15, 1
    %p54 = por %p52, %p53
    %p55 = scmp.ne.s32.totalorder %s44, %s45
    %p56 = scmp.eq.s32.totalorder %s15, 0
    %p57 = por %p55, %p56
    %p58 = scmp.ne.s32.totalorder %s44, %s45
    %p59 = scmp.eq.s32.totalorder %s16, 1
    %p60 = por %p58, %p59
    %p62 = scmp.ne.s32.totalorder %s45, %s61
    %p63 = scmp.eq.s32.totalorder %s16, 0
    %p64 = por %p62, %p63
    %s65 = ssub.s32 %s19, %s28
    %s66 = ssub.s32 %s18, %s32
    %s67 = sor.u32 %s65, %s66
    %p68 = scmp.eq.s32.totalorder %s67, 0
    %s70 = sadd.s32 %s69, 1
    %s71 = scalar_select %p68, %s69, %s70
    %p74 = pneg %p68
    %p75 = scmp.eq.s32.totalorder %s10, 1
    %p76 = por %p74, %p75
    %p77 = scmp.ne.s32.totalorder %s69, %s72
    %p78 = scmp.eq.s32.totalorder %s10, 0
    %p79 = por %p77, %p78
    %p80 = scmp.ne.s32.totalorder %s69, %s72
    %p81 = scmp.eq.s32.totalorder %s15, 1
    %p82 = por %p80, %p81
    %p83 = scmp.ne.s32.totalorder %s72, %s73
    %p84 = scmp.eq.s32.totalorder %s15, 0
    %p85 = por %p83, %p84
    %p86 = scmp.ne.s32.totalorder %s72, %s73
    %p87 = scmp.eq.s32.totalorder %s16, 1
    %p88 = por %p86, %p87
    %p90 = scmp.ne.s32.totalorder %s73, %s89
    %p91 = scmp.eq.s32.totalorder %s16, 0
    %p92 = por %p90, %p91
    %s93 = ssub.s32 %s18, %s32
    %p94 = scmp.eq.s32.totalorder %s93, 0
    %s96 = sadd.s32 %s95, 1
    %s97 = scalar_select %p94, %s95, %s96
    %p100 = pneg %p94
    %p101 = scmp.eq.s32.totalorder %s10, 1
    %p102 = por %p100, %p101
    %p103 = scmp.ne.s32.totalorder %s95, %s98
    %p104 = scmp.eq.s32.totalorder %s10, 0
    %p105 = por %p103, %p104
    %p106 = scmp.ne.s32.totalorder %s95, %s98
    %p107 = scmp.eq.s32.totalorder %s15, 1
    %p108 = por %p106, %p107
    %p109 = scmp.ne.s32.totalorder %s98, %s99
    %p110 = scmp.eq.s32.totalorder %s15, 0
    %p111 = por %p109, %p110
    %p112 = scmp.ne.s32.totalorder %s98, %s99
    %p113 = scmp.eq.s32.totalorder %s16, 1
    %p114 = por %p112, %p113
    %p116 = scmp.ne.s32.totalorder %s99, %s115
    %p117 = scmp.eq.s32.totalorder %s16, 0
    %p118 = por %p116, %p117
    %s119 = ssub.s32 %s18, %s32
    %p120 = scmp.eq.s32.totalorder %s119, 0
    %s122 = sadd.s32 %s121, 1
    %s123 = scalar_select %p120, %s121, %s122
    %p126 = pneg %p120
    %p127 = scmp.eq.s32.totalorder %s10, 1
    %p128 = por %p126, %p127
    %p129 = scmp.ne.s32.totalorder %s121, %s124
    %p130 = scmp.eq.s32.totalorder %s10, 0
    %p131 = por %p129, %p130
    %p132 = scmp.ne.s32.totalorder %s121, %s124
    %p133 = scmp.eq.s32.totalorder %s15, 1
    %p134 = por %p132, %p133
    %p135 = scmp.ne.s32.totalorder %s124, %s125
    %p136 = scmp.eq.s32.totalorder %s15, 0
    %p137 = por %p135, %p136
    %p138 = scmp.ne.s32.totalorder %s124, %s125
    %p139 = scmp.eq.s32.totalorder %s16, 1
    %p140 = por %p138, %p139
    %p142 = scmp.ne.s32.totalorder %s125, %s141
    %p143 = scmp.eq.s32.totalorder %s16, 0
    %p144 = por %p142, %p143
    %s145 = ssub.s32 %s17, %s36
    %s146 = ssub.s32 %s18, %s32
    %s147 = sor.u32 %s145, %s146
    %p148 = scmp.eq.s32.totalorder %s147, 0
    %s150 = sadd.s32 %s149, 1
    %s151 = scalar_select %p148, %s149, %s150
    %p154 = pneg %p148
    %p155 = scmp.eq.s32.totalorder %s10, 1
    %p156 = por %p154, %p155
    %p157 = scmp.ne.s32.totalorder %s149, %s152
    %p158 = scmp.eq.s32.totalorder %s10, 0
    %p159 = por %p157, %p158
    %p160 = scmp.ne.s32.totalorder %s149, %s152
    %p161 = scmp.eq.s32.totalorder %s15, 1
    %p162 = por %p160, %p161
    %p163 = scmp.ne.s32.totalorder %s152, %s153
    %p164 = scmp.eq.s32.totalorder %s15, 0
    %p165 = por %p163, %p164
    %p166 = scmp.ne.s32.totalorder %s152, %s153
    %p167 = scmp.eq.s32.totalorder %s16, 1
    %p168 = por %p166, %p167
    %p170 = scmp.ne.s32.totalorder %s153, %s169
    %p171 = scmp.eq.s32.totalorder %s16, 0
    %p172 = por %p170, %p171
    %p173 = scmp.le.s32.totalorder 1, %s10
    %p174 = scmp.lt.s32.totalorder %s10, 3
    %p175 = pnand %p173, %p174
    %p176 = pneg %p175
    // Predicated region
    $region9: #{upsample_bn_apply.3} parent=5 // pred_check
      _
    $region10: #{upsample_bn_apply.3} parent=5 // pred_check_branch
      %178 = sbr.rel (%p175) target = $region12
    $region11: #{upsample_bn_apply.3} parent=5 // pred_region
      %s179 = ssub.s32 %s10, 1
      // Predicated region
      $region13: #{upsample_bn_apply.3} parent=11 // pred_check
        %p180 = pneg %p85
      $region14: #{upsample_bn_apply.3} parent=11 // pred_check_branch
        %182 = sbr.rel (%p180) target = $region16
      $region15: #{upsample_bn_apply.3} parent=11 // pred_region
        %s183 = smul.u32 16, %s22
        %p184 = scmp.lt.s32.totalorder %s183, 15
        %s185 = scalar_select %p184, %s183, 15
        %p186 = scmp.lt.s32.totalorder %s21, 0
        %s187 = scalar_select %p186, %s21, 0
        %s188 = sadd.s32 %s187, %s185
        %s189 = smul.addr %s188, 4
        %s190 = scalar_lea.vmem %s1, %s189
        %s191 = smul.u32 16, %s22
      $region16: #{upsample_bn_apply.3} parent=11 // pred_fallthru
        _
      // Predicated region
      $region17: #{upsample_bn_apply.3} parent=11 // pred_check
        %p192 = pneg %p111
      $region18: #{upsample_bn_apply.3} parent=11 // pred_check_branch
        %194 = sbr.rel (%p192) target = $region20
      $region19: #{upsample_bn_apply.3} parent=11 // pred_region
        %p195 = scmp.lt.s32.totalorder %s21, 0
        %s196 = scalar_select %p195, %s21, 0
        %s197 = scalar_lea.vmem %s2, %s196
      $region20: #{upsample_bn_apply.3} parent=11 // pred_fallthru
        _
      // Predicated region
      $region21: #{upsample_bn_apply.3} parent=11 // pred_check
        %p198 = pneg %p137
      $region22: #{upsample_bn_apply.3} parent=11 // pred_check_branch
        %200 = sbr.rel (%p198) target = $region24
      $region23: #{upsample_bn_apply.3} parent=11 // pred_region
        %p201 = scmp.lt.s32.totalorder %s21, 0
        %s202 = scalar_select %p201, %s21, 0
        %s203 = scalar_lea.vmem %s3, %s202
      $region24: #{upsample_bn_apply.3} parent=11 // pred_fallthru
        _
    $region12: #{upsample_bn_apply.3} parent=5 // pred_fallthru
      _
    %p204 = scmp.lt.s32.totalorder %s10, 2
    // Predicated region
    $region25: #{upsample_bn_apply.3} parent=5 // pred_check
      %p205 = pneg %p204
    $region26: #{upsample_bn_apply.3} parent=5 // pred_check_branch
      %207 = sbr.rel (%p205) target = $region28
    $region27: #{upsample_bn_apply.3} parent=5 // pred_region
      // Predicated region
      $region29: #{upsample_bn_apply.3} parent=27 // pred_check
        %p208 = pneg %p51
      $region30: #{upsample_bn_apply.3} parent=27 // pred_check_branch
        %210 = sbr.rel (%p208) target = $region32
      $region31: #{upsample_bn_apply.3} parent=27 // pred_region
        %p211 = scmp.lt.s32.totalorder %s17, 1
        %s212 = scalar_select %p211, %s17, 1
        %p213 = scmp.lt.s32.totalorder %s19, 0
        %s214 = scalar_select %p213, %s19, 0
        %s215 = smul.addr %s212, 56
        %s216 = sadd.s32 %s214, %s215
        %s217 = smul.addr %s216, 4
        %s218 = scalar_lea.vmem %s0, %s217
      $region32: #{upsample_bn_apply.3} parent=27 // pred_fallthru
        _
    $region28: #{upsample_bn_apply.3} parent=5 // pred_fallthru
      _
    %p219 = scmp.le.s32.totalorder 1, %s10
    %p220 = scmp.lt.s32.totalorder %s10, 3
    %p221 = pnand %p219, %p220
    %p222 = pneg %p221
    // Predicated region
    $region33: #{upsample_bn_apply.3} parent=5 // pred_check
      _
    $region34: #{upsample_bn_apply.3} parent=5 // pred_check_branch
      %224 = sbr.rel (%p221) target = $region36
    $region35: #{upsample_bn_apply.3} parent=5 // pred_region
      %s225 = ssub.s32 %s10, 1
      %p226 = scmp.lt.s32.totalorder %s20, 1
      %s227 = scalar_select %p226, %s20, 1
      %p228 = scmp.lt.s32.totalorder %s22, 0
      %s229 = scalar_select %p228, %s22, 0
      %s230 = smul.addr %s227, 56
      %s231 = sadd.s32 %s229, %s230
      %s232 = smul.addr %s231, 4
      %s233 = scalar_lea.vmem %s0, %s232
      %p234 = pneg %p57
      %p235 = pneg %p54
      %s236 = smul.u32 16, %s22
      %p237 = scmp.lt.s32.totalorder %s236, 15
      %s238 = scalar_select %p237, %s236, 15
      %p239 = scmp.lt.s32.totalorder %s21, 0
      %s240 = scalar_select %p239, %s21, 0
      %s241 = sadd.s32 %s240, %s238
      %s242 = smul.addr %s241, 4
      %s243 = scalar_lea.vmem %s1, %s242
      %p244 = pneg %p85
      %p245 = pneg %p82
      %p246 = scmp.lt.s32.totalorder %s21, 0
      %s247 = scalar_select %p246, %s21, 0
      %s248 = scalar_lea.vmem %s2, %s247
      %p249 = pneg %p111
      %p250 = pneg %p108
      %p251 = scmp.lt.s32.totalorder %s21, 0
      %s252 = scalar_select %p251, %s21, 0
      %s253 = scalar_lea.vmem %s3, %s252
      %p254 = pneg %p137
      %p255 = pneg %p134
      %p256 = pneg %p165
      %p257 = pneg %p162
      %p258 = scmp.lt.s32.totalorder %s20, 1
      %s259 = scalar_select %p258, %s20, 1
      %p260 = scmp.lt.s32.totalorder %s21, 0
      %s261 = scalar_select %p260, %s21, 0
      %s262 = smul.addr %s259, 48
      %s263 = sadd.s32 %s261, %s262
      %s264 = smul.addr %s263, 8
      %s265 = scalar_lea.vmem %s4, %s264
      %p266 = scmp.lt.s32.totalorder %s20, 1
      %s267 = scalar_select %p266, %s20, 1
      %p268 = scmp.lt.s32.totalorder %s22, 0
      %s269 = scalar_select %p268, %s22, 0
      %s270 = smul.addr %s267, 56
      %s271 = sadd.s32 %s269, %s270
      %s272 = smul.addr %s271, 4
      %s273 = scalar_lea.vmem %s0, %s272
      %s274 = smul.u32 16, %s22
      %p275 = scmp.lt.s32.totalorder %s274, 15
      %s276 = scalar_select %p275, %s274, 15
      %p277 = scmp.lt.s32.totalorder %s21, 0
      %s278 = scalar_select %p277, %s21, 0
      %s279 = sadd.s32 %s278, %s276
      %s280 = smul.addr %s279, 4
      %s281 = scalar_lea.vmem %s1, %s280
      %s282 = smul.u32 16, %s22
      %p283 = scmp.lt.s32.totalorder %s21, 0
      %s284 = scalar_select %p283, %s21, 0
      %s285 = scalar_lea.vmem %s2, %s284
      %p286 = scmp.lt.s32.totalorder %s21, 0
      %s287 = scalar_select %p286, %s21, 0
      %s288 = scalar_lea.vmem %s3, %s287
      %p289 = scmp.lt.s32.totalorder %s20, 1
      %s290 = scalar_select %p289, %s20, 1
      %p291 = scmp.lt.s32.totalorder %s21, 0
      %s292 = scalar_select %p291, %s21, 0
      %s293 = smul.addr %s290, 48
      %s294 = sadd.s32 %s292, %s293
      %s295 = smul.addr %s294, 8
      %s296 = scalar_lea.vmem %s4, %s295
      %p297 = scmp.eq.s32.totalorder %s22, 0
      // Predicated region
      $region37: #{upsample_bn_apply.3} parent=35 // pred_check
        %p298 = pneg %p297
      $region38: #{upsample_bn_apply.3} parent=35 // pred_check_branch
        %300 = sbr.rel (%p298) target = $region40
      $region39: #{upsample_bn_apply.3} parent=35 // pred_region
        %301 = vst [vmem:[%s296] sm:$0xff] 0.0
        %302 = vst [vmem:[%s296 + $0x8] sm:$0xff] 0.0
        %303 = vst [vmem:[%s296 + $0x10] sm:$0xff] 0.0
        %304 = vst [vmem:[%s296 + $0x18] sm:$0xff] 0.0
        %305 = vst [vmem:[%s296 + $0x20] sm:$0xff] 0.0
        %306 = vst [vmem:[%s296 + $0x28] sm:$0xff] 0.0
        %307 = vst [vmem:[%s296 + $0x30] sm:$0xff] 0.0
        %308 = vst [vmem:[%s296 + $0x38] sm:$0xff] 0.0
        %309 = vst [vmem:[%s296 + $0x40] sm:$0xff] 0.0
        %310 = vst [vmem:[%s296 + $0x48] sm:$0xff] 0.0
        %311 = vst [vmem:[%s296 + $0x50] sm:$0xff] 0.0
        %312 = vst [vmem:[%s296 + $0x58] sm:$0xff] 0.0
        %313 = vst [vmem:[%s296 + $0x60] sm:$0xff] 0.0
        %314 = vst [vmem:[%s296 + $0x68] sm:$0xff] 0.0
        %315 = vst [vmem:[%s296 + $0x70] sm:$0xff] 0.0
        %316 = vst [vmem:[%s296 + $0x78] sm:$0xff] 0.0
        %317 = vst [vmem:[%s296 + $0x80] sm:$0xff] 0.0
        %318 = vst [vmem:[%s296 + $0x88] sm:$0xff] 0.0
        %319 = vst [vmem:[%s296 + $0x90] sm:$0xff] 0.0
        %320 = vst [vmem:[%s296 + $0x98] sm:$0xff] 0.0
        %321 = vst [vmem:[%s296 + $0xa0] sm:$0xff] 0.0
        %322 = vst [vmem:[%s296 + $0xa8] sm:$0xff] 0.0
        %323 = vst [vmem:[%s296 + $0xb0] sm:$0xff] 0.0
        %324 = vst [vmem:[%s296 + $0xb8] sm:$0xff] 0.0
        %325 = vst [vmem:[%s296 + $0xc0] sm:$0xff] 0.0
        %326 = vst [vmem:[%s296 + $0xc8] sm:$0xff] 0.0
        %327 = vst [vmem:[%s296 + $0xd0] sm:$0xff] 0.0
        %328 = vst [vmem:[%s296 + $0xd8] sm:$0xff] 0.0
        %329 = vst [vmem:[%s296 + $0xe0] sm:$0xff] 0.0
        %330 = vst [vmem:[%s296 + $0xe8] sm:$0xff] 0.0
        %331 = vst [vmem:[%s296 + $0xf0] sm:$0xff] 0.0
        %332 = vst [vmem:[%s296 + $0xf8] sm:$0xff] 0.0
        %333 = vst [vmem:[%s296 + $0x100] sm:$0xff] 0.0
        %334 = vst [vmem:[%s296 + $0x108] sm:$0xff] 0.0
        %335 = vst [vmem:[%s296 + $0x110] sm:$0xff] 0.0
        %336 = vst [vmem:[%s296 + $0x118] sm:$0xff] 0.0
        %337 = vst [vmem:[%s296 + $0x120] sm:$0xff] 0.0
        %338 = vst [vmem:[%s296 + $0x128] sm:$0xff] 0.0
        %339 = vst [vmem:[%s296 + $0x130] sm:$0xff] 0.0
        %340 = vst [vmem:[%s296 + $0x138] sm:$0xff] 0.0
        %341 = vst [vmem:[%s296 + $0x140] sm:$0xff] 0.0
        %342 = vst [vmem:[%s296 + $0x148] sm:$0xff] 0.0
        %343 = vst [vmem:[%s296 + $0x150] sm:$0xff] 0.0
        %344 = vst [vmem:[%s296 + $0x158] sm:$0xff] 0.0
        %345 = vst [vmem:[%s296 + $0x160] sm:$0xff] 0.0
        %346 = vst [vmem:[%s296 + $0x168] sm:$0xff] 0.0
        %347 = vst [vmem:[%s296 + $0x170] sm:$0xff] 0.0
        %348 = vst [vmem:[%s296 + $0x178] sm:$0xff] 0.0
      $region40: #{upsample_bn_apply.3} parent=35 // pred_fallthru
        _
      %v349 = vld [vmem:[%s296] sm:$0xff]
      %v350 = vld [vmem:[%s296 + $0x8] sm:$0xff]
      %v351 = vld [vmem:[%s296 + $0x10] sm:$0xff]
      %v352 = vld [vmem:[%s296 + $0x18] sm:$0xff]
      %v353 = vld [vmem:[%s296 + $0x20] sm:$0xff]
      %v354 = vld [vmem:[%s296 + $0x28] sm:$0xff]
      %v355 = vld [vmem:[%s296 + $0x30] sm:$0xff]
      %v356 = vld [vmem:[%s296 + $0x38] sm:$0xff]
      %v357 = vld [vmem:[%s296 + $0x40] sm:$0xff]
      %v358 = vld [vmem:[%s296 + $0x48] sm:$0xff]
      %v359 = vld [vmem:[%s296 + $0x50] sm:$0xff]
      %v360 = vld [vmem:[%s296 + $0x58] sm:$0xff]
      %v361 = vld [vmem:[%s296 + $0x60] sm:$0xff]
      %v362 = vld [vmem:[%s296 + $0x68] sm:$0xff]
      %v363 = vld [vmem:[%s296 + $0x70] sm:$0xff]
      %v364 = vld [vmem:[%s296 + $0x78] sm:$0xff]
      %v365 = vld [vmem:[%s296 + $0x80] sm:$0xff]
      %v366 = vld [vmem:[%s296 + $0x88] sm:$0xff]
      %v367 = vld [vmem:[%s296 + $0x90] sm:$0xff]
      %v368 = vld [vmem:[%s296 + $0x98] sm:$0xff]
      %v369 = vld [vmem:[%s296 + $0xa0] sm:$0xff]
      %v370 = vld [vmem:[%s296 + $0xa8] sm:$0xff]
      %v371 = vld [vmem:[%s296 + $0xb0] sm:$0xff]
      %v372 = vld [vmem:[%s296 + $0xb8] sm:$0xff]
      %v373 = vld [vmem:[%s296 + $0xc0] sm:$0xff]
      %v374 = vld [vmem:[%s296 + $0xc8] sm:$0xff]
      %v375 = vld [vmem:[%s296 + $0xd0] sm:$0xff]
      %v376 = vld [vmem:[%s296 + $0xd8] sm:$0xff]
      %v377 = vld [vmem:[%s296 + $0xe0] sm:$0xff]
      %v378 = vld [vmem:[%s296 + $0xe8] sm:$0xff]
      %v379 = vld [vmem:[%s296 + $0xf0] sm:$0xff]
      %v380 = vld [vmem:[%s296 + $0xf8] sm:$0xff]
      %v381 = vld [vmem:[%s296 + $0x100] sm:$0xff]
      %v382 = vld [vmem:[%s296 + $0x108] sm:$0xff]
      %v383 = vld [vmem:[%s296 + $0x110] sm:$0xff]
      %v384 = vld [vmem:[%s296 + $0x118] sm:$0xff]
      %v385 = vld [vmem:[%s296 + $0x120] sm:$0xff]
      %v386 = vld [vmem:[%s296 + $0x128] sm:$0xff]
      %v387 = vld [vmem:[%s296 + $0x130] sm:$0xff]
      %v388 = vld [vmem:[%s296 + $0x138] sm:$0xff]
      %v389 = vld [vmem:[%s296 + $0x140] sm:$0xff]
      %v390 = vld [vmem:[%s296 + $0x148] sm:$0xff]
      %v391 = vld [vmem:[%s296 + $0x150] sm:$0xff]
      %v392 = vld [vmem:[%s296 + $0x158] sm:$0xff]
      %v393 = vld [vmem:[%s296 + $0x160] sm:$0xff]
      %v394 = vld [vmem:[%s296 + $0x168] sm:$0xff]
      %v395 = vld [vmem:[%s296 + $0x170] sm:$0xff]
      %v396 = vld [vmem:[%s296 + $0x178] sm:$0xff]
      %v397 = vld [vmem:[%s273] sm:$0xf]
      %v398 = vld [vmem:[%s273 + $0x4] sm:$0xf]
      %v399 = vld [vmem:[%s273 + $0x8] sm:$0xf]
      %v400 = vld [vmem:[%s273 + $0xc] sm:$0xf]
      %v401 = vld [vmem:[%s273 + $0x10] sm:$0xf]
      %v402 = vld [vmem:[%s273 + $0x14] sm:$0xf]
      %v403 = vld [vmem:[%s273 + $0x18] sm:$0xf]
      %v404 = vld [vmem:[%s273 + $0x1c] sm:$0xf]
      %v405 = vld [vmem:[%s273 + $0x20] sm:$0xf]
      %v406 = vld [vmem:[%s273 + $0x24] sm:$0xf]
      %v407 = vld [vmem:[%s273 + $0x28] sm:$0xf]
      %v408 = vld [vmem:[%s273 + $0x2c] sm:$0xf]
      %v409 = vld [vmem:[%s273 + $0x30] sm:$0xf]
      %v410 = vld [vmem:[%s273 + $0x34] sm:$0xf]
      %v411 = vld [vmem:[%s273 + $0x38] sm:$0xf]
      %v412 = vld [vmem:[%s273 + $0x3c] sm:$0xf]
      %v413 = vld [vmem:[%s273 + $0x40] sm:$0xf]
      %v414 = vld [vmem:[%s273 + $0x44] sm:$0xf]
      %v415 = vld [vmem:[%s273 + $0x48] sm:$0xf]
      %v416 = vld [vmem:[%s273 + $0x4c] sm:$0xf]
      %v417 = vld [vmem:[%s273 + $0x50] sm:$0xf]
      %v418 = vld [vmem:[%s273 + $0x54] sm:$0xf]
      %v419 = vld [vmem:[%s273 + $0x58] sm:$0xf]
      %v420 = vld [vmem:[%s273 + $0x5c] sm:$0xf]
      %v421 = vld [vmem:[%s273 + $0x60] sm:$0xf]
      %v422 = vld [vmem:[%s273 + $0x64] sm:$0xf]
      %v423 = vld [vmem:[%s273 + $0x68] sm:$0xf]
      %v424 = vld [vmem:[%s273 + $0x6c] sm:$0xf]
      %v425 = vld [vmem:[%s273 + $0x70] sm:$0xf]
      %v426 = vld [vmem:[%s273 + $0x74] sm:$0xf]
      %v427 = vld [vmem:[%s273 + $0x78] sm:$0xf]
      %v428 = vld [vmem:[%s273 + $0x7c] sm:$0xf]
      %v429 = vld [vmem:[%s273 + $0x80] sm:$0xf]
      %v430 = vld [vmem:[%s273 + $0x84] sm:$0xf]
      %v431 = vld [vmem:[%s273 + $0x88] sm:$0xf]
      %v432 = vld [vmem:[%s273 + $0x8c] sm:$0xf]
      %v433 = vld [vmem:[%s273 + $0x90] sm:$0xf]
      %v434 = vld [vmem:[%s273 + $0x94] sm:$0xf]
      %v435 = vld [vmem:[%s273 + $0x98] sm:$0xf]
      %v436 = vld [vmem:[%s273 + $0x9c] sm:$0xf]
      %v437 = vld [vmem:[%s273 + $0xa0] sm:$0xf]
      %v438 = vld [vmem:[%s273 + $0xa4] sm:$0xf]
      %v439 = vld [vmem:[%s273 + $0xa8] sm:$0xf]
      %v440 = vld [vmem:[%s273 + $0xac] sm:$0xf]
      %v441 = vld [vmem:[%s273 + $0xb0] sm:$0xf]
      %v442 = vld [vmem:[%s273 + $0xb4] sm:$0xf]
      %v443 = vld [vmem:[%s273 + $0xb8] sm:$0xf]
      %v444 = vld [vmem:[%s273 + $0xbc] sm:$0xf]
      %v445 = vld [vmem:[%s273 + $0xc0] sm:$0xf]
      %v446 = vld [vmem:[%s273 + $0xc4] sm:$0xf]
      %v447 = vld [vmem:[%s273 + $0xc8] sm:$0xf]
      %v448 = vld [vmem:[%s273 + $0xcc] sm:$0xf]
      %v449 = vld [vmem:[%s273 + $0xd0] sm:$0xf]
      %v450 = vld [vmem:[%s273 + $0xd4] sm:$0xf]
      %v451 = vld [vmem:[%s281] sm:$0xf]
      %v452 = vld [vmem:[%s281 + $0x4] sm:$0xf]
      %v453 = vld [vmem:[%s281 + $0x8] sm:$0xf]
      %v454 = vld [vmem:[%s281 + $0xc] sm:$0xf]
      %v455 = vld [vmem:[%s281 + $0x10] sm:$0xf]
      %v456 = vld [vmem:[%s281 + $0x14] sm:$0xf]
      %v457 = vld [vmem:[%s281 + $0x18] sm:$0xf]
      %v458 = vld [vmem:[%s281 + $0x1c] sm:$0xf]
      %v459 = vld [vmem:[%s281 + $0x20] sm:$0xf]
      %v460 = vld [vmem:[%s281 + $0x24] sm:$0xf]
      %v461 = vld [vmem:[%s281 + $0x28] sm:$0xf]
      %v462 = vld [vmem:[%s281 + $0x2c] sm:$0xf]
      %v463 = vld [vmem:[%s281 + $0x30] sm:$0xf]
      %v464 = vld [vmem:[%s281 + $0x34] sm:$0xf]
      %v465 = vld [vmem:[%s281 + $0x38] sm:$0xf]
      %v466 = vld [vmem:[%s281 + $0x3c] sm:$0xf]
      %v515 = vunpack.c.l.b16 %v397
      %v516 = vunpack.c.l.b16 %v398
      %v517 = vunpack.c.l.b16 %v399
      %v518 = vunpack.c.l.b16 %v400
      %v519 = vunpack.c.l.b16 %v401
      %v520 = vunpack.c.l.b16 %v402
      %v521 = vunpack.c.l.b16 %v403
      %v522 = vunpack.c.l.b16 %v404
      %v523 = vunpack.c.l.b16 %v405
      %v524 = vunpack.c.l.b16 %v406
      %v525 = vunpack.c.l.b16 %v407
      %v526 = vunpack.c.l.b16 %v408
      %v527 = vunpack.c.l.b16 %v409
      %v528 = vunpack.c.l.b16 %v410
      %v529 = vunpack.c.l.b16 %v411
      %v530 = vunpack.c.l.b16 %v412
      %v531 = vunpack.c.l.b16 %v413
      %v532 = vunpack.c.l.b16 %v414
      %v533 = vunpack.c.l.b16 %v415
      %v534 = vunpack.c.l.b16 %v416
      %v535 = vunpack.c.l.b16 %v417
      %v536 = vunpack.c.l.b16 %v418
      %v537 = vunpack.c.l.b16 %v419
      %v538 = vunpack.c.l.b16 %v420
      %v539 = vunpack.c.l.b16 %v421
      %v540 = vunpack.c.l.b16 %v422
      %v541 = vunpack.c.l.b16 %v423
      %v542 = vunpack.c.l.b16 %v424
      %v543 = vunpack.c.l.b16 %v425
      %v544 = vunpack.c.l.b16 %v426
      %v545 = vunpack.c.l.b16 %v427
      %v546 = vunpack.c.l.b16 %v428
      %v547 = vunpack.c.l.b16 %v429
      %v548 = vunpack.c.l.b16 %v430
      %v549 = vunpack.c.l.b16 %v431
      %v550 = vunpack.c.l.b16 %v432
      %v551 = vunpack.c.l.b16 %v433
      %v552 = vunpack.c.l.b16 %v434
      %v553 = vunpack.c.l.b16 %v435
      %v554 = vunpack.c.l.b16 %v436
      %v555 = vunpack.c.l.b16 %v437
      %v556 = vunpack.c.l.b16 %v438
      %v557 = vunpack.c.l.b16 %v439
      %v558 = vunpack.c.l.b16 %v440
      %v559 = vunpack.c.l.b16 %v441
      %v560 = vunpack.c.l.b16 %v442
      %v561 = vunpack.c.l.b16 %v443
      %v562 = vunpack.c.l.b16 %v444
      %v563 = vpack.c.b16 %v516, %v515
      %v564 = vpack.c.b16 %v518, %v517
      %v565 = vpack.c.b16 %v520, %v519
      %v566 = vpack.c.b16 %v522, %v521
      %v567 = vpack.c.b16 %v524, %v523
      %v568 = vpack.c.b16 %v526, %v525
      %v569 = vpack.c.b16 %v528, %v527
      %v570 = vpack.c.b16 %v530, %v529
      %v571 = vpack.c.b16 %v532, %v531
      %v572 = vpack.c.b16 %v534, %v533
      %v573 = vpack.c.b16 %v536, %v535
      %v574 = vpack.c.b16 %v538, %v537
      %v575 = vpack.c.b16 %v540, %v539
      %v576 = vpack.c.b16 %v542, %v541
      %v577 = vpack.c.b16 %v544, %v543
      %v578 = vpack.c.b16 %v546, %v545
      %v579 = vpack.c.b16 %v548, %v547
      %v580 = vpack.c.b16 %v550, %v549
      %v581 = vpack.c.b16 %v552, %v551
      %v582 = vpack.c.b16 %v554, %v553
      %v583 = vpack.c.b16 %v556, %v555
      %v584 = vpack.c.b16 %v558, %v557
      %v585 = vpack.c.b16 %v560, %v559
      %v586 = vpack.c.b16 %v562, %v561
      %v627 = vunpack.c.l.b16 %v451
      %v628 = vunpack.c.l.b16 %v452
      %v629 = vunpack.c.l.b16 %v453
      %v630 = vunpack.c.l.b16 %v454
      %v631 = vunpack.c.l.b16 %v455
      %v632 = vunpack.c.l.b16 %v456
      %v633 = vunpack.c.l.b16 %v457
      %v634 = vunpack.c.l.b16 %v458
      %v635 = vunpack.c.l.b16 %v459
      %v636 = vunpack.c.l.b16 %v460
      %v637 = vunpack.c.l.b16 %v461
      %v638 = vunpack.c.l.b16 %v462
      %v639 = vunpack.c.l.b16 %v463
      %v640 = vunpack.c.l.b16 %v464
      %v641 = vunpack.c.l.b16 %v465
      %v642 = vunpack.c.l.b16 %v466
      %v643 = vpack.c.b16 %v628, %v627
      %v644 = vpack.c.b16 %v630, %v629
      %v645 = vpack.c.b16 %v632, %v631
      %v646 = vpack.c.b16 %v634, %v633
      %v647 = vpack.c.b16 %v636, %v635
      %v648 = vpack.c.b16 %v638, %v637
      %v649 = vpack.c.b16 %v640, %v639
      %v650 = vpack.c.b16 %v642, %v641
      %659 = vmatpush.bf16.msra.mxu0 %v650
      %660 = vmatpush.bf16.msra.mxu0 %v649
      %661 = vmatpush.bf16.msra.mxu0 %v648
      %662 = vmatpush.bf16.msra.mxu0 %v647
      %663 = vmatpush.bf16.msra.mxu0 %v646
      %664 = vmatpush.bf16.msra.mxu0 %v645
      %665 = vmatpush.bf16.msra.mxu0 %v644
      %666 = vmatpush.bf16.msra.mxu0 %v643
      %667 = vmatmul.bf16.gmra.mxu0 %v563
      %v668 = vpop.f32.mrf.mxu0
      %v669 = vadd.f32 0.0, %v668
      %v670 = vpop.f32.mrf.mxu0
      %v671 = vadd.f32 0.0, %v670
      %672 = vmatmul.bf16.gmra.mxu0 %v564
      %v673 = vpop.f32.mrf.mxu0
      %v674 = vadd.f32 0.0, %v673
      %v675 = vpop.f32.mrf.mxu0
      %v676 = vadd.f32 0.0, %v675
      %677 = vmatmul.bf16.gmra.mxu0 %v565
      %v678 = vpop.f32.mrf.mxu0
      %v679 = vadd.f32 0.0, %v678
      %v680 = vpop.f32.mrf.mxu0
      %v681 = vadd.f32 0.0, %v680
      %682 = vmatmul.bf16.gmra.mxu0 %v566
      %v683 = vpop.f32.mrf.mxu0
      %v684 = vadd.f32 0.0, %v683
      %v685 = vpop.f32.mrf.mxu0
      %v686 = vadd.f32 0.0, %v685
      %687 = vmatmul.bf16.gmra.mxu0 %v567
      %v688 = vpop.f32.mrf.mxu0
      %v689 = vadd.f32 0.0, %v688
      %v690 = vpop.f32.mrf.mxu0
      %v691 = vadd.f32 0.0, %v690
      %692 = vmatmul.bf16.gmra.mxu0 %v568
      %v693 = vpop.f32.mrf.mxu0
      %v694 = vadd.f32 0.0, %v693
      %v695 = vpop.f32.mrf.mxu0
      %v696 = vadd.f32 0.0, %v695
      %697 = vmatmul.bf16.gmra.mxu0 %v569
      %v698 = vpop.f32.mrf.mxu0
      %v699 = vadd.f32 0.0, %v698
      %v700 = vpop.f32.mrf.mxu0
      %v701 = vadd.f32 0.0, %v700
      %702 = vmatmul.bf16.gmra.mxu0 %v570
      %v703 = vpop.f32.mrf.mxu0
      %v704 = vadd.f32 0.0, %v703
      %v705 = vpop.f32.mrf.mxu0
      %v706 = vadd.f32 0.0, %v705
      %707 = vmatmul.bf16.gmra.mxu0 %v571
      %v708 = vpop.f32.mrf.mxu0
      %v709 = vadd.f32 0.0, %v708
      %v710 = vpop.f32.mrf.mxu0
      %v711 = vadd.f32 0.0, %v710
      %712 = vmatmul.bf16.gmra.mxu0 %v572
      %v713 = vpop.f32.mrf.mxu0
      %v714 = vadd.f32 0.0, %v713
      %v715 = vpop.f32.mrf.mxu0
      %v716 = vadd.f32 0.0, %v715
      %717 = vmatmul.bf16.gmra.mxu0 %v573
      %v718 = vpop.f32.mrf.mxu0
      %v719 = vadd.f32 0.0, %v718
      %v720 = vpop.f32.mrf.mxu0
      %v721 = vadd.f32 0.0, %v720
      %722 = vmatmul.bf16.gmra.mxu0 %v574
      %v723 = vpop.f32.mrf.mxu0
      %v724 = vadd.f32 0.0, %v723
      %v725 = vpop.f32.mrf.mxu0
      %v726 = vadd.f32 0.0, %v725
      %727 = vmatmul.bf16.gmra.mxu0 %v575
      %v728 = vpop.f32.mrf.mxu0
      %v729 = vadd.f32 0.0, %v728
      %v730 = vpop.f32.mrf.mxu0
      %v731 = vadd.f32 0.0, %v730
      %732 = vmatmul.bf16.gmra.mxu0 %v576
      %v733 = vpop.f32.mrf.mxu0
      %v734 = vadd.f32 0.0, %v733
      %v735 = vpop.f32.mrf.mxu0
      %v736 = vadd.f32 0.0, %v735
      %737 = vmatmul.bf16.gmra.mxu0 %v577
      %v738 = vpop.f32.mrf.mxu0
      %v739 = vadd.f32 0.0, %v738
      %v740 = vpop.f32.mrf.mxu0
      %v741 = vadd.f32 0.0, %v740
      %742 = vmatmul.bf16.gmra.mxu0 %v578
      %v743 = vpop.f32.mrf.mxu0
      %v744 = vadd.f32 0.0, %v743
      %v745 = vpop.f32.mrf.mxu0
      %v746 = vadd.f32 0.0, %v745
      %747 = vmatmul.bf16.gmra.mxu0 %v579
      %v748 = vpop.f32.mrf.mxu0
      %v749 = vadd.f32 0.0, %v748
      %v750 = vpop.f32.mrf.mxu0
      %v751 = vadd.f32 0.0, %v750
      %752 = vmatmul.bf16.gmra.mxu0 %v580
      %v753 = vpop.f32.mrf.mxu0
      %v754 = vadd.f32 0.0, %v753
      %v755 = vpop.f32.mrf.mxu0
      %v756 = vadd.f32 0.0, %v755
      %757 = vmatmul.bf16.gmra.mxu0 %v581
      %v758 = vpop.f32.mrf.mxu0
      %v759 = vadd.f32 0.0, %v758
      %v760 = vpop.f32.mrf.mxu0
      %v761 = vadd.f32 0.0, %v760
      %762 = vmatmul.bf16.gmra.mxu0 %v582
      %v763 = vpop.f32.mrf.mxu0
      %v764 = vadd.f32 0.0, %v763
      %v765 = vpop.f32.mrf.mxu0
      %v766 = vadd.f32 0.0, %v765
      %767 = vmatmul.bf16.gmra.mxu0 %v583
      %v768 = vpop.f32.mrf.mxu0
      %v769 = vadd.f32 0.0, %v768
      %v770 = vpop.f32.mrf.mxu0
      %v771 = vadd.f32 0.0, %v770
      %772 = vmatmul.bf16.gmra.mxu0 %v584
      %v773 = vpop.f32.mrf.mxu0
      %v774 = vadd.f32 0.0, %v773
      %v775 = vpop.f32.mrf.mxu0
      %v776 = vadd.f32 0.0, %v775
      %777 = vmatmul.bf16.gmra.mxu0 %v585
      %v778 = vpop.f32.mrf.mxu0
      %v779 = vadd.f32 0.0, %v778
      %v780 = vpop.f32.mrf.mxu0
      %v781 = vadd.f32 0.0, %v780
      %782 = vmatmul.bf16.gmra.mxu0 %v586
      %v783 = vpop.f32.mrf.mxu0
      %v784 = vadd.f32 0.0, %v783
      %v785 = vpop.f32.mrf.mxu0
      %v786 = vadd.f32 0.0, %v785
      %787 = vdwg.mxu0
      %v788 = vadd.f32 %v349, %v669
      %v789 = vadd.f32 %v350, %v671
      %v790 = vadd.f32 %v351, %v674
      %v791 = vadd.f32 %v352, %v676
      %v792 = vadd.f32 %v353, %v679
      %v793 = vadd.f32 %v354, %v681
      %v794 = vadd.f32 %v355, %v684
      %v795 = vadd.f32 %v356, %v686
      %v796 = vadd.f32 %v357, %v689
      %v797 = vadd.f32 %v358, %v691
      %v798 = vadd.f32 %v359, %v694
      %v799 = vadd.f32 %v360, %v696
      %v800 = vadd.f32 %v361, %v699
      %v801 = vadd.f32 %v362, %v701
      %v802 = vadd.f32 %v363, %v704
      %v803 = vadd.f32 %v364, %v706
      %v804 = vadd.f32 %v365, %v709
      %v805 = vadd.f32 %v366, %v711
      %v806 = vadd.f32 %v367, %v714
      %v807 = vadd.f32 %v368, %v716
      %v808 = vadd.f32 %v369, %v719
      %v809 = vadd.f32 %v370, %v721
      %v810 = vadd.f32 %v371, %v724
      %v811 = vadd.f32 %v372, %v726
      %v812 = vadd.f32 %v373, %v729
      %v813 = vadd.f32 %v374, %v731
      %v814 = vadd.f32 %v375, %v734
      %v815 = vadd.f32 %v376, %v736
      %v816 = vadd.f32 %v377, %v739
      %v817 = vadd.f32 %v378, %v741
      %v818 = vadd.f32 %v379, %v744
      %v819 = vadd.f32 %v380, %v746
      %v820 = vadd.f32 %v381, %v749
      %v821 = vadd.f32 %v382, %v751
      %v822 = vadd.f32 %v383, %v754
      %v823 = vadd.f32 %v384, %v756
      %v824 = vadd.f32 %v385, %v759
      %v825 = vadd.f32 %v386, %v761
      %v826 = vadd.f32 %v387, %v764
      %v827 = vadd.f32 %v388, %v766
      %v828 = vadd.f32 %v389, %v769
      %v829 = vadd.f32 %v390, %v771
      %v830 = vadd.f32 %v391, %v774
      %v831 = vadd.f32 %v392, %v776
      %v832 = vadd.f32 %v393, %v779
      %v833 = vadd.f32 %v394, %v781
      %v834 = vadd.f32 %v395, %v784
      %v835 = vadd.f32 %v396, %v786
      %s836 = scalar_lea.vmem %s281, 192
      %v837 = vld [vmem:[%s836] sm:$0xf]
      %v838 = vld [vmem:[%s836 + $0x4] sm:$0xf]
      %v839 = vld [vmem:[%s836 + $0x8] sm:$0xf]
      %v840 = vld [vmem:[%s836 + $0xc] sm:$0xf]
      %v841 = vld [vmem:[%s836 + $0x10] sm:$0xf]
      %v842 = vld [vmem:[%s836 + $0x14] sm:$0xf]
      %v843 = vld [vmem:[%s836 + $0x18] sm:$0xf]
      %v844 = vld [vmem:[%s836 + $0x1c] sm:$0xf]
      %v845 = vld [vmem:[%s836 + $0x20] sm:$0xf]
      %v846 = vld [vmem:[%s836 + $0x24] sm:$0xf]
      %v847 = vld [vmem:[%s836 + $0x28] sm:$0xf]
      %v848 = vld [vmem:[%s836 + $0x2c] sm:$0xf]
      %v849 = vld [vmem:[%s836 + $0x30] sm:$0xf]
      %v850 = vld [vmem:[%s836 + $0x34] sm:$0xf]
      %v851 = vld [vmem:[%s836 + $0x38] sm:$0xf]
      %v852 = vld [vmem:[%s836 + $0x3c] sm:$0xf]
      %v856 = vunpack.c.l.b16 %v445
      %v857 = vunpack.c.l.b16 %v446
      %v858 = vunpack.c.l.b16 %v447
      %v859 = vpack.c.b16 %v519, %v518
      %v860 = vpack.c.b16 %v521, %v520
      %v861 = vpack.c.b16 %v523, %v522
      %v862 = vpack.c.b16 %v525, %v524
      %v863 = vpack.c.b16 %v527, %v526
      %v864 = vpack.c.b16 %v529, %v528
      %v865 = vpack.c.b16 %v531, %v530
      %v866 = vpack.c.b16 %v533, %v532
      %v867 = vpack.c.b16 %v535, %v534
      %v868 = vpack.c.b16 %v537, %v536
      %v869 = vpack.c.b16 %v539, %v538
      %v870 = vpack.c.b16 %v541, %v540
      %v871 = vpack.c.b16 %v543, %v542
      %v872 = vpack.c.b16 %v545, %v544
      %v873 = vpack.c.b16 %v547, %v546
      %v874 = vpack.c.b16 %v549, %v548
      %v875 = vpack.c.b16 %v551, %v550
      %v876 = vpack.c.b16 %v553, %v552
      %v877 = vpack.c.b16 %v555, %v554
      %v878 = vpack.c.b16 %v557, %v556
      %v879 = vpack.c.b16 %v559, %v558
      %v880 = vpack.c.b16 %v561, %v560
      %v881 = vpack.c.b16 %v856, %v562
      %v882 = vpack.c.b16 %v858, %v857
      %v923 = vunpack.c.l.b16 %v837
      %v924 = vunpack.c.l.b16 %v838
      %v925 = vunpack.c.l.b16 %v839
      %v926 = vunpack.c.l.b16 %v840
      %v927 = vunpack.c.l.b16 %v841
      %v928 = vunpack.c.l.b16 %v842
      %v929 = vunpack.c.l.b16 %v843
      %v930 = vunpack.c.l.b16 %v844
      %v931 = vunpack.c.l.b16 %v845
      %v932 = vunpack.c.l.b16 %v846
      %v933 = vunpack.c.l.b16 %v847
      %v934 = vunpack.c.l.b16 %v848
      %v935 = vunpack.c.l.b16 %v849
      %v936 = vunpack.c.l.b16 %v850
      %v937 = vunpack.c.l.b16 %v851
      %v938 = vunpack.c.l.b16 %v852
      %v939 = vpack.c.b16 %v924, %v923
      %v940 = vpack.c.b16 %v926, %v925
      %v941 = vpack.c.b16 %v928, %v927
      %v942 = vpack.c.b16 %v930, %v929
      %v943 = vpack.c.b16 %v932, %v931
      %v944 = vpack.c.b16 %v934, %v933
      %v945 = vpack.c.b16 %v936, %v935
      %v946 = vpack.c.b16 %v938, %v937
      %955 = vmatpush.bf16.msra.mxu0 %v946
      %956 = vmatpush.bf16.msra.mxu0 %v945
      %957 = vmatpush.bf16.msra.mxu0 %v944
      %958 = vmatpush.bf16.msra.mxu0 %v943
      %959 = vmatpush.bf16.msra.mxu0 %v942
      %960 = vmatpush.bf16.msra.mxu0 %v941
      %961 = vmatpush.bf16.msra.mxu0 %v940
      %962 = vmatpush.bf16.msra.mxu0 %v939
      %963 = vmatmul.bf16.gmra.mxu0 %v859
      %v964 = vpop.f32.mrf.mxu0
      %v965 = vadd.f32 0.0, %v964
      %v966 = vpop.f32.mrf.mxu0
      %v967 = vadd.f32 0.0, %v966
      %968 = vmatmul.bf16.gmra.mxu0 %v860
      %v969 = vpop.f32.mrf.mxu0
      %v970 = vadd.f32 0.0, %v969
      %v971 = vpop.f32.mrf.mxu0
      %v972 = vadd.f32 0.0, %v971
      %973 = vmatmul.bf16.gmra.mxu0 %v861
      %v974 = vpop.f32.mrf.mxu0
      %v975 = vadd.f32 0.0, %v974
      %v976 = vpop.f32.mrf.mxu0
      %v977 = vadd.f32 0.0, %v976
      %978 = vmatmul.bf16.gmra.mxu0 %v862
      %v979 = vpop.f32.mrf.mxu0
      %v980 = vadd.f32 0.0, %v979
      %v981 = vpop.f32.mrf.mxu0
      %v982 = vadd.f32 0.0, %v981
      %983 = vmatmul.bf16.gmra.mxu0 %v863
      %v984 = vpop.f32.mrf.mxu0
      %v985 = vadd.f32 0.0, %v984
      %v986 = vpop.f32.mrf.mxu0
      %v987 = vadd.f32 0.0, %v986
      %988 = vmatmul.bf16.gmra.mxu0 %v864
      %v989 = vpop.f32.mrf.mxu0
      %v990 = vadd.f32 0.0, %v989
      %v991 = vpop.f32.mrf.mxu0
      %v992 = vadd.f32 0.0, %v991
      %993 = vmatmul.bf16.gmra.mxu0 %v865
      %v994 = vpop.f32.mrf.mxu0
      %v995 = vadd.f32 0.0, %v994
      %v996 = vpop.f32.mrf.mxu0
      %v997 = vadd.f32 0.0, %v996
      %998 = vmatmul.bf16.gmra.mxu0 %v866
      %v999 = vpop.f32.mrf.mxu0
      %v1000 = vadd.f32 0.0, %v999
      %v1001 = vpop.f32.mrf.mxu0
      %v1002 = vadd.f32 0.0, %v1001
      %1003 = vmatmul.bf16.gmra.mxu0 %v867
      %v1004 = vpop.f32.mrf.mxu0
      %v1005 = vadd.f32 0.0, %v1004
      %v1006 = vpop.f32.mrf.mxu0
      %v1007 = vadd.f32 0.0, %v1006
      %1008 = vmatmul.bf16.gmra.mxu0 %v868
      %v1009 = vpop.f32.mrf.mxu0
      %v1010 = vadd.f32 0.0, %v1009
      %v1011 = vpop.f32.mrf.mxu0
      %v1012 = vadd.f32 0.0, %v1011
      %1013 = vmatmul.bf16.gmra.mxu0 %v869
      %v1014 = vpop.f32.mrf.mxu0
      %v1015 = vadd.f32 0.0, %v1014
      %v1016 = vpop.f32.mrf.mxu0
      %v1017 = vadd.f32 0.0, %v1016
      %1018 = vmatmul.bf16.gmra.mxu0 %v870
      %v1019 = vpop.f32.mrf.mxu0
      %v1020 = vadd.f32 0.0, %v1019
      %v1021 = vpop.f32.mrf.mxu0
      %v1022 = vadd.f32 0.0, %v1021
      %1023 = vmatmul.bf16.gmra.mxu0 %v871
      %v1024 = vpop.f32.mrf.mxu0
      %v1025 = vadd.f32 0.0, %v1024
      %v1026 = vpop.f32.mrf.mxu0
      %v1027 = vadd.f32 0.0, %v1026
      %1028 = vmatmul.bf16.gmra.mxu0 %v872
      %v1029 = vpop.f32.mrf.mxu0
      %v1030 = vadd.f32 0.0, %v1029
      %v1031 = vpop.f32.mrf.mxu0
      %v1032 = vadd.f32 0.0, %v1031
      %1033 = vmatmul.bf16.gmra.mxu0 %v873
      %v1034 = vpop.f32.mrf.mxu0
      %v1035 = vadd.f32 0.0, %v1034
      %v1036 = vpop.f32.mrf.mxu0
      %v1037 = vadd.f32 0.0, %v1036
      %1038 = vmatmul.bf16.gmra.mxu0 %v874
      %v1039 = vpop.f32.mrf.mxu0
      %v1040 = vadd.f32 0.0, %v1039
      %v1041 = vpop.f32.mrf.mxu0
      %v1042 = vadd.f32 0.0, %v1041
      %1043 = vmatmul.bf16.gmra.mxu0 %v875
      %v1044 = vpop.f32.mrf.mxu0
      %v1045 = vadd.f32 0.0, %v1044
      %v1046 = vpop.f32.mrf.mxu0
      %v1047 = vadd.f32 0.0, %v1046
      %1048 = vmatmul.bf16.gmra.mxu0 %v876
      %v1049 = vpop.f32.mrf.mxu0
      %v1050 = vadd.f32 0.0, %v1049
      %v1051 = vpop.f32.mrf.mxu0
      %v1052 = vadd.f32 0.0, %v1051
      %1053 = vmatmul.bf16.gmra.mxu0 %v877
      %v1054 = vpop.f32.mrf.mxu0
      %v1055 = vadd.f32 0.0, %v1054
      %v1056 = vpop.f32.mrf.mxu0
      %v1057 = vadd.f32 0.0, %v1056
      %1058 = vmatmul.bf16.gmra.mxu0 %v878
      %v1059 = vpop.f32.mrf.mxu0
      %v1060 = vadd.f32 0.0, %v1059
      %v1061 = vpop.f32.mrf.mxu0
      %v1062 = vadd.f32 0.0, %v1061
      %1063 = vmatmul.bf16.gmra.mxu0 %v879
      %v1064 = vpop.f32.mrf.mxu0
      %v1065 = vadd.f32 0.0, %v1064
      %v1066 = vpop.f32.mrf.mxu0
      %v1067 = vadd.f32 0.0, %v1066
      %1068 = vmatmul.bf16.gmra.mxu0 %v880
      %v1069 = vpop.f32.mrf.mxu0
      %v1070 = vadd.f32 0.0, %v1069
      %v1071 = vpop.f32.mrf.mxu0
      %v1072 = vadd.f32 0.0, %v1071
      %1073 = vmatmul.bf16.gmra.mxu0 %v881
      %v1074 = vpop.f32.mrf.mxu0
      %v1075 = vadd.f32 0.0, %v1074
      %v1076 = vpop.f32.mrf.mxu0
      %v1077 = vadd.f32 0.0, %v1076
      %1078 = vmatmul.bf16.gmra.mxu0 %v882
      %v1079 = vpop.f32.mrf.mxu0
      %v1080 = vadd.f32 0.0, %v1079
      %v1081 = vpop.f32.mrf.mxu0
      %v1082 = vadd.f32 0.0, %v1081
      %1083 = vdwg.mxu0
      %v1084 = vadd.f32 %v788, %v965
      %v1085 = vadd.f32 %v789, %v967
      %v1086 = vadd.f32 %v790, %v970
      %v1087 = vadd.f32 %v791, %v972
      %v1088 = vadd.f32 %v792, %v975
      %v1089 = vadd.f32 %v793, %v977
      %v1090 = vadd.f32 %v794, %v980
      %v1091 = vadd.f32 %v795, %v982
      %v1092 = vadd.f32 %v796, %v985
      %v1093 = vadd.f32 %v797, %v987
      %v1094 = vadd.f32 %v798, %v990
      %v1095 = vadd.f32 %v799, %v992
      %v1096 = vadd.f32 %v800, %v995
      %v1097 = vadd.f32 %v801, %v997
      %v1098 = vadd.f32 %v802, %v1000
      %v1099 = vadd.f32 %v803, %v1002
      %v1100 = vadd.f32 %v804, %v1005
      %v1101 = vadd.f32 %v805, %v1007
      %v1102 = vadd.f32 %v806, %v1010
      %v1103 = vadd.f32 %v807, %v1012
      %v1104 = vadd.f32 %v808, %v1015
      %v1105 = vadd.f32 %v809, %v1017
      %v1106 = vadd.f32 %v810, %v1020
      %v1107 = vadd.f32 %v811, %v1022
      %v1108 = vadd.f32 %v812, %v1025
      %v1109 = vadd.f32 %v813, %v1027
      %v1110 = vadd.f32 %v814, %v1030
      %v1111 = vadd.f32 %v815, %v1032
      %v1112 = vadd.f32 %v816, %v1035
      %v1113 = vadd.f32 %v817, %v1037
      %v1114 = vadd.f32 %v818, %v1040
      %v1115 = vadd.f32 %v819, %v1042
      %v1116 = vadd.f32 %v820, %v1045
      %v1117 = vadd.f32 %v821, %v1047
      %v1118 = vadd.f32 %v822, %v1050
      %v1119 = vadd.f32 %v823, %v1052
      %v1120 = vadd.f32 %v824, %v1055
      %v1121 = vadd.f32 %v825, %v1057
      %v1122 = vadd.f32 %v826, %v1060
      %v1123 = vadd.f32 %v827, %v1062
      %v1124 = vadd.f32 %v828, %v1065
      %v1125 = vadd.f32 %v829, %v1067
      %v1126 = vadd.f32 %v830, %v1070
      %v1127 = vadd.f32 %v831, %v1072
      %v1128 = vadd.f32 %v832, %v1075
      %v1129 = vadd.f32 %v833, %v1077
      %v1130 = vadd.f32 %v834, %v1080
      %v1131 = vadd.f32 %v835, %v1082
      %s1132 = scalar_lea.vmem %s281, 384
      %v1133 = vld [vmem:[%s1132] sm:$0xf]
      %v1134 = vld [vmem:[%s1132 + $0x4] sm:$0xf]
      %v1135 = vld [vmem:[%s1132 + $0x8] sm:$0xf]
      %v1136 = vld [vmem:[%s1132 + $0xc] sm:$0xf]
      %v1137 = vld [vmem:[%s1132 + $0x10] sm:$0xf]
      %v1138 = vld [vmem:[%s1132 + $0x14] sm:$0xf]
      %v1139 = vld [vmem:[%s1132 + $0x18] sm:$0xf]
      %v1140 = vld [vmem:[%s1132 + $0x1c] sm:$0xf]
      %v1141 = vld [vmem:[%s1132 + $0x20] sm:$0xf]
      %v1142 = vld [vmem:[%s1132 + $0x24] sm:$0xf]
      %v1143 = vld [vmem:[%s1132 + $0x28] sm:$0xf]
      %v1144 = vld [vmem:[%s1132 + $0x2c] sm:$0xf]
      %v1145 = vld [vmem:[%s1132 + $0x30] sm:$0xf]
      %v1146 = vld [vmem:[%s1132 + $0x34] sm:$0xf]
      %v1147 = vld [vmem:[%s1132 + $0x38] sm:$0xf]
      %v1148 = vld [vmem:[%s1132 + $0x3c] sm:$0xf]
      %v1152 = vunpack.c.l.b16 %v448
      %v1153 = vunpack.c.l.b16 %v449
      %v1154 = vunpack.c.l.b16 %v450
      %v1155 = vpack.c.b16 %v857, %v856
      %v1156 = vpack.c.b16 %v1152, %v858
      %v1157 = vpack.c.b16 %v1154, %v1153
      %v1177 = vunpack.c.l.b16 %v1133
      %v1178 = vunpack.c.l.b16 %v1134
      %v1179 = vunpack.c.l.b16 %v1135
      %v1180 = vunpack.c.l.b16 %v1136
      %v1181 = vunpack.c.l.b16 %v1137
      %v1182 = vunpack.c.l.b16 %v1138
      %v1183 = vunpack.c.l.b16 %v1139
      %v1184 = vunpack.c.l.b16 %v1140
      %v1185 = vunpack.c.l.b16 %v1141
      %v1186 = vunpack.c.l.b16 %v1142
      %v1187 = vunpack.c.l.b16 %v1143
      %v1188 = vunpack.c.l.b16 %v1144
      %v1189 = vunpack.c.l.b16 %v1145
      %v1190 = vunpack.c.l.b16 %v1146
      %v1191 = vunpack.c.l.b16 %v1147
      %v1192 = vunpack.c.l.b16 %v1148
      %v1193 = vpack.c.b16 %v1178, %v1177
      %v1194 = vpack.c.b16 %v1180, %v1179
      %v1195 = vpack.c.b16 %v1182, %v1181
      %v1196 = vpack.c.b16 %v1184, %v1183
      %v1197 = vpack.c.b16 %v1186, %v1185
      %v1198 = vpack.c.b16 %v1188, %v1187
      %v1199 = vpack.c.b16 %v1190, %v1189
      %v1200 = vpack.c.b16 %v1192, %v1191
      %1209 = vmatpush.bf16.msra.mxu0 %v1200
      %1210 = vmatpush.bf16.msra.mxu0 %v1199
      %1211 = vmatpush.bf16.msra.mxu0 %v1198
      %1212 = vmatpush.bf16.msra.mxu0 %v1197
      %1213 = vmatpush.bf16.msra.mxu0 %v1196
      %1214 = vmatpush.bf16.msra.mxu0 %v1195
      %1215 = vmatpush.bf16.msra.mxu0 %v1194
      %1216 = vmatpush.bf16.msra.mxu0 %v1193
      %1217 = vmatmul.bf16.gmra.mxu0 %v566
      %v1218 = vpop.f32.mrf.mxu0
      %v1219 = vadd.f32 0.0, %v1218
      %v1220 = vpop.f32.mrf.mxu0
      %v1221 = vadd.f32 0.0, %v1220
      %1222 = vmatmul.bf16.gmra.mxu0 %v567
      %v1223 = vpop.f32.mrf.mxu0
      %v1224 = vadd.f32 0.0, %v1223
      %v1225 = vpop.f32.mrf.mxu0
      %v1226 = vadd.f32 0.0, %v1225
      %1227 = vmatmul.bf16.gmra.mxu0 %v568
      %v1228 = vpop.f32.mrf.mxu0
      %v1229 = vadd.f32 0.0, %v1228
      %v1230 = vpop.f32.mrf.mxu0
      %v1231 = vadd.f32 0.0, %v1230
      %1232 = vmatmul.bf16.gmra.mxu0 %v569
      %v1233 = vpop.f32.mrf.mxu0
      %v1234 = vadd.f32 0.0, %v1233
      %v1235 = vpop.f32.mrf.mxu0
      %v1236 = vadd.f32 0.0, %v1235
      %1237 = vmatmul.bf16.gmra.mxu0 %v570
      %v1238 = vpop.f32.mrf.mxu0
      %v1239 = vadd.f32 0.0, %v1238
      %v1240 = vpop.f32.mrf.mxu0
      %v1241 = vadd.f32 0.0, %v1240
      %1242 = vmatmul.bf16.gmra.mxu0 %v571
      %v1243 = vpop.f32.mrf.mxu0
      %v1244 = vadd.f32 0.0, %v1243
      %v1245 = vpop.f32.mrf.mxu0
      %v1246 = vadd.f32 0.0, %v1245
      %1247 = vmatmul.bf16.gmra.mxu0 %v572
      %v1248 = vpop.f32.mrf.mxu0
      %v1249 = vadd.f32 0.0, %v1248
      %v1250 = vpop.f32.mrf.mxu0
      %v1251 = vadd.f32 0.0, %v1250
      %1252 = vmatmul.bf16.gmra.mxu0 %v573
      %v1253 = vpop.f32.mrf.mxu0
      %v1254 = vadd.f32 0.0, %v1253
      %v1255 = vpop.f32.mrf.mxu0
      %v1256 = vadd.f32 0.0, %v1255
      %1257 = vmatmul.bf16.gmra.mxu0 %v574
      %v1258 = vpop.f32.mrf.mxu0
      %v1259 = vadd.f32 0.0, %v1258
      %v1260 = vpop.f32.mrf.mxu0
      %v1261 = vadd.f32 0.0, %v1260
      %1262 = vmatmul.bf16.gmra.mxu0 %v575
      %v1263 = vpop.f32.mrf.mxu0
      %v1264 = vadd.f32 0.0, %v1263
      %v1265 = vpop.f32.mrf.mxu0
      %v1266 = vadd.f32 0.0, %v1265
      %1267 = vmatmul.bf16.gmra.mxu0 %v576
      %v1268 = vpop.f32.mrf.mxu0
      %v1269 = vadd.f32 0.0, %v1268
      %v1270 = vpop.f32.mrf.mxu0
      %v1271 = vadd.f32 0.0, %v1270
      %1272 = vmatmul.bf16.gmra.mxu0 %v577
      %v1273 = vpop.f32.mrf.mxu0
      %v1274 = vadd.f32 0.0, %v1273
      %v1275 = vpop.f32.mrf.mxu0
      %v1276 = vadd.f32 0.0, %v1275
      %1277 = vmatmul.bf16.gmra.mxu0 %v578
      %v1278 = vpop.f32.mrf.mxu0
      %v1279 = vadd.f32 0.0, %v1278
      %v1280 = vpop.f32.mrf.mxu0
      %v1281 = vadd.f32 0.0, %v1280
      %1282 = vmatmul.bf16.gmra.mxu0 %v579
      %v1283 = vpop.f32.mrf.mxu0
      %v1284 = vadd.f32 0.0, %v1283
      %v1285 = vpop.f32.mrf.mxu0
      %v1286 = vadd.f32 0.0, %v1285
      %1287 = vmatmul.bf16.gmra.mxu0 %v580
      %v1288 = vpop.f32.mrf.mxu0
      %v1289 = vadd.f32 0.0, %v1288
      %v1290 = vpop.f32.mrf.mxu0
      %v1291 = vadd.f32 0.0, %v1290
      %1292 = vmatmul.bf16.gmra.mxu0 %v581
      %v1293 = vpop.f32.mrf.mxu0
      %v1294 = vadd.f32 0.0, %v1293
      %v1295 = vpop.f32.mrf.mxu0
      %v1296 = vadd.f32 0.0, %v1295
      %1297 = vmatmul.bf16.gmra.mxu0 %v582
      %v1298 = vpop.f32.mrf.mxu0
      %v1299 = vadd.f32 0.0, %v1298
      %v1300 = vpop.f32.mrf.mxu0
      %v1301 = vadd.f32 0.0, %v1300
      %1302 = vmatmul.bf16.gmra.mxu0 %v583
      %v1303 = vpop.f32.mrf.mxu0
      %v1304 = vadd.f32 0.0, %v1303
      %v1305 = vpop.f32.mrf.mxu0
      %v1306 = vadd.f32 0.0, %v1305
      %1307 = vmatmul.bf16.gmra.mxu0 %v584
      %v1308 = vpop.f32.mrf.mxu0
      %v1309 = vadd.f32 0.0, %v1308
      %v1310 = vpop.f32.mrf.mxu0
      %v1311 = vadd.f32 0.0, %v1310
      %1312 = vmatmul.bf16.gmra.mxu0 %v585
      %v1313 = vpop.f32.mrf.mxu0
      %v1314 = vadd.f32 0.0, %v1313
      %v1315 = vpop.f32.mrf.mxu0
      %v1316 = vadd.f32 0.0, %v1315
      %1317 = vmatmul.bf16.gmra.mxu0 %v586
      %v1318 = vpop.f32.mrf.mxu0
      %v1319 = vadd.f32 0.0, %v1318
      %v1320 = vpop.f32.mrf.mxu0
      %v1321 = vadd.f32 0.0, %v1320
      %1322 = vmatmul.bf16.gmra.mxu0 %v1155
      %v1323 = vpop.f32.mrf.mxu0
      %v1324 = vadd.f32 0.0, %v1323
      %v1325 = vpop.f32.mrf.mxu0
      %v1326 = vadd.f32 0.0, %v1325
      %1327 = vmatmul.bf16.gmra.mxu0 %v1156
      %v1328 = vpop.f32.mrf.mxu0
      %v1329 = vadd.f32 0.0, %v1328
      %v1330 = vpop.f32.mrf.mxu0
      %v1331 = vadd.f32 0.0, %v1330
      %1332 = vmatmul.bf16.gmra.mxu0 %v1157
      %v1333 = vpop.f32.mrf.mxu0
      %v1334 = vadd.f32 0.0, %v1333
      %v1335 = vpop.f32.mrf.mxu0
      %v1336 = vadd.f32 0.0, %v1335
      %1337 = vdwg.mxu0
      %v1338 = vadd.f32 %v1084, %v1219
      %v1339 = vadd.f32 %v1085, %v1221
      %v1340 = vadd.f32 %v1086, %v1224
      %v1341 = vadd.f32 %v1087, %v1226
      %v1342 = vadd.f32 %v1088, %v1229
      %v1343 = vadd.f32 %v1089, %v1231
      %v1344 = vadd.f32 %v1090, %v1234
      %v1345 = vadd.f32 %v1091, %v1236
      %v1346 = vadd.f32 %v1092, %v1239
      %v1347 = vadd.f32 %v1093, %v1241
      %v1348 = vadd.f32 %v1094, %v1244
      %v1349 = vadd.f32 %v1095, %v1246
      %v1350 = vadd.f32 %v1096, %v1249
      %v1351 = vadd.f32 %v1097, %v1251
      %v1352 = vadd.f32 %v1098, %v1254
      %v1353 = vadd.f32 %v1099, %v1256
      %v1354 = vadd.f32 %v1100, %v1259
      %v1355 = vadd.f32 %v1101, %v1261
      %v1356 = vadd.f32 %v1102, %v1264
      %v1357 = vadd.f32 %v1103, %v1266
      %v1358 = vadd.f32 %v1104, %v1269
      %v1359 = vadd.f32 %v1105, %v1271
      %v1360 = vadd.f32 %v1106, %v1274
      %v1361 = vadd.f32 %v1107, %v1276
      %v1362 = vadd.f32 %v1108, %v1279
      %v1363 = vadd.f32 %v1109, %v1281
      %v1364 = vadd.f32 %v1110, %v1284
      %v1365 = vadd.f32 %v1111, %v1286
      %v1366 = vadd.f32 %v1112, %v1289
      %v1367 = vadd.f32 %v1113, %v1291
      %v1368 = vadd.f32 %v1114, %v1294
      %v1369 = vadd.f32 %v1115, %v1296
      %v1370 = vadd.f32 %v1116, %v1299
      %v1371 = vadd.f32 %v1117, %v1301
      %v1372 = vadd.f32 %v1118, %v1304
      %v1373 = vadd.f32 %v1119, %v1306
      %v1374 = vadd.f32 %v1120, %v1309
      %v1375 = vadd.f32 %v1121, %v1311
      %v1376 = vadd.f32 %v1122, %v1314
      %v1377 = vadd.f32 %v1123, %v1316
      %v1378 = vadd.f32 %v1124, %v1319
      %v1379 = vadd.f32 %v1125, %v1321
      %v1380 = vadd.f32 %v1126, %v1324
      %v1381 = vadd.f32 %v1127, %v1326
      %v1382 = vadd.f32 %v1128, %v1329
      %v1383 = vadd.f32 %v1129, %v1331
      %v1384 = vadd.f32 %v1130, %v1334
      %v1385 = vadd.f32 %v1131, %v1336
      %v1386 = vld [vmem:[%s273] sm:$0xf]
      %v1387 = vld [vmem:[%s273 + $0x4] sm:$0xf]
      %v1388 = vld [vmem:[%s273 + $0x8] sm:$0xf]
      %v1389 = vld [vmem:[%s273 + $0xc] sm:$0xf]
      %v1390 = vld [vmem:[%s273 + $0x10] sm:$0xf]
      %v1391 = vld [vmem:[%s273 + $0x14] sm:$0xf]
      %v1392 = vld [vmem:[%s273 + $0x18] sm:$0xf]
      %v1393 = vld [vmem:[%s273 + $0x1c] sm:$0xf]
      %v1394 = vld [vmem:[%s273 + $0x20] sm:$0xf]
      %v1395 = vld [vmem:[%s273 + $0x24] sm:$0xf]
      %v1396 = vld [vmem:[%s273 + $0x28] sm:$0xf]
      %v1397 = vld [vmem:[%s273 + $0x2c] sm:$0xf]
      %v1398 = vld [vmem:[%s273 + $0x30] sm:$0xf]
      %v1399 = vld [vmem:[%s273 + $0x34] sm:$0xf]
      %v1400 = vld [vmem:[%s273 + $0x38] sm:$0xf]
      %v1401 = vld [vmem:[%s273 + $0x3c] sm:$0xf]
      %v1402 = vld [vmem:[%s273 + $0x40] sm:$0xf]
      %v1403 = vld [vmem:[%s273 + $0x44] sm:$0xf]
      %v1404 = vld [vmem:[%s273 + $0x48] sm:$0xf]
      %v1405 = vld [vmem:[%s273 + $0x4c] sm:$0xf]
      %v1406 = vld [vmem:[%s273 + $0x50] sm:$0xf]
      %v1407 = vld [vmem:[%s273 + $0x54] sm:$0xf]
      %v1408 = vld [vmem:[%s273 + $0x58] sm:$0xf]
      %v1409 = vld [vmem:[%s273 + $0x5c] sm:$0xf]
      %v1410 = vld [vmem:[%s273 + $0x60] sm:$0xf]
      %v1411 = vld [vmem:[%s273 + $0x64] sm:$0xf]
      %v1412 = vld [vmem:[%s273 + $0x68] sm:$0xf]
      %v1413 = vld [vmem:[%s273 + $0x6c] sm:$0xf]
      %v1414 = vld [vmem:[%s273 + $0x70] sm:$0xf]
      %v1415 = vld [vmem:[%s273 + $0x74] sm:$0xf]
      %v1416 = vld [vmem:[%s273 + $0x78] sm:$0xf]
      %v1417 = vld [vmem:[%s273 + $0x7c] sm:$0xf]
      %v1418 = vld [vmem:[%s273 + $0x80] sm:$0xf]
      %v1419 = vld [vmem:[%s273 + $0x84] sm:$0xf]
      %v1420 = vld [vmem:[%s273 + $0x88] sm:$0xf]
      %v1421 = vld [vmem:[%s273 + $0x8c] sm:$0xf]
      %v1422 = vld [vmem:[%s273 + $0x90] sm:$0xf]
      %v1423 = vld [vmem:[%s273 + $0x94] sm:$0xf]
      %v1424 = vld [vmem:[%s273 + $0x98] sm:$0xf]
      %v1425 = vld [vmem:[%s273 + $0x9c] sm:$0xf]
      %v1426 = vld [vmem:[%s273 + $0xa0] sm:$0xf]
      %v1427 = vld [vmem:[%s273 + $0xa4] sm:$0xf]
      %v1428 = vld [vmem:[%s273 + $0xa8] sm:$0xf]
      %v1429 = vld [vmem:[%s273 + $0xac] sm:$0xf]
      %v1430 = vld [vmem:[%s273 + $0xb0] sm:$0xf]
      %v1431 = vld [vmem:[%s273 + $0xb4] sm:$0xf]
      %v1432 = vld [vmem:[%s273 + $0xb8] sm:$0xf]
      %v1433 = vld [vmem:[%s273 + $0xbc] sm:$0xf]
      %v1434 = vld [vmem:[%s273 + $0xc0] sm:$0xf]
      %v1435 = vld [vmem:[%s273 + $0xc4] sm:$0xf]
      %v1436 = vld [vmem:[%s273 + $0xc8] sm:$0xf]
      %v1437 = vld [vmem:[%s273 + $0xcc] sm:$0xf]
      %v1438 = vld [vmem:[%s273 + $0xd0] sm:$0xf]
      %v1439 = vld [vmem:[%s273 + $0xd4] sm:$0xf]
      %v1440 = vld [vmem:[%s273 + $0xd8] sm:$0x1]
      %s1441 = scalar_lea.vmem %s281, 64
      %v1442 = vld [vmem:[%s1441] sm:$0xf]
      %v1443 = vld [vmem:[%s1441 + $0x4] sm:$0xf]
      %v1444 = vld [vmem:[%s1441 + $0x8] sm:$0xf]
      %v1445 = vld [vmem:[%s1441 + $0xc] sm:$0xf]
      %v1446 = vld [vmem:[%s1441 + $0x10] sm:$0xf]
      %v1447 = vld [vmem:[%s1441 + $0x14] sm:$0xf]
      %v1448 = vld [vmem:[%s1441 + $0x18] sm:$0xf]
      %v1449 = vld [vmem:[%s1441 + $0x1c] sm:$0xf]
      %v1450 = vld [vmem:[%s1441 + $0x20] sm:$0xf]
      %v1451 = vld [vmem:[%s1441 + $0x24] sm:$0xf]
      %v1452 = vld [vmem:[%s1441 + $0x28] sm:$0xf]
      %v1453 = vld [vmem:[%s1441 + $0x2c] sm:$0xf]
      %v1454 = vld [vmem:[%s1441 + $0x30] sm:$0xf]
      %v1455 = vld [vmem:[%s1441 + $0x34] sm:$0xf]
      %v1456 = vld [vmem:[%s1441 + $0x38] sm:$0xf]
      %v1457 = vld [vmem:[%s1441 + $0x3c] sm:$0xf]
      %v1507 = vunpack.c.l.b16 %v1386
      %v1508 = vunpack.c.l.b16 %v1387
      %v1509 = vunpack.c.l.b16 %v1388
      %v1510 = vunpack.c.l.b16 %v1389
      %v1511 = vunpack.c.l.b16 %v1390
      %v1512 = vunpack.c.l.b16 %v1391
      %v1513 = vunpack.c.l.b16 %v1392
      %v1514 = vunpack.c.l.b16 %v1393
      %v1515 = vunpack.c.l.b16 %v1394
      %v1516 = vunpack.c.l.b16 %v1395
      %v1517 = vunpack.c.l.b16 %v1396
      %v1518 = vunpack.c.l.b16 %v1397
      %v1519 = vunpack.c.l.b16 %v1398
      %v1520 = vunpack.c.l.b16 %v1399
      %v1521 = vunpack.c.l.b16 %v1400
      %v1522 = vunpack.c.l.b16 %v1401
      %v1523 = vunpack.c.l.b16 %v1402
      %v1524 = vunpack.c.l.b16 %v1403
      %v1525 = vunpack.c.l.b16 %v1404
      %v1526 = vunpack.c.l.b16 %v1405
      %v1527 = vunpack.c.l.b16 %v1406
      %v1528 = vunpack.c.l.b16 %v1407
      %v1529 = vunpack.c.l.b16 %v1408
      %v1530 = vunpack.c.l.b16 %v1409
      %v1531 = vunpack.c.l.b16 %v1410
      %v1532 = vunpack.c.l.b16 %v1411
      %v1533 = vunpack.c.l.b16 %v1412
      %v1534 = vunpack.c.l.b16 %v1413
      %v1535 = vunpack.c.l.b16 %v1414
      %v1536 = vunpack.c.l.b16 %v1415
      %v1537 = vunpack.c.l.b16 %v1416
      %v1538 = vunpack.c.l.b16 %v1417
      %v1539 = vunpack.c.l.b16 %v1418
      %v1540 = vunpack.c.l.b16 %v1419
      %v1541 = vunpack.c.l.b16 %v1420
      %v1542 = vunpack.c.l.b16 %v1421
      %v1543 = vunpack.c.l.b16 %v1422
      %v1544 = vunpack.c.l.b16 %v1423
      %v1545 = vunpack.c.l.b16 %v1424
      %v1546 = vunpack.c.l.b16 %v1425
      %v1547 = vunpack.c.l.b16 %v1426
      %v1548 = vunpack.c.l.b16 %v1427
      %v1549 = vunpack.c.l.b16 %v1428
      %v1550 = vunpack.c.l.b16 %v1429
      %v1551 = vunpack.c.l.b16 %v1430
      %v1552 = vunpack.c.l.b16 %v1431
      %v1553 = vunpack.c.l.b16 %v1432
      %v1554 = vunpack.c.l.b16 %v1433
      %v1555 = vunpack.c.l.b16 %v1434
      %v1556 = vpack.c.b16 %v1508, %v1507
      %v1557 = vpack.c.b16 %v1510, %v1509
      %v1558 = vpack.c.b16 %v1512, %v1511
      %v1559 = vpack.c.b16 %v1514, %v1513
      %v1560 = vpack.c.b16 %v1516, %v1515
      %v1561 = vpack.c.b16 %v1518, %v1517
      %v1562 = vpack.c.b16 %v1520, %v1519
      %v1563 = vpack.c.b16 %v1522, %v1521
      %v1564 = vpack.c.b16 %v1524, %v1523
      %v1565 = vpack.c.b16 %v1526, %v1525
      %v1566 = vpack.c.b16 %v1528, %v1527
      %v1567 = vpack.c.b16 %v1530, %v1529
      %v1568 = vpack.c.b16 %v1532, %v1531
      %v1569 = vpack.c.b16 %v1534, %v1533
      %v1570 = vpack.c.b16 %v1536, %v1535
      %v1571 = vpack.c.b16 %v1538, %v1537
      %v1572 = vpack.c.b16 %v1540, %v1539
      %v1573 = vpack.c.b16 %v1542, %v1541
      %v1574 = vpack.c.b16 %v1544, %v1543
      %v1575 = vpack.c.b16 %v1546, %v1545
      %v1576 = vpack.c.b16 %v1548, %v1547
      %v1577 = vpack.c.b16 %v1550, %v1549
      %v1578 = vpack.c.b16 %v1552, %v1551
      %v1579 = vpack.c.b16 %v1554, %v1553
      %v1580 = vpack.c.b16 %v1555, %v1555
      %vm1581 = vsmask.f32 7424
      %v1583 = vshrl.u32 %v1556, 16
      %v1585 = vshll.u32 %v1556, 16
      %v1587 = vrot.slane %v1585, 1
      %v1588 = vor.u32 %v1583, %v1587
      %v1590 = vshll.u32 %v1557, 16
      %v1592 = vrot.slane %v1590, 1
      %v1593 = vsel %vm1581, %v1588, %v1592
      %v1594 = vshrl.u32 %v1557, 16
      %v1596 = vor.u32 %v1594, %v1592
      %v1598 = vshll.u32 %v1558, 16
      %v1600 = vrot.slane %v1598, 1
      %v1601 = vsel %vm1581, %v1596, %v1600
      %v1602 = vshrl.u32 %v1558, 16
      %v1604 = vor.u32 %v1602, %v1600
      %v1606 = vshll.u32 %v1559, 16
      %v1608 = vrot.slane %v1606, 1
      %v1609 = vsel %vm1581, %v1604, %v1608
      %v1610 = vshrl.u32 %v1559, 16
      %v1612 = vor.u32 %v1610, %v1608
      %v1614 = vshll.u32 %v1560, 16
      %v1616 = vrot.slane %v1614, 1
      %v1617 = vsel %vm1581, %v1612, %v1616
      %v1618 = vshrl.u32 %v1560, 16
      %v1620 = vor.u32 %v1618, %v1616
      %v1622 = vshll.u32 %v1561, 16
      %v1624 = vrot.slane %v1622, 1
      %v1625 = vsel %vm1581, %v1620, %v1624
      %v1626 = vshrl.u32 %v1561, 16
      %v1628 = vor.u32 %v1626, %v1624
      %v1630 = vshll.u32 %v1562, 16
      %v1632 = vrot.slane %v1630, 1
      %v1633 = vsel %vm1581, %v1628, %v1632
      %v1634 = vshrl.u32 %v1562, 16
      %v1636 = vor.u32 %v1634, %v1632
      %v1638 = vshll.u32 %v1563, 16
      %v1640 = vrot.slane %v1638, 1
      %v1641 = vsel %vm1581, %v1636, %v1640
      %v1642 = vshrl.u32 %v1563, 16
      %v1644 = vor.u32 %v1642, %v1640
      %v1646 = vshll.u32 %v1564, 16
      %v1648 = vrot.slane %v1646, 1
      %v1649 = vsel %vm1581, %v1644, %v1648
      %v1650 = vshrl.u32 %v1564, 16
      %v1652 = vor.u32 %v1650, %v1648
      %v1654 = vshll.u32 %v1565, 16
      %v1656 = vrot.slane %v1654, 1
      %v1657 = vsel %vm1581, %v1652, %v1656
      %v1658 = vshrl.u32 %v1565, 16
      %v1660 = vor.u32 %v1658, %v1656
      %v1662 = vshll.u32 %v1566, 16
      %v1664 = vrot.slane %v1662, 1
      %v1665 = vsel %vm1581, %v1660, %v1664
      %v1666 = vshrl.u32 %v1566, 16
      %v1668 = vor.u32 %v1666, %v1664
      %v1670 = vshll.u32 %v1567, 16
      %v1672 = vrot.slane %v1670, 1
      %v1673 = vsel %vm1581, %v1668, %v1672
      %v1674 = vshrl.u32 %v1567, 16
      %v1676 = vor.u32 %v1674, %v1672
      %v1678 = vshll.u32 %v1568, 16
      %v1680 = vrot.slane %v1678, 1
      %v1681 = vsel %vm1581, %v1676, %v1680
      %v1682 = vshrl.u32 %v1568, 16
      %v1684 = vor.u32 %v1682, %v1680
      %v1686 = vshll.u32 %v1569, 16
      %v1688 = vrot.slane %v1686, 1
      %v1689 = vsel %vm1581, %v1684, %v1688
      %v1690 = vshrl.u32 %v1569, 16
      %v1692 = vor.u32 %v1690, %v1688
      %v1694 = vshll.u32 %v1570, 16
      %v1696 = vrot.slane %v1694, 1
      %v1697 = vsel %vm1581, %v1692, %v1696
      %v1698 = vshrl.u32 %v1570, 16
      %v1700 = vor.u32 %v1698, %v1696
      %v1702 = vshll.u32 %v1571, 16
      %v1704 = vrot.slane %v1702, 1
      %v1705 = vsel %vm1581, %v1700, %v1704
      %v1706 = vshrl.u32 %v1571, 16
      %v1708 = vor.u32 %v1706, %v1704
      %v1710 = vshll.u32 %v1572, 16
      %v1712 = vrot.slane %v1710, 1
      %v1713 = vsel %vm1581, %v1708, %v1712
      %v1714 = vshrl.u32 %v1572, 16
      %v1716 = vor.u32 %v1714, %v1712
      %v1718 = vshll.u32 %v1573, 16
      %v1720 = vrot.slane %v1718, 1
      %v1721 = vsel %vm1581, %v1716, %v1720
      %v1722 = vshrl.u32 %v1573, 16
      %v1724 = vor.u32 %v1722, %v1720
      %v1726 = vshll.u32 %v1574, 16
      %v1728 = vrot.slane %v1726, 1
      %v1729 = vsel %vm1581, %v1724, %v1728
      %v1730 = vshrl.u32 %v1574, 16
      %v1732 = vor.u32 %v1730, %v1728
      %v1734 = vshll.u32 %v1575, 16
      %v1736 = vrot.slane %v1734, 1
      %v1737 = vsel %vm1581, %v1732, %v1736
      %v1738 = vshrl.u32 %v1575, 16
      %v1740 = vor.u32 %v1738, %v1736
      %v1742 = vshll.u32 %v1576, 16
      %v1744 = vrot.slane %v1742, 1
      %v1745 = vsel %vm1581, %v1740, %v1744
      %v1746 = vshrl.u32 %v1576, 16
      %v1748 = vor.u32 %v1746, %v1744
      %v1750 = vshll.u32 %v1577, 16
      %v1752 = vrot.slane %v1750, 1
      %v1753 = vsel %vm1581, %v1748, %v1752
      %v1754 = vshrl.u32 %v1577, 16
      %v1756 = vor.u32 %v1754, %v1752
      %v1758 = vshll.u32 %v1578, 16
      %v1760 = vrot.slane %v1758, 1
      %v1761 = vsel %vm1581, %v1756, %v1760
      %v1762 = vshrl.u32 %v1578, 16
      %v1764 = vor.u32 %v1762, %v1760
      %v1766 = vshll.u32 %v1579, 16
      %v1768 = vrot.slane %v1766, 1
      %v1769 = vsel %vm1581, %v1764, %v1768
      %v1770 = vshrl.u32 %v1579, 16
      %v1772 = vor.u32 %v1770, %v1768
      %v1774 = vshll.u32 %v1580, 16
      %v1776 = vrot.slane %v1774, 1
      %v1777 = vsel %vm1581, %v1772, %v1776
      %v1818 = vunpack.c.l.b16 %v1442
      %v1819 = vunpack.c.l.b16 %v1443
      %v1820 = vunpack.c.l.b16 %v1444
      %v1821 = vunpack.c.l.b16 %v1445
      %v1822 = vunpack.c.l.b16 %v1446
      %v1823 = vunpack.c.l.b16 %v1447
      %v1824 = vunpack.c.l.b16 %v1448
      %v1825 = vunpack.c.l.b16 %v1449
      %v1826 = vunpack.c.l.b16 %v1450
      %v1827 = vunpack.c.l.b16 %v1451
      %v1828 = vunpack.c.l.b16 %v1452
      %v1829 = vunpack.c.l.b16 %v1453
      %v1830 = vunpack.c.l.b16 %v1454
      %v1831 = vunpack.c.l.b16 %v1455
      %v1832 = vunpack.c.l.b16 %v1456
      %v1833 = vunpack.c.l.b16 %v1457
      %v1834 = vpack.c.b16 %v1819, %v1818
      %v1835 = vpack.c.b16 %v1821, %v1820
      %v1836 = vpack.c.b16 %v1823, %v1822
      %v1837 = vpack.c.b16 %v1825, %v1824
      %v1838 = vpack.c.b16 %v1827, %v1826
      %v1839 = vpack.c.b16 %v1829, %v1828
      %v1840 = vpack.c.b16 %v1831, %v1830
      %v1841 = vpack.c.b16 %v1833, %v1832
      %1850 = vmatpush.bf16.msra.mxu0 %v1841
      %1851 = vmatpush.bf16.msra.mxu0 %v1840
      %1852 = vmatpush.bf16.msra.mxu0 %v1839
      %1853 = vmatpush.bf16.msra.mxu0 %v1838
      %1854 = vmatpush.bf16.msra.mxu0 %v1837
      %1855 = vmatpush.bf16.msra.mxu0 %v1836
      %1856 = vmatpush.bf16.msra.mxu0 %v1835
      %1857 = vmatpush.bf16.msra.mxu0 %v1834
      %1858 = vmatmul.bf16.gmra.mxu0 %v1593
      %v1859 = vpop.f32.mrf.mxu0
      %v1860 = vadd.f32 0.0, %v1859
      %v1861 = vpop.f32.mrf.mxu0
      %v1862 = vadd.f32 0.0, %v1861
      %1863 = vmatmul.bf16.gmra.mxu0 %v1601
      %v1864 = vpop.f32.mrf.mxu0
      %v1865 = vadd.f32 0.0, %v1864
      %v1866 = vpop.f32.mrf.mxu0
      %v1867 = vadd.f32 0.0, %v1866
      %1868 = vmatmul.bf16.gmra.mxu0 %v1609
      %v1869 = vpop.f32.mrf.mxu0
      %v1870 = vadd.f32 0.0, %v1869
      %v1871 = vpop.f32.mrf.mxu0
      %v1872 = vadd.f32 0.0, %v1871
      %1873 = vmatmul.bf16.gmra.mxu0 %v1617
      %v1874 = vpop.f32.mrf.mxu0
      %v1875 = vadd.f32 0.0, %v1874
      %v1876 = vpop.f32.mrf.mxu0
      %v1877 = vadd.f32 0.0, %v1876
      %1878 = vmatmul.bf16.gmra.mxu0 %v1625
      %v1879 = vpop.f32.mrf.mxu0
      %v1880 = vadd.f32 0.0, %v1879
      %v1881 = vpop.f32.mrf.mxu0
      %v1882 = vadd.f32 0.0, %v1881
      %1883 = vmatmul.bf16.gmra.mxu0 %v1633
      %v1884 = vpop.f32.mrf.mxu0
      %v1885 = vadd.f32 0.0, %v1884
      %v1886 = vpop.f32.mrf.mxu0
      %v1887 = vadd.f32 0.0, %v1886
      %1888 = vmatmul.bf16.gmra.mxu0 %v1641
      %v1889 = vpop.f32.mrf.mxu0
      %v1890 = vadd.f32 0.0, %v1889
      %v1891 = vpop.f32.mrf.mxu0
      %v1892 = vadd.f32 0.0, %v1891
      %1893 = vmatmul.bf16.gmra.mxu0 %v1649
      %v1894 = vpop.f32.mrf.mxu0
      %v1895 = vadd.f32 0.0, %v1894
      %v1896 = vpop.f32.mrf.mxu0
      %v1897 = vadd.f32 0.0, %v1896
      %1898 = vmatmul.bf16.gmra.mxu0 %v1657
      %v1899 = vpop.f32.mrf.mxu0
      %v1900 = vadd.f32 0.0, %v1899
      %v1901 = vpop.f32.mrf.mxu0
      %v1902 = vadd.f32 0.0, %v1901
      %1903 = vmatmul.bf16.gmra.mxu0 %v1665
      %v1904 = vpop.f32.mrf.mxu0
      %v1905 = vadd.f32 0.0, %v1904
      %v1906 = vpop.f32.mrf.mxu0
      %v1907 = vadd.f32 0.0, %v1906
      %1908 = vmatmul.bf16.gmra.mxu0 %v1673
      %v1909 = vpop.f32.mrf.mxu0
      %v1910 = vadd.f32 0.0, %v1909
      %v1911 = vpop.f32.mrf.mxu0
      %v1912 = vadd.f32 0.0, %v1911
      %1913 = vmatmul.bf16.gmra.mxu0 %v1681
      %v1914 = vpop.f32.mrf.mxu0
      %v1915 = vadd.f32 0.0, %v1914
      %v1916 = vpop.f32.mrf.mxu0
      %v1917 = vadd.f32 0.0, %v1916
      %1918 = vmatmul.bf16.gmra.mxu0 %v1689
      %v1919 = vpop.f32.mrf.mxu0
      %v1920 = vadd.f32 0.0, %v1919
      %v1921 = vpop.f32.mrf.mxu0
      %v1922 = vadd.f32 0.0, %v1921
      %1923 = vmatmul.bf16.gmra.mxu0 %v1697
      %v1924 = vpop.f32.mrf.mxu0
      %v1925 = vadd.f32 0.0, %v1924
      %v1926 = vpop.f32.mrf.mxu0
      %v1927 = vadd.f32 0.0, %v1926
      %1928 = vmatmul.bf16.gmra.mxu0 %v1705
      %v1929 = vpop.f32.mrf.mxu0
      %v1930 = vadd.f32 0.0, %v1929
      %v1931 = vpop.f32.mrf.mxu0
      %v1932 = vadd.f32 0.0, %v1931
      %1933 = vmatmul.bf16.gmra.mxu0 %v1713
      %v1934 = vpop.f32.mrf.mxu0
      %v1935 = vadd.f32 0.0, %v1934
      %v1936 = vpop.f32.mrf.mxu0
      %v1937 = vadd.f32 0.0, %v1936
      %1938 = vmatmul.bf16.gmra.mxu0 %v1721
      %v1939 = vpop.f32.mrf.mxu0
      %v1940 = vadd.f32 0.0, %v1939
      %v1941 = vpop.f32.mrf.mxu0
      %v1942 = vadd.f32 0.0, %v1941
      %1943 = vmatmul.bf16.gmra.mxu0 %v1729
      %v1944 = vpop.f32.mrf.mxu0
      %v1945 = vadd.f32 0.0, %v1944
      %v1946 = vpop.f32.mrf.mxu0
      %v1947 = vadd.f32 0.0, %v1946
      %1948 = vmatmul.bf16.gmra.mxu0 %v1737
      %v1949 = vpop.f32.mrf.mxu0
      %v1950 = vadd.f32 0.0, %v1949
      %v1951 = vpop.f32.mrf.mxu0
      %v1952 = vadd.f32 0.0, %v1951
      %1953 = vmatmul.bf16.gmra.mxu0 %v1745
      %v1954 = vpop.f32.mrf.mxu0
      %v1955 = vadd.f32 0.0, %v1954
      %v1956 = vpop.f32.mrf.mxu0
      %v1957 = vadd.f32 0.0, %v1956
      %1958 = vmatmul.bf16.gmra.mxu0 %v1753
      %v1959 = vpop.f32.mrf.mxu0
      %v1960 = vadd.f32 0.0, %v1959
      %v1961 = vpop.f32.mrf.mxu0
      %v1962 = vadd.f32 0.0, %v1961
      %1963 = vmatmul.bf16.gmra.mxu0 %v1761
      %v1964 = vpop.f32.mrf.mxu0
      %v1965 = vadd.f32 0.0, %v1964
      %v1966 = vpop.f32.mrf.mxu0
      %v1967 = vadd.f32 0.0, %v1966
      %1968 = vmatmul.bf16.gmra.mxu0 %v1769
      %v1969 = vpop.f32.mrf.mxu0
      %v1970 = vadd.f32 0.0, %v1969
      %v1971 = vpop.f32.mrf.mxu0
      %v1972 = vadd.f32 0.0, %v1971
      %1973 = vmatmul.bf16.gmra.mxu0 %v1777
      %v1974 = vpop.f32.mrf.mxu0
      %v1975 = vadd.f32 0.0, %v1974
      %v1976 = vpop.f32.mrf.mxu0
      %v1977 = vadd.f32 0.0, %v1976
      %1978 = vdwg.mxu0
      %v1979 = vadd.f32 %v1338, %v1860
      %v1980 = vadd.f32 %v1339, %v1862
      %v1981 = vadd.f32 %v1340, %v1865
      %v1982 = vadd.f32 %v1341, %v1867
      %v1983 = vadd.f32 %v1342, %v1870
      %v1984 = vadd.f32 %v1343, %v1872
      %v1985 = vadd.f32 %v1344, %v1875
      %v1986 = vadd.f32 %v1345, %v1877
      %v1987 = vadd.f32 %v1346, %v1880
      %v1988 = vadd.f32 %v1347, %v1882
      %v1989 = vadd.f32 %v1348, %v1885
      %v1990 = vadd.f32 %v1349, %v1887
      %v1991 = vadd.f32 %v1350, %v1890
      %v1992 = vadd.f32 %v1351, %v1892
      %v1993 = vadd.f32 %v1352, %v1895
      %v1994 = vadd.f32 %v1353, %v1897
      %v1995 = vadd.f32 %v1354, %v1900
      %v1996 = vadd.f32 %v1355, %v1902
      %v1997 = vadd.f32 %v1356, %v1905
      %v1998 = vadd.f32 %v1357, %v1907
      %v1999 = vadd.f32 %v1358, %v1910
      %v2000 = vadd.f32 %v1359, %v1912
      %v2001 = vadd.f32 %v1360, %v1915
      %v2002 = vadd.f32 %v1361, %v1917
      %v2003 = vadd.f32 %v1362, %v1920
      %v2004 = vadd.f32 %v1363, %v1922
      %v2005 = vadd.f32 %v1364, %v1925
      %v2006 = vadd.f32 %v1365, %v1927
      %v2007 = vadd.f32 %v1366, %v1930
      %v2008 = vadd.f32 %v1367, %v1932
      %v2009 = vadd.f32 %v1368, %v1935
      %v2010 = vadd.f32 %v1369, %v1937
      %v2011 = vadd.f32 %v1370, %v1940
      %v2012 = vadd.f32 %v1371, %v1942
      %v2013 = vadd.f32 %v1372, %v1945
      %v2014 = vadd.f32 %v1373, %v1947
      %v2015 = vadd.f32 %v1374, %v1950
      %v2016 = vadd.f32 %v1375, %v1952
      %v2017 = vadd.f32 %v1376, %v1955
      %v2018 = vadd.f32 %v1377, %v1957
      %v2019 = vadd.f32 %v1378, %v1960
      %v2020 = vadd.f32 %v1379, %v1962
      %v2021 = vadd.f32 %v1380, %v1965
      %v2022 = vadd.f32 %v1381, %v1967
      %v2023 = vadd.f32 %v1382, %v1970
      %v2024 = vadd.f32 %v1383, %v1972
      %v2025 = vadd.f32 %v1384, %v1975
      %v2026 = vadd.f32 %v1385, %v1977
      %s2027 = scalar_lea.vmem %s281, 256
      %v2028 = vld [vmem:[%s2027] sm:$0xf]
      %v2029 = vld [vmem:[%s2027 + $0x4] sm:$0xf]
      %v2030 = vld [vmem:[%s2027 + $0x8] sm:$0xf]
      %v2031 = vld [vmem:[%s2027 + $0xc] sm:$0xf]
      %v2032 = vld [vmem:[%s2027 + $0x10] sm:$0xf]
      %v2033 = vld [vmem:[%s2027 + $0x14] sm:$0xf]
      %v2034 = vld [vmem:[%s2027 + $0x18] sm:$0xf]
      %v2035 = vld [vmem:[%s2027 + $0x1c] sm:$0xf]
      %v2036 = vld [vmem:[%s2027 + $0x20] sm:$0xf]
      %v2037 = vld [vmem:[%s2027 + $0x24] sm:$0xf]
      %v2038 = vld [vmem:[%s2027 + $0x28] sm:$0xf]
      %v2039 = vld [vmem:[%s2027 + $0x2c] sm:$0xf]
      %v2040 = vld [vmem:[%s2027 + $0x30] sm:$0xf]
      %v2041 = vld [vmem:[%s2027 + $0x34] sm:$0xf]
      %v2042 = vld [vmem:[%s2027 + $0x38] sm:$0xf]
      %v2043 = vld [vmem:[%s2027 + $0x3c] sm:$0xf]
      %v2047 = vunpack.c.l.b16 %v1435
      %v2048 = vunpack.c.l.b16 %v1436
      %v2049 = vunpack.c.l.b16 %v1437
      %v2050 = vpack.c.b16 %v1511, %v1510
      %v2051 = vpack.c.b16 %v1513, %v1512
      %v2052 = vpack.c.b16 %v1515, %v1514
      %v2053 = vpack.c.b16 %v1517, %v1516
      %v2054 = vpack.c.b16 %v1519, %v1518
      %v2055 = vpack.c.b16 %v1521, %v1520
      %v2056 = vpack.c.b16 %v1523, %v1522
      %v2057 = vpack.c.b16 %v1525, %v1524
      %v2058 = vpack.c.b16 %v1527, %v1526
      %v2059 = vpack.c.b16 %v1529, %v1528
      %v2060 = vpack.c.b16 %v1531, %v1530
      %v2061 = vpack.c.b16 %v1533, %v1532
      %v2062 = vpack.c.b16 %v1535, %v1534
      %v2063 = vpack.c.b16 %v1537, %v1536
      %v2064 = vpack.c.b16 %v1539, %v1538
      %v2065 = vpack.c.b16 %v1541, %v1540
      %v2066 = vpack.c.b16 %v1543, %v1542
      %v2067 = vpack.c.b16 %v1545, %v1544
      %v2068 = vpack.c.b16 %v1547, %v1546
      %v2069 = vpack.c.b16 %v1549, %v1548
      %v2070 = vpack.c.b16 %v1551, %v1550
      %v2071 = vpack.c.b16 %v1553, %v1552
      %v2072 = vpack.c.b16 %v1555, %v1554
      %v2073 = vpack.c.b16 %v2048, %v2047
      %v2074 = vpack.c.b16 %v2049, %v2049
      %v2076 = vshrl.u32 %v2050, 16
      %v2078 = vshll.u32 %v2050, 16
      %v2080 = vrot.slane %v2078, 1
      %v2081 = vor.u32 %v2076, %v2080
      %v2083 = vshll.u32 %v2051, 16
      %v2085 = vrot.slane %v2083, 1
      %v2086 = vsel %vm1581, %v2081, %v2085
      %v2087 = vshrl.u32 %v2051, 16
      %v2089 = vor.u32 %v2087, %v2085
      %v2091 = vshll.u32 %v2052, 16
      %v2093 = vrot.slane %v2091, 1
      %v2094 = vsel %vm1581, %v2089, %v2093
      %v2095 = vshrl.u32 %v2052, 16
      %v2097 = vor.u32 %v2095, %v2093
      %v2099 = vshll.u32 %v2053, 16
      %v2101 = vrot.slane %v2099, 1
      %v2102 = vsel %vm1581, %v2097, %v2101
      %v2103 = vshrl.u32 %v2053, 16
      %v2105 = vor.u32 %v2103, %v2101
      %v2107 = vshll.u32 %v2054, 16
      %v2109 = vrot.slane %v2107, 1
      %v2110 = vsel %vm1581, %v2105, %v2109
      %v2111 = vshrl.u32 %v2054, 16
      %v2113 = vor.u32 %v2111, %v2109
      %v2115 = vshll.u32 %v2055, 16
      %v2117 = vrot.slane %v2115, 1
      %v2118 = vsel %vm1581, %v2113, %v2117
      %v2119 = vshrl.u32 %v2055, 16
      %v2121 = vor.u32 %v2119, %v2117
      %v2123 = vshll.u32 %v2056, 16
      %v2125 = vrot.slane %v2123, 1
      %v2126 = vsel %vm1581, %v2121, %v2125
      %v2127 = vshrl.u32 %v2056, 16
      %v2129 = vor.u32 %v2127, %v2125
      %v2131 = vshll.u32 %v2057, 16
      %v2133 = vrot.slane %v2131, 1
      %v2134 = vsel %vm1581, %v2129, %v2133
      %v2135 = vshrl.u32 %v2057, 16
      %v2137 = vor.u32 %v2135, %v2133
      %v2139 = vshll.u32 %v2058, 16
      %v2141 = vrot.slane %v2139, 1
      %v2142 = vsel %vm1581, %v2137, %v2141
      %v2143 = vshrl.u32 %v2058, 16
      %v2145 = vor.u32 %v2143, %v2141
      %v2147 = vshll.u32 %v2059, 16
      %v2149 = vrot.slane %v2147, 1
      %v2150 = vsel %vm1581, %v2145, %v2149
      %v2151 = vshrl.u32 %v2059, 16
      %v2153 = vor.u32 %v2151, %v2149
      %v2155 = vshll.u32 %v2060, 16
      %v2157 = vrot.slane %v2155, 1
      %v2158 = vsel %vm1581, %v2153, %v2157
      %v2159 = vshrl.u32 %v2060, 16
      %v2161 = vor.u32 %v2159, %v2157
      %v2163 = vshll.u32 %v2061, 16
      %v2165 = vrot.slane %v2163, 1
      %v2166 = vsel %vm1581, %v2161, %v2165
      %v2167 = vshrl.u32 %v2061, 16
      %v2169 = vor.u32 %v2167, %v2165
      %v2171 = vshll.u32 %v2062, 16
      %v2173 = vrot.slane %v2171, 1
      %v2174 = vsel %vm1581, %v2169, %v2173
      %v2175 = vshrl.u32 %v2062, 16
      %v2177 = vor.u32 %v2175, %v2173
      %v2179 = vshll.u32 %v2063, 16
      %v2181 = vrot.slane %v2179, 1
      %v2182 = vsel %vm1581, %v2177, %v2181
      %v2183 = vshrl.u32 %v2063, 16
      %v2185 = vor.u32 %v2183, %v2181
      %v2187 = vshll.u32 %v2064, 16
      %v2189 = vrot.slane %v2187, 1
      %v2190 = vsel %vm1581, %v2185, %v2189
      %v2191 = vshrl.u32 %v2064, 16
      %v2193 = vor.u32 %v2191, %v2189
      %v2195 = vshll.u32 %v2065, 16
      %v2197 = vrot.slane %v2195, 1
      %v2198 = vsel %vm1581, %v2193, %v2197
      %v2199 = vshrl.u32 %v2065, 16
      %v2201 = vor.u32 %v2199, %v2197
      %v2203 = vshll.u32 %v2066, 16
      %v2205 = vrot.slane %v2203, 1
      %v2206 = vsel %vm1581, %v2201, %v2205
      %v2207 = vshrl.u32 %v2066, 16
      %v2209 = vor.u32 %v2207, %v2205
      %v2211 = vshll.u32 %v2067, 16
      %v2213 = vrot.slane %v2211, 1
      %v2214 = vsel %vm1581, %v2209, %v2213
      %v2215 = vshrl.u32 %v2067, 16
      %v2217 = vor.u32 %v2215, %v2213
      %v2219 = vshll.u32 %v2068, 16
      %v2221 = vrot.slane %v2219, 1
      %v2222 = vsel %vm1581, %v2217, %v2221
      %v2223 = vshrl.u32 %v2068, 16
      %v2225 = vor.u32 %v2223, %v2221
      %v2227 = vshll.u32 %v2069, 16
      %v2229 = vrot.slane %v2227, 1
      %v2230 = vsel %vm1581, %v2225, %v2229
      %v2231 = vshrl.u32 %v2069, 16
      %v2233 = vor.u32 %v2231, %v2229
      %v2235 = vshll.u32 %v2070, 16
      %v2237 = vrot.slane %v2235, 1
      %v2238 = vsel %vm1581, %v2233, %v2237
      %v2239 = vshrl.u32 %v2070, 16
      %v2241 = vor.u32 %v2239, %v2237
      %v2243 = vshll.u32 %v2071, 16
      %v2245 = vrot.slane %v2243, 1
      %v2246 = vsel %vm1581, %v2241, %v2245
      %v2247 = vshrl.u32 %v2071, 16
      %v2249 = vor.u32 %v2247, %v2245
      %v2251 = vshll.u32 %v2072, 16
      %v2253 = vrot.slane %v2251, 1
      %v2254 = vsel %vm1581, %v2249, %v2253
      %v2255 = vshrl.u32 %v2072, 16
      %v2257 = vor.u32 %v2255, %v2253
      %v2259 = vshll.u32 %v2073, 16
      %v2261 = vrot.slane %v2259, 1
      %v2262 = vsel %vm1581, %v2257, %v2261
      %v2263 = vshrl.u32 %v2073, 16
      %v2265 = vor.u32 %v2263, %v2261
      %v2267 = vshll.u32 %v2074, 16
      %v2269 = vrot.slane %v2267, 1
      %v2270 = vsel %vm1581, %v2265, %v2269
      %v2311 = vunpack.c.l.b16 %v2028
      %v2312 = vunpack.c.l.b16 %v2029
      %v2313 = vunpack.c.l.b16 %v2030
      %v2314 = vunpack.c.l.b16 %v2031
      %v2315 = vunpack.c.l.b16 %v2032
      %v2316 = vunpack.c.l.b16 %v2033
      %v2317 = vunpack.c.l.b16 %v2034
      %v2318 = vunpack.c.l.b16 %v2035
      %v2319 = vunpack.c.l.b16 %v2036
      %v2320 = vunpack.c.l.b16 %v2037
      %v2321 = vunpack.c.l.b16 %v2038
      %v2322 = vunpack.c.l.b16 %v2039
      %v2323 = vunpack.c.l.b16 %v2040
      %v2324 = vunpack.c.l.b16 %v2041
      %v2325 = vunpack.c.l.b16 %v2042
      %v2326 = vunpack.c.l.b16 %v2043
      %v2327 = vpack.c.b16 %v2312, %v2311
      %v2328 = vpack.c.b16 %v2314, %v2313
      %v2329 = vpack.c.b16 %v2316, %v2315
      %v2330 = vpack.c.b16 %v2318, %v2317
      %v2331 = vpack.c.b16 %v2320, %v2319
      %v2332 = vpack.c.b16 %v2322, %v2321
      %v2333 = vpack.c.b16 %v2324, %v2323
      %v2334 = vpack.c.b16 %v2326, %v2325
      %2343 = vmatpush.bf16.msra.mxu0 %v2334
      %2344 = vmatpush.bf16.msra.mxu0 %v2333
      %2345 = vmatpush.bf16.msra.mxu0 %v2332
      %2346 = vmatpush.bf16.msra.mxu0 %v2331
      %2347 = vmatpush.bf16.msra.mxu0 %v2330
      %2348 = vmatpush.bf16.msra.mxu0 %v2329
      %2349 = vmatpush.bf16.msra.mxu0 %v2328
      %2350 = vmatpush.bf16.msra.mxu0 %v2327
      %2351 = vmatmul.bf16.gmra.mxu0 %v2086
      %v2352 = vpop.f32.mrf.mxu0
      %v2353 = vadd.f32 0.0, %v2352
      %v2354 = vpop.f32.mrf.mxu0
      %v2355 = vadd.f32 0.0, %v2354
      %2356 = vmatmul.bf16.gmra.mxu0 %v2094
      %v2357 = vpop.f32.mrf.mxu0
      %v2358 = vadd.f32 0.0, %v2357
      %v2359 = vpop.f32.mrf.mxu0
      %v2360 = vadd.f32 0.0, %v2359
      %2361 = vmatmul.bf16.gmra.mxu0 %v2102
      %v2362 = vpop.f32.mrf.mxu0
      %v2363 = vadd.f32 0.0, %v2362
      %v2364 = vpop.f32.mrf.mxu0
      %v2365 = vadd.f32 0.0, %v2364
      %2366 = vmatmul.bf16.gmra.mxu0 %v2110
      %v2367 = vpop.f32.mrf.mxu0
      %v2368 = vadd.f32 0.0, %v2367
      %v2369 = vpop.f32.mrf.mxu0
      %v2370 = vadd.f32 0.0, %v2369
      %2371 = vmatmul.bf16.gmra.mxu0 %v2118
      %v2372 = vpop.f32.mrf.mxu0
      %v2373 = vadd.f32 0.0, %v2372
      %v2374 = vpop.f32.mrf.mxu0
      %v2375 = vadd.f32 0.0, %v2374
      %2376 = vmatmul.bf16.gmra.mxu0 %v2126
      %v2377 = vpop.f32.mrf.mxu0
      %v2378 = vadd.f32 0.0, %v2377
      %v2379 = vpop.f32.mrf.mxu0
      %v2380 = vadd.f32 0.0, %v2379
      %2381 = vmatmul.bf16.gmra.mxu0 %v2134
      %v2382 = vpop.f32.mrf.mxu0
      %v2383 = vadd.f32 0.0, %v2382
      %v2384 = vpop.f32.mrf.mxu0
      %v2385 = vadd.f32 0.0, %v2384
      %2386 = vmatmul.bf16.gmra.mxu0 %v2142
      %v2387 = vpop.f32.mrf.mxu0
      %v2388 = vadd.f32 0.0, %v2387
      %v2389 = vpop.f32.mrf.mxu0
      %v2390 = vadd.f32 0.0, %v2389
      %2391 = vmatmul.bf16.gmra.mxu0 %v2150
      %v2392 = vpop.f32.mrf.mxu0
      %v2393 = vadd.f32 0.0, %v2392
      %v2394 = vpop.f32.mrf.mxu0
      %v2395 = vadd.f32 0.0, %v2394
      %2396 = vmatmul.bf16.gmra.mxu0 %v2158
      %v2397 = vpop.f32.mrf.mxu0
      %v2398 = vadd.f32 0.0, %v2397
      %v2399 = vpop.f32.mrf.mxu0
      %v2400 = vadd.f32 0.0, %v2399
      %2401 = vmatmul.bf16.gmra.mxu0 %v2166
      %v2402 = vpop.f32.mrf.mxu0
      %v2403 = vadd.f32 0.0, %v2402
      %v2404 = vpop.f32.mrf.mxu0
      %v2405 = vadd.f32 0.0, %v2404
      %2406 = vmatmul.bf16.gmra.mxu0 %v2174
      %v2407 = vpop.f32.mrf.mxu0
      %v2408 = vadd.f32 0.0, %v2407
      %v2409 = vpop.f32.mrf.mxu0
      %v2410 = vadd.f32 0.0, %v2409
      %2411 = vmatmul.bf16.gmra.mxu0 %v2182
      %v2412 = vpop.f32.mrf.mxu0
      %v2413 = vadd.f32 0.0, %v2412
      %v2414 = vpop.f32.mrf.mxu0
      %v2415 = vadd.f32 0.0, %v2414
      %2416 = vmatmul.bf16.gmra.mxu0 %v2190
      %v2417 = vpop.f32.mrf.mxu0
      %v2418 = vadd.f32 0.0, %v2417
      %v2419 = vpop.f32.mrf.mxu0
      %v2420 = vadd.f32 0.0, %v2419
      %2421 = vmatmul.bf16.gmra.mxu0 %v2198
      %v2422 = vpop.f32.mrf.mxu0
      %v2423 = vadd.f32 0.0, %v2422
      %v2424 = vpop.f32.mrf.mxu0
      %v2425 = vadd.f32 0.0, %v2424
      %2426 = vmatmul.bf16.gmra.mxu0 %v2206
      %v2427 = vpop.f32.mrf.mxu0
      %v2428 = vadd.f32 0.0, %v2427
      %v2429 = vpop.f32.mrf.mxu0
      %v2430 = vadd.f32 0.0, %v2429
      %2431 = vmatmul.bf16.gmra.mxu0 %v2214
      %v2432 = vpop.f32.mrf.mxu0
      %v2433 = vadd.f32 0.0, %v2432
      %v2434 = vpop.f32.mrf.mxu0
      %v2435 = vadd.f32 0.0, %v2434
      %2436 = vmatmul.bf16.gmra.mxu0 %v2222
      %v2437 = vpop.f32.mrf.mxu0
      %v2438 = vadd.f32 0.0, %v2437
      %v2439 = vpop.f32.mrf.mxu0
      %v2440 = vadd.f32 0.0, %v2439
      %2441 = vmatmul.bf16.gmra.mxu0 %v2230
      %v2442 = vpop.f32.mrf.mxu0
      %v2443 = vadd.f32 0.0, %v2442
      %v2444 = vpop.f32.mrf.mxu0
      %v2445 = vadd.f32 0.0, %v2444
      %2446 = vmatmul.bf16.gmra.mxu0 %v2238
      %v2447 = vpop.f32.mrf.mxu0
      %v2448 = vadd.f32 0.0, %v2447
      %v2449 = vpop.f32.mrf.mxu0
      %v2450 = vadd.f32 0.0, %v2449
      %2451 = vmatmul.bf16.gmra.mxu0 %v2246
      %v2452 = vpop.f32.mrf.mxu0
      %v2453 = vadd.f32 0.0, %v2452
      %v2454 = vpop.f32.mrf.mxu0
      %v2455 = vadd.f32 0.0, %v2454
      %2456 = vmatmul.bf16.gmra.mxu0 %v2254
      %v2457 = vpop.f32.mrf.mxu0
      %v2458 = vadd.f32 0.0, %v2457
      %v2459 = vpop.f32.mrf.mxu0
      %v2460 = vadd.f32 0.0, %v2459
      %2461 = vmatmul.bf16.gmra.mxu0 %v2262
      %v2462 = vpop.f32.mrf.mxu0
      %v2463 = vadd.f32 0.0, %v2462
      %v2464 = vpop.f32.mrf.mxu0
      %v2465 = vadd.f32 0.0, %v2464
      %2466 = vmatmul.bf16.gmra.mxu0 %v2270
      %v2467 = vpop.f32.mrf.mxu0
      %v2468 = vadd.f32 0.0, %v2467
      %v2469 = vpop.f32.mrf.mxu0
      %v2470 = vadd.f32 0.0, %v2469
      %2471 = vdwg.mxu0
      %v2472 = vadd.f32 %v1979, %v2353
      %v2473 = vadd.f32 %v1980, %v2355
      %v2474 = vadd.f32 %v1981, %v2358
      %v2475 = vadd.f32 %v1982, %v2360
      %v2476 = vadd.f32 %v1983, %v2363
      %v2477 = vadd.f32 %v1984, %v2365
      %v2478 = vadd.f32 %v1985, %v2368
      %v2479 = vadd.f32 %v1986, %v2370
      %v2480 = vadd.f32 %v1987, %v2373
      %v2481 = vadd.f32 %v1988, %v2375
      %v2482 = vadd.f32 %v1989, %v2378
      %v2483 = vadd.f32 %v1990, %v2380
      %v2484 = vadd.f32 %v1991, %v2383
      %v2485 = vadd.f32 %v1992, %v2385
      %v2486 = vadd.f32 %v1993, %v2388
      %v2487 = vadd.f32 %v1994, %v2390
      %v2488 = vadd.f32 %v1995, %v2393
      %v2489 = vadd.f32 %v1996, %v2395
      %v2490 = vadd.f32 %v1997, %v2398
      %v2491 = vadd.f32 %v1998, %v2400
      %v2492 = vadd.f32 %v1999, %v2403
      %v2493 = vadd.f32 %v2000, %v2405
      %v2494 = vadd.f32 %v2001, %v2408
      %v2495 = vadd.f32 %v2002, %v2410
      %v2496 = vadd.f32 %v2003, %v2413
      %v2497 = vadd.f32 %v2004, %v2415
      %v2498 = vadd.f32 %v2005, %v2418
      %v2499 = vadd.f32 %v2006, %v2420
      %v2500 = vadd.f32 %v2007, %v2423
      %v2501 = vadd.f32 %v2008, %v2425
      %v2502 = vadd.f32 %v2009, %v2428
      %v2503 = vadd.f32 %v2010, %v2430
      %v2504 = vadd.f32 %v2011, %v2433
      %v2505 = vadd.f32 %v2012, %v2435
      %v2506 = vadd.f32 %v2013, %v2438
      %v2507 = vadd.f32 %v2014, %v2440
      %v2508 = vadd.f32 %v2015, %v2443
      %v2509 = vadd.f32 %v2016, %v2445
      %v2510 = vadd.f32 %v2017, %v2448
      %v2511 = vadd.f32 %v2018, %v2450
      %v2512 = vadd.f32 %v2019, %v2453
      %v2513 = vadd.f32 %v2020, %v2455
      %v2514 = vadd.f32 %v2021, %v2458
      %v2515 = vadd.f32 %v2022, %v2460
      %v2516 = vadd.f32 %v2023, %v2463
      %v2517 = vadd.f32 %v2024, %v2465
      %v2518 = vadd.f32 %v2025, %v2468
      %v2519 = vadd.f32 %v2026, %v2470
      %s2520 = scalar_lea.vmem %s281, 448
      %v2521 = vld [vmem:[%s2520] sm:$0xf]
      %v2522 = vld [vmem:[%s2520 + $0x4] sm:$0xf]
      %v2523 = vld [vmem:[%s2520 + $0x8] sm:$0xf]
      %v2524 = vld [vmem:[%s2520 + $0xc] sm:$0xf]
      %v2525 = vld [vmem:[%s2520 + $0x10] sm:$0xf]
      %v2526 = vld [vmem:[%s2520 + $0x14] sm:$0xf]
      %v2527 = vld [vmem:[%s2520 + $0x18] sm:$0xf]
      %v2528 = vld [vmem:[%s2520 + $0x1c] sm:$0xf]
      %v2529 = vld [vmem:[%s2520 + $0x20] sm:$0xf]
      %v2530 = vld [vmem:[%s2520 + $0x24] sm:$0xf]
      %v2531 = vld [vmem:[%s2520 + $0x28] sm:$0xf]
      %v2532 = vld [vmem:[%s2520 + $0x2c] sm:$0xf]
      %v2533 = vld [vmem:[%s2520 + $0x30] sm:$0xf]
      %v2534 = vld [vmem:[%s2520 + $0x34] sm:$0xf]
      %v2535 = vld [vmem:[%s2520 + $0x38] sm:$0xf]
      %v2536 = vld [vmem:[%s2520 + $0x3c] sm:$0xf]
      %v2540 = vunpack.c.l.b16 %v1438
      %v2541 = vunpack.c.l.b16 %v1439
      %v2542 = vunpack.c.l.b16 %v1440
      %v2543 = vpack.c.b16 %v2047, %v1555
      %v2544 = vpack.c.b16 %v2049, %v2048
      %v2545 = vpack.c.b16 %v2541, %v2540
      %v2546 = vpack.c.b16 %v2542, %v2542
      %v2548 = vshll.u32 %v2543, 16
      %v2550 = vrot.slane %v2548, 1
      %v2551 = vsel %vm1581, %v1772, %v2550
      %v2552 = vshrl.u32 %v2543, 16
      %v2554 = vor.u32 %v2552, %v2550
      %v2556 = vshll.u32 %v2544, 16
      %v2558 = vrot.slane %v2556, 1
      %v2559 = vsel %vm1581, %v2554, %v2558
      %v2560 = vshrl.u32 %v2544, 16
      %v2562 = vor.u32 %v2560, %v2558
      %v2564 = vshll.u32 %v2545, 16
      %v2566 = vrot.slane %v2564, 1
      %v2567 = vsel %vm1581, %v2562, %v2566
      %v2568 = vshrl.u32 %v2545, 16
      %v2570 = vor.u32 %v2568, %v2566
      %v2572 = vshll.u32 %v2546, 16
      %v2574 = vrot.slane %v2572, 1
      %v2575 = vsel %vm1581, %v2570, %v2574
      %v2596 = vunpack.c.l.b16 %v2521
      %v2597 = vunpack.c.l.b16 %v2522
      %v2598 = vunpack.c.l.b16 %v2523
      %v2599 = vunpack.c.l.b16 %v2524
      %v2600 = vunpack.c.l.b16 %v2525
      %v2601 = vunpack.c.l.b16 %v2526
      %v2602 = vunpack.c.l.b16 %v2527
      %v2603 = vunpack.c.l.b16 %v2528
      %v2604 = vunpack.c.l.b16 %v2529
      %v2605 = vunpack.c.l.b16 %v2530
      %v2606 = vunpack.c.l.b16 %v2531
      %v2607 = vunpack.c.l.b16 %v2532
      %v2608 = vunpack.c.l.b16 %v2533
      %v2609 = vunpack.c.l.b16 %v2534
      %v2610 = vunpack.c.l.b16 %v2535
      %v2611 = vunpack.c.l.b16 %v2536
      %v2612 = vpack.c.b16 %v2597, %v2596
      %v2613 = vpack.c.b16 %v2599, %v2598
      %v2614 = vpack.c.b16 %v2601, %v2600
      %v2615 = vpack.c.b16 %v2603, %v2602
      %v2616 = vpack.c.b16 %v2605, %v2604
      %v2617 = vpack.c.b16 %v2607, %v2606
      %v2618 = vpack.c.b16 %v2609, %v2608
      %v2619 = vpack.c.b16 %v2611, %v2610
      %2628 = vmatpush.bf16.msra.mxu0 %v2619
      %2629 = vmatpush.bf16.msra.mxu0 %v2618
      %2630 = vmatpush.bf16.msra.mxu0 %v2617
      %2631 = vmatpush.bf16.msra.mxu0 %v2616
      %2632 = vmatpush.bf16.msra.mxu0 %v2615
      %2633 = vmatpush.bf16.msra.mxu0 %v2614
      %2634 = vmatpush.bf16.msra.mxu0 %v2613
      %2635 = vmatpush.bf16.msra.mxu0 %v2612
      %2636 = vmatmul.bf16.gmra.mxu0 %v1617
      %v2637 = vpop.f32.mrf.mxu0
      %v2638 = vadd.f32 0.0, %v2637
      %v2639 = vpop.f32.mrf.mxu0
      %v2640 = vadd.f32 0.0, %v2639
      %2641 = vmatmul.bf16.gmra.mxu0 %v1625
      %v2642 = vpop.f32.mrf.mxu0
      %v2643 = vadd.f32 0.0, %v2642
      %v2644 = vpop.f32.mrf.mxu0
      %v2645 = vadd.f32 0.0, %v2644
      %2646 = vmatmul.bf16.gmra.mxu0 %v1633
      %v2647 = vpop.f32.mrf.mxu0
      %v2648 = vadd.f32 0.0, %v2647
      %v2649 = vpop.f32.mrf.mxu0
      %v2650 = vadd.f32 0.0, %v2649
      %2651 = vmatmul.bf16.gmra.mxu0 %v1641
      %v2652 = vpop.f32.mrf.mxu0
      %v2653 = vadd.f32 0.0, %v2652
      %v2654 = vpop.f32.mrf.mxu0
      %v2655 = vadd.f32 0.0, %v2654
      %2656 = vmatmul.bf16.gmra.mxu0 %v1649
      %v2657 = vpop.f32.mrf.mxu0
      %v2658 = vadd.f32 0.0, %v2657
      %v2659 = vpop.f32.mrf.mxu0
      %v2660 = vadd.f32 0.0, %v2659
      %2661 = vmatmul.bf16.gmra.mxu0 %v1657
      %v2662 = vpop.f32.mrf.mxu0
      %v2663 = vadd.f32 0.0, %v2662
      %v2664 = vpop.f32.mrf.mxu0
      %v2665 = vadd.f32 0.0, %v2664
      %2666 = vmatmul.bf16.gmra.mxu0 %v1665
      %v2667 = vpop.f32.mrf.mxu0
      %v2668 = vadd.f32 0.0, %v2667
      %v2669 = vpop.f32.mrf.mxu0
      %v2670 = vadd.f32 0.0, %v2669
      %2671 = vmatmul.bf16.gmra.mxu0 %v1673
      %v2672 = vpop.f32.mrf.mxu0
      %v2673 = vadd.f32 0.0, %v2672
      %v2674 = vpop.f32.mrf.mxu0
      %v2675 = vadd.f32 0.0, %v2674
      %2676 = vmatmul.bf16.gmra.mxu0 %v1681
      %v2677 = vpop.f32.mrf.mxu0
      %v2678 = vadd.f32 0.0, %v2677
      %v2679 = vpop.f32.mrf.mxu0
      %v2680 = vadd.f32 0.0, %v2679
      %2681 = vmatmul.bf16.gmra.mxu0 %v1689
      %v2682 = vpop.f32.mrf.mxu0
      %v2683 = vadd.f32 0.0, %v2682
      %v2684 = vpop.f32.mrf.mxu0
      %v2685 = vadd.f32 0.0, %v2684
      %2686 = vmatmul.bf16.gmra.mxu0 %v1697
      %v2687 = vpop.f32.mrf.mxu0
      %v2688 = vadd.f32 0.0, %v2687
      %v2689 = vpop.f32.mrf.mxu0
      %v2690 = vadd.f32 0.0, %v2689
      %2691 = vmatmul.bf16.gmra.mxu0 %v1705
      %v2692 = vpop.f32.mrf.mxu0
      %v2693 = vadd.f32 0.0, %v2692
      %v2694 = vpop.f32.mrf.mxu0
      %v2695 = vadd.f32 0.0, %v2694
      %2696 = vmatmul.bf16.gmra.mxu0 %v1713
      %v2697 = vpop.f32.mrf.mxu0
      %v2698 = vadd.f32 0.0, %v2697
      %v2699 = vpop.f32.mrf.mxu0
      %v2700 = vadd.f32 0.0, %v2699
      %2701 = vmatmul.bf16.gmra.mxu0 %v1721
      %v2702 = vpop.f32.mrf.mxu0
      %v2703 = vadd.f32 0.0, %v2702
      %v2704 = vpop.f32.mrf.mxu0
      %v2705 = vadd.f32 0.0, %v2704
      %2706 = vmatmul.bf16.gmra.mxu0 %v1729
      %v2707 = vpop.f32.mrf.mxu0
      %v2708 = vadd.f32 0.0, %v2707
      %v2709 = vpop.f32.mrf.mxu0
      %v2710 = vadd.f32 0.0, %v2709
      %2711 = vmatmul.bf16.gmra.mxu0 %v1737
      %v2712 = vpop.f32.mrf.mxu0
      %v2713 = vadd.f32 0.0, %v2712
      %v2714 = vpop.f32.mrf.mxu0
      %v2715 = vadd.f32 0.0, %v2714
      %2716 = vmatmul.bf16.gmra.mxu0 %v1745
      %v2717 = vpop.f32.mrf.mxu0
      %v2718 = vadd.f32 0.0, %v2717
      %v2719 = vpop.f32.mrf.mxu0
      %v2720 = vadd.f32 0.0, %v2719
      %2721 = vmatmul.bf16.gmra.mxu0 %v1753
      %v2722 = vpop.f32.mrf.mxu0
      %v2723 = vadd.f32 0.0, %v2722
      %v2724 = vpop.f32.mrf.mxu0
      %v2725 = vadd.f32 0.0, %v2724
      %2726 = vmatmul.bf16.gmra.mxu0 %v1761
      %v2727 = vpop.f32.mrf.mxu0
      %v2728 = vadd.f32 0.0, %v2727
      %v2729 = vpop.f32.mrf.mxu0
      %v2730 = vadd.f32 0.0, %v2729
      %2731 = vmatmul.bf16.gmra.mxu0 %v1769
      %v2732 = vpop.f32.mrf.mxu0
      %v2733 = vadd.f32 0.0, %v2732
      %v2734 = vpop.f32.mrf.mxu0
      %v2735 = vadd.f32 0.0, %v2734
      %2736 = vmatmul.bf16.gmra.mxu0 %v2551
      %v2737 = vpop.f32.mrf.mxu0
      %v2738 = vadd.f32 0.0, %v2737
      %v2739 = vpop.f32.mrf.mxu0
      %v2740 = vadd.f32 0.0, %v2739
      %2741 = vmatmul.bf16.gmra.mxu0 %v2559
      %v2742 = vpop.f32.mrf.mxu0
      %v2743 = vadd.f32 0.0, %v2742
      %v2744 = vpop.f32.mrf.mxu0
      %v2745 = vadd.f32 0.0, %v2744
      %2746 = vmatmul.bf16.gmra.mxu0 %v2567
      %v2747 = vpop.f32.mrf.mxu0
      %v2748 = vadd.f32 0.0, %v2747
      %v2749 = vpop.f32.mrf.mxu0
      %v2750 = vadd.f32 0.0, %v2749
      %2751 = vmatmul.bf16.gmra.mxu0 %v2575
      %v2752 = vpop.f32.mrf.mxu0
      %v2753 = vadd.f32 0.0, %v2752
      %v2754 = vpop.f32.mrf.mxu0
      %v2755 = vadd.f32 0.0, %v2754
      %2756 = vdwg.mxu0
      %v2757 = vadd.f32 %v2472, %v2638
      %v2758 = vadd.f32 %v2473, %v2640
      %v2759 = vadd.f32 %v2474, %v2643
      %v2760 = vadd.f32 %v2475, %v2645
      %v2761 = vadd.f32 %v2476, %v2648
      %v2762 = vadd.f32 %v2477, %v2650
      %v2763 = vadd.f32 %v2478, %v2653
      %v2764 = vadd.f32 %v2479, %v2655
      %v2765 = vadd.f32 %v2480, %v2658
      %v2766 = vadd.f32 %v2481, %v2660
      %v2767 = vadd.f32 %v2482, %v2663
      %v2768 = vadd.f32 %v2483, %v2665
      %v2769 = vadd.f32 %v2484, %v2668
      %v2770 = vadd.f32 %v2485, %v2670
      %v2771 = vadd.f32 %v2486, %v2673
      %v2772 = vadd.f32 %v2487, %v2675
      %v2773 = vadd.f32 %v2488, %v2678
      %v2774 = vadd.f32 %v2489, %v2680
      %v2775 = vadd.f32 %v2490, %v2683
      %v2776 = vadd.f32 %v2491, %v2685
      %v2777 = vadd.f32 %v2492, %v2688
      %v2778 = vadd.f32 %v2493, %v2690
      %v2779 = vadd.f32 %v2494, %v2693
      %v2780 = vadd.f32 %v2495, %v2695
      %v2781 = vadd.f32 %v2496, %v2698
      %v2782 = vadd.f32 %v2497, %v2700
      %v2783 = vadd.f32 %v2498, %v2703
      %v2784 = vadd.f32 %v2499, %v2705
      %v2785 = vadd.f32 %v2500, %v2708
      %v2786 = vadd.f32 %v2501, %v2710
      %v2787 = vadd.f32 %v2502, %v2713
      %v2788 = vadd.f32 %v2503, %v2715
      %v2789 = vadd.f32 %v2504, %v2718
      %v2790 = vadd.f32 %v2505, %v2720
      %v2791 = vadd.f32 %v2506, %v2723
      %v2792 = vadd.f32 %v2507, %v2725
      %v2793 = vadd.f32 %v2508, %v2728
      %v2794 = vadd.f32 %v2509, %v2730
      %v2795 = vadd.f32 %v2510, %v2733
      %v2796 = vadd.f32 %v2511, %v2735
      %v2797 = vadd.f32 %v2512, %v2738
      %v2798 = vadd.f32 %v2513, %v2740
      %v2799 = vadd.f32 %v2514, %v2743
      %v2800 = vadd.f32 %v2515, %v2745
      %v2801 = vadd.f32 %v2516, %v2748
      %v2802 = vadd.f32 %v2517, %v2750
      %v2803 = vadd.f32 %v2518, %v2753
      %v2804 = vadd.f32 %v2519, %v2755
      %v2805 = vld [vmem:[%s273] sm:$0xe]
      %s2806 = scalar_lea.vmem %s281, 128
      %v2807 = vld [vmem:[%s2806] sm:$0xf]
      %v2808 = vld [vmem:[%s2806 + $0x4] sm:$0xf]
      %v2809 = vld [vmem:[%s2806 + $0x8] sm:$0xf]
      %v2810 = vld [vmem:[%s2806 + $0xc] sm:$0xf]
      %v2811 = vld [vmem:[%s2806 + $0x10] sm:$0xf]
      %v2812 = vld [vmem:[%s2806 + $0x14] sm:$0xf]
      %v2813 = vld [vmem:[%s2806 + $0x18] sm:$0xf]
      %v2814 = vld [vmem:[%s2806 + $0x1c] sm:$0xf]
      %v2815 = vld [vmem:[%s2806 + $0x20] sm:$0xf]
      %v2816 = vld [vmem:[%s2806 + $0x24] sm:$0xf]
      %v2817 = vld [vmem:[%s2806 + $0x28] sm:$0xf]
      %v2818 = vld [vmem:[%s2806 + $0x2c] sm:$0xf]
      %v2819 = vld [vmem:[%s2806 + $0x30] sm:$0xf]
      %v2820 = vld [vmem:[%s2806 + $0x34] sm:$0xf]
      %v2821 = vld [vmem:[%s2806 + $0x38] sm:$0xf]
      %v2822 = vld [vmem:[%s2806 + $0x3c] sm:$0xf]
      %v2824 = vunpack.c.l.b16 %v2805
      %v2825 = vpack.c.b16 %v1508, %v2824
      %vm2826 = vcmask 1046528
      %v2827 = vrot.slane %v2825, 1
      %v2828 = vrot.slane %v1557, 1
      %v2829 = vsel %vm2826, %v2827, %v2828
      %v2830 = vrot.slane %v1558, 1
      %v2831 = vsel %vm2826, %v2828, %v2830
      %v2832 = vrot.slane %v1559, 1
      %v2833 = vsel %vm2826, %v2830, %v2832
      %v2834 = vrot.slane %v1560, 1
      %v2835 = vsel %vm2826, %v2832, %v2834
      %v2836 = vrot.slane %v1561, 1
      %v2837 = vsel %vm2826, %v2834, %v2836
      %v2838 = vrot.slane %v1562, 1
      %v2839 = vsel %vm2826, %v2836, %v2838
      %v2840 = vrot.slane %v1563, 1
      %v2841 = vsel %vm2826, %v2838, %v2840
      %v2842 = vrot.slane %v1564, 1
      %v2843 = vsel %vm2826, %v2840, %v2842
      %v2844 = vrot.slane %v1565, 1
      %v2845 = vsel %vm2826, %v2842, %v2844
      %v2846 = vrot.slane %v1566, 1
      %v2847 = vsel %vm2826, %v2844, %v2846
      %v2848 = vrot.slane %v1567, 1
      %v2849 = vsel %vm2826, %v2846, %v2848
      %v2850 = vrot.slane %v1568, 1
      %v2851 = vsel %vm2826, %v2848, %v2850
      %v2852 = vrot.slane %v1569, 1
      %v2853 = vsel %vm2826, %v2850, %v2852
      %v2854 = vrot.slane %v1570, 1
      %v2855 = vsel %vm2826, %v2852, %v2854
      %v2856 = vrot.slane %v1571, 1
      %v2857 = vsel %vm2826, %v2854, %v2856
      %v2858 = vrot.slane %v1572, 1
      %v2859 = vsel %vm2826, %v2856, %v2858
      %v2860 = vrot.slane %v1573, 1
      %v2861 = vsel %vm2826, %v2858, %v2860
      %v2862 = vrot.slane %v1574, 1
      %v2863 = vsel %vm2826, %v2860, %v2862
      %v2864 = vrot.slane %v1575, 1
      %v2865 = vsel %vm2826, %v2862, %v2864
      %v2866 = vrot.slane %v1576, 1
      %v2867 = vsel %vm2826, %v2864, %v2866
      %v2868 = vrot.slane %v1577, 1
      %v2869 = vsel %vm2826, %v2866, %v2868
      %v2870 = vrot.slane %v1578, 1
      %v2871 = vsel %vm2826, %v2868, %v2870
      %v2872 = vrot.slane %v1579, 1
      %v2873 = vsel %vm2826, %v2870, %v2872
      %v2874 = vrot.slane %v1580, 1
      %v2875 = vsel %vm2826, %v2872, %v2874
      %v2916 = vunpack.c.l.b16 %v2807
      %v2917 = vunpack.c.l.b16 %v2808
      %v2918 = vunpack.c.l.b16 %v2809
      %v2919 = vunpack.c.l.b16 %v2810
      %v2920 = vunpack.c.l.b16 %v2811
      %v2921 = vunpack.c.l.b16 %v2812
      %v2922 = vunpack.c.l.b16 %v2813
      %v2923 = vunpack.c.l.b16 %v2814
      %v2924 = vunpack.c.l.b16 %v2815
      %v2925 = vunpack.c.l.b16 %v2816
      %v2926 = vunpack.c.l.b16 %v2817
      %v2927 = vunpack.c.l.b16 %v2818
      %v2928 = vunpack.c.l.b16 %v2819
      %v2929 = vunpack.c.l.b16 %v2820
      %v2930 = vunpack.c.l.b16 %v2821
      %v2931 = vunpack.c.l.b16 %v2822
      %v2932 = vpack.c.b16 %v2917, %v2916
      %v2933 = vpack.c.b16 %v2919, %v2918
      %v2934 = vpack.c.b16 %v2921, %v2920
      %v2935 = vpack.c.b16 %v2923, %v2922
      %v2936 = vpack.c.b16 %v2925, %v2924
      %v2937 = vpack.c.b16 %v2927, %v2926
      %v2938 = vpack.c.b16 %v2929, %v2928
      %v2939 = vpack.c.b16 %v2931, %v2930
      %2948 = vmatpush.bf16.msra.mxu0 %v2939
      %2949 = vmatpush.bf16.msra.mxu0 %v2938
      %2950 = vmatpush.bf16.msra.mxu0 %v2937
      %2951 = vmatpush.bf16.msra.mxu0 %v2936
      %2952 = vmatpush.bf16.msra.mxu0 %v2935
      %2953 = vmatpush.bf16.msra.mxu0 %v2934
      %2954 = vmatpush.bf16.msra.mxu0 %v2933
      %2955 = vmatpush.bf16.msra.mxu0 %v2932
      %2956 = vmatmul.bf16.gmra.mxu0 %v2829
      %v2957 = vpop.f32.mrf.mxu0
      %v2958 = vadd.f32 0.0, %v2957
      %v2959 = vpop.f32.mrf.mxu0
      %v2960 = vadd.f32 0.0, %v2959
      %2961 = vmatmul.bf16.gmra.mxu0 %v2831
      %v2962 = vpop.f32.mrf.mxu0
      %v2963 = vadd.f32 0.0, %v2962
      %v2964 = vpop.f32.mrf.mxu0
      %v2965 = vadd.f32 0.0, %v2964
      %2966 = vmatmul.bf16.gmra.mxu0 %v2833
      %v2967 = vpop.f32.mrf.mxu0
      %v2968 = vadd.f32 0.0, %v2967
      %v2969 = vpop.f32.mrf.mxu0
      %v2970 = vadd.f32 0.0, %v2969
      %2971 = vmatmul.bf16.gmra.mxu0 %v2835
      %v2972 = vpop.f32.mrf.mxu0
      %v2973 = vadd.f32 0.0, %v2972
      %v2974 = vpop.f32.mrf.mxu0
      %v2975 = vadd.f32 0.0, %v2974
      %2976 = vmatmul.bf16.gmra.mxu0 %v2837
      %v2977 = vpop.f32.mrf.mxu0
      %v2978 = vadd.f32 0.0, %v2977
      %v2979 = vpop.f32.mrf.mxu0
      %v2980 = vadd.f32 0.0, %v2979
      %2981 = vmatmul.bf16.gmra.mxu0 %v2839
      %v2982 = vpop.f32.mrf.mxu0
      %v2983 = vadd.f32 0.0, %v2982
      %v2984 = vpop.f32.mrf.mxu0
      %v2985 = vadd.f32 0.0, %v2984
      %2986 = vmatmul.bf16.gmra.mxu0 %v2841
      %v2987 = vpop.f32.mrf.mxu0
      %v2988 = vadd.f32 0.0, %v2987
      %v2989 = vpop.f32.mrf.mxu0
      %v2990 = vadd.f32 0.0, %v2989
      %2991 = vmatmul.bf16.gmra.mxu0 %v2843
      %v2992 = vpop.f32.mrf.mxu0
      %v2993 = vadd.f32 0.0, %v2992
      %v2994 = vpop.f32.mrf.mxu0
      %v2995 = vadd.f32 0.0, %v2994
      %2996 = vmatmul.bf16.gmra.mxu0 %v2845
      %v2997 = vpop.f32.mrf.mxu0
      %v2998 = vadd.f32 0.0, %v2997
      %v2999 = vpop.f32.mrf.mxu0
      %v3000 = vadd.f32 0.0, %v2999
      %3001 = vmatmul.bf16.gmra.mxu0 %v2847
      %v3002 = vpop.f32.mrf.mxu0
      %v3003 = vadd.f32 0.0, %v3002
      %v3004 = vpop.f32.mrf.mxu0
      %v3005 = vadd.f32 0.0, %v3004
      %3006 = vmatmul.bf16.gmra.mxu0 %v2849
      %v3007 = vpop.f32.mrf.mxu0
      %v3008 = vadd.f32 0.0, %v3007
      %v3009 = vpop.f32.mrf.mxu0
      %v3010 = vadd.f32 0.0, %v3009
      %3011 = vmatmul.bf16.gmra.mxu0 %v2851
      %v3012 = vpop.f32.mrf.mxu0
      %v3013 = vadd.f32 0.0, %v3012
      %v3014 = vpop.f32.mrf.mxu0
      %v3015 = vadd.f32 0.0, %v3014
      %3016 = vmatmul.bf16.gmra.mxu0 %v2853
      %v3017 = vpop.f32.mrf.mxu0
      %v3018 = vadd.f32 0.0, %v3017
      %v3019 = vpop.f32.mrf.mxu0
      %v3020 = vadd.f32 0.0, %v3019
      %3021 = vmatmul.bf16.gmra.mxu0 %v2855
      %v3022 = vpop.f32.mrf.mxu0
      %v3023 = vadd.f32 0.0, %v3022
      %v3024 = vpop.f32.mrf.mxu0
      %v3025 = vadd.f32 0.0, %v3024
      %3026 = vmatmul.bf16.gmra.mxu0 %v2857
      %v3027 = vpop.f32.mrf.mxu0
      %v3028 = vadd.f32 0.0, %v3027
      %v3029 = vpop.f32.mrf.mxu0
      %v3030 = vadd.f32 0.0, %v3029
      %3031 = vmatmul.bf16.gmra.mxu0 %v2859
      %v3032 = vpop.f32.mrf.mxu0
      %v3033 = vadd.f32 0.0, %v3032
      %v3034 = vpop.f32.mrf.mxu0
      %v3035 = vadd.f32 0.0, %v3034
      %3036 = vmatmul.bf16.gmra.mxu0 %v2861
      %v3037 = vpop.f32.mrf.mxu0
      %v3038 = vadd.f32 0.0, %v3037
      %v3039 = vpop.f32.mrf.mxu0
      %v3040 = vadd.f32 0.0, %v3039
      %3041 = vmatmul.bf16.gmra.mxu0 %v2863
      %v3042 = vpop.f32.mrf.mxu0
      %v3043 = vadd.f32 0.0, %v3042
      %v3044 = vpop.f32.mrf.mxu0
      %v3045 = vadd.f32 0.0, %v3044
      %3046 = vmatmul.bf16.gmra.mxu0 %v2865
      %v3047 = vpop.f32.mrf.mxu0
      %v3048 = vadd.f32 0.0, %v3047
      %v3049 = vpop.f32.mrf.mxu0
      %v3050 = vadd.f32 0.0, %v3049
      %3051 = vmatmul.bf16.gmra.mxu0 %v2867
      %v3052 = vpop.f32.mrf.mxu0
      %v3053 = vadd.f32 0.0, %v3052
      %v3054 = vpop.f32.mrf.mxu0
      %v3055 = vadd.f32 0.0, %v3054
      %3056 = vmatmul.bf16.gmra.mxu0 %v2869
      %v3057 = vpop.f32.mrf.mxu0
      %v3058 = vadd.f32 0.0, %v3057
      %v3059 = vpop.f32.mrf.mxu0
      %v3060 = vadd.f32 0.0, %v3059
      %3061 = vmatmul.bf16.gmra.mxu0 %v2871
      %v3062 = vpop.f32.mrf.mxu0
      %v3063 = vadd.f32 0.0, %v3062
      %v3064 = vpop.f32.mrf.mxu0
      %v3065 = vadd.f32 0.0, %v3064
      %3066 = vmatmul.bf16.gmra.mxu0 %v2873
      %v3067 = vpop.f32.mrf.mxu0
      %v3068 = vadd.f32 0.0, %v3067
      %v3069 = vpop.f32.mrf.mxu0
      %v3070 = vadd.f32 0.0, %v3069
      %3071 = vmatmul.bf16.gmra.mxu0 %v2875
      %v3072 = vpop.f32.mrf.mxu0
      %v3073 = vadd.f32 0.0, %v3072
      %v3074 = vpop.f32.mrf.mxu0
      %v3075 = vadd.f32 0.0, %v3074
      %3076 = vdwg.mxu0
      %v3077 = vadd.f32 %v2757, %v2958
      %v3078 = vadd.f32 %v2758, %v2960
      %v3079 = vadd.f32 %v2759, %v2963
      %v3080 = vadd.f32 %v2760, %v2965
      %v3081 = vadd.f32 %v2761, %v2968
      %v3082 = vadd.f32 %v2762, %v2970
      %v3083 = vadd.f32 %v2763, %v2973
      %v3084 = vadd.f32 %v2764, %v2975
      %v3085 = vadd.f32 %v2765, %v2978
      %v3086 = vadd.f32 %v2766, %v2980
      %v3087 = vadd.f32 %v2767, %v2983
      %v3088 = vadd.f32 %v2768, %v2985
      %v3089 = vadd.f32 %v2769, %v2988
      %v3090 = vadd.f32 %v2770, %v2990
      %v3091 = vadd.f32 %v2771, %v2993
      %v3092 = vadd.f32 %v2772, %v2995
      %v3093 = vadd.f32 %v2773, %v2998
      %v3094 = vadd.f32 %v2774, %v3000
      %v3095 = vadd.f32 %v2775, %v3003
      %v3096 = vadd.f32 %v2776, %v3005
      %v3097 = vadd.f32 %v2777, %v3008
      %v3098 = vadd.f32 %v2778, %v3010
      %v3099 = vadd.f32 %v2779, %v3013
      %v3100 = vadd.f32 %v2780, %v3015
      %v3101 = vadd.f32 %v2781, %v3018
      %v3102 = vadd.f32 %v2782, %v3020
      %v3103 = vadd.f32 %v2783, %v3023
      %v3104 = vadd.f32 %v2784, %v3025
      %v3105 = vadd.f32 %v2785, %v3028
      %v3106 = vadd.f32 %v2786, %v3030
      %v3107 = vadd.f32 %v2787, %v3033
      %v3108 = vadd.f32 %v2788, %v3035
      %v3109 = vadd.f32 %v2789, %v3038
      %v3110 = vadd.f32 %v2790, %v3040
      %v3111 = vadd.f32 %v2791, %v3043
      %v3112 = vadd.f32 %v2792, %v3045
      %v3113 = vadd.f32 %v2793, %v3048
      %v3114 = vadd.f32 %v2794, %v3050
      %v3115 = vadd.f32 %v2795, %v3053
      %v3116 = vadd.f32 %v2796, %v3055
      %v3117 = vadd.f32 %v2797, %v3058
      %v3118 = vadd.f32 %v2798, %v3060
      %v3119 = vadd.f32 %v2799, %v3063
      %v3120 = vadd.f32 %v2800, %v3065
      %v3121 = vadd.f32 %v2801, %v3068
      %v3122 = vadd.f32 %v2802, %v3070
      %v3123 = vadd.f32 %v2803, %v3073
      %v3124 = vadd.f32 %v2804, %v3075
      %s3125 = scalar_lea.vmem %s281, 320
      %v3126 = vld [vmem:[%s3125] sm:$0xf]
      %v3127 = vld [vmem:[%s3125 + $0x4] sm:$0xf]
      %v3128 = vld [vmem:[%s3125 + $0x8] sm:$0xf]
      %v3129 = vld [vmem:[%s3125 + $0xc] sm:$0xf]
      %v3130 = vld [vmem:[%s3125 + $0x10] sm:$0xf]
      %v3131 = vld [vmem:[%s3125 + $0x14] sm:$0xf]
      %v3132 = vld [vmem:[%s3125 + $0x18] sm:$0xf]
      %v3133 = vld [vmem:[%s3125 + $0x1c] sm:$0xf]
      %v3134 = vld [vmem:[%s3125 + $0x20] sm:$0xf]
      %v3135 = vld [vmem:[%s3125 + $0x24] sm:$0xf]
      %v3136 = vld [vmem:[%s3125 + $0x28] sm:$0xf]
      %v3137 = vld [vmem:[%s3125 + $0x2c] sm:$0xf]
      %v3138 = vld [vmem:[%s3125 + $0x30] sm:$0xf]
      %v3139 = vld [vmem:[%s3125 + $0x34] sm:$0xf]
      %v3140 = vld [vmem:[%s3125 + $0x38] sm:$0xf]
      %v3141 = vld [vmem:[%s3125 + $0x3c] sm:$0xf]
      %v3142 = vrot.slane %v2050, 1
      %v3143 = vrot.slane %v2051, 1
      %v3144 = vsel %vm2826, %v3142, %v3143
      %v3145 = vrot.slane %v2052, 1
      %v3146 = vsel %vm2826, %v3143, %v3145
      %v3147 = vrot.slane %v2053, 1
      %v3148 = vsel %vm2826, %v3145, %v3147
      %v3149 = vrot.slane %v2054, 1
      %v3150 = vsel %vm2826, %v3147, %v3149
      %v3151 = vrot.slane %v2055, 1
      %v3152 = vsel %vm2826, %v3149, %v3151
      %v3153 = vrot.slane %v2056, 1
      %v3154 = vsel %vm2826, %v3151, %v3153
      %v3155 = vrot.slane %v2057, 1
      %v3156 = vsel %vm2826, %v3153, %v3155
      %v3157 = vrot.slane %v2058, 1
      %v3158 = vsel %vm2826, %v3155, %v3157
      %v3159 = vrot.slane %v2059, 1
      %v3160 = vsel %vm2826, %v3157, %v3159
      %v3161 = vrot.slane %v2060, 1
      %v3162 = vsel %vm2826, %v3159, %v3161
      %v3163 = vrot.slane %v2061, 1
      %v3164 = vsel %vm2826, %v3161, %v3163
      %v3165 = vrot.slane %v2062, 1
      %v3166 = vsel %vm2826, %v3163, %v3165
      %v3167 = vrot.slane %v2063, 1
      %v3168 = vsel %vm2826, %v3165, %v3167
      %v3169 = vrot.slane %v2064, 1
      %v3170 = vsel %vm2826, %v3167, %v3169
      %v3171 = vrot.slane %v2065, 1
      %v3172 = vsel %vm2826, %v3169, %v3171
      %v3173 = vrot.slane %v2066, 1
      %v3174 = vsel %vm2826, %v3171, %v3173
      %v3175 = vrot.slane %v2067, 1
      %v3176 = vsel %vm2826, %v3173, %v3175
      %v3177 = vrot.slane %v2068, 1
      %v3178 = vsel %vm2826, %v3175, %v3177
      %v3179 = vrot.slane %v2069, 1
      %v3180 = vsel %vm2826, %v3177, %v3179
      %v3181 = vrot.slane %v2070, 1
      %v3182 = vsel %vm2826, %v3179, %v3181
      %v3183 = vrot.slane %v2071, 1
      %v3184 = vsel %vm2826, %v3181, %v3183
      %v3185 = vrot.slane %v2072, 1
      %v3186 = vsel %vm2826, %v3183, %v3185
      %v3187 = vrot.slane %v2073, 1
      %v3188 = vsel %vm2826, %v3185, %v3187
      %v3189 = vrot.slane %v2074, 1
      %v3190 = vsel %vm2826, %v3187, %v3189
      %v3231 = vunpack.c.l.b16 %v3126
      %v3232 = vunpack.c.l.b16 %v3127
      %v3233 = vunpack.c.l.b16 %v3128
      %v3234 = vunpack.c.l.b16 %v3129
      %v3235 = vunpack.c.l.b16 %v3130
      %v3236 = vunpack.c.l.b16 %v3131
      %v3237 = vunpack.c.l.b16 %v3132
      %v3238 = vunpack.c.l.b16 %v3133
      %v3239 = vunpack.c.l.b16 %v3134
      %v3240 = vunpack.c.l.b16 %v3135
      %v3241 = vunpack.c.l.b16 %v3136
      %v3242 = vunpack.c.l.b16 %v3137
      %v3243 = vunpack.c.l.b16 %v3138
      %v3244 = vunpack.c.l.b16 %v3139
      %v3245 = vunpack.c.l.b16 %v3140
      %v3246 = vunpack.c.l.b16 %v3141
      %v3247 = vpack.c.b16 %v3232, %v3231
      %v3248 = vpack.c.b16 %v3234, %v3233
      %v3249 = vpack.c.b16 %v3236, %v3235
      %v3250 = vpack.c.b16 %v3238, %v3237
      %v3251 = vpack.c.b16 %v3240, %v3239
      %v3252 = vpack.c.b16 %v3242, %v3241
      %v3253 = vpack.c.b16 %v3244, %v3243
      %v3254 = vpack.c.b16 %v3246, %v3245
      %3263 = vmatpush.bf16.msra.mxu0 %v3254
      %3264 = vmatpush.bf16.msra.mxu0 %v3253
      %3265 = vmatpush.bf16.msra.mxu0 %v3252
      %3266 = vmatpush.bf16.msra.mxu0 %v3251
      %3267 = vmatpush.bf16.msra.mxu0 %v3250
      %3268 = vmatpush.bf16.msra.mxu0 %v3249
      %3269 = vmatpush.bf16.msra.mxu0 %v3248
      %3270 = vmatpush.bf16.msra.mxu0 %v3247
      %3271 = vmatmul.bf16.gmra.mxu0 %v3144
      %v3272 = vpop.f32.mrf.mxu0
      %v3273 = vadd.f32 0.0, %v3272
      %v3274 = vpop.f32.mrf.mxu0
      %v3275 = vadd.f32 0.0, %v3274
      %3276 = vmatmul.bf16.gmra.mxu0 %v3146
      %v3277 = vpop.f32.mrf.mxu0
      %v3278 = vadd.f32 0.0, %v3277
      %v3279 = vpop.f32.mrf.mxu0
      %v3280 = vadd.f32 0.0, %v3279
      %3281 = vmatmul.bf16.gmra.mxu0 %v3148
      %v3282 = vpop.f32.mrf.mxu0
      %v3283 = vadd.f32 0.0, %v3282
      %v3284 = vpop.f32.mrf.mxu0
      %v3285 = vadd.f32 0.0, %v3284
      %3286 = vmatmul.bf16.gmra.mxu0 %v3150
      %v3287 = vpop.f32.mrf.mxu0
      %v3288 = vadd.f32 0.0, %v3287
      %v3289 = vpop.f32.mrf.mxu0
      %v3290 = vadd.f32 0.0, %v3289
      %3291 = vmatmul.bf16.gmra.mxu0 %v3152
      %v3292 = vpop.f32.mrf.mxu0
      %v3293 = vadd.f32 0.0, %v3292
      %v3294 = vpop.f32.mrf.mxu0
      %v3295 = vadd.f32 0.0, %v3294
      %3296 = vmatmul.bf16.gmra.mxu0 %v3154
      %v3297 = vpop.f32.mrf.mxu0
      %v3298 = vadd.f32 0.0, %v3297
      %v3299 = vpop.f32.mrf.mxu0
      %v3300 = vadd.f32 0.0, %v3299
      %3301 = vmatmul.bf16.gmra.mxu0 %v3156
      %v3302 = vpop.f32.mrf.mxu0
      %v3303 = vadd.f32 0.0, %v3302
      %v3304 = vpop.f32.mrf.mxu0
      %v3305 = vadd.f32 0.0, %v3304
      %3306 = vmatmul.bf16.gmra.mxu0 %v3158
      %v3307 = vpop.f32.mrf.mxu0
      %v3308 = vadd.f32 0.0, %v3307
      %v3309 = vpop.f32.mrf.mxu0
      %v3310 = vadd.f32 0.0, %v3309
      %3311 = vmatmul.bf16.gmra.mxu0 %v3160
      %v3312 = vpop.f32.mrf.mxu0
      %v3313 = vadd.f32 0.0, %v3312
      %v3314 = vpop.f32.mrf.mxu0
      %v3315 = vadd.f32 0.0, %v3314
      %3316 = vmatmul.bf16.gmra.mxu0 %v3162
      %v3317 = vpop.f32.mrf.mxu0
      %v3318 = vadd.f32 0.0, %v3317
      %v3319 = vpop.f32.mrf.mxu0
      %v3320 = vadd.f32 0.0, %v3319
      %3321 = vmatmul.bf16.gmra.mxu0 %v3164
      %v3322 = vpop.f32.mrf.mxu0
      %v3323 = vadd.f32 0.0, %v3322
      %v3324 = vpop.f32.mrf.mxu0
      %v3325 = vadd.f32 0.0, %v3324
      %3326 = vmatmul.bf16.gmra.mxu0 %v3166
      %v3327 = vpop.f32.mrf.mxu0
      %v3328 = vadd.f32 0.0, %v3327
      %v3329 = vpop.f32.mrf.mxu0
      %v3330 = vadd.f32 0.0, %v3329
      %3331 = vmatmul.bf16.gmra.mxu0 %v3168
      %v3332 = vpop.f32.mrf.mxu0
      %v3333 = vadd.f32 0.0, %v3332
      %v3334 = vpop.f32.mrf.mxu0
      %v3335 = vadd.f32 0.0, %v3334
      %3336 = vmatmul.bf16.gmra.mxu0 %v3170
      %v3337 = vpop.f32.mrf.mxu0
      %v3338 = vadd.f32 0.0, %v3337
      %v3339 = vpop.f32.mrf.mxu0
      %v3340 = vadd.f32 0.0, %v3339
      %3341 = vmatmul.bf16.gmra.mxu0 %v3172
      %v3342 = vpop.f32.mrf.mxu0
      %v3343 = vadd.f32 0.0, %v3342
      %v3344 = vpop.f32.mrf.mxu0
      %v3345 = vadd.f32 0.0, %v3344
      %3346 = vmatmul.bf16.gmra.mxu0 %v3174
      %v3347 = vpop.f32.mrf.mxu0
      %v3348 = vadd.f32 0.0, %v3347
      %v3349 = vpop.f32.mrf.mxu0
      %v3350 = vadd.f32 0.0, %v3349
      %3351 = vmatmul.bf16.gmra.mxu0 %v3176
      %v3352 = vpop.f32.mrf.mxu0
      %v3353 = vadd.f32 0.0, %v3352
      %v3354 = vpop.f32.mrf.mxu0
      %v3355 = vadd.f32 0.0, %v3354
      %3356 = vmatmul.bf16.gmra.mxu0 %v3178
      %v3357 = vpop.f32.mrf.mxu0
      %v3358 = vadd.f32 0.0, %v3357
      %v3359 = vpop.f32.mrf.mxu0
      %v3360 = vadd.f32 0.0, %v3359
      %3361 = vmatmul.bf16.gmra.mxu0 %v3180
      %v3362 = vpop.f32.mrf.mxu0
      %v3363 = vadd.f32 0.0, %v3362
      %v3364 = vpop.f32.mrf.mxu0
      %v3365 = vadd.f32 0.0, %v3364
      %3366 = vmatmul.bf16.gmra.mxu0 %v3182
      %v3367 = vpop.f32.mrf.mxu0
      %v3368 = vadd.f32 0.0, %v3367
      %v3369 = vpop.f32.mrf.mxu0
      %v3370 = vadd.f32 0.0, %v3369
      %3371 = vmatmul.bf16.gmra.mxu0 %v3184
      %v3372 = vpop.f32.mrf.mxu0
      %v3373 = vadd.f32 0.0, %v3372
      %v3374 = vpop.f32.mrf.mxu0
      %v3375 = vadd.f32 0.0, %v3374
      %3376 = vmatmul.bf16.gmra.mxu0 %v3186
      %v3377 = vpop.f32.mrf.mxu0
      %v3378 = vadd.f32 0.0, %v3377
      %v3379 = vpop.f32.mrf.mxu0
      %v3380 = vadd.f32 0.0, %v3379
      %3381 = vmatmul.bf16.gmra.mxu0 %v3188
      %v3382 = vpop.f32.mrf.mxu0
      %v3383 = vadd.f32 0.0, %v3382
      %v3384 = vpop.f32.mrf.mxu0
      %v3385 = vadd.f32 0.0, %v3384
      %3386 = vmatmul.bf16.gmra.mxu0 %v3190
      %v3387 = vpop.f32.mrf.mxu0
      %v3388 = vadd.f32 0.0, %v3387
      %v3389 = vpop.f32.mrf.mxu0
      %v3390 = vadd.f32 0.0, %v3389
      %3391 = vdwg.mxu0
      %v3392 = vadd.f32 %v3077, %v3273
      %v3393 = vadd.f32 %v3078, %v3275
      %v3394 = vadd.f32 %v3079, %v3278
      %v3395 = vadd.f32 %v3080, %v3280
      %v3396 = vadd.f32 %v3081, %v3283
      %v3397 = vadd.f32 %v3082, %v3285
      %v3398 = vadd.f32 %v3083, %v3288
      %v3399 = vadd.f32 %v3084, %v3290
      %v3400 = vadd.f32 %v3085, %v3293
      %v3401 = vadd.f32 %v3086, %v3295
      %v3402 = vadd.f32 %v3087, %v3298
      %v3403 = vadd.f32 %v3088, %v3300
      %v3404 = vadd.f32 %v3089, %v3303
      %v3405 = vadd.f32 %v3090, %v3305
      %v3406 = vadd.f32 %v3091, %v3308
      %v3407 = vadd.f32 %v3092, %v3310
      %v3408 = vadd.f32 %v3093, %v3313
      %v3409 = vadd.f32 %v3094, %v3315
      %v3410 = vadd.f32 %v3095, %v3318
      %v3411 = vadd.f32 %v3096, %v3320
      %v3412 = vadd.f32 %v3097, %v3323
      %v3413 = vadd.f32 %v3098, %v3325
      %v3414 = vadd.f32 %v3099, %v3328
      %v3415 = vadd.f32 %v3100, %v3330
      %v3416 = vadd.f32 %v3101, %v3333
      %v3417 = vadd.f32 %v3102, %v3335
      %v3418 = vadd.f32 %v3103, %v3338
      %v3419 = vadd.f32 %v3104, %v3340
      %v3420 = vadd.f32 %v3105, %v3343
      %v3421 = vadd.f32 %v3106, %v3345
      %v3422 = vadd.f32 %v3107, %v3348
      %v3423 = vadd.f32 %v3108, %v3350
      %v3424 = vadd.f32 %v3109, %v3353
      %v3425 = vadd.f32 %v3110, %v3355
      %v3426 = vadd.f32 %v3111, %v3358
      %v3427 = vadd.f32 %v3112, %v3360
      %v3428 = vadd.f32 %v3113, %v3363
      %v3429 = vadd.f32 %v3114, %v3365
      %v3430 = vadd.f32 %v3115, %v3368
      %v3431 = vadd.f32 %v3116, %v3370
      %v3432 = vadd.f32 %v3117, %v3373
      %v3433 = vadd.f32 %v3118, %v3375
      %v3434 = vadd.f32 %v3119, %v3378
      %v3435 = vadd.f32 %v3120, %v3380
      %v3436 = vadd.f32 %v3121, %v3383
      %v3437 = vadd.f32 %v3122, %v3385
      %v3438 = vadd.f32 %v3123, %v3388
      %v3439 = vadd.f32 %v3124, %v3390
      %s3440 = scalar_lea.vmem %s281, 512
      %v3441 = vld [vmem:[%s3440] sm:$0xf]
      %v3442 = vld [vmem:[%s3440 + $0x4] sm:$0xf]
      %v3443 = vld [vmem:[%s3440 + $0x8] sm:$0xf]
      %v3444 = vld [vmem:[%s3440 + $0xc] sm:$0xf]
      %v3445 = vld [vmem:[%s3440 + $0x10] sm:$0xf]
      %v3446 = vld [vmem:[%s3440 + $0x14] sm:$0xf]
      %v3447 = vld [vmem:[%s3440 + $0x18] sm:$0xf]
      %v3448 = vld [vmem:[%s3440 + $0x1c] sm:$0xf]
      %v3449 = vld [vmem:[%s3440 + $0x20] sm:$0xf]
      %v3450 = vld [vmem:[%s3440 + $0x24] sm:$0xf]
      %v3451 = vld [vmem:[%s3440 + $0x28] sm:$0xf]
      %v3452 = vld [vmem:[%s3440 + $0x2c] sm:$0xf]
      %v3453 = vld [vmem:[%s3440 + $0x30] sm:$0xf]
      %v3454 = vld [vmem:[%s3440 + $0x34] sm:$0xf]
      %v3455 = vld [vmem:[%s3440 + $0x38] sm:$0xf]
      %v3456 = vld [vmem:[%s3440 + $0x3c] sm:$0xf]
      %v3457 = vrot.slane %v2543, 1
      %v3458 = vsel %vm2826, %v2872, %v3457
      %v3459 = vrot.slane %v2544, 1
      %v3460 = vsel %vm2826, %v3457, %v3459
      %v3461 = vrot.slane %v2545, 1
      %v3462 = vsel %vm2826, %v3459, %v3461
      %v3463 = vrot.slane %v2546, 1
      %v3464 = vsel %vm2826, %v3461, %v3463
      %v3485 = vunpack.c.l.b16 %v3441
      %v3486 = vunpack.c.l.b16 %v3442
      %v3487 = vunpack.c.l.b16 %v3443
      %v3488 = vunpack.c.l.b16 %v3444
      %v3489 = vunpack.c.l.b16 %v3445
      %v3490 = vunpack.c.l.b16 %v3446
      %v3491 = vunpack.c.l.b16 %v3447
      %v3492 = vunpack.c.l.b16 %v3448
      %v3493 = vunpack.c.l.b16 %v3449
      %v3494 = vunpack.c.l.b16 %v3450
      %v3495 = vunpack.c.l.b16 %v3451
      %v3496 = vunpack.c.l.b16 %v3452
      %v3497 = vunpack.c.l.b16 %v3453
      %v3498 = vunpack.c.l.b16 %v3454
      %v3499 = vunpack.c.l.b16 %v3455
      %v3500 = vunpack.c.l.b16 %v3456
      %v3501 = vpack.c.b16 %v3486, %v3485
      %v3502 = vpack.c.b16 %v3488, %v3487
      %v3503 = vpack.c.b16 %v3490, %v3489
      %v3504 = vpack.c.b16 %v3492, %v3491
      %v3505 = vpack.c.b16 %v3494, %v3493
      %v3506 = vpack.c.b16 %v3496, %v3495
      %v3507 = vpack.c.b16 %v3498, %v3497
      %v3508 = vpack.c.b16 %v3500, %v3499
      %3517 = vmatpush.bf16.msra.mxu0 %v3508
      %3518 = vmatpush.bf16.msra.mxu0 %v3507
      %3519 = vmatpush.bf16.msra.mxu0 %v3506
      %3520 = vmatpush.bf16.msra.mxu0 %v3505
      %3521 = vmatpush.bf16.msra.mxu0 %v3504
      %3522 = vmatpush.bf16.msra.mxu0 %v3503
      %3523 = vmatpush.bf16.msra.mxu0 %v3502
      %3524 = vmatpush.bf16.msra.mxu0 %v3501
      %3525 = vmatmul.bf16.gmra.mxu0 %v2835
      %v3526 = vpop.f32.mrf.mxu0
      %v3527 = vadd.f32 0.0, %v3526
      %v3528 = vpop.f32.mrf.mxu0
      %v3529 = vadd.f32 0.0, %v3528
      %3530 = vmatmul.bf16.gmra.mxu0 %v2837
      %v3531 = vpop.f32.mrf.mxu0
      %v3532 = vadd.f32 0.0, %v3531
      %v3533 = vpop.f32.mrf.mxu0
      %v3534 = vadd.f32 0.0, %v3533
      %3535 = vmatmul.bf16.gmra.mxu0 %v2839
      %v3536 = vpop.f32.mrf.mxu0
      %v3537 = vadd.f32 0.0, %v3536
      %v3538 = vpop.f32.mrf.mxu0
      %v3539 = vadd.f32 0.0, %v3538
      %3540 = vmatmul.bf16.gmra.mxu0 %v2841
      %v3541 = vpop.f32.mrf.mxu0
      %v3542 = vadd.f32 0.0, %v3541
      %v3543 = vpop.f32.mrf.mxu0
      %v3544 = vadd.f32 0.0, %v3543
      %3545 = vmatmul.bf16.gmra.mxu0 %v2843
      %v3546 = vpop.f32.mrf.mxu0
      %v3547 = vadd.f32 0.0, %v3546
      %v3548 = vpop.f32.mrf.mxu0
      %v3549 = vadd.f32 0.0, %v3548
      %3550 = vmatmul.bf16.gmra.mxu0 %v2845
      %v3551 = vpop.f32.mrf.mxu0
      %v3552 = vadd.f32 0.0, %v3551
      %v3553 = vpop.f32.mrf.mxu0
      %v3554 = vadd.f32 0.0, %v3553
      %3555 = vmatmul.bf16.gmra.mxu0 %v2847
      %v3556 = vpop.f32.mrf.mxu0
      %v3557 = vadd.f32 0.0, %v3556
      %v3558 = vpop.f32.mrf.mxu0
      %v3559 = vadd.f32 0.0, %v3558
      %3560 = vmatmul.bf16.gmra.mxu0 %v2849
      %v3561 = vpop.f32.mrf.mxu0
      %v3562 = vadd.f32 0.0, %v3561
      %v3563 = vpop.f32.mrf.mxu0
      %v3564 = vadd.f32 0.0, %v3563
      %3565 = vmatmul.bf16.gmra.mxu0 %v2851
      %v3566 = vpop.f32.mrf.mxu0
      %v3567 = vadd.f32 0.0, %v3566
      %v3568 = vpop.f32.mrf.mxu0
      %v3569 = vadd.f32 0.0, %v3568
      %3570 = vmatmul.bf16.gmra.mxu0 %v2853
      %v3571 = vpop.f32.mrf.mxu0
      %v3572 = vadd.f32 0.0, %v3571
      %v3573 = vpop.f32.mrf.mxu0
      %v3574 = vadd.f32 0.0, %v3573
      %3575 = vmatmul.bf16.gmra.mxu0 %v2855
      %v3576 = vpop.f32.mrf.mxu0
      %v3577 = vadd.f32 0.0, %v3576
      %v3578 = vpop.f32.mrf.mxu0
      %v3579 = vadd.f32 0.0, %v3578
      %3580 = vmatmul.bf16.gmra.mxu0 %v2857
      %v3581 = vpop.f32.mrf.mxu0
      %v3582 = vadd.f32 0.0, %v3581
      %v3583 = vpop.f32.mrf.mxu0
      %v3584 = vadd.f32 0.0, %v3583
      %3585 = vmatmul.bf16.gmra.mxu0 %v2859
      %v3586 = vpop.f32.mrf.mxu0
      %v3587 = vadd.f32 0.0, %v3586
      %v3588 = vpop.f32.mrf.mxu0
      %v3589 = vadd.f32 0.0, %v3588
      %3590 = vmatmul.bf16.gmra.mxu0 %v2861
      %v3591 = vpop.f32.mrf.mxu0
      %v3592 = vadd.f32 0.0, %v3591
      %v3593 = vpop.f32.mrf.mxu0
      %v3594 = vadd.f32 0.0, %v3593
      %3595 = vmatmul.bf16.gmra.mxu0 %v2863
      %v3596 = vpop.f32.mrf.mxu0
      %v3597 = vadd.f32 0.0, %v3596
      %v3598 = vpop.f32.mrf.mxu0
      %v3599 = vadd.f32 0.0, %v3598
      %3600 = vmatmul.bf16.gmra.mxu0 %v2865
      %v3601 = vpop.f32.mrf.mxu0
      %v3602 = vadd.f32 0.0, %v3601
      %v3603 = vpop.f32.mrf.mxu0
      %v3604 = vadd.f32 0.0, %v3603
      %3605 = vmatmul.bf16.gmra.mxu0 %v2867
      %v3606 = vpop.f32.mrf.mxu0
      %v3607 = vadd.f32 0.0, %v3606
      %v3608 = vpop.f32.mrf.mxu0
      %v3609 = vadd.f32 0.0, %v3608
      %3610 = vmatmul.bf16.gmra.mxu0 %v2869
      %v3611 = vpop.f32.mrf.mxu0
      %v3612 = vadd.f32 0.0, %v3611
      %v3613 = vpop.f32.mrf.mxu0
      %v3614 = vadd.f32 0.0, %v3613
      %3615 = vmatmul.bf16.gmra.mxu0 %v2871
      %v3616 = vpop.f32.mrf.mxu0
      %v3617 = vadd.f32 0.0, %v3616
      %v3618 = vpop.f32.mrf.mxu0
      %v3619 = vadd.f32 0.0, %v3618
      %3620 = vmatmul.bf16.gmra.mxu0 %v2873
      %v3621 = vpop.f32.mrf.mxu0
      %v3622 = vadd.f32 0.0, %v3621
      %v3623 = vpop.f32.mrf.mxu0
      %v3624 = vadd.f32 0.0, %v3623
      %3625 = vmatmul.bf16.gmra.mxu0 %v3458
      %v3626 = vpop.f32.mrf.mxu0
      %v3627 = vadd.f32 0.0, %v3626
      %v3628 = vpop.f32.mrf.mxu0
      %v3629 = vadd.f32 0.0, %v3628
      %3630 = vmatmul.bf16.gmra.mxu0 %v3460
      %v3631 = vpop.f32.mrf.mxu0
      %v3632 = vadd.f32 0.0, %v3631
      %v3633 = vpop.f32.mrf.mxu0
      %v3634 = vadd.f32 0.0, %v3633
      %3635 = vmatmul.bf16.gmra.mxu0 %v3462
      %v3636 = vpop.f32.mrf.mxu0
      %v3637 = vadd.f32 0.0, %v3636
      %v3638 = vpop.f32.mrf.mxu0
      %v3639 = vadd.f32 0.0, %v3638
      %3640 = vmatmul.bf16.gmra.mxu0 %v3464
      %v3641 = vpop.f32.mrf.mxu0
      %v3642 = vadd.f32 0.0, %v3641
      %v3643 = vpop.f32.mrf.mxu0
      %v3644 = vadd.f32 0.0, %v3643
      %3645 = vdwg.mxu0
      %v3646 = vadd.f32 %v3392, %v3527
      %v3647 = vadd.f32 %v3393, %v3529
      %v3648 = vadd.f32 %v3394, %v3532
      %v3649 = vadd.f32 %v3395, %v3534
      %v3650 = vadd.f32 %v3396, %v3537
      %v3651 = vadd.f32 %v3397, %v3539
      %v3652 = vadd.f32 %v3398, %v3542
      %v3653 = vadd.f32 %v3399, %v3544
      %v3654 = vadd.f32 %v3400, %v3547
      %v3655 = vadd.f32 %v3401, %v3549
      %v3656 = vadd.f32 %v3402, %v3552
      %v3657 = vadd.f32 %v3403, %v3554
      %v3658 = vadd.f32 %v3404, %v3557
      %v3659 = vadd.f32 %v3405, %v3559
      %v3660 = vadd.f32 %v3406, %v3562
      %v3661 = vadd.f32 %v3407, %v3564
      %v3662 = vadd.f32 %v3408, %v3567
      %v3663 = vadd.f32 %v3409, %v3569
      %v3664 = vadd.f32 %v3410, %v3572
      %v3665 = vadd.f32 %v3411, %v3574
      %v3666 = vadd.f32 %v3412, %v3577
      %v3667 = vadd.f32 %v3413, %v3579
      %v3668 = vadd.f32 %v3414, %v3582
      %v3669 = vadd.f32 %v3415, %v3584
      %v3670 = vadd.f32 %v3416, %v3587
      %v3671 = vadd.f32 %v3417, %v3589
      %v3672 = vadd.f32 %v3418, %v3592
      %v3673 = vadd.f32 %v3419, %v3594
      %v3674 = vadd.f32 %v3420, %v3597
      %v3675 = vadd.f32 %v3421, %v3599
      %v3676 = vadd.f32 %v3422, %v3602
      %v3677 = vadd.f32 %v3423, %v3604
      %v3678 = vadd.f32 %v3424, %v3607
      %v3679 = vadd.f32 %v3425, %v3609
      %v3680 = vadd.f32 %v3426, %v3612
      %v3681 = vadd.f32 %v3427, %v3614
      %v3682 = vadd.f32 %v3428, %v3617
      %v3683 = vadd.f32 %v3429, %v3619
      %v3684 = vadd.f32 %v3430, %v3622
      %v3685 = vadd.f32 %v3431, %v3624
      %v3686 = vadd.f32 %v3432, %v3627
      %v3687 = vadd.f32 %v3433, %v3629
      %v3688 = vadd.f32 %v3434, %v3632
      %v3689 = vadd.f32 %v3435, %v3634
      %v3690 = vadd.f32 %v3436, %v3637
      %v3691 = vadd.f32 %v3437, %v3639
      %v3692 = vadd.f32 %v3438, %v3642
      %v3693 = vadd.f32 %v3439, %v3644
      %3694 = vst [vmem:[%s296] sm:$0xff] %v3646
      %3695 = vst [vmem:[%s296 + $0x8] sm:$0xff] %v3647
      %3696 = vst [vmem:[%s296 + $0x10] sm:$0xff] %v3648
      %3697 = vst [vmem:[%s296 + $0x18] sm:$0xff] %v3649
      %3698 = vst [vmem:[%s296 + $0x20] sm:$0xff] %v3650
      %3699 = vst [vmem:[%s296 + $0x28] sm:$0xff] %v3651
      %3700 = vst [vmem:[%s296 + $0x30] sm:$0xff] %v3652
      %3701 = vst [vmem:[%s296 + $0x38] sm:$0xff] %v3653
      %3702 = vst [vmem:[%s296 + $0x40] sm:$0xff] %v3654
      %3703 = vst [vmem:[%s296 + $0x48] sm:$0xff] %v3655
      %3704 = vst [vmem:[%s296 + $0x50] sm:$0xff] %v3656
      %3705 = vst [vmem:[%s296 + $0x58] sm:$0xff] %v3657
      %3706 = vst [vmem:[%s296 + $0x60] sm:$0xff] %v3658
      %3707 = vst [vmem:[%s296 + $0x68] sm:$0xff] %v3659
      %3708 = vst [vmem:[%s296 + $0x70] sm:$0xff] %v3660
      %3709 = vst [vmem:[%s296 + $0x78] sm:$0xff] %v3661
      %3710 = vst [vmem:[%s296 + $0x80] sm:$0xff] %v3662
      %3711 = vst [vmem:[%s296 + $0x88] sm:$0xff] %v3663
      %3712 = vst [vmem:[%s296 + $0x90] sm:$0xff] %v3664
      %3713 = vst [vmem:[%s296 + $0x98] sm:$0xff] %v3665
      %3714 = vst [vmem:[%s296 + $0xa0] sm:$0xff] %v3666
      %3715 = vst [vmem:[%s296 + $0xa8] sm:$0xff] %v3667
      %3716 = vst [vmem:[%s296 + $0xb0] sm:$0xff] %v3668
      %3717 = vst [vmem:[%s296 + $0xb8] sm:$0xff] %v3669
      %3718 = vst [vmem:[%s296 + $0xc0] sm:$0xff] %v3670
      %3719 = vst [vmem:[%s296 + $0xc8] sm:$0xff] %v3671
      %3720 = vst [vmem:[%s296 + $0xd0] sm:$0xff] %v3672
      %3721 = vst [vmem:[%s296 + $0xd8] sm:$0xff] %v3673
      %3722 = vst [vmem:[%s296 + $0xe0] sm:$0xff] %v3674
      %3723 = vst [vmem:[%s296 + $0xe8] sm:$0xff] %v3675
      %3724 = vst [vmem:[%s296 + $0xf0] sm:$0xff] %v3676
      %3725 = vst [vmem:[%s296 + $0xf8] sm:$0xff] %v3677
      %3726 = vst [vmem:[%s296 + $0x100] sm:$0xff] %v3678
      %3727 = vst [vmem:[%s296 + $0x108] sm:$0xff] %v3679
      %3728 = vst [vmem:[%s296 + $0x110] sm:$0xff] %v3680
      %3729 = vst [vmem:[%s296 + $0x118] sm:$0xff] %v3681
      %3730 = vst [vmem:[%s296 + $0x120] sm:$0xff] %v3682
      %3731 = vst [vmem:[%s296 + $0x128] sm:$0xff] %v3683
      %3732 = vst [vmem:[%s296 + $0x130] sm:$0xff] %v3684
      %3733 = vst [vmem:[%s296 + $0x138] sm:$0xff] %v3685
      %3734 = vst [vmem:[%s296 + $0x140] sm:$0xff] %v3686
      %3735 = vst [vmem:[%s296 + $0x148] sm:$0xff] %v3687
      %3736 = vst [vmem:[%s296 + $0x150] sm:$0xff] %v3688
      %3737 = vst [vmem:[%s296 + $0x158] sm:$0xff] %v3689
      %3738 = vst [vmem:[%s296 + $0x160] sm:$0xff] %v3690
      %3739 = vst [vmem:[%s296 + $0x168] sm:$0xff] %v3691
      %3740 = vst [vmem:[%s296 + $0x170] sm:$0xff] %v3692
      %3741 = vst [vmem:[%s296 + $0x178] sm:$0xff] %v3693
      // Predicated region
      $region41: #{upsample_bn_apply.3} parent=35 // pred_check
        %p3742 = pneg %p297
      $region42: #{upsample_bn_apply.3} parent=35 // pred_check_branch
        %3744 = sbr.rel (%p3742) target = $region44
      $region43: #{upsample_bn_apply.3} parent=35 // pred_region
        %v3745 = vld [vmem:[%s296] sm:$0xff]
        %v3746 = vld [vmem:[%s296 + $0x8] sm:$0xff]
        %v3747 = vld [vmem:[%s296 + $0x10] sm:$0xff]
        %v3748 = vld [vmem:[%s296 + $0x18] sm:$0xff]
        %v3749 = vld [vmem:[%s296 + $0x20] sm:$0xff]
        %v3750 = vld [vmem:[%s296 + $0x28] sm:$0xff]
        %v3751 = vld [vmem:[%s296 + $0x30] sm:$0xff]
        %v3752 = vld [vmem:[%s296 + $0x38] sm:$0xff]
        %v3753 = vld [vmem:[%s296 + $0x40] sm:$0xff]
        %v3754 = vld [vmem:[%s296 + $0x48] sm:$0xff]
        %v3755 = vld [vmem:[%s296 + $0x50] sm:$0xff]
        %v3756 = vld [vmem:[%s296 + $0x58] sm:$0xff]
        %v3757 = vld [vmem:[%s296 + $0x60] sm:$0xff]
        %v3758 = vld [vmem:[%s296 + $0x68] sm:$0xff]
        %v3759 = vld [vmem:[%s296 + $0x70] sm:$0xff]
        %v3760 = vld [vmem:[%s296 + $0x78] sm:$0xff]
        %v3761 = vld [vmem:[%s296 + $0x80] sm:$0xff]
        %v3762 = vld [vmem:[%s296 + $0x88] sm:$0xff]
        %v3763 = vld [vmem:[%s296 + $0x90] sm:$0xff]
        %v3764 = vld [vmem:[%s296 + $0x98] sm:$0xff]
        %v3765 = vld [vmem:[%s296 + $0xa0] sm:$0xff]
        %v3766 = vld [vmem:[%s296 + $0xa8] sm:$0xff]
        %v3767 = vld [vmem:[%s296 + $0xb0] sm:$0xff]
        %v3768 = vld [vmem:[%s296 + $0xb8] sm:$0xff]
        %v3769 = vld [vmem:[%s296 + $0xc0] sm:$0xff]
        %v3770 = vld [vmem:[%s296 + $0xc8] sm:$0xff]
        %v3771 = vld [vmem:[%s296 + $0xd0] sm:$0xff]
        %v3772 = vld [vmem:[%s296 + $0xd8] sm:$0xff]
        %v3773 = vld [vmem:[%s296 + $0xe0] sm:$0xff]
        %v3774 = vld [vmem:[%s296 + $0xe8] sm:$0xff]
        %v3775 = vld [vmem:[%s296 + $0xf0] sm:$0xff]
        %v3776 = vld [vmem:[%s296 + $0xf8] sm:$0xff]
        %v3777 = vld [vmem:[%s296 + $0x100] sm:$0xff]
        %v3778 = vld [vmem:[%s296 + $0x108] sm:$0xff]
        %v3779 = vld [vmem:[%s296 + $0x110] sm:$0xff]
        %v3780 = vld [vmem:[%s296 + $0x118] sm:$0xff]
        %v3781 = vld [vmem:[%s296 + $0x120] sm:$0xff]
        %v3782 = vld [vmem:[%s296 + $0x128] sm:$0xff]
        %v3783 = vld [vmem:[%s296 + $0x130] sm:$0xff]
        %v3784 = vld [vmem:[%s296 + $0x138] sm:$0xff]
        %v3785 = vld [vmem:[%s296 + $0x140] sm:$0xff]
        %v3786 = vld [vmem:[%s296 + $0x148] sm:$0xff]
        %v3787 = vld [vmem:[%s296 + $0x150] sm:$0xff]
        %v3788 = vld [vmem:[%s296 + $0x158] sm:$0xff]
        %v3789 = vld [vmem:[%s296 + $0x160] sm:$0xff]
        %v3790 = vld [vmem:[%s296 + $0x168] sm:$0xff]
        %v3791 = vld [vmem:[%s296 + $0x170] sm:$0xff]
        %v3792 = vld [vmem:[%s296 + $0x178] sm:$0xff]
        %v3793 = vld [vmem:[%s285] sm:$0x1]
        %v3795 = vperm.slane %v3793, 0
        %v3797 = vmul.f32 %v3745, %v3795
        %v3798 = vmul.f32 %v3746, %v3795
        %v3799 = vmul.f32 %v3747, %v3795
        %v3800 = vmul.f32 %v3748, %v3795
        %v3801 = vmul.f32 %v3749, %v3795
        %v3802 = vmul.f32 %v3750, %v3795
        %v3803 = vmul.f32 %v3751, %v3795
        %v3804 = vmul.f32 %v3752, %v3795
        %v3805 = vmul.f32 %v3753, %v3795
        %v3806 = vmul.f32 %v3754, %v3795
        %v3807 = vmul.f32 %v3755, %v3795
        %v3808 = vmul.f32 %v3756, %v3795
        %v3809 = vmul.f32 %v3757, %v3795
        %v3810 = vmul.f32 %v3758, %v3795
        %v3811 = vmul.f32 %v3759, %v3795
        %v3812 = vmul.f32 %v3760, %v3795
        %v3813 = vmul.f32 %v3761, %v3795
        %v3814 = vmul.f32 %v3762, %v3795
        %v3815 = vmul.f32 %v3763, %v3795
        %v3816 = vmul.f32 %v3764, %v3795
        %v3817 = vmul.f32 %v3765, %v3795
        %v3818 = vmul.f32 %v3766, %v3795
        %v3819 = vmul.f32 %v3767, %v3795
        %v3820 = vmul.f32 %v3768, %v3795
        %v3821 = vmul.f32 %v3769, %v3795
        %v3822 = vmul.f32 %v3770, %v3795
        %v3823 = vmul.f32 %v3771, %v3795
        %v3824 = vmul.f32 %v3772, %v3795
        %v3825 = vmul.f32 %v3773, %v3795
        %v3826 = vmul.f32 %v3774, %v3795
        %v3827 = vmul.f32 %v3775, %v3795
        %v3828 = vmul.f32 %v3776, %v3795
        %v3829 = vmul.f32 %v3777, %v3795
        %v3830 = vmul.f32 %v3778, %v3795
        %v3831 = vmul.f32 %v3779, %v3795
        %v3832 = vmul.f32 %v3780, %v3795
        %v3833 = vmul.f32 %v3781, %v3795
        %v3834 = vmul.f32 %v3782, %v3795
        %v3835 = vmul.f32 %v3783, %v3795
        %v3836 = vmul.f32 %v3784, %v3795
        %v3837 = vmul.f32 %v3785, %v3795
        %v3838 = vmul.f32 %v3786, %v3795
        %v3839 = vmul.f32 %v3787, %v3795
        %v3840 = vmul.f32 %v3788, %v3795
        %v3841 = vmul.f32 %v3789, %v3795
        %v3842 = vmul.f32 %v3790, %v3795
        %v3843 = vmul.f32 %v3791, %v3795
        %v3844 = vmul.f32 %v3792, %v3795
        %v3845 = vld [vmem:[%s288] sm:$0x1]
        %v3847 = vperm.slane %v3845, 0
        %v3849 = vadd.f32 %v3797, %v3847
        %v3850 = vadd.f32 %v3798, %v3847
        %v3851 = vadd.f32 %v3799, %v3847
        %v3852 = vadd.f32 %v3800, %v3847
        %v3853 = vadd.f32 %v3801, %v3847
        %v3854 = vadd.f32 %v3802, %v3847
        %v3855 = vadd.f32 %v3803, %v3847
        %v3856 = vadd.f32 %v3804, %v3847
        %v3857 = vadd.f32 %v3805, %v3847
        %v3858 = vadd.f32 %v3806, %v3847
        %v3859 = vadd.f32 %v3807, %v3847
        %v3860 = vadd.f32 %v3808, %v3847
        %v3861 = vadd.f32 %v3809, %v3847
        %v3862 = vadd.f32 %v3810, %v3847
        %v3863 = vadd.f32 %v3811, %v3847
        %v3864 = vadd.f32 %v3812, %v3847
        %v3865 = vadd.f32 %v3813, %v3847
        %v3866 = vadd.f32 %v3814, %v3847
        %v3867 = vadd.f32 %v3815, %v3847
        %v3868 = vadd.f32 %v3816, %v3847
        %v3869 = vadd.f32 %v3817, %v3847
        %v3870 = vadd.f32 %v3818, %v3847
        %v3871 = vadd.f32 %v3819, %v3847
        %v3872 = vadd.f32 %v3820, %v3847
        %v3873 = vadd.f32 %v3821, %v3847
        %v3874 = vadd.f32 %v3822, %v3847
        %v3875 = vadd.f32 %v3823, %v3847
        %v3876 = vadd.f32 %v3824, %v3847
        %v3877 = vadd.f32 %v3825, %v3847
        %v3878 = vadd.f32 %v3826, %v3847
        %v3879 = vadd.f32 %v3827, %v3847
        %v3880 = vadd.f32 %v3828, %v3847
        %v3881 = vadd.f32 %v3829, %v3847
        %v3882 = vadd.f32 %v3830, %v3847
        %v3883 = vadd.f32 %v3831, %v3847
        %v3884 = vadd.f32 %v3832, %v3847
        %v3885 = vadd.f32 %v3833, %v3847
        %v3886 = vadd.f32 %v3834, %v3847
        %v3887 = vadd.f32 %v3835, %v3847
        %v3888 = vadd.f32 %v3836, %v3847
        %v3889 = vadd.f32 %v3837, %v3847
        %v3890 = vadd.f32 %v3838, %v3847
        %v3891 = vadd.f32 %v3839, %v3847
        %v3892 = vadd.f32 %v3840, %v3847
        %v3893 = vadd.f32 %v3841, %v3847
        %v3894 = vadd.f32 %v3842, %v3847
        %v3895 = vadd.f32 %v3843, %v3847
        %v3896 = vadd.f32 %v3844, %v3847
        %vm3897 = vcmp.ge.f32.partialorder %v3849, 0.0
        %vm3898 = vcmp.ge.f32.partialorder %v3850, 0.0
        %vm3899 = vcmp.ge.f32.partialorder %v3851, 0.0
        %vm3900 = vcmp.ge.f32.partialorder %v3852, 0.0
        %vm3901 = vcmp.ge.f32.partialorder %v3853, 0.0
        %vm3902 = vcmp.ge.f32.partialorder %v3854, 0.0
        %vm3903 = vcmp.ge.f32.partialorder %v3855, 0.0
        %vm3904 = vcmp.ge.f32.partialorder %v3856, 0.0
        %vm3905 = vcmp.ge.f32.partialorder %v3857, 0.0
        %vm3906 = vcmp.ge.f32.partialorder %v3858, 0.0
        %vm3907 = vcmp.ge.f32.partialorder %v3859, 0.0
        %vm3908 = vcmp.ge.f32.partialorder %v3860, 0.0
        %vm3909 = vcmp.ge.f32.partialorder %v3861, 0.0
        %vm3910 = vcmp.ge.f32.partialorder %v3862, 0.0
        %vm3911 = vcmp.ge.f32.partialorder %v3863, 0.0
        %vm3912 = vcmp.ge.f32.partialorder %v3864, 0.0
        %vm3913 = vcmp.ge.f32.partialorder %v3865, 0.0
        %vm3914 = vcmp.ge.f32.partialorder %v3866, 0.0
        %vm3915 = vcmp.ge.f32.partialorder %v3867, 0.0
        %vm3916 = vcmp.ge.f32.partialorder %v3868, 0.0
        %vm3917 = vcmp.ge.f32.partialorder %v3869, 0.0
        %vm3918 = vcmp.ge.f32.partialorder %v3870, 0.0
        %vm3919 = vcmp.ge.f32.partialorder %v3871, 0.0
        %vm3920 = vcmp.ge.f32.partialorder %v3872, 0.0
        %vm3921 = vcmp.ge.f32.partialorder %v3873, 0.0
        %vm3922 = vcmp.ge.f32.partialorder %v3874, 0.0
        %vm3923 = vcmp.ge.f32.partialorder %v3875, 0.0
        %vm3924 = vcmp.ge.f32.partialorder %v3876, 0.0
        %vm3925 = vcmp.ge.f32.partialorder %v3877, 0.0
        %vm3926 = vcmp.ge.f32.partialorder %v3878, 0.0
        %vm3927 = vcmp.ge.f32.partialorder %v3879, 0.0
        %vm3928 = vcmp.ge.f32.partialorder %v3880, 0.0
        %vm3929 = vcmp.ge.f32.partialorder %v3881, 0.0
        %vm3930 = vcmp.ge.f32.partialorder %v3882, 0.0
        %vm3931 = vcmp.ge.f32.partialorder %v3883, 0.0
        %vm3932 = vcmp.ge.f32.partialorder %v3884, 0.0
        %vm3933 = vcmp.ge.f32.partialorder %v3885, 0.0
        %vm3934 = vcmp.ge.f32.partialorder %v3886, 0.0
        %vm3935 = vcmp.ge.f32.partialorder %v3887, 0.0
        %vm3936 = vcmp.ge.f32.partialorder %v3888, 0.0
        %vm3937 = vcmp.ge.f32.partialorder %v3889, 0.0
        %vm3938 = vcmp.ge.f32.partialorder %v3890, 0.0
        %vm3939 = vcmp.ge.f32.partialorder %v3891, 0.0
        %vm3940 = vcmp.ge.f32.partialorder %v3892, 0.0
        %vm3941 = vcmp.ge.f32.partialorder %v3893, 0.0
        %vm3942 = vcmp.ge.f32.partialorder %v3894, 0.0
        %vm3943 = vcmp.ge.f32.partialorder %v3895, 0.0
        %vm3944 = vcmp.ge.f32.partialorder %v3896, 0.0
        %v3945 = vmul.f32 %v3849, 0.01
        %v3946 = vmul.f32 %v3850, 0.01
        %v3947 = vmul.f32 %v3851, 0.01
        %v3948 = vmul.f32 %v3852, 0.01
        %v3949 = vmul.f32 %v3853, 0.01
        %v3950 = vmul.f32 %v3854, 0.01
        %v3951 = vmul.f32 %v3855, 0.01
        %v3952 = vmul.f32 %v3856, 0.01
        %v3953 = vmul.f32 %v3857, 0.01
        %v3954 = vmul.f32 %v3858, 0.01
        %v3955 = vmul.f32 %v3859, 0.01
        %v3956 = vmul.f32 %v3860, 0.01
        %v3957 = vmul.f32 %v3861, 0.01
        %v3958 = vmul.f32 %v3862, 0.01
        %v3959 = vmul.f32 %v3863, 0.01
        %v3960 = vmul.f32 %v3864, 0.01
        %v3961 = vmul.f32 %v3865, 0.01
        %v3962 = vmul.f32 %v3866, 0.01
        %v3963 = vmul.f32 %v3867, 0.01
        %v3964 = vmul.f32 %v3868, 0.01
        %v3965 = vmul.f32 %v3869, 0.01
        %v3966 = vmul.f32 %v3870, 0.01
        %v3967 = vmul.f32 %v3871, 0.01
        %v3968 = vmul.f32 %v3872, 0.01
        %v3969 = vmul.f32 %v3873, 0.01
        %v3970 = vmul.f32 %v3874, 0.01
        %v3971 = vmul.f32 %v3875, 0.01
        %v3972 = vmul.f32 %v3876, 0.01
        %v3973 = vmul.f32 %v3877, 0.01
        %v3974 = vmul.f32 %v3878, 0.01
        %v3975 = vmul.f32 %v3879, 0.01
        %v3976 = vmul.f32 %v3880, 0.01
        %v3977 = vmul.f32 %v3881, 0.01
        %v3978 = vmul.f32 %v3882, 0.01
        %v3979 = vmul.f32 %v3883, 0.01
        %v3980 = vmul.f32 %v3884, 0.01
        %v3981 = vmul.f32 %v3885, 0.01
        %v3982 = vmul.f32 %v3886, 0.01
        %v3983 = vmul.f32 %v3887, 0.01
        %v3984 = vmul.f32 %v3888, 0.01
        %v3985 = vmul.f32 %v3889, 0.01
        %v3986 = vmul.f32 %v3890, 0.01
        %v3987 = vmul.f32 %v3891, 0.01
        %v3988 = vmul.f32 %v3892, 0.01
        %v3989 = vmul.f32 %v3893, 0.01
        %v3990 = vmul.f32 %v3894, 0.01
        %v3991 = vmul.f32 %v3895, 0.01
        %v3992 = vmul.f32 %v3896, 0.01
        %v3993 = vsel %vm3897, %v3849, %v3945
        %v3994 = vsel %vm3898, %v3850, %v3946
        %v3995 = vsel %vm3899, %v3851, %v3947
        %v3996 = vsel %vm3900, %v3852, %v3948
        %v3997 = vsel %vm3901, %v3853, %v3949
        %v3998 = vsel %vm3902, %v3854, %v3950
        %v3999 = vsel %vm3903, %v3855, %v3951
        %v4000 = vsel %vm3904, %v3856, %v3952
        %v4001 = vsel %vm3905, %v3857, %v3953
        %v4002 = vsel %vm3906, %v3858, %v3954
        %v4003 = vsel %vm3907, %v3859, %v3955
        %v4004 = vsel %vm3908, %v3860, %v3956
        %v4005 = vsel %vm3909, %v3861, %v3957
        %v4006 = vsel %vm3910, %v3862, %v3958
        %v4007 = vsel %vm3911, %v3863, %v3959
        %v4008 = vsel %vm3912, %v3864, %v3960
        %v4009 = vsel %vm3913, %v3865, %v3961
        %v4010 = vsel %vm3914, %v3866, %v3962
        %v4011 = vsel %vm3915, %v3867, %v3963
        %v4012 = vsel %vm3916, %v3868, %v3964
        %v4013 = vsel %vm3917, %v3869, %v3965
        %v4014 = vsel %vm3918, %v3870, %v3966
        %v4015 = vsel %vm3919, %v3871, %v3967
        %v4016 = vsel %vm3920, %v3872, %v3968
        %v4017 = vsel %vm3921, %v3873, %v3969
        %v4018 = vsel %vm3922, %v3874, %v3970
        %v4019 = vsel %vm3923, %v3875, %v3971
        %v4020 = vsel %vm3924, %v3876, %v3972
        %v4021 = vsel %vm3925, %v3877, %v3973
        %v4022 = vsel %vm3926, %v3878, %v3974
        %v4023 = vsel %vm3927, %v3879, %v3975
        %v4024 = vsel %vm3928, %v3880, %v3976
        %v4025 = vsel %vm3929, %v3881, %v3977
        %v4026 = vsel %vm3930, %v3882, %v3978
        %v4027 = vsel %vm3931, %v3883, %v3979
        %v4028 = vsel %vm3932, %v3884, %v3980
        %v4029 = vsel %vm3933, %v3885, %v3981
        %v4030 = vsel %vm3934, %v3886, %v3982
        %v4031 = vsel %vm3935, %v3887, %v3983
        %v4032 = vsel %vm3936, %v3888, %v3984
        %v4033 = vsel %vm3937, %v3889, %v3985
        %v4034 = vsel %vm3938, %v3890, %v3986
        %v4035 = vsel %vm3939, %v3891, %v3987
        %v4036 = vsel %vm3940, %v3892, %v3988
        %v4037 = vsel %vm3941, %v3893, %v3989
        %v4038 = vsel %vm3942, %v3894, %v3990
        %v4039 = vsel %vm3943, %v3895, %v3991
        %v4040 = vsel %vm3944, %v3896, %v3992
        %4041 = vst [vmem:[%s296] sm:$0xff] %v3993
        %4042 = vst [vmem:[%s296 + $0x8] sm:$0xff] %v3994
        %4043 = vst [vmem:[%s296 + $0x10] sm:$0xff] %v3995
        %4044 = vst [vmem:[%s296 + $0x18] sm:$0xff] %v3996
        %4045 = vst [vmem:[%s296 + $0x20] sm:$0xff] %v3997
        %4046 = vst [vmem:[%s296 + $0x28] sm:$0xff] %v3998
        %4047 = vst [vmem:[%s296 + $0x30] sm:$0xff] %v3999
        %4048 = vst [vmem:[%s296 + $0x38] sm:$0xff] %v4000
        %4049 = vst [vmem:[%s296 + $0x40] sm:$0xff] %v4001
        %4050 = vst [vmem:[%s296 + $0x48] sm:$0xff] %v4002
        %4051 = vst [vmem:[%s296 + $0x50] sm:$0xff] %v4003
        %4052 = vst [vmem:[%s296 + $0x58] sm:$0xff] %v4004
        %4053 = vst [vmem:[%s296 + $0x60] sm:$0xff] %v4005
        %4054 = vst [vmem:[%s296 + $0x68] sm:$0xff] %v4006
        %4055 = vst [vmem:[%s296 + $0x70] sm:$0xff] %v4007
        %4056 = vst [vmem:[%s296 + $0x78] sm:$0xff] %v4008
        %4057 = vst [vmem:[%s296 + $0x80] sm:$0xff] %v4009
        %4058 = vst [vmem:[%s296 + $0x88] sm:$0xff] %v4010
        %4059 = vst [vmem:[%s296 + $0x90] sm:$0xff] %v4011
        %4060 = vst [vmem:[%s296 + $0x98] sm:$0xff] %v4012
        %4061 = vst [vmem:[%s296 + $0xa0] sm:$0xff] %v4013
        %4062 = vst [vmem:[%s296 + $0xa8] sm:$0xff] %v4014
        %4063 = vst [vmem:[%s296 + $0xb0] sm:$0xff] %v4015
        %4064 = vst [vmem:[%s296 + $0xb8] sm:$0xff] %v4016
        %4065 = vst [vmem:[%s296 + $0xc0] sm:$0xff] %v4017
        %4066 = vst [vmem:[%s296 + $0xc8] sm:$0xff] %v4018
        %4067 = vst [vmem:[%s296 + $0xd0] sm:$0xff] %v4019
        %4068 = vst [vmem:[%s296 + $0xd8] sm:$0xff] %v4020
        %4069 = vst [vmem:[%s296 + $0xe0] sm:$0xff] %v4021
        %4070 = vst [vmem:[%s296 + $0xe8] sm:$0xff] %v4022
        %4071 = vst [vmem:[%s296 + $0xf0] sm:$0xff] %v4023
        %4072 = vst [vmem:[%s296 + $0xf8] sm:$0xff] %v4024
        %4073 = vst [vmem:[%s296 + $0x100] sm:$0xff] %v4025
        %4074 = vst [vmem:[%s296 + $0x108] sm:$0xff] %v4026
        %4075 = vst [vmem:[%s296 + $0x110] sm:$0xff] %v4027
        %4076 = vst [vmem:[%s296 + $0x118] sm:$0xff] %v4028
        %4077 = vst [vmem:[%s296 + $0x120] sm:$0xff] %v4029
        %4078 = vst [vmem:[%s296 + $0x128] sm:$0xff] %v4030
        %4079 = vst [vmem:[%s296 + $0x130] sm:$0xff] %v4031
        %4080 = vst [vmem:[%s296 + $0x138] sm:$0xff] %v4032
        %4081 = vst [vmem:[%s296 + $0x140] sm:$0xff] %v4033
        %4082 = vst [vmem:[%s296 + $0x148] sm:$0xff] %v4034
        %4083 = vst [vmem:[%s296 + $0x150] sm:$0xff] %v4035
        %4084 = vst [vmem:[%s296 + $0x158] sm:$0xff] %v4036
        %4085 = vst [vmem:[%s296 + $0x160] sm:$0xff] %v4037
        %4086 = vst [vmem:[%s296 + $0x168] sm:$0xff] %v4038
        %4087 = vst [vmem:[%s296 + $0x170] sm:$0xff] %v4039
        %4088 = vst [vmem:[%s296 + $0x178] sm:$0xff] %v4040
      $region44: #{upsample_bn_apply.3} parent=35 // pred_fallthru
        _
      %p4089 = scmp.lt.s32.totalorder %s20, 1
      %s4090 = scalar_select %p4089, %s20, 1
      %p4091 = scmp.lt.s32.totalorder %s21, 0
      %s4092 = scalar_select %p4091, %s21, 0
      %s4093 = smul.addr %s4090, 48
      %s4094 = sadd.s32 %s4092, %s4093
      %s4095 = smul.addr %s4094, 8
      %s4096 = scalar_lea.vmem %s4, %s4095
      // Predicated region
      $region45: #{upsample_bn_apply.3} parent=35 // pred_check
        %p4097 = pneg %p162
      $region46: #{upsample_bn_apply.3} parent=35 // pred_check_branch
        %4099 = sbr.rel (%p4097) target = $region48
      $region47: #{upsample_bn_apply.3} parent=35 // pred_region
        _
      $region48: #{upsample_bn_apply.3} parent=35 // pred_fallthru
        _
    $region36: #{upsample_bn_apply.3} parent=5 // pred_fallthru
      _
    %p4100 = scmp.le.s32.totalorder 2, %s10
    // Predicated region
    $region49: #{upsample_bn_apply.3} parent=5 // pred_check
      %p4101 = pneg %p4100
    $region50: #{upsample_bn_apply.3} parent=5 // pred_check_branch
      %4103 = sbr.rel (%p4101) target = $region52
    $region51: #{upsample_bn_apply.3} parent=5 // pred_region
      %s4104 = ssub.s32 %s10, 2
      // Predicated region
      $region53: #{upsample_bn_apply.3} parent=51 // pred_check
        %p4105 = pneg %p168
      $region54: #{upsample_bn_apply.3} parent=51 // pred_check_branch
        %4107 = sbr.rel (%p4105) target = $region56
      $region55: #{upsample_bn_apply.3} parent=51 // pred_region
        %p4108 = scmp.lt.s32.totalorder %s23, 1
        %s4109 = scalar_select %p4108, %s23, 1
        %p4110 = scmp.lt.s32.totalorder %s24, 0
        %s4111 = scalar_select %p4110, %s24, 0
        %s4112 = smul.addr %s4109, 48
        %s4113 = sadd.s32 %s4111, %s4112
        %s4114 = smul.addr %s4113, 8
        %s4115 = scalar_lea.vmem %s4, %s4114
      $region56: #{upsample_bn_apply.3} parent=51 // pred_fallthru
        _
    $region52: #{upsample_bn_apply.3} parent=5 // pred_fallthru
      _
  $region6: #{upsample_bn_apply.3} parent=0 // loop_footer
    %s14 = sadd.s32 1, %s10
  $region7: #{upsample_bn_apply.3} parent=0 // loop_footer_branch
    %9 = sbr.rel target = $region3
  $region8: #{upsample_bn_apply.3} parent=0 // loop_exit
    _

</llo_original>
